<compile_context>
chip_gen: v6e
topology: v6e:2x2x1
jax: 0.10.0
libtpu: 0.0.40
codegen_flags: <defaults>
</compile_context>

<pallas_src>
import functools
import math

import jax
import jax.numpy as jnp
from jax.experimental import pallas as pl
from jax.experimental.pallas import tpu as pltpu

# ------------------------- small (synthetic) SAM config ----------------------
IMG_SIZE = 64          # SAM: 1024
PATCH = 16
ENC_DIM = 64           # SAM ViT-B: 768
ENC_DEPTH = 2          # SAM ViT-B: 12
ENC_HEADS = 2
ENC_MLP = 4
PROMPT_DIM = 32        # SAM: 256  (prompt embed dim / transformer dim / out_chans)
EMB_SIZE = IMG_SIZE // PATCH   # 4  (image embedding spatial size)
DEC_DEPTH = 2
DEC_HEADS = 2
DEC_MLP_DIM = 64       # SAM: 2048
NUM_MASK_TOKENS = 4
IOU_HIDDEN = 32


def _round_up(x, m):
    return ((x + m - 1) // m) * m


def _gelu(x):
    # tanh-approx GELU: tanh runs on the EUP slot (free w.r.t. the VALU).
    # TODO(synk): slight divergence from PyTorch's exact erf GELU.
    c = math.sqrt(2.0 / math.pi)
    return 0.5 * x * (1.0 + jnp.tanh(c * (x + 0.044715 * x * x * x)))


def _apply_act(x, activation):
    if activation == 'gelu':
        return _gelu(x)
    if activation == 'relu':
        return jnp.maximum(x, 0.0)
    return x


# ============================== Pallas kernels ===============================

def _mm_kernel(a_ref, b_ref, bias_ref, o_ref, *, activation, transpose_b):
    """One (tm, K) x (K, N) [or (N, K)^T] tile matmul with fused bias + act."""
    a = a_ref[...]
    b = b_ref[...]
    if transpose_b:
        acc = jax.lax.dot_general(a, b, (((1,), (1,)), ((), ())),
                                  preferred_element_type=jnp.float32)
    else:
        acc = jnp.dot(a, b, preferred_element_type=jnp.float32)
    acc = acc + bias_ref[...]
    o_ref[...] = _apply_act(acc, activation)


def pallas_matmul(a, b, bias=None, activation=None, transpose_b=False):
    """a: (M, K) @ b (K, N) (or b (N, K) if transpose_b) + bias + activation.

    Full-K / full-N blocks (K, N are small here), only M is tiled; operands in
    bf16, f32 accumulation. No pad-to-128.
    """
    M, K = a.shape
    if transpose_b:
        N, Kb = b.shape
    else:
        Kb, N = b.shape
    assert K == Kb
    tm = min(256, _round_up(M, 8))
    Mp = _round_up(M, tm)
    a = a.astype(jnp.bfloat16)
    if Mp != M:
        a = jnp.pad(a, ((0, Mp - M), (0, 0)))
    if bias is None:
        bias = jnp.zeros((N,), jnp.float32)
    bias2 = jnp.asarray(bias, jnp.float32).reshape(1, N)
    b_block = (N, K) if transpose_b else (K, N)
    out = pl.pallas_call(
        functools.partial(_mm_kernel, activation=activation,
                          transpose_b=transpose_b),
        out_shape=jax.ShapeDtypeStruct((Mp, N), jnp.float32),
        grid=(Mp // tm,),
        in_specs=[pl.BlockSpec((tm, K), lambda i: (i, 0)),
                  pl.BlockSpec(b_block, lambda i: (0, 0)),
                  pl.BlockSpec((1, N), lambda i: (0, 0))],
        out_specs=pl.BlockSpec((tm, N), lambda i: (i, 0)),
        compiler_params=pltpu.CompilerParams(
            dimension_semantics=("parallel",)),
    )(a, b.astype(jnp.bfloat16), bias2)
    if Mp != M:
        out = out[:M]
    return out


def _bmm_kernel(a_ref, b_ref, bias_ref, o_ref, *, activation, transpose_b):
    """Grouped matmul: one group per grid step, fused bias + activation."""
    a = a_ref[0]
    b = b_ref[0]
    if transpose_b:
        acc = jax.lax.dot_general(a, b, (((1,), (1,)), ((), ())),
                                  preferred_element_type=jnp.float32)
    else:
        acc = jnp.dot(a, b, preferred_element_type=jnp.float32)
    acc = acc + bias_ref[0]
    o_ref[0] = _apply_act(acc, activation)


def pallas_bmm(a, b, bias=None, activation=None, transpose_b=False):
    """a: (G, M, K), b: (G, K, N) (or (G, N, K)) -> (G, M, N); grid over G."""
    G, M, K = a.shape
    if transpose_b:
        G2, N, Kb = b.shape
    else:
        G2, Kb, N = b.shape
    assert G == G2 and K == Kb
    if bias is None:
        bias = jnp.zeros((G, N), jnp.float32)
    bias3 = jnp.asarray(bias, jnp.float32).reshape(G, 1, N)
    b_block = (1, N, K) if transpose_b else (1, K, N)
    return pl.pallas_call(
        functools.partial(_bmm_kernel, activation=activation,
                          transpose_b=transpose_b),
        out_shape=jax.ShapeDtypeStruct((G, M, N), jnp.float32),
        grid=(G,),
        in_specs=[pl.BlockSpec((1, M, K), lambda g: (g, 0, 0)),
                  pl.BlockSpec(b_block, lambda g: (g, 0, 0)),
                  pl.BlockSpec((1, 1, N), lambda g: (g, 0, 0))],
        out_specs=pl.BlockSpec((1, M, N), lambda g: (g, 0, 0)),
        compiler_params=pltpu.CompilerParams(
            dimension_semantics=("parallel",)),
    )(a.astype(jnp.bfloat16), b.astype(jnp.bfloat16), bias3)


def _attn_kernel(q_ref, k_ref, v_ref, o_ref, *, num_heads, scale):
    """Per-batch fused MHA; heads split in-kernel (no HBM head transposes)."""
    q = q_ref[0]        # (Nq, D) bf16
    k = k_ref[0]        # (Nk, D) bf16
    v = v_ref[0]        # (Nk, D) bf16
    D = q.shape[-1]
    hd = D // num_heads
    for h in range(num_heads):          # static, small (2 heads)
        lo, hi = h * hd, (h + 1) * hd
        s = jax.lax.dot_general(q[:, lo:hi], k[:, lo:hi],
                                (((1,), (1,)), ((), ())),
                                preferred_element_type=jnp.float32) * scale
        s = s - jnp.max(s, axis=-1, keepdims=True)
        p = jnp.exp(s)
        p = p * pl.reciprocal(jnp.sum(p, axis=-1, keepdims=True), approx=True)
        o = jnp.dot(p.astype(jnp.bfloat16), v[:, lo:hi],
                    preferred_element_type=jnp.float32)
        o_ref[0, :, lo:hi] = o


def pallas_attention(q, k, v, num_heads, scale):
    """q: (B, Nq, D), k/v: (B, Nk, D). Fused softmax(QK^T * scale) @ V."""
    B, Nq, D = q.shape
    Nk = k.shape[1]
    return pl.pallas_call(
        functools.partial(_attn_kernel, num_heads=num_heads, scale=scale),
        out_shape=jax.ShapeDtypeStruct((B, Nq, D), jnp.float32),
        grid=(B,),
        in_specs=[pl.BlockSpec((1, Nq, D), lambda b: (b, 0, 0)),
                  pl.BlockSpec((1, Nk, D), lambda b: (b, 0, 0)),
                  pl.BlockSpec((1, Nk, D), lambda b: (b, 0, 0))],
        out_specs=pl.BlockSpec((1, Nq, D), lambda b: (b, 0, 0)),
        compiler_params=pltpu.CompilerParams(
            dimension_semantics=("parallel",)),
    )(q.astype(jnp.bfloat16), k.astype(jnp.bfloat16), v.astype(jnp.bfloat16))


def _ln_kernel(x_ref, g_ref, b_ref, o_ref, *, eps, activation):
    x = x_ref[...]
    mu = jnp.mean(x, axis=-1, keepdims=True)
    xc = x - mu
    var = jnp.mean(xc * xc, axis=-1, keepdims=True)
    y = xc * jax.lax.rsqrt(var + eps) * g_ref[...] + b_ref[...]
    o_ref[...] = _apply_act(y, activation)


def pallas_layernorm(x, g, b, eps=1e-5, activation=None):
    """LayerNorm over the last axis, tiled over rows, optional fused GELU."""
    shape = x.shape
    D = shape[-1]
    x2 = x.reshape(-1, D).astype(jnp.float32)
    M = x2.shape[0]
    tm = min(512, _round_up(M, 8))
    Mp = _round_up(M, tm)
    if Mp != M:
        x2 = jnp.pad(x2, ((0, Mp - M), (0, 0)))
    out = pl.pallas_call(
        functools.partial(_ln_kernel, eps=eps, activation=activation),
        out_shape=jax.ShapeDtypeStruct((Mp, D), jnp.float32),
        grid=(Mp // tm,),
        in_specs=[pl.BlockSpec((tm, D), lambda i: (i, 0)),
                  pl.BlockSpec((1, D), lambda i: (0, 0)),
                  pl.BlockSpec((1, D), lambda i: (0, 0))],
        out_specs=pl.BlockSpec((tm, D), lambda i: (i, 0)),
        compiler_params=pltpu.CompilerParams(
            dimension_semantics=("parallel",)),
    )(x2, g.reshape(1, D).astype(jnp.float32), b.reshape(1, D).astype(jnp.float32))
    if Mp != M:
        out = out[:M]
    return out.reshape(shape)


# ============================== model building blocks ========================

def linear(x, w, b=None, activation=None):
    """PyTorch nn.Linear: y = act(x @ W.T + b), W stored (out, in)."""
    lead = x.shape[:-1]
    y = pallas_matmul(x.reshape(-1, x.shape[-1]), w, bias=b,
                      activation=activation, transpose_b=True)
    return y.reshape(lead + (w.shape[0],))


def mha(q, k, v, num_heads):
    D = q.shape[-1]
    hd = D // num_heads
    return pallas_attention(q, k, v, num_heads, 1.0 / math.sqrt(hd))


def conv3x3_same(x, w):
    """3x3 conv, stride 1, pad 1, no bias. x: (B,H,W,Cin), w: (Cout,Cin,3,3)."""
    # TODO(synk): at real SAM neck sizes replace im2col with an in-kernel
    #             9-tap accumulating matmul to avoid 9x HBM materialization.
    B, H, W, Cin = x.shape
    Cout = w.shape[0]
    xp = jnp.pad(x, ((0, 0), (1, 1), (1, 1), (0, 0)))
    cols = []
    for kh in range(3):
        for kw in range(3):
            cols.append(xp[:, kh:kh + H, kw:kw + W, :])
    patches = jnp.stack(cols, axis=-1).reshape(B * H * W, Cin * 9)  # (c, kh, kw)
    y = pallas_matmul(patches, w.reshape(Cout, Cin * 9), transpose_b=True)
    return y.reshape(B, H, W, Cout)


def conv_transpose2x2(x, w, b, activation=None):
    """ConvTranspose2d(kernel=2, stride=2) with fused bias (+ activation).

    x: (B,H,W,Cin), w: (Cin,Cout,2,2), b: (Cout,)."""
    B, H, W, Cin = x.shape
    Cout = w.shape[1]
    bias4 = jnp.repeat(b, 4)          # matches column layout cout*4 + kh*2 + kw
    y = pallas_matmul(x.reshape(-1, Cin), w.reshape(Cin, Cout * 4),
                      bias=bias4, activation=activation, transpose_b=False)
    y = y.reshape(B, H, W, Cout, 2, 2).transpose(0, 1, 4, 2, 5, 3)
    return y.reshape(B, 2 * H, 2 * W, Cout)


# ------------------------------- image encoder -------------------------------

def vit_block(x, p, num_heads):
    B, Hh, Ww, D = x.shape
    shortcut = x
    xn = pallas_layernorm(x, p['norm1_w'], p['norm1_b'], eps=1e-6)
    xf = xn.reshape(B, Hh * Ww, D)
    qkv = linear(xf, p['qkv_w'], p['qkv_b'])
    q, k, v = qkv[..., :D], qkv[..., D:2 * D], qkv[..., 2 * D:]
    attn_out = mha(q, k, v, num_heads)
    attn_out = linear(attn_out, p['proj_w'], p['proj_b'])
    x = shortcut + attn_out.reshape(B, Hh, Ww, D)
    xn2 = pallas_layernorm(x, p['norm2_w'], p['norm2_b'], eps=1e-6)
    h = linear(xn2, p['mlp1_w'], p['mlp1_b'], activation='gelu')   # fused GELU
    h = linear(h, p['mlp2_w'], p['mlp2_b'])
    return x + h


def image_encoder(image, p):
    # image: (B, 3, H, W) NCHW -> patch embed (stride == kernel) as matmul
    B, C, H, W = image.shape
    ph, pw = H // PATCH, W // PATCH
    patches = image.reshape(B, C, ph, PATCH, pw, PATCH)
    patches = patches.transpose(0, 2, 4, 1, 3, 5).reshape(B * ph * pw, C * PATCH * PATCH)
    x = linear(patches, p['patch_w'].reshape(ENC_DIM, -1), p['patch_b'])
    x = x.reshape(B, ph, pw, ENC_DIM)
    x = x + p['pos_embed']
    for blk in p['blocks']:
        x = vit_block(x, blk, ENC_HEADS)
    # neck: 1x1 conv -> LayerNorm2d -> 3x3 conv -> LayerNorm2d  (channels-last)
    x = linear(x, p['neck_conv1_w'].reshape(PROMPT_DIM, ENC_DIM))
    x = pallas_layernorm(x, p['neck_ln1_w'], p['neck_ln1_b'], eps=1e-6)
    x = conv3x3_same(x, p['neck_conv2_w'])
    x = pallas_layernorm(x, p['neck_ln2_w'], p['neck_ln2_b'], eps=1e-6)
    return x  # (B, EMB_SIZE, EMB_SIZE, PROMPT_DIM) channels-last


# ------------------------------- prompt encoder ------------------------------

def pe_encoding(coords01, gauss):
    c = 2.0 * coords01 - 1.0
    c = c @ gauss
    c = 2.0 * jnp.pi * c
    return jnp.concatenate([jnp.sin(c), jnp.cos(c)], axis=-1)


def get_dense_pe(p):
    ones = jnp.ones((EMB_SIZE, EMB_SIZE), jnp.float32)
    y_embed = (jnp.cumsum(ones, axis=0) - 0.5) / EMB_SIZE
    x_embed = (jnp.cumsum(ones, axis=1) - 0.5) / EMB_SIZE
    return pe_encoding(jnp.stack([x_embed, y_embed], axis=-1), p['pe_gauss'])  # (E,E,C)


def prompt_encoder(coords, labels, p, batch_size):
    if coords is not None:
        pts = coords + 0.5  # shift to pixel center
        pad_pt = jnp.zeros((pts.shape[0], 1, 2), jnp.float32)
        pad_lbl = -jnp.ones((pts.shape[0], 1), jnp.float32)
        pts = jnp.concatenate([pts, pad_pt], axis=1)
        lbl = jnp.concatenate([labels.astype(jnp.float32), pad_lbl], axis=1)
        c01 = pts / jnp.array([IMG_SIZE, IMG_SIZE], jnp.float32)  # x/W, y/H
        pe = pe_encoding(c01, p['pe_gauss'])
        lbl = lbl[..., None]
        pe = jnp.where(lbl == -1, 0.0, pe)
        pe = pe + jnp.where(lbl == -1, p['not_a_point'], 0.0)
        pe = pe + jnp.where(lbl == 0, p['point_emb'][0], 0.0)
        pe = pe + jnp.where(lbl == 1, p['point_emb'][1], 0.0)
        sparse = pe
    else:
        sparse = jnp.zeros((batch_size, 0, PROMPT_DIM), jnp.float32)
    dense = jnp.broadcast_to(p['no_mask'].reshape(1, 1, 1, PROMPT_DIM),
                             (batch_size, EMB_SIZE, EMB_SIZE, PROMPT_DIM))
    return sparse, dense


# -------------------------------- mask decoder -------------------------------

def dec_attention(q, k, v, p, num_heads):
    q = linear(q, p['q_w'], p['q_b'])
    k = linear(k, p['k_w'], p['k_b'])
    v = linear(v, p['v_w'], p['v_b'])
    out = mha(q, k, v, num_heads)
    return linear(out, p['out_w'], p['out_b'])


def twoway_block(queries, keys, query_pe, key_pe, p, skip_first_layer_pe):
    if skip_first_layer_pe:
        queries = dec_attention(queries, queries, queries, p['self_attn'], DEC_HEADS)
    else:
        q = queries + query_pe
        queries = queries + dec_attention(q, q, queries, p['self_attn'], DEC_HEADS)
    queries = pallas_layernorm(queries, p['norm1_w'], p['norm1_b'], eps=1e-5)

    q = queries + query_pe
    k = keys + key_pe
    queries = queries + dec_attention(q, k, keys, p['cross_t2i'], DEC_HEADS)
    queries = pallas_layernorm(queries, p['norm2_w'], p['norm2_b'], eps=1e-5)

    h = linear(queries, p['mlp1_w'], p['mlp1_b'], activation='relu')   # fused ReLU
    h = linear(h, p['mlp2_w'], p['mlp2_b'])
    queries = queries + h
    queries = pallas_layernorm(queries, p['norm3_w'], p['norm3_b'], eps=1e-5)

    q = queries + query_pe
    k = keys + key_pe
    keys = keys + dec_attention(k, q, queries, p['cross_i2t'], DEC_HEADS)
    keys = pallas_layernorm(keys, p['norm4_w'], p['norm4_b'], eps=1e-5)
    return queries, keys


def twoway_transformer(image_embedding, image_pe, point_embedding, p):
    queries, keys = point_embedding, image_embedding
    for i, layer in enumerate(p['layers']):
        queries, keys = twoway_block(queries, keys, point_embedding, image_pe,
                                     layer, skip_first_layer_pe=(i == 0))
    q = queries + point_embedding
    k = keys + image_pe
    queries = queries + dec_attention(q, k, keys, p['final_attn'], DEC_HEADS)
    queries = pallas_layernorm(queries, p['norm_final_w'], p['norm_final_b'], eps=1e-5)
    return queries, keys


def mlp_forward(x, layers):
    n = len(layers)
    for i, (w, b) in enumerate(layers):
        x = linear(x, w, b, activation='relu' if i < n - 1 else None)
    return x


def hyper_mlps_forward(mask_tokens_out, hyper_params):
    """All NUM_MASK_TOKENS hyper-MLPs in 3 grouped-matmul calls (not 12)."""
    x = jnp.transpose(mask_tokens_out, (1, 0, 2))        # (G=4, B, C)
    n_layers = len(hyper_params[0])
    for j in range(n_layers):
        w_stack = jnp.stack([hyper_params[i][j][0]
                             for i in range(NUM_MASK_TOKENS)], axis=0)   # (G, out, in)
        b_stack = jnp.stack([hyper_params[i][j][1]
                             for i in range(NUM_MASK_TOKENS)], axis=0)   # (G, out)
        act = 'relu' if j < n_layers - 1 else None
        x = pallas_bmm(x, w_stack, bias=b_stack, activation=act, transpose_b=True)
    return jnp.transpose(x, (1, 0, 2))                   # (B, G, C/8)


def mask_decoder(image_embeddings, image_pe, sparse, dense, p):
    B = sparse.shape[0]
    C = PROMPT_DIM
    output_tokens = jnp.concatenate([p['iou_token'], p['mask_tokens']], axis=0)
    output_tokens = jnp.broadcast_to(output_tokens[None], (B, NUM_MASK_TOKENS + 1, C))
    tokens = jnp.concatenate([output_tokens, sparse], axis=1)          # (B, Nt, C)

    src = image_embeddings + dense                                      # (B, E, E, C)
    E = src.shape[1]
    src_seq = src.reshape(B, E * E, C)
    pos_seq = jnp.broadcast_to(image_pe.reshape(1, E * E, C), (B, E * E, C))

    hs, src_out = twoway_transformer(src_seq, pos_seq, tokens, p['transformer'])
    iou_token_out = hs[:, 0, :]
    mask_tokens_out = hs[:, 1:1 + NUM_MASK_TOKENS, :]

    src_img = src_out.reshape(B, E, E, C)
    u = conv_transpose2x2(src_img, p['up1_w'], p['up1_b'])               # (B, 2E, 2E, C/4)
    u = pallas_layernorm(u, p['up_ln_w'], p['up_ln_b'], eps=1e-6,
                         activation='gelu')                              # fused GELU
    u = conv_transpose2x2(u, p['up2_w'], p['up2_b'], activation='gelu')  # (B, 4E, 4E, C/8)

    hyper_in = hyper_mlps_forward(mask_tokens_out, p['hyper_mlps'])      # (B, 4, C/8)

    B2, H4, W4, C8 = u.shape
    u_seq = u.reshape(B2, H4 * W4, C8)                                   # (B, H4*W4, C/8)
    masks = pallas_bmm(hyper_in, u_seq, transpose_b=True)                # (B, 4, H4*W4)
    masks = masks.reshape(B, NUM_MASK_TOKENS, H4, W4)

    iou_pred = mlp_forward(iou_token_out, p['iou_head'])
    # multimask_output=False
    return masks[:, 0:1], iou_pred[:, 0:1]


# ------------------------------- full forward --------------------------------

def medsam_forward(params, image, points=None):
    image_feats = image_encoder(image, params['image_encoder'])
    coords, labels = points if points is not None else (None, None)
    sparse, dense = prompt_encoder(coords, labels, params['prompt_encoder'],
                                   image.shape[0])
    dense_pe = get_dense_pe(params['prompt_encoder'])
    mask_logits, _ = mask_decoder(image_feats, dense_pe, sparse, dense,
                                  params['mask_decoder'])
    return mask_logits  # (B, 1, 4*EMB_SIZE, 4*EMB_SIZE)  NCHW, low-res logits


# ------------------------------ parameter init -------------------------------

class KeyGen:
    def __init__(self, key):
        self.key = key

    def __call__(self):
        self.key, sub = jax.random.split(self.key)
        return sub


def init_params(key):
    kg = KeyGen(key)

    def n(shape, scale=0.02):
        return scale * jax.random.normal(kg(), shape, dtype=jnp.float32)

    def zeros(shape):
        return jnp.zeros(shape, jnp.float32)

    def ones(shape):
        return jnp.ones(shape, jnp.float32)

    enc = {
        'patch_w': n((ENC_DIM, 3, PATCH, PATCH)),
        'patch_b': zeros((ENC_DIM,)),
        'pos_embed': n((1, EMB_SIZE, EMB_SIZE, ENC_DIM)),
        'blocks': [],
        'neck_conv1_w': n((PROMPT_DIM, ENC_DIM, 1, 1)),
        'neck_ln1_w': ones((PROMPT_DIM,)), 'neck_ln1_b': zeros((PROMPT_DIM,)),
        'neck_conv2_w': n((PROMPT_DIM, PROMPT_DIM, 3, 3)),
        'neck_ln2_w': ones((PROMPT_DIM,)), 'neck_ln2_b': zeros((PROMPT_DIM,)),
    }
    for _ in range(ENC_DEPTH):
        enc['blocks'].append({
            'norm1_w': ones((ENC_DIM,)), 'norm1_b': zeros((ENC_DIM,)),
            'qkv_w': n((3 * ENC_DIM, ENC_DIM)), 'qkv_b': zeros((3 * ENC_DIM,)),
            'proj_w': n((ENC_DIM, ENC_DIM)), 'proj_b': zeros((ENC_DIM,)),
            'norm2_w': ones((ENC_DIM,)), 'norm2_b': zeros((ENC_DIM,)),
            'mlp1_w': n((ENC_MLP * ENC_DIM, ENC_DIM)), 'mlp1_b': zeros((ENC_MLP * ENC_DIM,)),
            'mlp2_w': n((ENC_DIM, ENC_MLP * ENC_DIM)), 'mlp2_b': zeros((ENC_DIM,)),
        })

    prm = {
        'pe_gauss': jax.random.normal(kg(), (2, PROMPT_DIM // 2), dtype=jnp.float32),
        'point_emb': n((4, PROMPT_DIM)),
        'not_a_point': n((PROMPT_DIM,)),
        'no_mask': n((PROMPT_DIM,)),
    }

    def attn_params(internal):
        return {
            'q_w': n((internal, PROMPT_DIM)), 'q_b': zeros((internal,)),
            'k_w': n((internal, PROMPT_DIM)), 'k_b': zeros((internal,)),
            'v_w': n((internal, PROMPT_DIM)), 'v_b': zeros((internal,)),
            'out_w': n((PROMPT_DIM, internal)), 'out_b': zeros((PROMPT_DIM,)),
        }

    layers = []
    for _ in range(DEC_DEPTH):
        layers.append({
            'self_attn': attn_params(PROMPT_DIM),
            'norm1_w': ones((PROMPT_DIM,)), 'norm1_b': zeros((PROMPT_DIM,)),
            'cross_t2i': attn_params(PROMPT_DIM // 2),
            'norm2_w': ones((PROMPT_DIM,)), 'norm2_b': zeros((PROMPT_DIM,)),
            'mlp1_w': n((DEC_MLP_DIM, PROMPT_DIM)), 'mlp1_b': zeros((DEC_MLP_DIM,)),
            'mlp2_w': n((PROMPT_DIM, DEC_MLP_DIM)), 'mlp2_b': zeros((PROMPT_DIM,)),
            'norm3_w': ones((PROMPT_DIM,)), 'norm3_b': zeros((PROMPT_DIM,)),
            'cross_i2t': attn_params(PROMPT_DIM // 2),
            'norm4_w': ones((PROMPT_DIM,)), 'norm4_b': zeros((PROMPT_DIM,)),
        })

    def mlp_params(in_dim, hidden, out_dim, num_layers):
        dims = [in_dim] + [hidden] * (num_layers - 1) + [out_dim]
        return [(n((dims[i + 1], dims[i])), zeros((dims[i + 1],)))
                for i in range(num_layers)]

    dec = {
        'iou_token': n((1, PROMPT_DIM)),
        'mask_tokens': n((NUM_MASK_TOKENS, PROMPT_DIM)),
        'transformer': {
            'layers': layers,
            'final_attn': attn_params(PROMPT_DIM // 2),
            'norm_final_w': ones((PROMPT_DIM,)), 'norm_final_b': zeros((PROMPT_DIM,)),
        },
        'up1_w': n((PROMPT_DIM, PROMPT_DIM // 4, 2, 2)), 'up1_b': zeros((PROMPT_DIM // 4,)),
        'up_ln_w': ones((PROMPT_DIM // 4,)), 'up_ln_b': zeros((PROMPT_DIM // 4,)),
        'up2_w': n((PROMPT_DIM // 4, PROMPT_DIM // 8, 2, 2)), 'up2_b': zeros((PROMPT_DIM // 8,)),
        'hyper_mlps': [mlp_params(PROMPT_DIM, PROMPT_DIM, PROMPT_DIM // 8, 3)
                       for _ in range(NUM_MASK_TOKENS)],
        'iou_head': mlp_params(PROMPT_DIM, IOU_HIDDEN, NUM_MASK_TOKENS, 3),
    }
    return {'image_encoder': enc, 'prompt_encoder': prm, 'mask_decoder': dec}


# =================================== main =====================================

if __name__ == "__main__":
    root = jax.random.PRNGKey(0)
    pkey, ikey, ckey = jax.random.split(root, 3)

    params = init_params(pkey)

    B = 2
    image = jax.random.normal(ikey, (B, 3, IMG_SIZE, IMG_SIZE), dtype=jnp.float32)
    coords = jax.random.uniform(ckey, (B, 1, 2), minval=0.0, maxval=float(IMG_SIZE),
                                dtype=jnp.float32)          # (x, y) pixel coords
    labels = jnp.ones((B, 1), jnp.float32)                    # positive points

    fwd = jax.jit(medsam_forward)
    mask_logits = fwd(params, image, (coords, labels))
    mask_logits = jax.block_until_ready(mask_logits)

    assert mask_logits.shape == (B, 1, 4 * EMB_SIZE, 4 * EMB_SIZE), mask_logits.shape
    assert bool(jnp.all(jnp.isfinite(mask_logits)))
    print("KERNEL_OK")
</pallas_src>

<mosaic_0001>
module attributes {stable_mosaic.version = 11 : i64} {
  func.func @_mm_kernel(%arg0: i32, %arg1: memref<32x768xbf16, #tpu.memory_space<vmem>>, %arg2: memref<64x768xbf16, #tpu.memory_space<vmem>>, %arg3: memref<1x64xf32, #tpu.memory_space<vmem>>, %arg4: memref<32x64xf32, #tpu.memory_space<vmem>>) attributes {dimension_semantics = [#tpu.dimension_semantics<parallel>], iteration_bounds = array<i64: 1>, scalar_prefetch = 0 : i64, scratch_operands = 0 : i64, tpu.core_type = #tpu.core_type<tc>, window_params = [{transform_indices = @transform_0, window_bounds = array<i64: 32, 768>}, {pipeline_mode = #tpu.pipeline_mode<synchronous>, transform_indices = @transform_1, window_bounds = array<i64: 64, 768>}, {pipeline_mode = #tpu.pipeline_mode<synchronous>, transform_indices = @transform_2, window_bounds = array<i64: 1, 64>}, {transform_indices = @transform_3, window_bounds = array<i64: 32, 64>}]} {
    %c0 = arith.constant 0 : index
    %c0_0 = arith.constant 0 : index
    %0 = vector.load %arg1[%c0, %c0_0] : memref<32x768xbf16, #tpu.memory_space<vmem>>, vector<32x768xbf16>
    %c0_1 = arith.constant 0 : index
    %c0_2 = arith.constant 0 : index
    %1 = vector.load %arg2[%c0_1, %c0_2] : memref<64x768xbf16, #tpu.memory_space<vmem>>, vector<64x768xbf16>
    %cst = arith.constant dense<0.000000e+00> : vector<32x64xf32>
    %2 = tpu.matmul %0, %1, %cst {dimension_numbers = #tpu.dot_dimension_numbers<[1], [1], [0], [0], [0, 0, 1, 0], [], []>} : vector<32x768xbf16>, vector<64x768xbf16>, vector<32x64xf32> -> vector<32x64xf32>
    %c0_3 = arith.constant 0 : index
    %c0_4 = arith.constant 0 : index
    %3 = vector.load %arg3[%c0_3, %c0_4] : memref<1x64xf32, #tpu.memory_space<vmem>>, vector<1x64xf32>
    %4 = vector.broadcast %3 : vector<1x64xf32> to vector<32x64xf32>
    %5 = arith.addf %2, %4 : vector<32x64xf32>
    %c0_5 = arith.constant 0 : index
    %c0_6 = arith.constant 0 : index
    %6 = vector.load %arg4[%c0_5, %c0_6] : memref<32x64xf32, #tpu.memory_space<vmem>>, vector<32x64xf32>
    tpu.vector_store %arg4[%c0_5, %c0_6], %5 {strides = array<i32>} : memref<32x64xf32, #tpu.memory_space<vmem>>, vector<32x64xf32>,
    return
  }
  func.func @transform_0(%arg0: i32) -> (i32, i32) {
    %c0_i32 = arith.constant 0 : i32
    %c0_i32_0 = arith.constant 0 : i32
    return %arg0, %c0_i32 : i32, i32
  }
  func.func @transform_1(%arg0: i32) -> (i32, i32) {
    %c0_i32 = arith.constant 0 : i32
    %c0_i32_0 = arith.constant 0 : i32
    %c0_i32_1 = arith.constant 0 : i32
    return %c0_i32, %c0_i32_0 : i32, i32
  }
  func.func @transform_2(%arg0: i32) -> (i32, i32) {
    %c0_i32 = arith.constant 0 : i32
    %c0_i32_0 = arith.constant 0 : i32
    %c0_i32_1 = arith.constant 0 : i32
    return %c0_i32, %c0_i32_0 : i32, i32
  }
  func.func @transform_3(%arg0: i32) -> (i32, i32) {
    %c0_i32 = arith.constant 0 : i32
    %c0_i32_0 = arith.constant 0 : i32
    return %arg0, %c0_i32 : i32, i32
  }
}

module attributes {stable_mosaic.version = 11 : i64} {
  func.func @_ln_kernel(%arg0: i32, %arg1: memref<32x64xf32, #tpu.memory_space<vmem>>, %arg2: memref<1x64xf32, #tpu.memory_space<vmem>>, %arg3: memref<1x64xf32, #tpu.memory_space<vmem>>, %arg4: memref<32x64xf32, #tpu.memory_space<vmem>>) attributes {dimension_semantics = [#tpu.dimension_semantics<parallel>], iteration_bounds = array<i64: 1>, scalar_prefetch = 0 : i64, scratch_operands = 0 : i64, tpu.core_type = #tpu.core_type<tc>, window_params = [{transform_indices = @transform_0, window_bounds = array<i64: 32, 64>}, {pipeline_mode = #tpu.pipeline_mode<synchronous>, transform_indices = @transform_1, window_bounds = array<i64: 1, 64>}, {pipeline_mode = #tpu.pipeline_mode<synchronous>, transform_indices = @transform_2, window_bounds = array<i64: 1, 64>}, {transform_indices = @transform_3, window_bounds = array<i64: 32, 64>}]} {
    %c0 = arith.constant 0 : index
    %c0_0 = arith.constant 0 : index
    %0 = vector.load %arg1[%c0, %c0_0] : memref<32x64xf32, #tpu.memory_space<vmem>>, vector<32x64xf32>
    %cst = arith.constant dense<0.000000e+00> : vector<32xf32>
    %1 = vector.multi_reduction <add>, %0, %cst [1] : vector<32x64xf32> to vector<32xf32>
    %2 = vector.shape_cast %1 : vector<32xf32> to vector<32x1xf32>
    %cst_1 = arith.constant 6.400000e+01 : f32
    %3 = vector.broadcast %cst_1 : f32 to vector<32x1xf32>
    %4 = arith.divf %2, %3 : vector<32x1xf32>
    %5 = vector.broadcast %4 : vector<32x1xf32> to vector<32x64xf32>
    %6 = arith.subf %0, %5 : vector<32x64xf32>
    %7 = arith.mulf %6, %6 : vector<32x64xf32>
    %cst_2 = arith.constant dense<0.000000e+00> : vector<32xf32>
    %8 = vector.multi_reduction <add>, %7, %cst_2 [1] : vector<32x64xf32> to vector<32xf32>
    %9 = vector.shape_cast %8 : vector<32xf32> to vector<32x1xf32>
    %cst_3 = arith.constant 6.400000e+01 : f32
    %10 = vector.broadcast %cst_3 : f32 to vector<32x1xf32>
    %11 = arith.divf %9, %10 : vector<32x1xf32>
    %cst_4 = arith.constant 9.99999997E-7 : f32
    %12 = vector.broadcast %cst_4 : f32 to vector<32x1xf32>
    %13 = arith.addf %11, %12 : vector<32x1xf32>
    %14 = math.rsqrt %13 : vector<32x1xf32>
    %15 = vector.broadcast %14 : vector<32x1xf32> to vector<32x64xf32>
    %16 = arith.mulf %6, %15 : vector<32x64xf32>
    %c0_5 = arith.constant 0 : index
    %c0_6 = arith.constant 0 : index
    %17 = vector.load %arg2[%c0_5, %c0_6] : memref<1x64xf32, #tpu.memory_space<vmem>>, vector<1x64xf32>
    %18 = vector.broadcast %17 : vector<1x64xf32> to vector<32x64xf32>
    %19 = arith.mulf %16, %18 : vector<32x64xf32>
    %c0_7 = arith.constant 0 : index
    %c0_8 = arith.constant 0 : index
    %20 = vector.load %arg3[%c0_7, %c0_8] : memref<1x64xf32, #tpu.memory_space<vmem>>, vector<1x64xf32>
    %21 = vector.broadcast %20 : vector<1x64xf32> to vector<32x64xf32>
    %22 = arith.addf %19, %21 : vector<32x64xf32>
    %c0_9 = arith.constant 0 : index
    %c0_10 = arith.constant 0 : index
    %23 = vector.load %arg4[%c0_9, %c0_10] : memref<32x64xf32, #tpu.memory_space<vmem>>, vector<32x64xf32>
    tpu.vector_store %arg4[%c0_9, %c0_10], %22 {strides = array<i32>} : memref<32x64xf32, #tpu.memory_space<vmem>>, vector<32x64xf32>,
    return
  }
  func.func @transform_0(%arg0: i32) -> (i32, i32) {
    %c0_i32 = arith.constant 0 : i32
    %c0_i32_0 = arith.constant 0 : i32
    return %arg0, %c0_i32 : i32, i32
  }
  func.func @transform_1(%arg0: i32) -> (i32, i32) {
    %c0_i32 = arith.constant 0 : i32
    %c0_i32_0 = arith.constant 0 : i32
    %c0_i32_1 = arith.constant 0 : i32
    return %c0_i32, %c0_i32_0 : i32, i32
  }
  func.func @transform_2(%arg0: i32) -> (i32, i32) {
    %c0_i32 = arith.constant 0 : i32
    %c0_i32_0 = arith.constant 0 : i32
    %c0_i32_1 = arith.constant 0 : i32
    return %c0_i32, %c0_i32_0 : i32, i32
  }
  func.func @transform_3(%arg0: i32) -> (i32, i32) {
    %c0_i32 = arith.constant 0 : i32
    %c0_i32_0 = arith.constant 0 : i32
    return %arg0, %c0_i32 : i32, i32
  }
}

module attributes {stable_mosaic.version = 11 : i64} {
  func.func @_mm_kernel(%arg0: i32, %arg1: memref<32x64xbf16, #tpu.memory_space<vmem>>, %arg2: memref<192x64xbf16, #tpu.memory_space<vmem>>, %arg3: memref<1x192xf32, #tpu.memory_space<vmem>>, %arg4: memref<32x192xf32, #tpu.memory_space<vmem>>) attributes {dimension_semantics = [#tpu.dimension_semantics<parallel>], iteration_bounds = array<i64: 1>, scalar_prefetch = 0 : i64, scratch_operands = 0 : i64, tpu.core_type = #tpu.core_type<tc>, window_params = [{transform_indices = @transform_0, window_bounds = array<i64: 32, 64>}, {pipeline_mode = #tpu.pipeline_mode<synchronous>, transform_indices = @transform_1, window_bounds = array<i64: 192, 64>}, {pipeline_mode = #tpu.pipeline_mode<synchronous>, transform_indices = @transform_2, window_bounds = array<i64: 1, 192>}, {transform_indices = @transform_3, window_bounds = array<i64: 32, 192>}]} {
    %c0 = arith.constant 0 : index
    %c0_0 = arith.constant 0 : index
    %0 = vector.load %arg1[%c0, %c0_0] : memref<32x64xbf16, #tpu.memory_space<vmem>>, vector<32x64xbf16>
    %c0_1 = arith.constant 0 : index
    %c0_2 = arith.constant 0 : index
    %1 = vector.load %arg2[%c0_1, %c0_2] : memref<192x64xbf16, #tpu.memory_space<vmem>>, vector<192x64xbf16>
    %cst = arith.constant dense<0.000000e+00> : vector<32x192xf32>
    %2 = tpu.matmul %0, %1, %cst {dimension_numbers = #tpu.dot_dimension_numbers<[1], [1], [0], [0], [0, 0, 1, 0], [], []>} : vector<32x64xbf16>, vector<192x64xbf16>, vector<32x192xf32> -> vector<32x192xf32>
    %c0_3 = arith.constant 0 : index
    %c0_4 = arith.constant 0 : index
    %3 = vector.load %arg3[%c0_3, %c0_4] : memref<1x192xf32, #tpu.memory_space<vmem>>, vector<1x192xf32>
    %4 = vector.broadcast %3 : vector<1x192xf32> to vector<32x192xf32>
    %5 = arith.addf %2, %4 : vector<32x192xf32>
    %c0_5 = arith.constant 0 : index
    %c0_6 = arith.constant 0 : index
    %6 = vector.load %arg4[%c0_5, %c0_6] : memref<32x192xf32, #tpu.memory_space<vmem>>, vector<32x192xf32>
    tpu.vector_store %arg4[%c0_5, %c0_6], %5 {strides = array<i32>} : memref<32x192xf32, #tpu.memory_space<vmem>>, vector<32x192xf32>,
    return
  }
  func.func @transform_0(%arg0: i32) -> (i32, i32) {
    %c0_i32 = arith.constant 0 : i32
    %c0_i32_0 = arith.constant 0 : i32
    return %arg0, %c0_i32 : i32, i32
  }
  func.func @transform_1(%arg0: i32) -> (i32, i32) {
    %c0_i32 = arith.constant 0 : i32
    %c0_i32_0 = arith.constant 0 : i32
    %c0_i32_1 = arith.constant 0 : i32
    return %c0_i32, %c0_i32_0 : i32, i32
  }
  func.func @transform_2(%arg0: i32) -> (i32, i32) {
    %c0_i32 = arith.constant 0 : i32
    %c0_i32_0 = arith.constant 0 : i32
    %c0_i32_1 = arith.constant 0 : i32
    return %c0_i32, %c0_i32_0 : i32, i32
  }
  func.func @transform_3(%arg0: i32) -> (i32, i32) {
    %c0_i32 = arith.constant 0 : i32
    %c0_i32_0 = arith.constant 0 : i32
    return %arg0, %c0_i32 : i32, i32
  }
}

module attributes {stable_mosaic.version = 11 : i64} {
  func.func @_attn_kernel(%arg0: i32, %arg1: memref<1x16x64xbf16, #tpu.memory_space<vmem>>, %arg2: memref<1x16x64xbf16, #tpu.memory_space<vmem>>, %arg3: memref<1x16x64xbf16, #tpu.memory_space<vmem>>, %arg4: memref<1x16x64xf32, #tpu.memory_space<vmem>>) attributes {dimension_semantics = [#tpu.dimension_semantics<parallel>], iteration_bounds = array<i64: 2>, scalar_prefetch = 0 : i64, scratch_operands = 0 : i64, tpu.core_type = #tpu.core_type<tc>, window_params = [{transform_indices = @transform_0, window_bounds = array<i64: 1, 16, 64>}, {transform_indices = @transform_1, window_bounds = array<i64: 1, 16, 64>}, {transform_indices = @transform_2, window_bounds = array<i64: 1, 16, 64>}, {transform_indices = @transform_3, window_bounds = array<i64: 1, 16, 64>}]} {
    %c0 = arith.constant 0 : index
    %c0_0 = arith.constant 0 : index
    %c0_1 = arith.constant 0 : index
    %0 = vector.load %arg1[%c0, %c0_0, %c0_1] : memref<1x16x64xbf16, #tpu.memory_space<vmem>>, vector<1x16x64xbf16>
    %1 = vector.shape_cast %0 : vector<1x16x64xbf16> to vector<16x64xbf16>
    %c0_2 = arith.constant 0 : index
    %c0_3 = arith.constant 0 : index
    %c0_4 = arith.constant 0 : index
    %2 = vector.load %arg2[%c0_2, %c0_3, %c0_4] : memref<1x16x64xbf16, #tpu.memory_space<vmem>>, vector<1x16x64xbf16>
    %3 = vector.shape_cast %2 : vector<1x16x64xbf16> to vector<16x64xbf16>
    %c0_5 = arith.constant 0 : index
    %c0_6 = arith.constant 0 : index
    %c0_7 = arith.constant 0 : index
    %4 = vector.load %arg3[%c0_5, %c0_6, %c0_7] : memref<1x16x64xbf16, #tpu.memory_space<vmem>>, vector<1x16x64xbf16>
    %5 = vector.shape_cast %4 : vector<1x16x64xbf16> to vector<16x64xbf16>
    %6 = vector.extract_strided_slice %1 {offsets = [0, 0], sizes = [16, 32], strides = [1, 1]} : vector<16x64xbf16> to vector<16x32xbf16>
    %7 = vector.extract_strided_slice %3 {offsets = [0, 0], sizes = [16, 32], strides = [1, 1]} : vector<16x64xbf16> to vector<16x32xbf16>
    %cst = arith.constant dense<0.000000e+00> : vector<16x16xf32>
    %8 = tpu.matmul %6, %7, %cst {dimension_numbers = #tpu.dot_dimension_numbers<[1], [1], [0], [0], [0, 0, 1, 0], [], []>} : vector<16x32xbf16>, vector<16x32xbf16>, vector<16x16xf32> -> vector<16x16xf32>
    %cst_8 = arith.constant 0.176776692 : f32
    %9 = vector.broadcast %cst_8 : f32 to vector<16x16xf32>
    %10 = arith.mulf %8, %9 : vector<16x16xf32>
    %cst_9 = arith.constant dense<0xFF800000> : vector<16xf32>
    %11 = vector.multi_reduction <maximumf>, %10, %cst_9 [1] : vector<16x16xf32> to vector<16xf32>
    %12 = vector.shape_cast %11 : vector<16xf32> to vector<16x1xf32>
    %13 = vector.broadcast %12 : vector<16x1xf32> to vector<16x16xf32>
    %14 = arith.subf %10, %13 : vector<16x16xf32>
    %15 = math.exp %14 : vector<16x16xf32>
    %cst_10 = arith.constant dense<0.000000e+00> : vector<16xf32>
    %16 = vector.multi_reduction <add>, %15, %cst_10 [1] : vector<16x16xf32> to vector<16xf32>
    %17 = vector.shape_cast %16 : vector<16xf32> to vector<16x1xf32>
    %18 = tpu.reciprocal %17 {approx = true} : vector<16x1xf32> -> vector<16x1xf32>
    %19 = vector.broadcast %18 : vector<16x1xf32> to vector<16x16xf32>
    %20 = arith.mulf %15, %19 : vector<16x16xf32>
    %21 = arith.truncf %20 : vector<16x16xf32> to vector<16x16xbf16>
    %22 = vector.extract_strided_slice %5 {offsets = [0, 0], sizes = [16, 32], strides = [1, 1]} : vector<16x64xbf16> to vector<16x32xbf16>
    %cst_11 = arith.constant dense<0.000000e+00> : vector<16x32xf32>
    %23 = tpu.matmul %21, %22, %cst_11 {dimension_numbers = #tpu.dot_dimension_numbers<[1], [0], [0], [1], [0, 0, 1, 1], [], []>} : vector<16x16xbf16>, vector<16x32xbf16>, vector<16x32xf32> -> vector<16x32xf32>
    %c0_12 = arith.constant 0 : index
    %c0_13 = arith.constant 0 : index
    %c0_14 = arith.constant 0 : index
    %24 = vector.load %arg4[%c0_12, %c0_13, %c0_14] : memref<1x16x64xf32, #tpu.memory_space<vmem>>, vector<1x16x32xf32>
    %25 = vector.shape_cast %24 : vector<1x16x32xf32> to vector<16x32xf32>
    %26 = vector.shape_cast %23 : vector<16x32xf32> to vector<1x16x32xf32>
    tpu.vector_store %arg4[%c0_12, %c0_13, %c0_14], %26 {strides = array<i32>} : memref<1x16x64xf32, #tpu.memory_space<vmem>>, vector<1x16x32xf32>,
    %27 = vector.extract_strided_slice %1 {offsets = [0, 32], sizes = [16, 32], strides = [1, 1]} : vector<16x64xbf16> to vector<16x32xbf16>
    %28 = vector.extract_strided_slice %3 {offsets = [0, 32], sizes = [16, 32], strides = [1, 1]} : vector<16x64xbf16> to vector<16x32xbf16>
    %cst_15 = arith.constant dense<0.000000e+00> : vector<16x16xf32>
    %29 = tpu.matmul %27, %28, %cst_15 {dimension_numbers = #tpu.dot_dimension_numbers<[1], [1], [0], [0], [0, 0, 1, 0], [], []>} : vector<16x32xbf16>, vector<16x32xbf16>, vector<16x16xf32> -> vector<16x16xf32>
    %cst_16 = arith.constant 0.176776692 : f32
    %30 = vector.broadcast %cst_16 : f32 to vector<16x16xf32>
    %31 = arith.mulf %29, %30 : vector<16x16xf32>
    %cst_17 = arith.constant dense<0xFF800000> : vector<16xf32>
    %32 = vector.multi_reduction <maximumf>, %31, %cst_17 [1] : vector<16x16xf32> to vector<16xf32>
    %33 = vector.shape_cast %32 : vector<16xf32> to vector<16x1xf32>
    %34 = vector.broadcast %33 : vector<16x1xf32> to vector<16x16xf32>
    %35 = arith.subf %31, %34 : vector<16x16xf32>
    %36 = math.exp %35 : vector<16x16xf32>
    %cst_18 = arith.constant dense<0.000000e+00> : vector<16xf32>
    %37 = vector.multi_reduction <add>, %36, %cst_18 [1] : vector<16x16xf32> to vector<16xf32>
    %38 = vector.shape_cast %37 : vector<16xf32> to vector<16x1xf32>
    %39 = tpu.reciprocal %38 {approx = true} : vector<16x1xf32> -> vector<16x1xf32>
    %40 = vector.broadcast %39 : vector<16x1xf32> to vector<16x16xf32>
    %41 = arith.mulf %36, %40 : vector<16x16xf32>
    %42 = arith.truncf %41 : vector<16x16xf32> to vector<16x16xbf16>
    %43 = vector.extract_strided_slice %5 {offsets = [0, 32], sizes = [16, 32], strides = [1, 1]} : vector<16x64xbf16> to vector<16x32xbf16>
    %cst_19 = arith.constant dense<0.000000e+00> : vector<16x32xf32>
    %44 = tpu.matmul %42, %43, %cst_19 {dimension_numbers = #tpu.dot_dimension_numbers<[1], [0], [0], [1], [0, 0, 1, 1], [], []>} : vector<16x16xbf16>, vector<16x32xbf16>, vector<16x32xf32> -> vector<16x32xf32>
    %c0_20 = arith.constant 0 : index
    %c0_21 = arith.constant 0 : index
    %c32 = arith.constant 32 : index
    %45 = vector.load %arg4[%c0_20, %c0_21, %c32] : memref<1x16x64xf32, #tpu.memory_space<vmem>>, vector<1x16x32xf32>
    %46 = vector.shape_cast %45 : vector<1x16x32xf32> to vector<16x32xf32>
    %47 = vector.shape_cast %44 : vector<16x32xf32> to vector<1x16x32xf32>
    tpu.vector_store %arg4[%c0_20, %c0_21, %c32], %47 {strides = array<i32>} : memref<1x16x64xf32, #tpu.memory_space<vmem>>, vector<1x16x32xf32>,
    return
  }
  func.func @transform_0(%arg0: i32) -> (i32, i32, i32) {
    %c0_i32 = arith.constant 0 : i32
    %c0_i32_0 = arith.constant 0 : i32
    %c0_i32_1 = arith.constant 0 : i32
    return %arg0, %c0_i32, %c0_i32_0 : i32, i32, i32
  }
  func.func @transform_1(%arg0: i32) -> (i32, i32, i32) {
    %c0_i32 = arith.constant 0 : i32
    %c0_i32_0 = arith.constant 0 : i32
    %c0_i32_1 = arith.constant 0 : i32
    return %arg0, %c0_i32, %c0_i32_0 : i32, i32, i32
  }
  func.func @transform_2(%arg0: i32) -> (i32, i32, i32) {
    %c0_i32 = arith.constant 0 : i32
    %c0_i32_0 = arith.constant 0 : i32
    %c0_i32_1 = arith.constant 0 : i32
    return %arg0, %c0_i32, %c0_i32_0 : i32, i32, i32
  }
  func.func @transform_3(%arg0: i32) -> (i32, i32, i32) {
    %c0_i32 = arith.constant 0 : i32
    %c0_i32_0 = arith.constant 0 : i32
    %c0_i32_1 = arith.constant 0 : i32
    return %arg0, %c0_i32, %c0_i32_0 : i32, i32, i32
  }
}

module attributes {stable_mosaic.version = 11 : i64} {
  func.func @_mm_kernel(%arg0: i32, %arg1: memref<32x64xbf16, #tpu.memory_space<vmem>>, %arg2: memref<64x64xbf16, #tpu.memory_space<vmem>>, %arg3: memref<1x64xf32, #tpu.memory_space<vmem>>, %arg4: memref<32x64xf32, #tpu.memory_space<vmem>>) attributes {dimension_semantics = [#tpu.dimension_semantics<parallel>], iteration_bounds = array<i64: 1>, scalar_prefetch = 0 : i64, scratch_operands = 0 : i64, tpu.core_type = #tpu.core_type<tc>, window_params = [{transform_indices = @transform_0, window_bounds = array<i64: 32, 64>}, {pipeline_mode = #tpu.pipeline_mode<synchronous>, transform_indices = @transform_1, window_bounds = array<i64: 64, 64>}, {pipeline_mode = #tpu.pipeline_mode<synchronous>, transform_indices = @transform_2, window_bounds = array<i64: 1, 64>}, {transform_indices = @transform_3, window_bounds = array<i64: 32, 64>}]} {
    %c0 = arith.constant 0 : index
    %c0_0 = arith.constant 0 : index
    %0 = vector.load %arg1[%c0, %c0_0] : memref<32x64xbf16, #tpu.memory_space<vmem>>, vector<32x64xbf16>
    %c0_1 = arith.constant 0 : index
    %c0_2 = arith.constant 0 : index
    %1 = vector.load %arg2[%c0_1, %c0_2] : memref<64x64xbf16, #tpu.memory_space<vmem>>, vector<64x64xbf16>
    %cst = arith.constant dense<0.000000e+00> : vector<32x64xf32>
    %2 = tpu.matmul %0, %1, %cst {dimension_numbers = #tpu.dot_dimension_numbers<[1], [1], [0], [0], [0, 0, 1, 0], [], []>} : vector<32x64xbf16>, vector<64x64xbf16>, vector<32x64xf32> -> vector<32x64xf32>
    %c0_3 = arith.constant 0 : index
    %c0_4 = arith.constant 0 : index
    %3 = vector.load %arg3[%c0_3, %c0_4] : memref<1x64xf32, #tpu.memory_space<vmem>>, vector<1x64xf32>
    %4 = vector.broadcast %3 : vector<1x64xf32> to vector<32x64xf32>
    %5 = arith.addf %2, %4 : vector<32x64xf32>
    %c0_5 = arith.constant 0 : index
    %c0_6 = arith.constant 0 : index
    %6 = vector.load %arg4[%c0_5, %c0_6] : memref<32x64xf32, #tpu.memory_space<vmem>>, vector<32x64xf32>
    tpu.vector_store %arg4[%c0_5, %c0_6], %5 {strides = array<i32>} : memref<32x64xf32, #tpu.memory_space<vmem>>, vector<32x64xf32>,
    return
  }
  func.func @transform_0(%arg0: i32) -> (i32, i32) {
    %c0_i32 = arith.constant 0 : i32
    %c0_i32_0 = arith.constant 0 : i32
    return %arg0, %c0_i32 : i32, i32
  }
  func.func @transform_1(%arg0: i32) -> (i32, i32) {
    %c0_i32 = arith.constant 0 : i32
    %c0_i32_0 = arith.constant 0 : i32
    %c0_i32_1 = arith.constant 0 : i32
    return %c0_i32, %c0_i32_0 : i32, i32
  }
  func.func @transform_2(%arg0: i32) -> (i32, i32) {
    %c0_i32 = arith.constant 0 : i32
    %c0_i32_0 = arith.constant 0 : i32
    %c0_i32_1 = arith.constant 0 : i32
    return %c0_i32, %c0_i32_0 : i32, i32
  }
  func.func @transform_3(%arg0: i32) -> (i32, i32) {
    %c0_i32 = arith.constant 0 : i32
    %c0_i32_0 = arith.constant 0 : i32
    return %arg0, %c0_i32 : i32, i32
  }
}

module attributes {stable_mosaic.version = 11 : i64} {
  func.func @_mm_kernel(%arg0: i32, %arg1: memref<32x64xbf16, #tpu.memory_space<vmem>>, %arg2: memref<256x64xbf16, #tpu.memory_space<vmem>>, %arg3: memref<1x256xf32, #tpu.memory_space<vmem>>, %arg4: memref<32x256xf32, #tpu.memory_space<vmem>>) attributes {dimension_semantics = [#tpu.dimension_semantics<parallel>], iteration_bounds = array<i64: 1>, scalar_prefetch = 0 : i64, scratch_operands = 0 : i64, tpu.core_type = #tpu.core_type<tc>, window_params = [{transform_indices = @transform_0, window_bounds = array<i64: 32, 64>}, {pipeline_mode = #tpu.pipeline_mode<synchronous>, transform_indices = @transform_1, window_bounds = array<i64: 256, 64>}, {pipeline_mode = #tpu.pipeline_mode<synchronous>, transform_indices = @transform_2, window_bounds = array<i64: 1, 256>}, {transform_indices = @transform_3, window_bounds = array<i64: 32, 256>}]} {
    %c0 = arith.constant 0 : index
    %c0_0 = arith.constant 0 : index
    %0 = vector.load %arg1[%c0, %c0_0] : memref<32x64xbf16, #tpu.memory_space<vmem>>, vector<32x64xbf16>
    %c0_1 = arith.constant 0 : index
    %c0_2 = arith.constant 0 : index
    %1 = vector.load %arg2[%c0_1, %c0_2] : memref<256x64xbf16, #tpu.memory_space<vmem>>, vector<256x64xbf16>
    %cst = arith.constant dense<0.000000e+00> : vector<32x256xf32>
    %2 = tpu.matmul %0, %1, %cst {dimension_numbers = #tpu.dot_dimension_numbers<[1], [1], [0], [0], [0, 0, 1, 0], [], []>} : vector<32x64xbf16>, vector<256x64xbf16>, vector<32x256xf32> -> vector<32x256xf32>
    %c0_3 = arith.constant 0 : index
    %c0_4 = arith.constant 0 : index
    %3 = vector.load %arg3[%c0_3, %c0_4] : memref<1x256xf32, #tpu.memory_space<vmem>>, vector<1x256xf32>
    %4 = vector.broadcast %3 : vector<1x256xf32> to vector<32x256xf32>
    %5 = arith.addf %2, %4 : vector<32x256xf32>
    %cst_5 = arith.constant 5.000000e-01 : f32
    %6 = vector.broadcast %cst_5 : f32 to vector<32x256xf32>
    %7 = arith.mulf %6, %5 : vector<32x256xf32>
    %cst_6 = arith.constant 4.471500e-02 : f32
    %8 = vector.broadcast %cst_6 : f32 to vector<32x256xf32>
    %9 = arith.mulf %8, %5 : vector<32x256xf32>
    %10 = arith.mulf %9, %5 : vector<32x256xf32>
    %11 = arith.mulf %10, %5 : vector<32x256xf32>
    %12 = arith.addf %5, %11 : vector<32x256xf32>
    %cst_7 = arith.constant 0.797884583 : f32
    %13 = vector.broadcast %cst_7 : f32 to vector<32x256xf32>
    %14 = arith.mulf %13, %12 : vector<32x256xf32>
    %15 = math.tanh %14 : vector<32x256xf32>
    %cst_8 = arith.constant 1.000000e+00 : f32
    %16 = vector.broadcast %cst_8 : f32 to vector<32x256xf32>
    %17 = arith.addf %16, %15 : vector<32x256xf32>
    %18 = arith.mulf %7, %17 : vector<32x256xf32>
    %c0_9 = arith.constant 0 : index
    %c0_10 = arith.constant 0 : index
    %19 = vector.load %arg4[%c0_9, %c0_10] : memref<32x256xf32, #tpu.memory_space<vmem>>, vector<32x256xf32>
    tpu.vector_store %arg4[%c0_9, %c0_10], %18 {strides = array<i32>} : memref<32x256xf32, #tpu.memory_space<vmem>>, vector<32x256xf32>,
    return
  }
  func.func @transform_0(%arg0: i32) -> (i32, i32) {
    %c0_i32 = arith.constant 0 : i32
    %c0_i32_0 = arith.constant 0 : i32
    return %arg0, %c0_i32 : i32, i32
  }
  func.func @transform_1(%arg0: i32) -> (i32, i32) {
    %c0_i32 = arith.constant 0 : i32
    %c0_i32_0 = arith.constant 0 : i32
    %c0_i32_1 = arith.constant 0 : i32
    return %c0_i32, %c0_i32_0 : i32, i32
  }
  func.func @transform_2(%arg0: i32) -> (i32, i32) {
    %c0_i32 = arith.constant 0 : i32
    %c0_i32_0 = arith.constant 0 : i32
    %c0_i32_1 = arith.constant 0 : i32
    return %c0_i32, %c0_i32_0 : i32, i32
  }
  func.func @transform_3(%arg0: i32) -> (i32, i32) {
    %c0_i32 = arith.constant 0 : i32
    %c0_i32_0 = arith.constant 0 : i32
    return %arg0, %c0_i32 : i32, i32
  }
}

module attributes {stable_mosaic.version = 11 : i64} {
  func.func @_mm_kernel(%arg0: i32, %arg1: memref<32x256xbf16, #tpu.memory_space<vmem>>, %arg2: memref<64x256xbf16, #tpu.memory_space<vmem>>, %arg3: memref<1x64xf32, #tpu.memory_space<vmem>>, %arg4: memref<32x64xf32, #tpu.memory_space<vmem>>) attributes {dimension_semantics = [#tpu.dimension_semantics<parallel>], iteration_bounds = array<i64: 1>, scalar_prefetch = 0 : i64, scratch_operands = 0 : i64, tpu.core_type = #tpu.core_type<tc>, window_params = [{transform_indices = @transform_0, window_bounds = array<i64: 32, 256>}, {pipeline_mode = #tpu.pipeline_mode<synchronous>, transform_indices = @transform_1, window_bounds = array<i64: 64, 256>}, {pipeline_mode = #tpu.pipeline_mode<synchronous>, transform_indices = @transform_2, window_bounds = array<i64: 1, 64>}, {transform_indices = @transform_3, window_bounds = array<i64: 32, 64>}]} {
    %c0 = arith.constant 0 : index
    %c0_0 = arith.constant 0 : index
    %0 = vector.load %arg1[%c0, %c0_0] : memref<32x256xbf16, #tpu.memory_space<vmem>>, vector<32x256xbf16>
    %c0_1 = arith.constant 0 : index
    %c0_2 = arith.constant 0 : index
    %1 = vector.load %arg2[%c0_1, %c0_2] : memref<64x256xbf16, #tpu.memory_space<vmem>>, vector<64x256xbf16>
    %cst = arith.constant dense<0.000000e+00> : vector<32x64xf32>
    %2 = tpu.matmul %0, %1, %cst {dimension_numbers = #tpu.dot_dimension_numbers<[1], [1], [0], [0], [0, 0, 1, 0], [], []>} : vector<32x256xbf16>, vector<64x256xbf16>, vector<32x64xf32> -> vector<32x64xf32>
    %c0_3 = arith.constant 0 : index
    %c0_4 = arith.constant 0 : index
    %3 = vector.load %arg3[%c0_3, %c0_4] : memref<1x64xf32, #tpu.memory_space<vmem>>, vector<1x64xf32>
    %4 = vector.broadcast %3 : vector<1x64xf32> to vector<32x64xf32>
    %5 = arith.addf %2, %4 : vector<32x64xf32>
    %c0_5 = arith.constant 0 : index
    %c0_6 = arith.constant 0 : index
    %6 = vector.load %arg4[%c0_5, %c0_6] : memref<32x64xf32, #tpu.memory_space<vmem>>, vector<32x64xf32>
    tpu.vector_store %arg4[%c0_5, %c0_6], %5 {strides = array<i32>} : memref<32x64xf32, #tpu.memory_space<vmem>>, vector<32x64xf32>,
    return
  }
  func.func @transform_0(%arg0: i32) -> (i32, i32) {
    %c0_i32 = arith.constant 0 : i32
    %c0_i32_0 = arith.constant 0 : i32
    return %arg0, %c0_i32 : i32, i32
  }
  func.func @transform_1(%arg0: i32) -> (i32, i32) {
    %c0_i32 = arith.constant 0 : i32
    %c0_i32_0 = arith.constant 0 : i32
    %c0_i32_1 = arith.constant 0 : i32
    return %c0_i32, %c0_i32_0 : i32, i32
  }
  func.func @transform_2(%arg0: i32) -> (i32, i32) {
    %c0_i32 = arith.constant 0 : i32
    %c0_i32_0 = arith.constant 0 : i32
    %c0_i32_1 = arith.constant 0 : i32
    return %c0_i32, %c0_i32_0 : i32, i32
  }
  func.func @transform_3(%arg0: i32) -> (i32, i32) {
    %c0_i32 = arith.constant 0 : i32
    %c0_i32_0 = arith.constant 0 : i32
    return %arg0, %c0_i32 : i32, i32
  }
}

module attributes {stable_mosaic.version = 11 : i64} {
  func.func @_mm_kernel(%arg0: i32, %arg1: memref<32x64xbf16, #tpu.memory_space<vmem>>, %arg2: memref<32x64xbf16, #tpu.memory_space<vmem>>, %arg3: memref<1x32xf32, #tpu.memory_space<vmem>>, %arg4: memref<32x32xf32, #tpu.memory_space<vmem>>) attributes {dimension_semantics = [#tpu.dimension_semantics<parallel>], iteration_bounds = array<i64: 1>, scalar_prefetch = 0 : i64, scratch_operands = 0 : i64, tpu.core_type = #tpu.core_type<tc>, window_params = [{transform_indices = @transform_0, window_bounds = array<i64: 32, 64>}, {pipeline_mode = #tpu.pipeline_mode<synchronous>, transform_indices = @transform_1, window_bounds = array<i64: 32, 64>}, {pipeline_mode = #tpu.pipeline_mode<synchronous>, transform_indices = @transform_2, window_bounds = array<i64: 1, 32>}, {transform_indices = @transform_3, window_bounds = array<i64: 32, 32>}]} {
    %c0 = arith.constant 0 : index
    %c0_0 = arith.constant 0 : index
    %0 = vector.load %arg1[%c0, %c0_0] : memref<32x64xbf16, #tpu.memory_space<vmem>>, vector<32x64xbf16>
    %c0_1 = arith.constant 0 : index
    %c0_2 = arith.constant 0 : index
    %1 = vector.load %arg2[%c0_1, %c0_2] : memref<32x64xbf16, #tpu.memory_space<vmem>>, vector<32x64xbf16>
    %cst = arith.constant dense<0.000000e+00> : vector<32x32xf32>
    %2 = tpu.matmul %0, %1, %cst {dimension_numbers = #tpu.dot_dimension_numbers<[1], [1], [0], [0], [0, 0, 1, 0], [], []>} : vector<32x64xbf16>, vector<32x64xbf16>, vector<32x32xf32> -> vector<32x32xf32>
    %c0_3 = arith.constant 0 : index
    %c0_4 = arith.constant 0 : index
    %3 = vector.load %arg3[%c0_3, %c0_4] : memref<1x32xf32, #tpu.memory_space<vmem>>, vector<1x32xf32>
    %4 = vector.broadcast %3 : vector<1x32xf32> to vector<32x32xf32>
    %5 = arith.addf %2, %4 : vector<32x32xf32>
    %c0_5 = arith.constant 0 : index
    %c0_6 = arith.constant 0 : index
    %6 = vector.load %arg4[%c0_5, %c0_6] : memref<32x32xf32, #tpu.memory_space<vmem>>, vector<32x32xf32>
    tpu.vector_store %arg4[%c0_5, %c0_6], %5 {strides = array<i32>} : memref<32x32xf32, #tpu.memory_space<vmem>>, vector<32x32xf32>,
    return
  }
  func.func @transform_0(%arg0: i32) -> (i32, i32) {
    %c0_i32 = arith.constant 0 : i32
    %c0_i32_0 = arith.constant 0 : i32
    return %arg0, %c0_i32 : i32, i32
  }
  func.func @transform_1(%arg0: i32) -> (i32, i32) {
    %c0_i32 = arith.constant 0 : i32
    %c0_i32_0 = arith.constant 0 : i32
    %c0_i32_1 = arith.constant 0 : i32
    return %c0_i32, %c0_i32_0 : i32, i32
  }
  func.func @transform_2(%arg0: i32) -> (i32, i32) {
    %c0_i32 = arith.constant 0 : i32
    %c0_i32_0 = arith.constant 0 : i32
    %c0_i32_1 = arith.constant 0 : i32
    return %c0_i32, %c0_i32_0 : i32, i32
  }
  func.func @transform_3(%arg0: i32) -> (i32, i32) {
    %c0_i32 = arith.constant 0 : i32
    %c0_i32_0 = arith.constant 0 : i32
    return %arg0, %c0_i32 : i32, i32
  }
}

module attributes {stable_mosaic.version = 11 : i64} {
  func.func @_ln_kernel(%arg0: i32, %arg1: memref<32x32xf32, #tpu.memory_space<vmem>>, %arg2: memref<1x32xf32, #tpu.memory_space<vmem>>, %arg3: memref<1x32xf32, #tpu.memory_space<vmem>>, %arg4: memref<32x32xf32, #tpu.memory_space<vmem>>) attributes {dimension_semantics = [#tpu.dimension_semantics<parallel>], iteration_bounds = array<i64: 1>, scalar_prefetch = 0 : i64, scratch_operands = 0 : i64, tpu.core_type = #tpu.core_type<tc>, window_params = [{transform_indices = @transform_0, window_bounds = array<i64: 32, 32>}, {pipeline_mode = #tpu.pipeline_mode<synchronous>, transform_indices = @transform_1, window_bounds = array<i64: 1, 32>}, {pipeline_mode = #tpu.pipeline_mode<synchronous>, transform_indices = @transform_2, window_bounds = array<i64: 1, 32>}, {transform_indices = @transform_3, window_bounds = array<i64: 32, 32>}]} {
    %c0 = arith.constant 0 : index
    %c0_0 = arith.constant 0 : index
    %0 = vector.load %arg1[%c0, %c0_0] : memref<32x32xf32, #tpu.memory_space<vmem>>, vector<32x32xf32>
    %cst = arith.constant dense<0.000000e+00> : vector<32xf32>
    %1 = vector.multi_reduction <add>, %0, %cst [1] : vector<32x32xf32> to vector<32xf32>
    %2 = vector.shape_cast %1 : vector<32xf32> to vector<32x1xf32>
    %cst_1 = arith.constant 3.200000e+01 : f32
    %3 = vector.broadcast %cst_1 : f32 to vector<32x1xf32>
    %4 = arith.divf %2, %3 : vector<32x1xf32>
    %5 = vector.broadcast %4 : vector<32x1xf32> to vector<32x32xf32>
    %6 = arith.subf %0, %5 : vector<32x32xf32>
    %7 = arith.mulf %6, %6 : vector<32x32xf32>
    %cst_2 = arith.constant dense<0.000000e+00> : vector<32xf32>
    %8 = vector.multi_reduction <add>, %7, %cst_2 [1] : vector<32x32xf32> to vector<32xf32>
    %9 = vector.shape_cast %8 : vector<32xf32> to vector<32x1xf32>
    %cst_3 = arith.constant 3.200000e+01 : f32
    %10 = vector.broadcast %cst_3 : f32 to vector<32x1xf32>
    %11 = arith.divf %9, %10 : vector<32x1xf32>
    %cst_4 = arith.constant 9.99999997E-7 : f32
    %12 = vector.broadcast %cst_4 : f32 to vector<32x1xf32>
    %13 = arith.addf %11, %12 : vector<32x1xf32>
    %14 = math.rsqrt %13 : vector<32x1xf32>
    %15 = vector.broadcast %14 : vector<32x1xf32> to vector<32x32xf32>
    %16 = arith.mulf %6, %15 : vector<32x32xf32>
    %c0_5 = arith.constant 0 : index
    %c0_6 = arith.constant 0 : index
    %17 = vector.load %arg2[%c0_5, %c0_6] : memref<1x32xf32, #tpu.memory_space<vmem>>, vector<1x32xf32>
    %18 = vector.broadcast %17 : vector<1x32xf32> to vector<32x32xf32>
    %19 = arith.mulf %16, %18 : vector<32x32xf32>
    %c0_7 = arith.constant 0 : index
    %c0_8 = arith.constant 0 : index
    %20 = vector.load %arg3[%c0_7, %c0_8] : memref<1x32xf32, #tpu.memory_space<vmem>>, vector<1x32xf32>
    %21 = vector.broadcast %20 : vector<1x32xf32> to vector<32x32xf32>
    %22 = arith.addf %19, %21 : vector<32x32xf32>
    %c0_9 = arith.constant 0 : index
    %c0_10 = arith.constant 0 : index
    %23 = vector.load %arg4[%c0_9, %c0_10] : memref<32x32xf32, #tpu.memory_space<vmem>>, vector<32x32xf32>
    tpu.vector_store %arg4[%c0_9, %c0_10], %22 {strides = array<i32>} : memref<32x32xf32, #tpu.memory_space<vmem>>, vector<32x32xf32>,
    return
  }
  func.func @transform_0(%arg0: i32) -> (i32, i32) {
    %c0_i32 = arith.constant 0 : i32
    %c0_i32_0 = arith.constant 0 : i32
    return %arg0, %c0_i32 : i32, i32
  }
  func.func @transform_1(%arg0: i32) -> (i32, i32) {
    %c0_i32 = arith.constant 0 : i32
    %c0_i32_0 = arith.constant 0 : i32
    %c0_i32_1 = arith.constant 0 : i32
    return %c0_i32, %c0_i32_0 : i32, i32
  }
  func.func @transform_2(%arg0: i32) -> (i32, i32) {
    %c0_i32 = arith.constant 0 : i32
    %c0_i32_0 = arith.constant 0 : i32
    %c0_i32_1 = arith.constant 0 : i32
    return %c0_i32, %c0_i32_0 : i32, i32
  }
  func.func @transform_3(%arg0: i32) -> (i32, i32) {
    %c0_i32 = arith.constant 0 : i32
    %c0_i32_0 = arith.constant 0 : i32
    return %arg0, %c0_i32 : i32, i32
  }
}

module attributes {stable_mosaic.version = 11 : i64} {
  func.func @_mm_kernel(%arg0: i32, %arg1: memref<32x288xbf16, #tpu.memory_space<vmem>>, %arg2: memref<32x288xbf16, #tpu.memory_space<vmem>>, %arg3: memref<1x32xf32, #tpu.memory_space<vmem>>, %arg4: memref<32x32xf32, #tpu.memory_space<vmem>>) attributes {dimension_semantics = [#tpu.dimension_semantics<parallel>], iteration_bounds = array<i64: 1>, scalar_prefetch = 0 : i64, scratch_operands = 0 : i64, tpu.core_type = #tpu.core_type<tc>, window_params = [{transform_indices = @transform_0, window_bounds = array<i64: 32, 288>}, {pipeline_mode = #tpu.pipeline_mode<synchronous>, transform_indices = @transform_1, window_bounds = array<i64: 32, 288>}, {pipeline_mode = #tpu.pipeline_mode<synchronous>, transform_indices = @transform_2, window_bounds = array<i64: 1, 32>}, {transform_indices = @transform_3, window_bounds = array<i64: 32, 32>}]} {
    %c0 = arith.constant 0 : index
    %c0_0 = arith.constant 0 : index
    %0 = vector.load %arg1[%c0, %c0_0] : memref<32x288xbf16, #tpu.memory_space<vmem>>, vector<32x288xbf16>
    %c0_1 = arith.constant 0 : index
    %c0_2 = arith.constant 0 : index
    %1 = vector.load %arg2[%c0_1, %c0_2] : memref<32x288xbf16, #tpu.memory_space<vmem>>, vector<32x288xbf16>
    %cst = arith.constant dense<0.000000e+00> : vector<32x32xf32>
    %2 = tpu.matmul %0, %1, %cst {dimension_numbers = #tpu.dot_dimension_numbers<[1], [1], [0], [0], [0, 0, 1, 0], [], []>} : vector<32x288xbf16>, vector<32x288xbf16>, vector<32x32xf32> -> vector<32x32xf32>
    %c0_3 = arith.constant 0 : index
    %c0_4 = arith.constant 0 : index
    %3 = vector.load %arg3[%c0_3, %c0_4] : memref<1x32xf32, #tpu.memory_space<vmem>>, vector<1x32xf32>
    %4 = vector.broadcast %3 : vector<1x32xf32> to vector<32x32xf32>
    %5 = arith.addf %2, %4 : vector<32x32xf32>
    %c0_5 = arith.constant 0 : index
    %c0_6 = arith.constant 0 : index
    %6 = vector.load %arg4[%c0_5, %c0_6] : memref<32x32xf32, #tpu.memory_space<vmem>>, vector<32x32xf32>
    tpu.vector_store %arg4[%c0_5, %c0_6], %5 {strides = array<i32>} : memref<32x32xf32, #tpu.memory_space<vmem>>, vector<32x32xf32>,
    return
  }
  func.func @transform_0(%arg0: i32) -> (i32, i32) {
    %c0_i32 = arith.constant 0 : i32
    %c0_i32_0 = arith.constant 0 : i32
    return %arg0, %c0_i32 : i32, i32
  }
  func.func @transform_1(%arg0: i32) -> (i32, i32) {
    %c0_i32 = arith.constant 0 : i32
    %c0_i32_0 = arith.constant 0 : i32
    %c0_i32_1 = arith.constant 0 : i32
    return %c0_i32, %c0_i32_0 : i32, i32
  }
  func.func @transform_2(%arg0: i32) -> (i32, i32) {
    %c0_i32 = arith.constant 0 : i32
    %c0_i32_0 = arith.constant 0 : i32
    %c0_i32_1 = arith.constant 0 : i32
    return %c0_i32, %c0_i32_0 : i32, i32
  }
  func.func @transform_3(%arg0: i32) -> (i32, i32) {
    %c0_i32 = arith.constant 0 : i32
    %c0_i32_0 = arith.constant 0 : i32
    return %arg0, %c0_i32 : i32, i32
  }
}

module attributes {stable_mosaic.version = 11 : i64} {
  func.func @_mm_kernel(%arg0: i32, %arg1: memref<32x32xbf16, #tpu.memory_space<vmem>>, %arg2: memref<16x32xbf16, #tpu.memory_space<vmem>>, %arg3: memref<1x16xf32, #tpu.memory_space<vmem>>, %arg4: memref<32x16xf32, #tpu.memory_space<vmem>>) attributes {dimension_semantics = [#tpu.dimension_semantics<parallel>], iteration_bounds = array<i64: 1>, scalar_prefetch = 0 : i64, scratch_operands = 0 : i64, tpu.core_type = #tpu.core_type<tc>, window_params = [{transform_indices = @transform_0, window_bounds = array<i64: 32, 32>}, {pipeline_mode = #tpu.pipeline_mode<synchronous>, transform_indices = @transform_1, window_bounds = array<i64: 16, 32>}, {pipeline_mode = #tpu.pipeline_mode<synchronous>, transform_indices = @transform_2, window_bounds = array<i64: 1, 16>}, {transform_indices = @transform_3, window_bounds = array<i64: 32, 16>}]} {
    %c0 = arith.constant 0 : index
    %c0_0 = arith.constant 0 : index
    %0 = vector.load %arg1[%c0, %c0_0] : memref<32x32xbf16, #tpu.memory_space<vmem>>, vector<32x32xbf16>
    %c0_1 = arith.constant 0 : index
    %c0_2 = arith.constant 0 : index
    %1 = vector.load %arg2[%c0_1, %c0_2] : memref<16x32xbf16, #tpu.memory_space<vmem>>, vector<16x32xbf16>
    %cst = arith.constant dense<0.000000e+00> : vector<32x16xf32>
    %2 = tpu.matmul %0, %1, %cst {dimension_numbers = #tpu.dot_dimension_numbers<[1], [1], [0], [0], [0, 0, 1, 0], [], []>} : vector<32x32xbf16>, vector<16x32xbf16>, vector<32x16xf32> -> vector<32x16xf32>
    %c0_3 = arith.constant 0 : index
    %c0_4 = arith.constant 0 : index
    %3 = vector.load %arg3[%c0_3, %c0_4] : memref<1x16xf32, #tpu.memory_space<vmem>>, vector<1x16xf32>
    %4 = vector.broadcast %3 : vector<1x16xf32> to vector<32x16xf32>
    %5 = arith.addf %2, %4 : vector<32x16xf32>
    %c0_5 = arith.constant 0 : index
    %c0_6 = arith.constant 0 : index
    %6 = vector.load %arg4[%c0_5, %c0_6] : memref<32x16xf32, #tpu.memory_space<vmem>>, vector<32x16xf32>
    tpu.vector_store %arg4[%c0_5, %c0_6], %5 {strides = array<i32>} : memref<32x16xf32, #tpu.memory_space<vmem>>, vector<32x16xf32>,
    return
  }
  func.func @transform_0(%arg0: i32) -> (i32, i32) {
    %c0_i32 = arith.constant 0 : i32
    %c0_i32_0 = arith.constant 0 : i32
    return %arg0, %c0_i32 : i32, i32
  }
  func.func @transform_1(%arg0: i32) -> (i32, i32) {
    %c0_i32 = arith.constant 0 : i32
    %c0_i32_0 = arith.constant 0 : i32
    %c0_i32_1 = arith.constant 0 : i32
    return %c0_i32, %c0_i32_0 : i32, i32
  }
  func.func @transform_2(%arg0: i32) -> (i32, i32) {
    %c0_i32 = arith.constant 0 : i32
    %c0_i32_0 = arith.constant 0 : i32
    %c0_i32_1 = arith.constant 0 : i32
    return %c0_i32, %c0_i32_0 : i32, i32
  }
  func.func @transform_3(%arg0: i32) -> (i32, i32) {
    %c0_i32 = arith.constant 0 : i32
    %c0_i32_0 = arith.constant 0 : i32
    return %arg0, %c0_i32 : i32, i32
  }
}

module attributes {stable_mosaic.version = 11 : i64} {
  func.func @_mm_kernel(%arg0: i32, %arg1: memref<16x32xbf16, #tpu.memory_space<vmem>>, %arg2: memref<32x32xbf16, #tpu.memory_space<vmem>>, %arg3: memref<1x32xf32, #tpu.memory_space<vmem>>, %arg4: memref<16x32xf32, #tpu.memory_space<vmem>>) attributes {dimension_semantics = [#tpu.dimension_semantics<parallel>], iteration_bounds = array<i64: 1>, scalar_prefetch = 0 : i64, scratch_operands = 0 : i64, tpu.core_type = #tpu.core_type<tc>, window_params = [{transform_indices = @transform_0, window_bounds = array<i64: 16, 32>}, {pipeline_mode = #tpu.pipeline_mode<synchronous>, transform_indices = @transform_1, window_bounds = array<i64: 32, 32>}, {pipeline_mode = #tpu.pipeline_mode<synchronous>, transform_indices = @transform_2, window_bounds = array<i64: 1, 32>}, {transform_indices = @transform_3, window_bounds = array<i64: 16, 32>}]} {
    %c0 = arith.constant 0 : index
    %c0_0 = arith.constant 0 : index
    %0 = vector.load %arg1[%c0, %c0_0] : memref<16x32xbf16, #tpu.memory_space<vmem>>, vector<16x32xbf16>
    %c0_1 = arith.constant 0 : index
    %c0_2 = arith.constant 0 : index
    %1 = vector.load %arg2[%c0_1, %c0_2] : memref<32x32xbf16, #tpu.memory_space<vmem>>, vector<32x32xbf16>
    %cst = arith.constant dense<0.000000e+00> : vector<16x32xf32>
    %2 = tpu.matmul %0, %1, %cst {dimension_numbers = #tpu.dot_dimension_numbers<[1], [1], [0], [0], [0, 0, 1, 0], [], []>} : vector<16x32xbf16>, vector<32x32xbf16>, vector<16x32xf32> -> vector<16x32xf32>
    %c0_3 = arith.constant 0 : index
    %c0_4 = arith.constant 0 : index
    %3 = vector.load %arg3[%c0_3, %c0_4] : memref<1x32xf32, #tpu.memory_space<vmem>>, vector<1x32xf32>
    %4 = vector.broadcast %3 : vector<1x32xf32> to vector<16x32xf32>
    %5 = arith.addf %2, %4 : vector<16x32xf32>
    %c0_5 = arith.constant 0 : index
    %c0_6 = arith.constant 0 : index
    %6 = vector.load %arg4[%c0_5, %c0_6] : memref<16x32xf32, #tpu.memory_space<vmem>>, vector<16x32xf32>
    tpu.vector_store %arg4[%c0_5, %c0_6], %5 {strides = array<i32>} : memref<16x32xf32, #tpu.memory_space<vmem>>, vector<16x32xf32>,
    return
  }
  func.func @transform_0(%arg0: i32) -> (i32, i32) {
    %c0_i32 = arith.constant 0 : i32
    %c0_i32_0 = arith.constant 0 : i32
    return %arg0, %c0_i32 : i32, i32
  }
  func.func @transform_1(%arg0: i32) -> (i32, i32) {
    %c0_i32 = arith.constant 0 : i32
    %c0_i32_0 = arith.constant 0 : i32
    %c0_i32_1 = arith.constant 0 : i32
    return %c0_i32, %c0_i32_0 : i32, i32
  }
  func.func @transform_2(%arg0: i32) -> (i32, i32) {
    %c0_i32 = arith.constant 0 : i32
    %c0_i32_0 = arith.constant 0 : i32
    %c0_i32_1 = arith.constant 0 : i32
    return %c0_i32, %c0_i32_0 : i32, i32
  }
  func.func @transform_3(%arg0: i32) -> (i32, i32) {
    %c0_i32 = arith.constant 0 : i32
    %c0_i32_0 = arith.constant 0 : i32
    return %arg0, %c0_i32 : i32, i32
  }
}

module attributes {stable_mosaic.version = 11 : i64} {
  func.func @_attn_kernel(%arg0: i32, %arg1: memref<1x7x32xbf16, #tpu.memory_space<vmem>>, %arg2: memref<1x7x32xbf16, #tpu.memory_space<vmem>>, %arg3: memref<1x7x32xbf16, #tpu.memory_space<vmem>>, %arg4: memref<1x7x32xf32, #tpu.memory_space<vmem>>) attributes {dimension_semantics = [#tpu.dimension_semantics<parallel>], iteration_bounds = array<i64: 2>, scalar_prefetch = 0 : i64, scratch_operands = 0 : i64, tpu.core_type = #tpu.core_type<tc>, window_params = [{transform_indices = @transform_0, window_bounds = array<i64: 1, 7, 32>}, {transform_indices = @transform_1, window_bounds = array<i64: 1, 7, 32>}, {transform_indices = @transform_2, window_bounds = array<i64: 1, 7, 32>}, {transform_indices = @transform_3, window_bounds = array<i64: 1, 7, 32>}]} {
    %c0 = arith.constant 0 : index
    %c0_0 = arith.constant 0 : index
    %c0_1 = arith.constant 0 : index
    %0 = vector.load %arg1[%c0, %c0_0, %c0_1] : memref<1x7x32xbf16, #tpu.memory_space<vmem>>, vector<1x7x32xbf16>
    %1 = vector.shape_cast %0 : vector<1x7x32xbf16> to vector<7x32xbf16>
    %c0_2 = arith.constant 0 : index
    %c0_3 = arith.constant 0 : index
    %c0_4 = arith.constant 0 : index
    %2 = vector.load %arg2[%c0_2, %c0_3, %c0_4] : memref<1x7x32xbf16, #tpu.memory_space<vmem>>, vector<1x7x32xbf16>
    %3 = vector.shape_cast %2 : vector<1x7x32xbf16> to vector<7x32xbf16>
    %c0_5 = arith.constant 0 : index
    %c0_6 = arith.constant 0 : index
    %c0_7 = arith.constant 0 : index
    %4 = vector.load %arg3[%c0_5, %c0_6, %c0_7] : memref<1x7x32xbf16, #tpu.memory_space<vmem>>, vector<1x7x32xbf16>
    %5 = vector.shape_cast %4 : vector<1x7x32xbf16> to vector<7x32xbf16>
    %6 = vector.extract_strided_slice %1 {offsets = [0, 0], sizes = [7, 16], strides = [1, 1]} : vector<7x32xbf16> to vector<7x16xbf16>
    %7 = vector.extract_strided_slice %3 {offsets = [0, 0], sizes = [7, 16], strides = [1, 1]} : vector<7x32xbf16> to vector<7x16xbf16>
    %cst = arith.constant dense<0.000000e+00> : vector<7x7xf32>
    %8 = tpu.matmul %6, %7, %cst {dimension_numbers = #tpu.dot_dimension_numbers<[1], [1], [0], [0], [0, 0, 1, 0], [], []>} : vector<7x16xbf16>, vector<7x16xbf16>, vector<7x7xf32> -> vector<7x7xf32>
    %cst_8 = arith.constant 2.500000e-01 : f32
    %9 = vector.broadcast %cst_8 : f32 to vector<7x7xf32>
    %10 = arith.mulf %8, %9 : vector<7x7xf32>
    %cst_9 = arith.constant dense<0xFF800000> : vector<7xf32>
    %11 = vector.multi_reduction <maximumf>, %10, %cst_9 [1] : vector<7x7xf32> to vector<7xf32>
    %12 = vector.shape_cast %11 : vector<7xf32> to vector<7x1xf32>
    %13 = vector.broadcast %12 : vector<7x1xf32> to vector<7x7xf32>
    %14 = arith.subf %10, %13 : vector<7x7xf32>
    %15 = math.exp %14 : vector<7x7xf32>
    %cst_10 = arith.constant dense<0.000000e+00> : vector<7xf32>
    %16 = vector.multi_reduction <add>, %15, %cst_10 [1] : vector<7x7xf32> to vector<7xf32>
    %17 = vector.shape_cast %16 : vector<7xf32> to vector<7x1xf32>
    %18 = tpu.reciprocal %17 {approx = true} : vector<7x1xf32> -> vector<7x1xf32>
    %19 = vector.broadcast %18 : vector<7x1xf32> to vector<7x7xf32>
    %20 = arith.mulf %15, %19 : vector<7x7xf32>
    %21 = arith.truncf %20 : vector<7x7xf32> to vector<7x7xbf16>
    %22 = vector.extract_strided_slice %5 {offsets = [0, 0], sizes = [7, 16], strides = [1, 1]} : vector<7x32xbf16> to vector<7x16xbf16>
    %cst_11 = arith.constant dense<0.000000e+00> : vector<7x16xf32>
    %23 = tpu.matmul %21, %22, %cst_11 {dimension_numbers = #tpu.dot_dimension_numbers<[1], [0], [0], [1], [0, 0, 1, 1], [], []>} : vector<7x7xbf16>, vector<7x16xbf16>, vector<7x16xf32> -> vector<7x16xf32>
    %c0_12 = arith.constant 0 : index
    %c0_13 = arith.constant 0 : index
    %c0_14 = arith.constant 0 : index
    %24 = vector.load %arg4[%c0_12, %c0_13, %c0_14] : memref<1x7x32xf32, #tpu.memory_space<vmem>>, vector<1x7x16xf32>
    %25 = vector.shape_cast %24 : vector<1x7x16xf32> to vector<7x16xf32>
    %26 = vector.shape_cast %23 : vector<7x16xf32> to vector<1x7x16xf32>
    tpu.vector_store %arg4[%c0_12, %c0_13, %c0_14], %26 {strides = array<i32>} : memref<1x7x32xf32, #tpu.memory_space<vmem>>, vector<1x7x16xf32>,
    %27 = vector.extract_strided_slice %1 {offsets = [0, 16], sizes = [7, 16], strides = [1, 1]} : vector<7x32xbf16> to vector<7x16xbf16>
    %28 = vector.extract_strided_slice %3 {offsets = [0, 16], sizes = [7, 16], strides = [1, 1]} : vector<7x32xbf16> to vector<7x16xbf16>
    %cst_15 = arith.constant dense<0.000000e+00> : vector<7x7xf32>
    %29 = tpu.matmul %27, %28, %cst_15 {dimension_numbers = #tpu.dot_dimension_numbers<[1], [1], [0], [0], [0, 0, 1, 0], [], []>} : vector<7x16xbf16>, vector<7x16xbf16>, vector<7x7xf32> -> vector<7x7xf32>
    %cst_16 = arith.constant 2.500000e-01 : f32
    %30 = vector.broadcast %cst_16 : f32 to vector<7x7xf32>
    %31 = arith.mulf %29, %30 : vector<7x7xf32>
    %cst_17 = arith.constant dense<0xFF800000> : vector<7xf32>
    %32 = vector.multi_reduction <maximumf>, %31, %cst_17 [1] : vector<7x7xf32> to vector<7xf32>
    %33 = vector.shape_cast %32 : vector<7xf32> to vector<7x1xf32>
    %34 = vector.broadcast %33 : vector<7x1xf32> to vector<7x7xf32>
    %35 = arith.subf %31, %34 : vector<7x7xf32>
    %36 = math.exp %35 : vector<7x7xf32>
    %cst_18 = arith.constant dense<0.000000e+00> : vector<7xf32>
    %37 = vector.multi_reduction <add>, %36, %cst_18 [1] : vector<7x7xf32> to vector<7xf32>
    %38 = vector.shape_cast %37 : vector<7xf32> to vector<7x1xf32>
    %39 = tpu.reciprocal %38 {approx = true} : vector<7x1xf32> -> vector<7x1xf32>
    %40 = vector.broadcast %39 : vector<7x1xf32> to vector<7x7xf32>
    %41 = arith.mulf %36, %40 : vector<7x7xf32>
    %42 = arith.truncf %41 : vector<7x7xf32> to vector<7x7xbf16>
    %43 = vector.extract_strided_slice %5 {offsets = [0, 16], sizes = [7, 16], strides = [1, 1]} : vector<7x32xbf16> to vector<7x16xbf16>
    %cst_19 = arith.constant dense<0.000000e+00> : vector<7x16xf32>
    %44 = tpu.matmul %42, %43, %cst_19 {dimension_numbers = #tpu.dot_dimension_numbers<[1], [0], [0], [1], [0, 0, 1, 1], [], []>} : vector<7x7xbf16>, vector<7x16xbf16>, vector<7x16xf32> -> vector<7x16xf32>
    %c0_20 = arith.constant 0 : index
    %c0_21 = arith.constant 0 : index
    %c16 = arith.constant 16 : index
    %45 = vector.load %arg4[%c0_20, %c0_21, %c16] : memref<1x7x32xf32, #tpu.memory_space<vmem>>, vector<1x7x16xf32>
    %46 = vector.shape_cast %45 : vector<1x7x16xf32> to vector<7x16xf32>
    %47 = vector.shape_cast %44 : vector<7x16xf32> to vector<1x7x16xf32>
    tpu.vector_store %arg4[%c0_20, %c0_21, %c16], %47 {strides = array<i32>} : memref<1x7x32xf32, #tpu.memory_space<vmem>>, vector<1x7x16xf32>,
    return
  }
  func.func @transform_0(%arg0: i32) -> (i32, i32, i32) {
    %c0_i32 = arith.constant 0 : i32
    %c0_i32_0 = arith.constant 0 : i32
    %c0_i32_1 = arith.constant 0 : i32
    return %arg0, %c0_i32, %c0_i32_0 : i32, i32, i32
  }
  func.func @transform_1(%arg0: i32) -> (i32, i32, i32) {
    %c0_i32 = arith.constant 0 : i32
    %c0_i32_0 = arith.constant 0 : i32
    %c0_i32_1 = arith.constant 0 : i32
    return %arg0, %c0_i32, %c0_i32_0 : i32, i32, i32
  }
  func.func @transform_2(%arg0: i32) -> (i32, i32, i32) {
    %c0_i32 = arith.constant 0 : i32
    %c0_i32_0 = arith.constant 0 : i32
    %c0_i32_1 = arith.constant 0 : i32
    return %arg0, %c0_i32, %c0_i32_0 : i32, i32, i32
  }
  func.func @transform_3(%arg0: i32) -> (i32, i32, i32) {
    %c0_i32 = arith.constant 0 : i32
    %c0_i32_0 = arith.constant 0 : i32
    %c0_i32_1 = arith.constant 0 : i32
    return %arg0, %c0_i32, %c0_i32_0 : i32, i32, i32
  }
}

module attributes {stable_mosaic.version = 11 : i64} {
  func.func @_ln_kernel(%arg0: i32, %arg1: memref<16x32xf32, #tpu.memory_space<vmem>>, %arg2: memref<1x32xf32, #tpu.memory_space<vmem>>, %arg3: memref<1x32xf32, #tpu.memory_space<vmem>>, %arg4: memref<16x32xf32, #tpu.memory_space<vmem>>) attributes {dimension_semantics = [#tpu.dimension_semantics<parallel>], iteration_bounds = array<i64: 1>, scalar_prefetch = 0 : i64, scratch_operands = 0 : i64, tpu.core_type = #tpu.core_type<tc>, window_params = [{transform_indices = @transform_0, window_bounds = array<i64: 16, 32>}, {pipeline_mode = #tpu.pipeline_mode<synchronous>, transform_indices = @transform_1, window_bounds = array<i64: 1, 32>}, {pipeline_mode = #tpu.pipeline_mode<synchronous>, transform_indices = @transform_2, window_bounds = array<i64: 1, 32>}, {transform_indices = @transform_3, window_bounds = array<i64: 16, 32>}]} {
    %c0 = arith.constant 0 : index
    %c0_0 = arith.constant 0 : index
    %0 = vector.load %arg1[%c0, %c0_0] : memref<16x32xf32, #tpu.memory_space<vmem>>, vector<16x32xf32>
    %cst = arith.constant dense<0.000000e+00> : vector<16xf32>
    %1 = vector.multi_reduction <add>, %0, %cst [1] : vector<16x32xf32> to vector<16xf32>
    %2 = vector.shape_cast %1 : vector<16xf32> to vector<16x1xf32>
    %cst_1 = arith.constant 3.200000e+01 : f32
    %3 = vector.broadcast %cst_1 : f32 to vector<16x1xf32>
    %4 = arith.divf %2, %3 : vector<16x1xf32>
    %5 = vector.broadcast %4 : vector<16x1xf32> to vector<16x32xf32>
    %6 = arith.subf %0, %5 : vector<16x32xf32>
    %7 = arith.mulf %6, %6 : vector<16x32xf32>
    %cst_2 = arith.constant dense<0.000000e+00> : vector<16xf32>
    %8 = vector.multi_reduction <add>, %7, %cst_2 [1] : vector<16x32xf32> to vector<16xf32>
    %9 = vector.shape_cast %8 : vector<16xf32> to vector<16x1xf32>
    %cst_3 = arith.constant 3.200000e+01 : f32
    %10 = vector.broadcast %cst_3 : f32 to vector<16x1xf32>
    %11 = arith.divf %9, %10 : vector<16x1xf32>
    %cst_4 = arith.constant 9.99999974E-6 : f32
    %12 = vector.broadcast %cst_4 : f32 to vector<16x1xf32>
    %13 = arith.addf %11, %12 : vector<16x1xf32>
    %14 = math.rsqrt %13 : vector<16x1xf32>
    %15 = vector.broadcast %14 : vector<16x1xf32> to vector<16x32xf32>
    %16 = arith.mulf %6, %15 : vector<16x32xf32>
    %c0_5 = arith.constant 0 : index
    %c0_6 = arith.constant 0 : index
    %17 = vector.load %arg2[%c0_5, %c0_6] : memref<1x32xf32, #tpu.memory_space<vmem>>, vector<1x32xf32>
    %18 = vector.broadcast %17 : vector<1x32xf32> to vector<16x32xf32>
    %19 = arith.mulf %16, %18 : vector<16x32xf32>
    %c0_7 = arith.constant 0 : index
    %c0_8 = arith.constant 0 : index
    %20 = vector.load %arg3[%c0_7, %c0_8] : memref<1x32xf32, #tpu.memory_space<vmem>>, vector<1x32xf32>
    %21 = vector.broadcast %20 : vector<1x32xf32> to vector<16x32xf32>
    %22 = arith.addf %19, %21 : vector<16x32xf32>
    %c0_9 = arith.constant 0 : index
    %c0_10 = arith.constant 0 : index
    %23 = vector.load %arg4[%c0_9, %c0_10] : memref<16x32xf32, #tpu.memory_space<vmem>>, vector<16x32xf32>
    tpu.vector_store %arg4[%c0_9, %c0_10], %22 {strides = array<i32>} : memref<16x32xf32, #tpu.memory_space<vmem>>, vector<16x32xf32>,
    return
  }
  func.func @transform_0(%arg0: i32) -> (i32, i32) {
    %c0_i32 = arith.constant 0 : i32
    %c0_i32_0 = arith.constant 0 : i32
    return %arg0, %c0_i32 : i32, i32
  }
  func.func @transform_1(%arg0: i32) -> (i32, i32) {
    %c0_i32 = arith.constant 0 : i32
    %c0_i32_0 = arith.constant 0 : i32
    %c0_i32_1 = arith.constant 0 : i32
    return %c0_i32, %c0_i32_0 : i32, i32
  }
  func.func @transform_2(%arg0: i32) -> (i32, i32) {
    %c0_i32 = arith.constant 0 : i32
    %c0_i32_0 = arith.constant 0 : i32
    %c0_i32_1 = arith.constant 0 : i32
    return %c0_i32, %c0_i32_0 : i32, i32
  }
  func.func @transform_3(%arg0: i32) -> (i32, i32) {
    %c0_i32 = arith.constant 0 : i32
    %c0_i32_0 = arith.constant 0 : i32
    return %arg0, %c0_i32 : i32, i32
  }
}

module attributes {stable_mosaic.version = 11 : i64} {
  func.func @_mm_kernel(%arg0: i32, %arg1: memref<16x32xbf16, #tpu.memory_space<vmem>>, %arg2: memref<16x32xbf16, #tpu.memory_space<vmem>>, %arg3: memref<1x16xf32, #tpu.memory_space<vmem>>, %arg4: memref<16x16xf32, #tpu.memory_space<vmem>>) attributes {dimension_semantics = [#tpu.dimension_semantics<parallel>], iteration_bounds = array<i64: 1>, scalar_prefetch = 0 : i64, scratch_operands = 0 : i64, tpu.core_type = #tpu.core_type<tc>, window_params = [{transform_indices = @transform_0, window_bounds = array<i64: 16, 32>}, {pipeline_mode = #tpu.pipeline_mode<synchronous>, transform_indices = @transform_1, window_bounds = array<i64: 16, 32>}, {pipeline_mode = #tpu.pipeline_mode<synchronous>, transform_indices = @transform_2, window_bounds = array<i64: 1, 16>}, {transform_indices = @transform_3, window_bounds = array<i64: 16, 16>}]} {
    %c0 = arith.constant 0 : index
    %c0_0 = arith.constant 0 : index
    %0 = vector.load %arg1[%c0, %c0_0] : memref<16x32xbf16, #tpu.memory_space<vmem>>, vector<16x32xbf16>
    %c0_1 = arith.constant 0 : index
    %c0_2 = arith.constant 0 : index
    %1 = vector.load %arg2[%c0_1, %c0_2] : memref<16x32xbf16, #tpu.memory_space<vmem>>, vector<16x32xbf16>
    %cst = arith.constant dense<0.000000e+00> : vector<16x16xf32>
    %2 = tpu.matmul %0, %1, %cst {dimension_numbers = #tpu.dot_dimension_numbers<[1], [1], [0], [0], [0, 0, 1, 0], [], []>} : vector<16x32xbf16>, vector<16x32xbf16>, vector<16x16xf32> -> vector<16x16xf32>
    %c0_3 = arith.constant 0 : index
    %c0_4 = arith.constant 0 : index
    %3 = vector.load %arg3[%c0_3, %c0_4] : memref<1x16xf32, #tpu.memory_space<vmem>>, vector<1x16xf32>
    %4 = vector.broadcast %3 : vector<1x16xf32> to vector<16x16xf32>
    %5 = arith.addf %2, %4 : vector<16x16xf32>
    %c0_5 = arith.constant 0 : index
    %c0_6 = arith.constant 0 : index
    %6 = vector.load %arg4[%c0_5, %c0_6] : memref<16x16xf32, #tpu.memory_space<vmem>>, vector<16x16xf32>
    tpu.vector_store %arg4[%c0_5, %c0_6], %5 {strides = array<i32>} : memref<16x16xf32, #tpu.memory_space<vmem>>, vector<16x16xf32>,
    return
  }
  func.func @transform_0(%arg0: i32) -> (i32, i32) {
    %c0_i32 = arith.constant 0 : i32
    %c0_i32_0 = arith.constant 0 : i32
    return %arg0, %c0_i32 : i32, i32
  }
  func.func @transform_1(%arg0: i32) -> (i32, i32) {
    %c0_i32 = arith.constant 0 : i32
    %c0_i32_0 = arith.constant 0 : i32
    %c0_i32_1 = arith.constant 0 : i32
    return %c0_i32, %c0_i32_0 : i32, i32
  }
  func.func @transform_2(%arg0: i32) -> (i32, i32) {
    %c0_i32 = arith.constant 0 : i32
    %c0_i32_0 = arith.constant 0 : i32
    %c0_i32_1 = arith.constant 0 : i32
    return %c0_i32, %c0_i32_0 : i32, i32
  }
  func.func @transform_3(%arg0: i32) -> (i32, i32) {
    %c0_i32 = arith.constant 0 : i32
    %c0_i32_0 = arith.constant 0 : i32
    return %arg0, %c0_i32 : i32, i32
  }
}

module attributes {stable_mosaic.version = 11 : i64} {
  func.func @_attn_kernel(%arg0: i32, %arg1: memref<1x7x16xbf16, #tpu.memory_space<vmem>>, %arg2: memref<1x16x16xbf16, #tpu.memory_space<vmem>>, %arg3: memref<1x16x16xbf16, #tpu.memory_space<vmem>>, %arg4: memref<1x7x16xf32, #tpu.memory_space<vmem>>) attributes {dimension_semantics = [#tpu.dimension_semantics<parallel>], iteration_bounds = array<i64: 2>, scalar_prefetch = 0 : i64, scratch_operands = 0 : i64, tpu.core_type = #tpu.core_type<tc>, window_params = [{transform_indices = @transform_0, window_bounds = array<i64: 1, 7, 16>}, {transform_indices = @transform_1, window_bounds = array<i64: 1, 16, 16>}, {transform_indices = @transform_2, window_bounds = array<i64: 1, 16, 16>}, {transform_indices = @transform_3, window_bounds = array<i64: 1, 7, 16>}]} {
    %c0 = arith.constant 0 : index
    %c0_0 = arith.constant 0 : index
    %c0_1 = arith.constant 0 : index
    %0 = vector.load %arg1[%c0, %c0_0, %c0_1] : memref<1x7x16xbf16, #tpu.memory_space<vmem>>, vector<1x7x16xbf16>
    %1 = vector.shape_cast %0 : vector<1x7x16xbf16> to vector<7x16xbf16>
    %c0_2 = arith.constant 0 : index
    %c0_3 = arith.constant 0 : index
    %c0_4 = arith.constant 0 : index
    %2 = vector.load %arg2[%c0_2, %c0_3, %c0_4] : memref<1x16x16xbf16, #tpu.memory_space<vmem>>, vector<1x16x16xbf16>
    %3 = vector.shape_cast %2 : vector<1x16x16xbf16> to vector<16x16xbf16>
    %c0_5 = arith.constant 0 : index
    %c0_6 = arith.constant 0 : index
    %c0_7 = arith.constant 0 : index
    %4 = vector.load %arg3[%c0_5, %c0_6, %c0_7] : memref<1x16x16xbf16, #tpu.memory_space<vmem>>, vector<1x16x16xbf16>
    %5 = vector.shape_cast %4 : vector<1x16x16xbf16> to vector<16x16xbf16>
    %6 = vector.extract_strided_slice %1 {offsets = [0, 0], sizes = [7, 8], strides = [1, 1]} : vector<7x16xbf16> to vector<7x8xbf16>
    %7 = vector.extract_strided_slice %3 {offsets = [0, 0], sizes = [16, 8], strides = [1, 1]} : vector<16x16xbf16> to vector<16x8xbf16>
    %cst = arith.constant dense<0.000000e+00> : vector<7x16xf32>
    %8 = tpu.matmul %6, %7, %cst {dimension_numbers = #tpu.dot_dimension_numbers<[1], [1], [0], [0], [0, 0, 1, 0], [], []>} : vector<7x8xbf16>, vector<16x8xbf16>, vector<7x16xf32> -> vector<7x16xf32>
    %cst_8 = arith.constant 0.353553385 : f32
    %9 = vector.broadcast %cst_8 : f32 to vector<7x16xf32>
    %10 = arith.mulf %8, %9 : vector<7x16xf32>
    %cst_9 = arith.constant dense<0xFF800000> : vector<7xf32>
    %11 = vector.multi_reduction <maximumf>, %10, %cst_9 [1] : vector<7x16xf32> to vector<7xf32>
    %12 = vector.shape_cast %11 : vector<7xf32> to vector<7x1xf32>
    %13 = vector.broadcast %12 : vector<7x1xf32> to vector<7x16xf32>
    %14 = arith.subf %10, %13 : vector<7x16xf32>
    %15 = math.exp %14 : vector<7x16xf32>
    %cst_10 = arith.constant dense<0.000000e+00> : vector<7xf32>
    %16 = vector.multi_reduction <add>, %15, %cst_10 [1] : vector<7x16xf32> to vector<7xf32>
    %17 = vector.shape_cast %16 : vector<7xf32> to vector<7x1xf32>
    %18 = tpu.reciprocal %17 {approx = true} : vector<7x1xf32> -> vector<7x1xf32>
    %19 = vector.broadcast %18 : vector<7x1xf32> to vector<7x16xf32>
    %20 = arith.mulf %15, %19 : vector<7x16xf32>
    %21 = arith.truncf %20 : vector<7x16xf32> to vector<7x16xbf16>
    %22 = vector.extract_strided_slice %5 {offsets = [0, 0], sizes = [16, 8], strides = [1, 1]} : vector<16x16xbf16> to vector<16x8xbf16>
    %cst_11 = arith.constant dense<0.000000e+00> : vector<7x8xf32>
    %23 = tpu.matmul %21, %22, %cst_11 {dimension_numbers = #tpu.dot_dimension_numbers<[1], [0], [0], [1], [0, 0, 1, 1], [], []>} : vector<7x16xbf16>, vector<16x8xbf16>, vector<7x8xf32> -> vector<7x8xf32>
    %c0_12 = arith.constant 0 : index
    %c0_13 = arith.constant 0 : index
    %c0_14 = arith.constant 0 : index
    %24 = vector.load %arg4[%c0_12, %c0_13, %c0_14] : memref<1x7x16xf32, #tpu.memory_space<vmem>>, vector<1x7x8xf32>
    %25 = vector.shape_cast %24 : vector<1x7x8xf32> to vector<7x8xf32>
    %26 = vector.shape_cast %23 : vector<7x8xf32> to vector<1x7x8xf32>
    tpu.vector_store %arg4[%c0_12, %c0_13, %c0_14], %26 {strides = array<i32>} : memref<1x7x16xf32, #tpu.memory_space<vmem>>, vector<1x7x8xf32>,
    %27 = vector.extract_strided_slice %1 {offsets = [0, 8], sizes = [7, 8], strides = [1, 1]} : vector<7x16xbf16> to vector<7x8xbf16>
    %28 = vector.extract_strided_slice %3 {offsets = [0, 8], sizes = [16, 8], strides = [1, 1]} : vector<16x16xbf16> to vector<16x8xbf16>
    %cst_15 = arith.constant dense<0.000000e+00> : vector<7x16xf32>
    %29 = tpu.matmul %27, %28, %cst_15 {dimension_numbers = #tpu.dot_dimension_numbers<[1], [1], [0], [0], [0, 0, 1, 0], [], []>} : vector<7x8xbf16>, vector<16x8xbf16>, vector<7x16xf32> -> vector<7x16xf32>
    %cst_16 = arith.constant 0.353553385 : f32
    %30 = vector.broadcast %cst_16 : f32 to vector<7x16xf32>
    %31 = arith.mulf %29, %30 : vector<7x16xf32>
    %cst_17 = arith.constant dense<0xFF800000> : vector<7xf32>
    %32 = vector.multi_reduction <maximumf>, %31, %cst_17 [1] : vector<7x16xf32> to vector<7xf32>
    %33 = vector.shape_cast %32 : vector<7xf32> to vector<7x1xf32>
    %34 = vector.broadcast %33 : vector<7x1xf32> to vector<7x16xf32>
    %35 = arith.subf %31, %34 : vector<7x16xf32>
    %36 = math.exp %35 : vector<7x16xf32>
    %cst_18 = arith.constant dense<0.000000e+00> : vector<7xf32>
    %37 = vector.multi_reduction <add>, %36, %cst_18 [1] : vector<7x16xf32> to vector<7xf32>
    %38 = vector.shape_cast %37 : vector<7xf32> to vector<7x1xf32>
    %39 = tpu.reciprocal %38 {approx = true} : vector<7x1xf32> -> vector<7x1xf32>
    %40 = vector.broadcast %39 : vector<7x1xf32> to vector<7x16xf32>
    %41 = arith.mulf %36, %40 : vector<7x16xf32>
    %42 = arith.truncf %41 : vector<7x16xf32> to vector<7x16xbf16>
    %43 = vector.extract_strided_slice %5 {offsets = [0, 8], sizes = [16, 8], strides = [1, 1]} : vector<16x16xbf16> to vector<16x8xbf16>
    %cst_19 = arith.constant dense<0.000000e+00> : vector<7x8xf32>
    %44 = tpu.matmul %42, %43, %cst_19 {dimension_numbers = #tpu.dot_dimension_numbers<[1], [0], [0], [1], [0, 0, 1, 1], [], []>} : vector<7x16xbf16>, vector<16x8xbf16>, vector<7x8xf32> -> vector<7x8xf32>
    %c0_20 = arith.constant 0 : index
    %c0_21 = arith.constant 0 : index
    %c8 = arith.constant 8 : index
    %45 = vector.load %arg4[%c0_20, %c0_21, %c8] : memref<1x7x16xf32, #tpu.memory_space<vmem>>, vector<1x7x8xf32>
    %46 = vector.shape_cast %45 : vector<1x7x8xf32> to vector<7x8xf32>
    %47 = vector.shape_cast %44 : vector<7x8xf32> to vector<1x7x8xf32>
    tpu.vector_store %arg4[%c0_20, %c0_21, %c8], %47 {strides = array<i32>} : memref<1x7x16xf32, #tpu.memory_space<vmem>>, vector<1x7x8xf32>,
    return
  }
  func.func @transform_0(%arg0: i32) -> (i32, i32, i32) {
    %c0_i32 = arith.constant 0 : i32
    %c0_i32_0 = arith.constant 0 : i32
    %c0_i32_1 = arith.constant 0 : i32
    return %arg0, %c0_i32, %c0_i32_0 : i32, i32, i32
  }
  func.func @transform_1(%arg0: i32) -> (i32, i32, i32) {
    %c0_i32 = arith.constant 0 : i32
    %c0_i32_0 = arith.constant 0 : i32
    %c0_i32_1 = arith.constant 0 : i32
    return %arg0, %c0_i32, %c0_i32_0 : i32, i32, i32
  }
  func.func @transform_2(%arg0: i32) -> (i32, i32, i32) {
    %c0_i32 = arith.constant 0 : i32
    %c0_i32_0 = arith.constant 0 : i32
    %c0_i32_1 = arith.constant 0 : i32
    return %arg0, %c0_i32, %c0_i32_0 : i32, i32, i32
  }
  func.func @transform_3(%arg0: i32) -> (i32, i32, i32) {
    %c0_i32 = arith.constant 0 : i32
    %c0_i32_0 = arith.constant 0 : i32
    %c0_i32_1 = arith.constant 0 : i32
    return %arg0, %c0_i32, %c0_i32_0 : i32, i32, i32
  }
}

module attributes {stable_mosaic.version = 11 : i64} {
  func.func @_mm_kernel(%arg0: i32, %arg1: memref<16x32xbf16, #tpu.memory_space<vmem>>, %arg2: memref<64x32xbf16, #tpu.memory_space<vmem>>, %arg3: memref<1x64xf32, #tpu.memory_space<vmem>>, %arg4: memref<16x64xf32, #tpu.memory_space<vmem>>) attributes {dimension_semantics = [#tpu.dimension_semantics<parallel>], iteration_bounds = array<i64: 1>, scalar_prefetch = 0 : i64, scratch_operands = 0 : i64, tpu.core_type = #tpu.core_type<tc>, window_params = [{transform_indices = @transform_0, window_bounds = array<i64: 16, 32>}, {pipeline_mode = #tpu.pipeline_mode<synchronous>, transform_indices = @transform_1, window_bounds = array<i64: 64, 32>}, {pipeline_mode = #tpu.pipeline_mode<synchronous>, transform_indices = @transform_2, window_bounds = array<i64: 1, 64>}, {transform_indices = @transform_3, window_bounds = array<i64: 16, 64>}]} {
    %c0 = arith.constant 0 : index
    %c0_0 = arith.constant 0 : index
    %0 = vector.load %arg1[%c0, %c0_0] : memref<16x32xbf16, #tpu.memory_space<vmem>>, vector<16x32xbf16>
    %c0_1 = arith.constant 0 : index
    %c0_2 = arith.constant 0 : index
    %1 = vector.load %arg2[%c0_1, %c0_2] : memref<64x32xbf16, #tpu.memory_space<vmem>>, vector<64x32xbf16>
    %cst = arith.constant dense<0.000000e+00> : vector<16x64xf32>
    %2 = tpu.matmul %0, %1, %cst {dimension_numbers = #tpu.dot_dimension_numbers<[1], [1], [0], [0], [0, 0, 1, 0], [], []>} : vector<16x32xbf16>, vector<64x32xbf16>, vector<16x64xf32> -> vector<16x64xf32>
    %c0_3 = arith.constant 0 : index
    %c0_4 = arith.constant 0 : index
    %3 = vector.load %arg3[%c0_3, %c0_4] : memref<1x64xf32, #tpu.memory_space<vmem>>, vector<1x64xf32>
    %4 = vector.broadcast %3 : vector<1x64xf32> to vector<16x64xf32>
    %5 = arith.addf %2, %4 : vector<16x64xf32>
    %cst_5 = arith.constant 0.000000e+00 : f32
    %6 = vector.broadcast %cst_5 : f32 to vector<16x64xf32>
    %7 = arith.maximumf %5, %6 : vector<16x64xf32>
    %c0_6 = arith.constant 0 : index
    %c0_7 = arith.constant 0 : index
    %8 = vector.load %arg4[%c0_6, %c0_7] : memref<16x64xf32, #tpu.memory_space<vmem>>, vector<16x64xf32>
    tpu.vector_store %arg4[%c0_6, %c0_7], %7 {strides = array<i32>} : memref<16x64xf32, #tpu.memory_space<vmem>>, vector<16x64xf32>,
    return
  }
  func.func @transform_0(%arg0: i32) -> (i32, i32) {
    %c0_i32 = arith.constant 0 : i32
    %c0_i32_0 = arith.constant 0 : i32
    return %arg0, %c0_i32 : i32, i32
  }
  func.func @transform_1(%arg0: i32) -> (i32, i32) {
    %c0_i32 = arith.constant 0 : i32
    %c0_i32_0 = arith.constant 0 : i32
    %c0_i32_1 = arith.constant 0 : i32
    return %c0_i32, %c0_i32_0 : i32, i32
  }
  func.func @transform_2(%arg0: i32) -> (i32, i32) {
    %c0_i32 = arith.constant 0 : i32
    %c0_i32_0 = arith.constant 0 : i32
    %c0_i32_1 = arith.constant 0 : i32
    return %c0_i32, %c0_i32_0 : i32, i32
  }
  func.func @transform_3(%arg0: i32) -> (i32, i32) {
    %c0_i32 = arith.constant 0 : i32
    %c0_i32_0 = arith.constant 0 : i32
    return %arg0, %c0_i32 : i32, i32
  }
}

module attributes {stable_mosaic.version = 11 : i64} {
  func.func @_mm_kernel(%arg0: i32, %arg1: memref<16x16xbf16, #tpu.memory_space<vmem>>, %arg2: memref<32x16xbf16, #tpu.memory_space<vmem>>, %arg3: memref<1x32xf32, #tpu.memory_space<vmem>>, %arg4: memref<16x32xf32, #tpu.memory_space<vmem>>) attributes {dimension_semantics = [#tpu.dimension_semantics<parallel>], iteration_bounds = array<i64: 1>, scalar_prefetch = 0 : i64, scratch_operands = 0 : i64, tpu.core_type = #tpu.core_type<tc>, window_params = [{transform_indices = @transform_0, window_bounds = array<i64: 16, 16>}, {pipeline_mode = #tpu.pipeline_mode<synchronous>, transform_indices = @transform_1, window_bounds = array<i64: 32, 16>}, {pipeline_mode = #tpu.pipeline_mode<synchronous>, transform_indices = @transform_2, window_bounds = array<i64: 1, 32>}, {transform_indices = @transform_3, window_bounds = array<i64: 16, 32>}]} {
    %c0 = arith.constant 0 : index
    %c0_0 = arith.constant 0 : index
    %0 = vector.load %arg1[%c0, %c0_0] : memref<16x16xbf16, #tpu.memory_space<vmem>>, vector<16x16xbf16>
    %c0_1 = arith.constant 0 : index
    %c0_2 = arith.constant 0 : index
    %1 = vector.load %arg2[%c0_1, %c0_2] : memref<32x16xbf16, #tpu.memory_space<vmem>>, vector<32x16xbf16>
    %cst = arith.constant dense<0.000000e+00> : vector<16x32xf32>
    %2 = tpu.matmul %0, %1, %cst {dimension_numbers = #tpu.dot_dimension_numbers<[1], [1], [0], [0], [0, 0, 1, 0], [], []>} : vector<16x16xbf16>, vector<32x16xbf16>, vector<16x32xf32> -> vector<16x32xf32>
    %c0_3 = arith.constant 0 : index
    %c0_4 = arith.constant 0 : index
    %3 = vector.load %arg3[%c0_3, %c0_4] : memref<1x32xf32, #tpu.memory_space<vmem>>, vector<1x32xf32>
    %4 = vector.broadcast %3 : vector<1x32xf32> to vector<16x32xf32>
    %5 = arith.addf %2, %4 : vector<16x32xf32>
    %c0_5 = arith.constant 0 : index
    %c0_6 = arith.constant 0 : index
    %6 = vector.load %arg4[%c0_5, %c0_6] : memref<16x32xf32, #tpu.memory_space<vmem>>, vector<16x32xf32>
    tpu.vector_store %arg4[%c0_5, %c0_6], %5 {strides = array<i32>} : memref<16x32xf32, #tpu.memory_space<vmem>>, vector<16x32xf32>,
    return
  }
  func.func @transform_0(%arg0: i32) -> (i32, i32) {
    %c0_i32 = arith.constant 0 : i32
    %c0_i32_0 = arith.constant 0 : i32
    return %arg0, %c0_i32 : i32, i32
  }
  func.func @transform_1(%arg0: i32) -> (i32, i32) {
    %c0_i32 = arith.constant 0 : i32
    %c0_i32_0 = arith.constant 0 : i32
    %c0_i32_1 = arith.constant 0 : i32
    return %c0_i32, %c0_i32_0 : i32, i32
  }
  func.func @transform_2(%arg0: i32) -> (i32, i32) {
    %c0_i32 = arith.constant 0 : i32
    %c0_i32_0 = arith.constant 0 : i32
    %c0_i32_1 = arith.constant 0 : i32
    return %c0_i32, %c0_i32_0 : i32, i32
  }
  func.func @transform_3(%arg0: i32) -> (i32, i32) {
    %c0_i32 = arith.constant 0 : i32
    %c0_i32_0 = arith.constant 0 : i32
    return %arg0, %c0_i32 : i32, i32
  }
}

module attributes {stable_mosaic.version = 11 : i64} {
  func.func @_mm_kernel(%arg0: i32, %arg1: memref<16x64xbf16, #tpu.memory_space<vmem>>, %arg2: memref<32x64xbf16, #tpu.memory_space<vmem>>, %arg3: memref<1x32xf32, #tpu.memory_space<vmem>>, %arg4: memref<16x32xf32, #tpu.memory_space<vmem>>) attributes {dimension_semantics = [#tpu.dimension_semantics<parallel>], iteration_bounds = array<i64: 1>, scalar_prefetch = 0 : i64, scratch_operands = 0 : i64, tpu.core_type = #tpu.core_type<tc>, window_params = [{transform_indices = @transform_0, window_bounds = array<i64: 16, 64>}, {pipeline_mode = #tpu.pipeline_mode<synchronous>, transform_indices = @transform_1, window_bounds = array<i64: 32, 64>}, {pipeline_mode = #tpu.pipeline_mode<synchronous>, transform_indices = @transform_2, window_bounds = array<i64: 1, 32>}, {transform_indices = @transform_3, window_bounds = array<i64: 16, 32>}]} {
    %c0 = arith.constant 0 : index
    %c0_0 = arith.constant 0 : index
    %0 = vector.load %arg1[%c0, %c0_0] : memref<16x64xbf16, #tpu.memory_space<vmem>>, vector<16x64xbf16>
    %c0_1 = arith.constant 0 : index
    %c0_2 = arith.constant 0 : index
    %1 = vector.load %arg2[%c0_1, %c0_2] : memref<32x64xbf16, #tpu.memory_space<vmem>>, vector<32x64xbf16>
    %cst = arith.constant dense<0.000000e+00> : vector<16x32xf32>
    %2 = tpu.matmul %0, %1, %cst {dimension_numbers = #tpu.dot_dimension_numbers<[1], [1], [0], [0], [0, 0, 1, 0], [], []>} : vector<16x64xbf16>, vector<32x64xbf16>, vector<16x32xf32> -> vector<16x32xf32>
    %c0_3 = arith.constant 0 : index
    %c0_4 = arith.constant 0 : index
    %3 = vector.load %arg3[%c0_3, %c0_4] : memref<1x32xf32, #tpu.memory_space<vmem>>, vector<1x32xf32>
    %4 = vector.broadcast %3 : vector<1x32xf32> to vector<16x32xf32>
    %5 = arith.addf %2, %4 : vector<16x32xf32>
    %c0_5 = arith.constant 0 : index
    %c0_6 = arith.constant 0 : index
    %6 = vector.load %arg4[%c0_5, %c0_6] : memref<16x32xf32, #tpu.memory_space<vmem>>, vector<16x32xf32>
    tpu.vector_store %arg4[%c0_5, %c0_6], %5 {strides = array<i32>} : memref<16x32xf32, #tpu.memory_space<vmem>>, vector<16x32xf32>,
    return
  }
  func.func @transform_0(%arg0: i32) -> (i32, i32) {
    %c0_i32 = arith.constant 0 : i32
    %c0_i32_0 = arith.constant 0 : i32
    return %arg0, %c0_i32 : i32, i32
  }
  func.func @transform_1(%arg0: i32) -> (i32, i32) {
    %c0_i32 = arith.constant 0 : i32
    %c0_i32_0 = arith.constant 0 : i32
    %c0_i32_1 = arith.constant 0 : i32
    return %c0_i32, %c0_i32_0 : i32, i32
  }
  func.func @transform_2(%arg0: i32) -> (i32, i32) {
    %c0_i32 = arith.constant 0 : i32
    %c0_i32_0 = arith.constant 0 : i32
    %c0_i32_1 = arith.constant 0 : i32
    return %c0_i32, %c0_i32_0 : i32, i32
  }
  func.func @transform_3(%arg0: i32) -> (i32, i32) {
    %c0_i32 = arith.constant 0 : i32
    %c0_i32_0 = arith.constant 0 : i32
    return %arg0, %c0_i32 : i32, i32
  }
}

module attributes {stable_mosaic.version = 11 : i64} {
  func.func @_attn_kernel(%arg0: i32, %arg1: memref<1x16x16xbf16, #tpu.memory_space<vmem>>, %arg2: memref<1x7x16xbf16, #tpu.memory_space<vmem>>, %arg3: memref<1x7x16xbf16, #tpu.memory_space<vmem>>, %arg4: memref<1x16x16xf32, #tpu.memory_space<vmem>>) attributes {dimension_semantics = [#tpu.dimension_semantics<parallel>], iteration_bounds = array<i64: 2>, scalar_prefetch = 0 : i64, scratch_operands = 0 : i64, tpu.core_type = #tpu.core_type<tc>, window_params = [{transform_indices = @transform_0, window_bounds = array<i64: 1, 16, 16>}, {transform_indices = @transform_1, window_bounds = array<i64: 1, 7, 16>}, {transform_indices = @transform_2, window_bounds = array<i64: 1, 7, 16>}, {transform_indices = @transform_3, window_bounds = array<i64: 1, 16, 16>}]} {
    %c0 = arith.constant 0 : index
    %c0_0 = arith.constant 0 : index
    %c0_1 = arith.constant 0 : index
    %0 = vector.load %arg1[%c0, %c0_0, %c0_1] : memref<1x16x16xbf16, #tpu.memory_space<vmem>>, vector<1x16x16xbf16>
    %1 = vector.shape_cast %0 : vector<1x16x16xbf16> to vector<16x16xbf16>
    %c0_2 = arith.constant 0 : index
    %c0_3 = arith.constant 0 : index
    %c0_4 = arith.constant 0 : index
    %2 = vector.load %arg2[%c0_2, %c0_3, %c0_4] : memref<1x7x16xbf16, #tpu.memory_space<vmem>>, vector<1x7x16xbf16>
    %3 = vector.shape_cast %2 : vector<1x7x16xbf16> to vector<7x16xbf16>
    %c0_5 = arith.constant 0 : index
    %c0_6 = arith.constant 0 : index
    %c0_7 = arith.constant 0 : index
    %4 = vector.load %arg3[%c0_5, %c0_6, %c0_7] : memref<1x7x16xbf16, #tpu.memory_space<vmem>>, vector<1x7x16xbf16>
    %5 = vector.shape_cast %4 : vector<1x7x16xbf16> to vector<7x16xbf16>
    %6 = vector.extract_strided_slice %1 {offsets = [0, 0], sizes = [16, 8], strides = [1, 1]} : vector<16x16xbf16> to vector<16x8xbf16>
    %7 = vector.extract_strided_slice %3 {offsets = [0, 0], sizes = [7, 8], strides = [1, 1]} : vector<7x16xbf16> to vector<7x8xbf16>
    %cst = arith.constant dense<0.000000e+00> : vector<16x7xf32>
    %8 = tpu.matmul %6, %7, %cst {dimension_numbers = #tpu.dot_dimension_numbers<[1], [1], [0], [0], [0, 0, 1, 0], [], []>} : vector<16x8xbf16>, vector<7x8xbf16>, vector<16x7xf32> -> vector<16x7xf32>
    %cst_8 = arith.constant 0.353553385 : f32
    %9 = vector.broadcast %cst_8 : f32 to vector<16x7xf32>
    %10 = arith.mulf %8, %9 : vector<16x7xf32>
    %cst_9 = arith.constant dense<0xFF800000> : vector<16xf32>
    %11 = vector.multi_reduction <maximumf>, %10, %cst_9 [1] : vector<16x7xf32> to vector<16xf32>
    %12 = vector.shape_cast %11 : vector<16xf32> to vector<16x1xf32>
    %13 = vector.broadcast %12 : vector<16x1xf32> to vector<16x7xf32>
    %14 = arith.subf %10, %13 : vector<16x7xf32>
    %15 = math.exp %14 : vector<16x7xf32>
    %cst_10 = arith.constant dense<0.000000e+00> : vector<16xf32>
    %16 = vector.multi_reduction <add>, %15, %cst_10 [1] : vector<16x7xf32> to vector<16xf32>
    %17 = vector.shape_cast %16 : vector<16xf32> to vector<16x1xf32>
    %18 = tpu.reciprocal %17 {approx = true} : vector<16x1xf32> -> vector<16x1xf32>
    %19 = vector.broadcast %18 : vector<16x1xf32> to vector<16x7xf32>
    %20 = arith.mulf %15, %19 : vector<16x7xf32>
    %21 = arith.truncf %20 : vector<16x7xf32> to vector<16x7xbf16>
    %22 = vector.extract_strided_slice %5 {offsets = [0, 0], sizes = [7, 8], strides = [1, 1]} : vector<7x16xbf16> to vector<7x8xbf16>
    %cst_11 = arith.constant dense<0.000000e+00> : vector<16x8xf32>
    %23 = tpu.matmul %21, %22, %cst_11 {dimension_numbers = #tpu.dot_dimension_numbers<[1], [0], [0], [1], [0, 0, 1, 1], [], []>} : vector<16x7xbf16>, vector<7x8xbf16>, vector<16x8xf32> -> vector<16x8xf32>
    %c0_12 = arith.constant 0 : index
    %c0_13 = arith.constant 0 : index
    %c0_14 = arith.constant 0 : index
    %24 = vector.load %arg4[%c0_12, %c0_13, %c0_14] : memref<1x16x16xf32, #tpu.memory_space<vmem>>, vector<1x16x8xf32>
    %25 = vector.shape_cast %24 : vector<1x16x8xf32> to vector<16x8xf32>
    %26 = vector.shape_cast %23 : vector<16x8xf32> to vector<1x16x8xf32>
    tpu.vector_store %arg4[%c0_12, %c0_13, %c0_14], %26 {strides = array<i32>} : memref<1x16x16xf32, #tpu.memory_space<vmem>>, vector<1x16x8xf32>,
    %27 = vector.extract_strided_slice %1 {offsets = [0, 8], sizes = [16, 8], strides = [1, 1]} : vector<16x16xbf16> to vector<16x8xbf16>
    %28 = vector.extract_strided_slice %3 {offsets = [0, 8], sizes = [7, 8], strides = [1, 1]} : vector<7x16xbf16> to vector<7x8xbf16>
    %cst_15 = arith.constant dense<0.000000e+00> : vector<16x7xf32>
    %29 = tpu.matmul %27, %28, %cst_15 {dimension_numbers = #tpu.dot_dimension_numbers<[1], [1], [0], [0], [0, 0, 1, 0], [], []>} : vector<16x8xbf16>, vector<7x8xbf16>, vector<16x7xf32> -> vector<16x7xf32>
    %cst_16 = arith.constant 0.353553385 : f32
    %30 = vector.broadcast %cst_16 : f32 to vector<16x7xf32>
    %31 = arith.mulf %29, %30 : vector<16x7xf32>
    %cst_17 = arith.constant dense<0xFF800000> : vector<16xf32>
    %32 = vector.multi_reduction <maximumf>, %31, %cst_17 [1] : vector<16x7xf32> to vector<16xf32>
    %33 = vector.shape_cast %32 : vector<16xf32> to vector<16x1xf32>
    %34 = vector.broadcast %33 : vector<16x1xf32> to vector<16x7xf32>
    %35 = arith.subf %31, %34 : vector<16x7xf32>
    %36 = math.exp %35 : vector<16x7xf32>
    %cst_18 = arith.constant dense<0.000000e+00> : vector<16xf32>
    %37 = vector.multi_reduction <add>, %36, %cst_18 [1] : vector<16x7xf32> to vector<16xf32>
    %38 = vector.shape_cast %37 : vector<16xf32> to vector<16x1xf32>
    %39 = tpu.reciprocal %38 {approx = true} : vector<16x1xf32> -> vector<16x1xf32>
    %40 = vector.broadcast %39 : vector<16x1xf32> to vector<16x7xf32>
    %41 = arith.mulf %36, %40 : vector<16x7xf32>
    %42 = arith.truncf %41 : vector<16x7xf32> to vector<16x7xbf16>
    %43 = vector.extract_strided_slice %5 {offsets = [0, 8], sizes = [7, 8], strides = [1, 1]} : vector<7x16xbf16> to vector<7x8xbf16>
    %cst_19 = arith.constant dense<0.000000e+00> : vector<16x8xf32>
    %44 = tpu.matmul %42, %43, %cst_19 {dimension_numbers = #tpu.dot_dimension_numbers<[1], [0], [0], [1], [0, 0, 1, 1], [], []>} : vector<16x7xbf16>, vector<7x8xbf16>, vector<16x8xf32> -> vector<16x8xf32>
    %c0_20 = arith.constant 0 : index
    %c0_21 = arith.constant 0 : index
    %c8 = arith.constant 8 : index
    %45 = vector.load %arg4[%c0_20, %c0_21, %c8] : memref<1x16x16xf32, #tpu.memory_space<vmem>>, vector<1x16x8xf32>
    %46 = vector.shape_cast %45 : vector<1x16x8xf32> to vector<16x8xf32>
    %47 = vector.shape_cast %44 : vector<16x8xf32> to vector<1x16x8xf32>
    tpu.vector_store %arg4[%c0_20, %c0_21, %c8], %47 {strides = array<i32>} : memref<1x16x16xf32, #tpu.memory_space<vmem>>, vector<1x16x8xf32>,
    return
  }
  func.func @transform_0(%arg0: i32) -> (i32, i32, i32) {
    %c0_i32 = arith.constant 0 : i32
    %c0_i32_0 = arith.constant 0 : i32
    %c0_i32_1 = arith.constant 0 : i32
    return %arg0, %c0_i32, %c0_i32_0 : i32, i32, i32
  }
  func.func @transform_1(%arg0: i32) -> (i32, i32, i32) {
    %c0_i32 = arith.constant 0 : i32
    %c0_i32_0 = arith.constant 0 : i32
    %c0_i32_1 = arith.constant 0 : i32
    return %arg0, %c0_i32, %c0_i32_0 : i32, i32, i32
  }
  func.func @transform_2(%arg0: i32) -> (i32, i32, i32) {
    %c0_i32 = arith.constant 0 : i32
    %c0_i32_0 = arith.constant 0 : i32
    %c0_i32_1 = arith.constant 0 : i32
    return %arg0, %c0_i32, %c0_i32_0 : i32, i32, i32
  }
  func.func @transform_3(%arg0: i32) -> (i32, i32, i32) {
    %c0_i32 = arith.constant 0 : i32
    %c0_i32_0 = arith.constant 0 : i32
    %c0_i32_1 = arith.constant 0 : i32
    return %arg0, %c0_i32, %c0_i32_0 : i32, i32, i32
  }
}

module attributes {stable_mosaic.version = 11 : i64} {
  func.func @_ln_kernel(%arg0: i32, %arg1: memref<32x32xf32, #tpu.memory_space<vmem>>, %arg2: memref<1x32xf32, #tpu.memory_space<vmem>>, %arg3: memref<1x32xf32, #tpu.memory_space<vmem>>, %arg4: memref<32x32xf32, #tpu.memory_space<vmem>>) attributes {dimension_semantics = [#tpu.dimension_semantics<parallel>], iteration_bounds = array<i64: 1>, scalar_prefetch = 0 : i64, scratch_operands = 0 : i64, tpu.core_type = #tpu.core_type<tc>, window_params = [{transform_indices = @transform_0, window_bounds = array<i64: 32, 32>}, {pipeline_mode = #tpu.pipeline_mode<synchronous>, transform_indices = @transform_1, window_bounds = array<i64: 1, 32>}, {pipeline_mode = #tpu.pipeline_mode<synchronous>, transform_indices = @transform_2, window_bounds = array<i64: 1, 32>}, {transform_indices = @transform_3, window_bounds = array<i64: 32, 32>}]} {
    %c0 = arith.constant 0 : index
    %c0_0 = arith.constant 0 : index
    %0 = vector.load %arg1[%c0, %c0_0] : memref<32x32xf32, #tpu.memory_space<vmem>>, vector<32x32xf32>
    %cst = arith.constant dense<0.000000e+00> : vector<32xf32>
    %1 = vector.multi_reduction <add>, %0, %cst [1] : vector<32x32xf32> to vector<32xf32>
    %2 = vector.shape_cast %1 : vector<32xf32> to vector<32x1xf32>
    %cst_1 = arith.constant 3.200000e+01 : f32
    %3 = vector.broadcast %cst_1 : f32 to vector<32x1xf32>
    %4 = arith.divf %2, %3 : vector<32x1xf32>
    %5 = vector.broadcast %4 : vector<32x1xf32> to vector<32x32xf32>
    %6 = arith.subf %0, %5 : vector<32x32xf32>
    %7 = arith.mulf %6, %6 : vector<32x32xf32>
    %cst_2 = arith.constant dense<0.000000e+00> : vector<32xf32>
    %8 = vector.multi_reduction <add>, %7, %cst_2 [1] : vector<32x32xf32> to vector<32xf32>
    %9 = vector.shape_cast %8 : vector<32xf32> to vector<32x1xf32>
    %cst_3 = arith.constant 3.200000e+01 : f32
    %10 = vector.broadcast %cst_3 : f32 to vector<32x1xf32>
    %11 = arith.divf %9, %10 : vector<32x1xf32>
    %cst_4 = arith.constant 9.99999974E-6 : f32
    %12 = vector.broadcast %cst_4 : f32 to vector<32x1xf32>
    %13 = arith.addf %11, %12 : vector<32x1xf32>
    %14 = math.rsqrt %13 : vector<32x1xf32>
    %15 = vector.broadcast %14 : vector<32x1xf32> to vector<32x32xf32>
    %16 = arith.mulf %6, %15 : vector<32x32xf32>
    %c0_5 = arith.constant 0 : index
    %c0_6 = arith.constant 0 : index
    %17 = vector.load %arg2[%c0_5, %c0_6] : memref<1x32xf32, #tpu.memory_space<vmem>>, vector<1x32xf32>
    %18 = vector.broadcast %17 : vector<1x32xf32> to vector<32x32xf32>
    %19 = arith.mulf %16, %18 : vector<32x32xf32>
    %c0_7 = arith.constant 0 : index
    %c0_8 = arith.constant 0 : index
    %20 = vector.load %arg3[%c0_7, %c0_8] : memref<1x32xf32, #tpu.memory_space<vmem>>, vector<1x32xf32>
    %21 = vector.broadcast %20 : vector<1x32xf32> to vector<32x32xf32>
    %22 = arith.addf %19, %21 : vector<32x32xf32>
    %c0_9 = arith.constant 0 : index
    %c0_10 = arith.constant 0 : index
    %23 = vector.load %arg4[%c0_9, %c0_10] : memref<32x32xf32, #tpu.memory_space<vmem>>, vector<32x32xf32>
    tpu.vector_store %arg4[%c0_9, %c0_10], %22 {strides = array<i32>} : memref<32x32xf32, #tpu.memory_space<vmem>>, vector<32x32xf32>,
    return
  }
  func.func @transform_0(%arg0: i32) -> (i32, i32) {
    %c0_i32 = arith.constant 0 : i32
    %c0_i32_0 = arith.constant 0 : i32
    return %arg0, %c0_i32 : i32, i32
  }
  func.func @transform_1(%arg0: i32) -> (i32, i32) {
    %c0_i32 = arith.constant 0 : i32
    %c0_i32_0 = arith.constant 0 : i32
    %c0_i32_1 = arith.constant 0 : i32
    return %c0_i32, %c0_i32_0 : i32, i32
  }
  func.func @transform_2(%arg0: i32) -> (i32, i32) {
    %c0_i32 = arith.constant 0 : i32
    %c0_i32_0 = arith.constant 0 : i32
    %c0_i32_1 = arith.constant 0 : i32
    return %c0_i32, %c0_i32_0 : i32, i32
  }
  func.func @transform_3(%arg0: i32) -> (i32, i32) {
    %c0_i32 = arith.constant 0 : i32
    %c0_i32_0 = arith.constant 0 : i32
    return %arg0, %c0_i32 : i32, i32
  }
}

module attributes {stable_mosaic.version = 11 : i64} {
  func.func @_mm_kernel(%arg0: i32, %arg1: memref<32x16xbf16, #tpu.memory_space<vmem>>, %arg2: memref<32x16xbf16, #tpu.memory_space<vmem>>, %arg3: memref<1x32xf32, #tpu.memory_space<vmem>>, %arg4: memref<32x32xf32, #tpu.memory_space<vmem>>) attributes {dimension_semantics = [#tpu.dimension_semantics<parallel>], iteration_bounds = array<i64: 1>, scalar_prefetch = 0 : i64, scratch_operands = 0 : i64, tpu.core_type = #tpu.core_type<tc>, window_params = [{transform_indices = @transform_0, window_bounds = array<i64: 32, 16>}, {pipeline_mode = #tpu.pipeline_mode<synchronous>, transform_indices = @transform_1, window_bounds = array<i64: 32, 16>}, {pipeline_mode = #tpu.pipeline_mode<synchronous>, transform_indices = @transform_2, window_bounds = array<i64: 1, 32>}, {transform_indices = @transform_3, window_bounds = array<i64: 32, 32>}]} {
    %c0 = arith.constant 0 : index
    %c0_0 = arith.constant 0 : index
    %0 = vector.load %arg1[%c0, %c0_0] : memref<32x16xbf16, #tpu.memory_space<vmem>>, vector<32x16xbf16>
    %c0_1 = arith.constant 0 : index
    %c0_2 = arith.constant 0 : index
    %1 = vector.load %arg2[%c0_1, %c0_2] : memref<32x16xbf16, #tpu.memory_space<vmem>>, vector<32x16xbf16>
    %cst = arith.constant dense<0.000000e+00> : vector<32x32xf32>
    %2 = tpu.matmul %0, %1, %cst {dimension_numbers = #tpu.dot_dimension_numbers<[1], [1], [0], [0], [0, 0, 1, 0], [], []>} : vector<32x16xbf16>, vector<32x16xbf16>, vector<32x32xf32> -> vector<32x32xf32>
    %c0_3 = arith.constant 0 : index
    %c0_4 = arith.constant 0 : index
    %3 = vector.load %arg3[%c0_3, %c0_4] : memref<1x32xf32, #tpu.memory_space<vmem>>, vector<1x32xf32>
    %4 = vector.broadcast %3 : vector<1x32xf32> to vector<32x32xf32>
    %5 = arith.addf %2, %4 : vector<32x32xf32>
    %c0_5 = arith.constant 0 : index
    %c0_6 = arith.constant 0 : index
    %6 = vector.load %arg4[%c0_5, %c0_6] : memref<32x32xf32, #tpu.memory_space<vmem>>, vector<32x32xf32>
    tpu.vector_store %arg4[%c0_5, %c0_6], %5 {strides = array<i32>} : memref<32x32xf32, #tpu.memory_space<vmem>>, vector<32x32xf32>,
    return
  }
  func.func @transform_0(%arg0: i32) -> (i32, i32) {
    %c0_i32 = arith.constant 0 : i32
    %c0_i32_0 = arith.constant 0 : i32
    return %arg0, %c0_i32 : i32, i32
  }
  func.func @transform_1(%arg0: i32) -> (i32, i32) {
    %c0_i32 = arith.constant 0 : i32
    %c0_i32_0 = arith.constant 0 : i32
    %c0_i32_1 = arith.constant 0 : i32
    return %c0_i32, %c0_i32_0 : i32, i32
  }
  func.func @transform_2(%arg0: i32) -> (i32, i32) {
    %c0_i32 = arith.constant 0 : i32
    %c0_i32_0 = arith.constant 0 : i32
    %c0_i32_1 = arith.constant 0 : i32
    return %c0_i32, %c0_i32_0 : i32, i32
  }
  func.func @transform_3(%arg0: i32) -> (i32, i32) {
    %c0_i32 = arith.constant 0 : i32
    %c0_i32_0 = arith.constant 0 : i32
    return %arg0, %c0_i32 : i32, i32
  }
}

module attributes {stable_mosaic.version = 11 : i64} {
  func.func @_mm_kernel(%arg0: i32, %arg1: memref<32x32xbf16, #tpu.memory_space<vmem>>, %arg2: memref<32x32xbf16, #tpu.memory_space<vmem>>, %arg3: memref<1x32xf32, #tpu.memory_space<vmem>>, %arg4: memref<32x32xf32, #tpu.memory_space<vmem>>) attributes {dimension_semantics = [#tpu.dimension_semantics<parallel>], iteration_bounds = array<i64: 1>, scalar_prefetch = 0 : i64, scratch_operands = 0 : i64, tpu.core_type = #tpu.core_type<tc>, window_params = [{transform_indices = @transform_0, window_bounds = array<i64: 32, 32>}, {pipeline_mode = #tpu.pipeline_mode<synchronous>, transform_indices = @transform_1, window_bounds = array<i64: 32, 32>}, {pipeline_mode = #tpu.pipeline_mode<synchronous>, transform_indices = @transform_2, window_bounds = array<i64: 1, 32>}, {transform_indices = @transform_3, window_bounds = array<i64: 32, 32>}]} {
    %c0 = arith.constant 0 : index
    %c0_0 = arith.constant 0 : index
    %0 = vector.load %arg1[%c0, %c0_0] : memref<32x32xbf16, #tpu.memory_space<vmem>>, vector<32x32xbf16>
    %c0_1 = arith.constant 0 : index
    %c0_2 = arith.constant 0 : index
    %1 = vector.load %arg2[%c0_1, %c0_2] : memref<32x32xbf16, #tpu.memory_space<vmem>>, vector<32x32xbf16>
    %cst = arith.constant dense<0.000000e+00> : vector<32x32xf32>
    %2 = tpu.matmul %0, %1, %cst {dimension_numbers = #tpu.dot_dimension_numbers<[1], [0], [0], [1], [0, 0, 1, 1], [], []>} : vector<32x32xbf16>, vector<32x32xbf16>, vector<32x32xf32> -> vector<32x32xf32>
    %c0_3 = arith.constant 0 : index
    %c0_4 = arith.constant 0 : index
    %3 = vector.load %arg3[%c0_3, %c0_4] : memref<1x32xf32, #tpu.memory_space<vmem>>, vector<1x32xf32>
    %4 = vector.broadcast %3 : vector<1x32xf32> to vector<32x32xf32>
    %5 = arith.addf %2, %4 : vector<32x32xf32>
    %c0_5 = arith.constant 0 : index
    %c0_6 = arith.constant 0 : index
    %6 = vector.load %arg4[%c0_5, %c0_6] : memref<32x32xf32, #tpu.memory_space<vmem>>, vector<32x32xf32>
    tpu.vector_store %arg4[%c0_5, %c0_6], %5 {strides = array<i32>} : memref<32x32xf32, #tpu.memory_space<vmem>>, vector<32x32xf32>,
    return
  }
  func.func @transform_0(%arg0: i32) -> (i32, i32) {
    %c0_i32 = arith.constant 0 : i32
    %c0_i32_0 = arith.constant 0 : i32
    return %arg0, %c0_i32 : i32, i32
  }
  func.func @transform_1(%arg0: i32) -> (i32, i32) {
    %c0_i32 = arith.constant 0 : i32
    %c0_i32_0 = arith.constant 0 : i32
    %c0_i32_1 = arith.constant 0 : i32
    return %c0_i32, %c0_i32_0 : i32, i32
  }
  func.func @transform_2(%arg0: i32) -> (i32, i32) {
    %c0_i32 = arith.constant 0 : i32
    %c0_i32_0 = arith.constant 0 : i32
    %c0_i32_1 = arith.constant 0 : i32
    return %c0_i32, %c0_i32_0 : i32, i32
  }
  func.func @transform_3(%arg0: i32) -> (i32, i32) {
    %c0_i32 = arith.constant 0 : i32
    %c0_i32_0 = arith.constant 0 : i32
    return %arg0, %c0_i32 : i32, i32
  }
}

module attributes {stable_mosaic.version = 11 : i64} {
  func.func @_ln_kernel(%arg0: i32, %arg1: memref<128x8xf32, #tpu.memory_space<vmem>>, %arg2: memref<1x8xf32, #tpu.memory_space<vmem>>, %arg3: memref<1x8xf32, #tpu.memory_space<vmem>>, %arg4: memref<128x8xf32, #tpu.memory_space<vmem>>) attributes {dimension_semantics = [#tpu.dimension_semantics<parallel>], iteration_bounds = array<i64: 1>, scalar_prefetch = 0 : i64, scratch_operands = 0 : i64, tpu.core_type = #tpu.core_type<tc>, window_params = [{transform_indices = @transform_0, window_bounds = array<i64: 128, 8>}, {pipeline_mode = #tpu.pipeline_mode<synchronous>, transform_indices = @transform_1, window_bounds = array<i64: 1, 8>}, {pipeline_mode = #tpu.pipeline_mode<synchronous>, transform_indices = @transform_2, window_bounds = array<i64: 1, 8>}, {transform_indices = @transform_3, window_bounds = array<i64: 128, 8>}]} {
    %c0 = arith.constant 0 : index
    %c0_0 = arith.constant 0 : index
    %0 = vector.load %arg1[%c0, %c0_0] : memref<128x8xf32, #tpu.memory_space<vmem>>, vector<128x8xf32>
    %cst = arith.constant dense<0.000000e+00> : vector<128xf32>
    %1 = vector.multi_reduction <add>, %0, %cst [1] : vector<128x8xf32> to vector<128xf32>
    %2 = vector.shape_cast %1 : vector<128xf32> to vector<128x1xf32>
    %cst_1 = arith.constant 8.000000e+00 : f32
    %3 = vector.broadcast %cst_1 : f32 to vector<128x1xf32>
    %4 = arith.divf %2, %3 : vector<128x1xf32>
    %5 = vector.broadcast %4 : vector<128x1xf32> to vector<128x8xf32>
    %6 = arith.subf %0, %5 : vector<128x8xf32>
    %7 = arith.mulf %6, %6 : vector<128x8xf32>
    %cst_2 = arith.constant dense<0.000000e+00> : vector<128xf32>
    %8 = vector.multi_reduction <add>, %7, %cst_2 [1] : vector<128x8xf32> to vector<128xf32>
    %9 = vector.shape_cast %8 : vector<128xf32> to vector<128x1xf32>
    %cst_3 = arith.constant 8.000000e+00 : f32
    %10 = vector.broadcast %cst_3 : f32 to vector<128x1xf32>
    %11 = arith.divf %9, %10 : vector<128x1xf32>
    %cst_4 = arith.constant 9.99999997E-7 : f32
    %12 = vector.broadcast %cst_4 : f32 to vector<128x1xf32>
    %13 = arith.addf %11, %12 : vector<128x1xf32>
    %14 = math.rsqrt %13 : vector<128x1xf32>
    %15 = vector.broadcast %14 : vector<128x1xf32> to vector<128x8xf32>
    %16 = arith.mulf %6, %15 : vector<128x8xf32>
    %c0_5 = arith.constant 0 : index
    %c0_6 = arith.constant 0 : index
    %17 = vector.load %arg2[%c0_5, %c0_6] : memref<1x8xf32, #tpu.memory_space<vmem>>, vector<1x8xf32>
    %18 = vector.broadcast %17 : vector<1x8xf32> to vector<128x8xf32>
    %19 = arith.mulf %16, %18 : vector<128x8xf32>
    %c0_7 = arith.constant 0 : index
    %c0_8 = arith.constant 0 : index
    %20 = vector.load %arg3[%c0_7, %c0_8] : memref<1x8xf32, #tpu.memory_space<vmem>>, vector<1x8xf32>
    %21 = vector.broadcast %20 : vector<1x8xf32> to vector<128x8xf32>
    %22 = arith.addf %19, %21 : vector<128x8xf32>
    %cst_9 = arith.constant 5.000000e-01 : f32
    %23 = vector.broadcast %cst_9 : f32 to vector<128x8xf32>
    %24 = arith.mulf %23, %22 : vector<128x8xf32>
    %cst_10 = arith.constant 4.471500e-02 : f32
    %25 = vector.broadcast %cst_10 : f32 to vector<128x8xf32>
    %26 = arith.mulf %25, %22 : vector<128x8xf32>
    %27 = arith.mulf %26, %22 : vector<128x8xf32>
    %28 = arith.mulf %27, %22 : vector<128x8xf32>
    %29 = arith.addf %22, %28 : vector<128x8xf32>
    %cst_11 = arith.constant 0.797884583 : f32
    %30 = vector.broadcast %cst_11 : f32 to vector<128x8xf32>
    %31 = arith.mulf %30, %29 : vector<128x8xf32>
    %32 = math.tanh %31 : vector<128x8xf32>
    %cst_12 = arith.constant 1.000000e+00 : f32
    %33 = vector.broadcast %cst_12 : f32 to vector<128x8xf32>
    %34 = arith.addf %33, %32 : vector<128x8xf32>
    %35 = arith.mulf %24, %34 : vector<128x8xf32>
    %c0_13 = arith.constant 0 : index
    %c0_14 = arith.constant 0 : index
    %36 = vector.load %arg4[%c0_13, %c0_14] : memref<128x8xf32, #tpu.memory_space<vmem>>, vector<128x8xf32>
    tpu.vector_store %arg4[%c0_13, %c0_14], %35 {strides = array<i32>} : memref<128x8xf32, #tpu.memory_space<vmem>>, vector<128x8xf32>,
    return
  }
  func.func @transform_0(%arg0: i32) -> (i32, i32) {
    %c0_i32 = arith.constant 0 : i32
    %c0_i32_0 = arith.constant 0 : i32
    return %arg0, %c0_i32 : i32, i32
  }
  func.func @transform_1(%arg0: i32) -> (i32, i32) {
    %c0_i32 = arith.constant 0 : i32
    %c0_i32_0 = arith.constant 0 : i32
    %c0_i32_1 = arith.constant 0 : i32
    return %c0_i32, %c0_i32_0 : i32, i32
  }
  func.func @transform_2(%arg0: i32) -> (i32, i32) {
    %c0_i32 = arith.constant 0 : i32
    %c0_i32_0 = arith.constant 0 : i32
    %c0_i32_1 = arith.constant 0 : i32
    return %c0_i32, %c0_i32_0 : i32, i32
  }
  func.func @transform_3(%arg0: i32) -> (i32, i32) {
    %c0_i32 = arith.constant 0 : i32
    %c0_i32_0 = arith.constant 0 : i32
    return %arg0, %c0_i32 : i32, i32
  }
}

module attributes {stable_mosaic.version = 11 : i64} {
  func.func @_mm_kernel(%arg0: i32, %arg1: memref<128x8xbf16, #tpu.memory_space<vmem>>, %arg2: memref<8x16xbf16, #tpu.memory_space<vmem>>, %arg3: memref<1x16xf32, #tpu.memory_space<vmem>>, %arg4: memref<128x16xf32, #tpu.memory_space<vmem>>) attributes {dimension_semantics = [#tpu.dimension_semantics<parallel>], iteration_bounds = array<i64: 1>, scalar_prefetch = 0 : i64, scratch_operands = 0 : i64, tpu.core_type = #tpu.core_type<tc>, window_params = [{transform_indices = @transform_0, window_bounds = array<i64: 128, 8>}, {pipeline_mode = #tpu.pipeline_mode<synchronous>, transform_indices = @transform_1, window_bounds = array<i64: 8, 16>}, {pipeline_mode = #tpu.pipeline_mode<synchronous>, transform_indices = @transform_2, window_bounds = array<i64: 1, 16>}, {transform_indices = @transform_3, window_bounds = array<i64: 128, 16>}]} {
    %c0 = arith.constant 0 : index
    %c0_0 = arith.constant 0 : index
    %0 = vector.load %arg1[%c0, %c0_0] : memref<128x8xbf16, #tpu.memory_space<vmem>>, vector<128x8xbf16>
    %c0_1 = arith.constant 0 : index
    %c0_2 = arith.constant 0 : index
    %1 = vector.load %arg2[%c0_1, %c0_2] : memref<8x16xbf16, #tpu.memory_space<vmem>>, vector<8x16xbf16>
    %cst = arith.constant dense<0.000000e+00> : vector<128x16xf32>
    %2 = tpu.matmul %0, %1, %cst {dimension_numbers = #tpu.dot_dimension_numbers<[1], [0], [0], [1], [0, 0, 1, 1], [], []>} : vector<128x8xbf16>, vector<8x16xbf16>, vector<128x16xf32> -> vector<128x16xf32>
    %c0_3 = arith.constant 0 : index
    %c0_4 = arith.constant 0 : index
    %3 = vector.load %arg3[%c0_3, %c0_4] : memref<1x16xf32, #tpu.memory_space<vmem>>, vector<1x16xf32>
    %4 = vector.broadcast %3 : vector<1x16xf32> to vector<128x16xf32>
    %5 = arith.addf %2, %4 : vector<128x16xf32>
    %cst_5 = arith.constant 5.000000e-01 : f32
    %6 = vector.broadcast %cst_5 : f32 to vector<128x16xf32>
    %7 = arith.mulf %6, %5 : vector<128x16xf32>
    %cst_6 = arith.constant 4.471500e-02 : f32
    %8 = vector.broadcast %cst_6 : f32 to vector<128x16xf32>
    %9 = arith.mulf %8, %5 : vector<128x16xf32>
    %10 = arith.mulf %9, %5 : vector<128x16xf32>
    %11 = arith.mulf %10, %5 : vector<128x16xf32>
    %12 = arith.addf %5, %11 : vector<128x16xf32>
    %cst_7 = arith.constant 0.797884583 : f32
    %13 = vector.broadcast %cst_7 : f32 to vector<128x16xf32>
    %14 = arith.mulf %13, %12 : vector<128x16xf32>
    %15 = math.tanh %14 : vector<128x16xf32>
    %cst_8 = arith.constant 1.000000e+00 : f32
    %16 = vector.broadcast %cst_8 : f32 to vector<128x16xf32>
    %17 = arith.addf %16, %15 : vector<128x16xf32>
    %18 = arith.mulf %7, %17 : vector<128x16xf32>
    %c0_9 = arith.constant 0 : index
    %c0_10 = arith.constant 0 : index
    %19 = vector.load %arg4[%c0_9, %c0_10] : memref<128x16xf32, #tpu.memory_space<vmem>>, vector<128x16xf32>
    tpu.vector_store %arg4[%c0_9, %c0_10], %18 {strides = array<i32>} : memref<128x16xf32, #tpu.memory_space<vmem>>, vector<128x16xf32>,
    return
  }
  func.func @transform_0(%arg0: i32) -> (i32, i32) {
    %c0_i32 = arith.constant 0 : i32
    %c0_i32_0 = arith.constant 0 : i32
    return %arg0, %c0_i32 : i32, i32
  }
  func.func @transform_1(%arg0: i32) -> (i32, i32) {
    %c0_i32 = arith.constant 0 : i32
    %c0_i32_0 = arith.constant 0 : i32
    %c0_i32_1 = arith.constant 0 : i32
    return %c0_i32, %c0_i32_0 : i32, i32
  }
  func.func @transform_2(%arg0: i32) -> (i32, i32) {
    %c0_i32 = arith.constant 0 : i32
    %c0_i32_0 = arith.constant 0 : i32
    %c0_i32_1 = arith.constant 0 : i32
    return %c0_i32, %c0_i32_0 : i32, i32
  }
  func.func @transform_3(%arg0: i32) -> (i32, i32) {
    %c0_i32 = arith.constant 0 : i32
    %c0_i32_0 = arith.constant 0 : i32
    return %arg0, %c0_i32 : i32, i32
  }
}

module attributes {stable_mosaic.version = 11 : i64} {
  func.func @_bmm_kernel(%arg0: i32, %arg1: memref<1x2x32xbf16, #tpu.memory_space<vmem>>, %arg2: memref<1x32x32xbf16, #tpu.memory_space<vmem>>, %arg3: memref<1x1x32xf32, #tpu.memory_space<vmem>>, %arg4: memref<1x2x32xf32, #tpu.memory_space<vmem>>) attributes {dimension_semantics = [#tpu.dimension_semantics<parallel>], iteration_bounds = array<i64: 4>, scalar_prefetch = 0 : i64, scratch_operands = 0 : i64, tpu.core_type = #tpu.core_type<tc>, window_params = [{transform_indices = @transform_0, window_bounds = array<i64: 1, 2, 32>}, {transform_indices = @transform_1, window_bounds = array<i64: 1, 32, 32>}, {transform_indices = @transform_2, window_bounds = array<i64: 1, 1, 32>}, {transform_indices = @transform_3, window_bounds = array<i64: 1, 2, 32>}]} {
    %c0 = arith.constant 0 : index
    %c0_0 = arith.constant 0 : index
    %c0_1 = arith.constant 0 : index
    %0 = vector.load %arg1[%c0, %c0_0, %c0_1] : memref<1x2x32xbf16, #tpu.memory_space<vmem>>, vector<1x2x32xbf16>
    %1 = vector.shape_cast %0 : vector<1x2x32xbf16> to vector<2x32xbf16>
    %c0_2 = arith.constant 0 : index
    %c0_3 = arith.constant 0 : index
    %c0_4 = arith.constant 0 : index
    %2 = vector.load %arg2[%c0_2, %c0_3, %c0_4] : memref<1x32x32xbf16, #tpu.memory_space<vmem>>, vector<1x32x32xbf16>
    %3 = vector.shape_cast %2 : vector<1x32x32xbf16> to vector<32x32xbf16>
    %cst = arith.constant dense<0.000000e+00> : vector<2x32xf32>
    %4 = tpu.matmul %1, %3, %cst {dimension_numbers = #tpu.dot_dimension_numbers<[1], [1], [0], [0], [0, 0, 1, 0], [], []>} : vector<2x32xbf16>, vector<32x32xbf16>, vector<2x32xf32> -> vector<2x32xf32>
    %c0_5 = arith.constant 0 : index
    %c0_6 = arith.constant 0 : index
    %c0_7 = arith.constant 0 : index
    %5 = vector.load %arg3[%c0_5, %c0_6, %c0_7] : memref<1x1x32xf32, #tpu.memory_space<vmem>>, vector<1x1x32xf32>
    %6 = vector.shape_cast %5 : vector<1x1x32xf32> to vector<1x32xf32>
    %7 = vector.broadcast %6 : vector<1x32xf32> to vector<2x32xf32>
    %8 = arith.addf %4, %7 : vector<2x32xf32>
    %cst_8 = arith.constant 0.000000e+00 : f32
    %9 = vector.broadcast %cst_8 : f32 to vector<2x32xf32>
    %10 = arith.maximumf %8, %9 : vector<2x32xf32>
    %c0_9 = arith.constant 0 : index
    %c0_10 = arith.constant 0 : index
    %c0_11 = arith.constant 0 : index
    %11 = vector.load %arg4[%c0_9, %c0_10, %c0_11] : memref<1x2x32xf32, #tpu.memory_space<vmem>>, vector<1x2x32xf32>
    %12 = vector.shape_cast %11 : vector<1x2x32xf32> to vector<2x32xf32>
    %13 = vector.shape_cast %10 : vector<2x32xf32> to vector<1x2x32xf32>
    tpu.vector_store %arg4[%c0_9, %c0_10, %c0_11], %13 {strides = array<i32>} : memref<1x2x32xf32, #tpu.memory_space<vmem>>, vector<1x2x32xf32>,
    return
  }
  func.func @transform_0(%arg0: i32) -> (i32, i32, i32) {
    %c0_i32 = arith.constant 0 : i32
    %c0_i32_0 = arith.constant 0 : i32
    %c0_i32_1 = arith.constant 0 : i32
    return %arg0, %c0_i32, %c0_i32_0 : i32, i32, i32
  }
  func.func @transform_1(%arg0: i32) -> (i32, i32, i32) {
    %c0_i32 = arith.constant 0 : i32
    %c0_i32_0 = arith.constant 0 : i32
    %c0_i32_1 = arith.constant 0 : i32
    return %arg0, %c0_i32, %c0_i32_0 : i32, i32, i32
  }
  func.func @transform_2(%arg0: i32) -> (i32, i32, i32) {
    %c0_i32 = arith.constant 0 : i32
    %c0_i32_0 = arith.constant 0 : i32
    %c0_i32_1 = arith.constant 0 : i32
    return %arg0, %c0_i32, %c0_i32_0 : i32, i32, i32
  }
  func.func @transform_3(%arg0: i32) -> (i32, i32, i32) {
    %c0_i32 = arith.constant 0 : i32
    %c0_i32_0 = arith.constant 0 : i32
    %c0_i32_1 = arith.constant 0 : i32
    return %arg0, %c0_i32, %c0_i32_0 : i32, i32, i32
  }
}

module attributes {stable_mosaic.version = 11 : i64} {
  func.func @_bmm_kernel(%arg0: i32, %arg1: memref<1x4x4xbf16, #tpu.memory_space<vmem>>, %arg2: memref<1x256x4xbf16, #tpu.memory_space<vmem>>, %arg3: memref<1x1x256xf32, #tpu.memory_space<vmem>>, %arg4: memref<1x4x256xf32, #tpu.memory_space<vmem>>) attributes {dimension_semantics = [#tpu.dimension_semantics<parallel>], iteration_bounds = array<i64: 2>, scalar_prefetch = 0 : i64, scratch_operands = 0 : i64, tpu.core_type = #tpu.core_type<tc>, window_params = [{transform_indices = @transform_0, window_bounds = array<i64: 1, 4, 4>}, {transform_indices = @transform_1, window_bounds = array<i64: 1, 256, 4>}, {transform_indices = @transform_2, window_bounds = array<i64: 1, 1, 256>}, {transform_indices = @transform_3, window_bounds = array<i64: 1, 4, 256>}]} {
    %c0 = arith.constant 0 : index
    %c0_0 = arith.constant 0 : index
    %c0_1 = arith.constant 0 : index
    %0 = vector.load %arg1[%c0, %c0_0, %c0_1] : memref<1x4x4xbf16, #tpu.memory_space<vmem>>, vector<1x4x4xbf16>
    %1 = vector.shape_cast %0 : vector<1x4x4xbf16> to vector<4x4xbf16>
    %c0_2 = arith.constant 0 : index
    %c0_3 = arith.constant 0 : index
    %c0_4 = arith.constant 0 : index
    %2 = vector.load %arg2[%c0_2, %c0_3, %c0_4] : memref<1x256x4xbf16, #tpu.memory_space<vmem>>, vector<1x256x4xbf16>
    %3 = vector.shape_cast %2 : vector<1x256x4xbf16> to vector<256x4xbf16>
    %cst = arith.constant dense<0.000000e+00> : vector<4x256xf32>
    %4 = tpu.matmul %1, %3, %cst {dimension_numbers = #tpu.dot_dimension_numbers<[1], [1], [0], [0], [0, 0, 1, 0], [], []>} : vector<4x4xbf16>, vector<256x4xbf16>, vector<4x256xf32> -> vector<4x256xf32>
    %c0_5 = arith.constant 0 : index
    %c0_6 = arith.constant 0 : index
    %c0_7 = arith.constant 0 : index
    %5 = vector.load %arg3[%c0_5, %c0_6, %c0_7] : memref<1x1x256xf32, #tpu.memory_space<vmem>>, vector<1x1x256xf32>
    %6 = vector.shape_cast %5 : vector<1x1x256xf32> to vector<1x256xf32>
    %7 = vector.broadcast %6 : vector<1x256xf32> to vector<4x256xf32>
    %8 = arith.addf %4, %7 : vector<4x256xf32>
    %c0_8 = arith.constant 0 : index
    %c0_9 = arith.constant 0 : index
    %c0_10 = arith.constant 0 : index
    %9 = vector.load %arg4[%c0_8, %c0_9, %c0_10] : memref<1x4x256xf32, #tpu.memory_space<vmem>>, vector<1x4x256xf32>
    %10 = vector.shape_cast %9 : vector<1x4x256xf32> to vector<4x256xf32>
    %11 = vector.shape_cast %8 : vector<4x256xf32> to vector<1x4x256xf32>
    tpu.vector_store %arg4[%c0_8, %c0_9, %c0_10], %11 {strides = array<i32>} : memref<1x4x256xf32, #tpu.memory_space<vmem>>, vector<1x4x256xf32>,
    return
  }
  func.func @transform_0(%arg0: i32) -> (i32, i32, i32) {
    %c0_i32 = arith.constant 0 : i32
    %c0_i32_0 = arith.constant 0 : i32
    %c0_i32_1 = arith.constant 0 : i32
    return %arg0, %c0_i32, %c0_i32_0 : i32, i32, i32
  }
  func.func @transform_1(%arg0: i32) -> (i32, i32, i32) {
    %c0_i32 = arith.constant 0 : i32
    %c0_i32_0 = arith.constant 0 : i32
    %c0_i32_1 = arith.constant 0 : i32
    return %arg0, %c0_i32, %c0_i32_0 : i32, i32, i32
  }
  func.func @transform_2(%arg0: i32) -> (i32, i32, i32) {
    %c0_i32 = arith.constant 0 : i32
    %c0_i32_0 = arith.constant 0 : i32
    %c0_i32_1 = arith.constant 0 : i32
    return %arg0, %c0_i32, %c0_i32_0 : i32, i32, i32
  }
  func.func @transform_3(%arg0: i32) -> (i32, i32, i32) {
    %c0_i32 = arith.constant 0 : i32
    %c0_i32_0 = arith.constant 0 : i32
    %c0_i32_1 = arith.constant 0 : i32
    return %arg0, %c0_i32, %c0_i32_0 : i32, i32, i32
  }
}

module attributes {stable_mosaic.version = 11 : i64} {
  func.func @_bmm_kernel(%arg0: i32, %arg1: memref<1x2x32xbf16, #tpu.memory_space<vmem>>, %arg2: memref<1x4x32xbf16, #tpu.memory_space<vmem>>, %arg3: memref<1x1x4xf32, #tpu.memory_space<vmem>>, %arg4: memref<1x2x4xf32, #tpu.memory_space<vmem>>) attributes {dimension_semantics = [#tpu.dimension_semantics<parallel>], iteration_bounds = array<i64: 4>, scalar_prefetch = 0 : i64, scratch_operands = 0 : i64, tpu.core_type = #tpu.core_type<tc>, window_params = [{transform_indices = @transform_0, window_bounds = array<i64: 1, 2, 32>}, {transform_indices = @transform_1, window_bounds = array<i64: 1, 4, 32>}, {transform_indices = @transform_2, window_bounds = array<i64: 1, 1, 4>}, {transform_indices = @transform_3, window_bounds = array<i64: 1, 2, 4>}]} {
    %c0 = arith.constant 0 : index
    %c0_0 = arith.constant 0 : index
    %c0_1 = arith.constant 0 : index
    %0 = vector.load %arg1[%c0, %c0_0, %c0_1] : memref<1x2x32xbf16, #tpu.memory_space<vmem>>, vector<1x2x32xbf16>
    %1 = vector.shape_cast %0 : vector<1x2x32xbf16> to vector<2x32xbf16>
    %c0_2 = arith.constant 0 : index
    %c0_3 = arith.constant 0 : index
    %c0_4 = arith.constant 0 : index
    %2 = vector.load %arg2[%c0_2, %c0_3, %c0_4] : memref<1x4x32xbf16, #tpu.memory_space<vmem>>, vector<1x4x32xbf16>
    %3 = vector.shape_cast %2 : vector<1x4x32xbf16> to vector<4x32xbf16>
    %cst = arith.constant dense<0.000000e+00> : vector<2x4xf32>
    %4 = tpu.matmul %1, %3, %cst {dimension_numbers = #tpu.dot_dimension_numbers<[1], [1], [0], [0], [0, 0, 1, 0], [], []>} : vector<2x32xbf16>, vector<4x32xbf16>, vector<2x4xf32> -> vector<2x4xf32>
    %c0_5 = arith.constant 0 : index
    %c0_6 = arith.constant 0 : index
    %c0_7 = arith.constant 0 : index
    %5 = vector.load %arg3[%c0_5, %c0_6, %c0_7] : memref<1x1x4xf32, #tpu.memory_space<vmem>>, vector<1x1x4xf32>
    %6 = vector.shape_cast %5 : vector<1x1x4xf32> to vector<1x4xf32>
    %7 = vector.broadcast %6 : vector<1x4xf32> to vector<2x4xf32>
    %8 = arith.addf %4, %7 : vector<2x4xf32>
    %c0_8 = arith.constant 0 : index
    %c0_9 = arith.constant 0 : index
    %c0_10 = arith.constant 0 : index
    %9 = vector.load %arg4[%c0_8, %c0_9, %c0_10] : memref<1x2x4xf32, #tpu.memory_space<vmem>>, vector<1x2x4xf32>
    %10 = vector.shape_cast %9 : vector<1x2x4xf32> to vector<2x4xf32>
    %11 = vector.shape_cast %8 : vector<2x4xf32> to vector<1x2x4xf32>
    tpu.vector_store %arg4[%c0_8, %c0_9, %c0_10], %11 {strides = array<i32>} : memref<1x2x4xf32, #tpu.memory_space<vmem>>, vector<1x2x4xf32>,
    return
  }
  func.func @transform_0(%arg0: i32) -> (i32, i32, i32) {
    %c0_i32 = arith.constant 0 : i32
    %c0_i32_0 = arith.constant 0 : i32
    %c0_i32_1 = arith.constant 0 : i32
    return %arg0, %c0_i32, %c0_i32_0 : i32, i32, i32
  }
  func.func @transform_1(%arg0: i32) -> (i32, i32, i32) {
    %c0_i32 = arith.constant 0 : i32
    %c0_i32_0 = arith.constant 0 : i32
    %c0_i32_1 = arith.constant 0 : i32
    return %arg0, %c0_i32, %c0_i32_0 : i32, i32, i32
  }
  func.func @transform_2(%arg0: i32) -> (i32, i32, i32) {
    %c0_i32 = arith.constant 0 : i32
    %c0_i32_0 = arith.constant 0 : i32
    %c0_i32_1 = arith.constant 0 : i32
    return %arg0, %c0_i32, %c0_i32_0 : i32, i32, i32
  }
  func.func @transform_3(%arg0: i32) -> (i32, i32, i32) {
    %c0_i32 = arith.constant 0 : i32
    %c0_i32_0 = arith.constant 0 : i32
    %c0_i32_1 = arith.constant 0 : i32
    return %arg0, %c0_i32, %c0_i32_0 : i32, i32, i32
  }
}

</mosaic_0001>

<llo_original>
// kernel: medsam_forward.75
$region0: #{medsam_forward.75}
  #allocation0 [shape = 'u32[]', space=smem, size = 0x4, offset = 0x4, fixed_abs, tag = 'smem constant byte address 0x4 - core index']
  #allocation1 [shape = 'u32[144,128]{1,0:T(1,128)}', space=vmem, size = 0x12000, scoped, tag = 'internal scratch']
  %s0 = inlined_call_operand.vmem [shape: f32[32,64], index: 0, kind: input, shape index: {}]
  %s1 = inlined_call_operand.vmem [shape: f32[1,64], index: 1, kind: input, shape index: {}]
  %s2 = inlined_call_operand.vmem [shape: f32[1,64], index: 2, kind: input, shape index: {}]
  %s3 = inlined_call_operand.vmem [shape: f32[32,64], index: 3, kind: output, shape index: {}]
  %s4 = sld [smem:[#allocation0]]
  $region22: #{medsam_forward.75} parent=0
    _
  %s6 = ssub.s32 1, %s4
  %s7 = scalar_select 0, %s6, %s4
  // Predicated region
  $region2: #{medsam_forward.75} parent=0 // pred_check
    _
  $region3: #{medsam_forward.75} parent=0 // pred_check_branch
    %9 = sbr.rel (0) target = $region5
  $region4: #{medsam_forward.75} parent=0 // pred_region
    _
  $region5: #{medsam_forward.75} parent=0 // pred_fallthru
    _
  // Predicated region
  $region6: #{medsam_forward.75} parent=0 // pred_check
    _
  $region7: #{medsam_forward.75} parent=0 // pred_check_branch
    %11 = sbr.rel (0) target = $region9
  $region8: #{medsam_forward.75} parent=0 // pred_region
    _
  $region9: #{medsam_forward.75} parent=0 // pred_fallthru
    _
  // Predicated region
  $region10: #{medsam_forward.75} parent=0 // pred_check
    _
  $region11: #{medsam_forward.75} parent=0 // pred_check_branch
    %13 = sbr.rel (0) target = $region13
  $region12: #{medsam_forward.75} parent=0 // pred_region
    _
  $region13: #{medsam_forward.75} parent=0 // pred_fallthru
    _
  %v14 = vld [vmem:[%s0] sm:$0xff]
  %v15 = vld [vmem:[%s0 + $0x8] sm:$0xff]
  %v16 = vld [vmem:[%s0 + $0x10] sm:$0xff]
  %v17 = vld [vmem:[%s0 + $0x18] sm:$0xff]
  %vm18 = vcmask 523264
  %v19 = vsel %vm18, %v14, 0.0
  %20 = vadd.xlane.f32.xlu0 %v19
  %v21 = vpop.xlane.xlu0 %20
  %v22 = vsel %vm18, %v15, 0.0
  %23 = vadd.xlane.f32.xlu0 %v22
  %v24 = vpop.xlane.xlu0 %23
  %v25 = vsel %vm18, %v16, 0.0
  %26 = vadd.xlane.f32.xlu0 %v25
  %v27 = vpop.xlane.xlu0 %26
  %v28 = vsel %vm18, %v17, 0.0
  %29 = vadd.xlane.f32.xlu0 %v28
  %v30 = vpop.xlane.xlu0 %29
  %v31 = vrcp.pop 64.0
  %v32 = vmul.f32 %v21, %v31
  %v33 = vmul.f32 %v24, %v31
  %v34 = vmul.f32 %v27, %v31
  %v35 = vmul.f32 %v30, %v31
  %v36 = vsub.f32 %v14, %v32
  %v37 = vsub.f32 %v15, %v33
  %v38 = vsub.f32 %v16, %v34
  %v39 = vsub.f32 %v17, %v35
  %v40 = vmul.f32 %v36, %v36
  %v41 = vmul.f32 %v37, %v37
  %v42 = vmul.f32 %v38, %v38
  %v43 = vmul.f32 %v39, %v39
  %v44 = vsel %vm18, %v40, 0.0
  %45 = vadd.xlane.f32.xlu0 %v44
  %v46 = vpop.xlane.xlu0 %45
  %v47 = vsel %vm18, %v41, 0.0
  %48 = vadd.xlane.f32.xlu0 %v47
  %v49 = vpop.xlane.xlu0 %48
  %v50 = vsel %vm18, %v42, 0.0
  %51 = vadd.xlane.f32.xlu0 %v50
  %v52 = vpop.xlane.xlu0 %51
  %v53 = vsel %vm18, %v43, 0.0
  %54 = vadd.xlane.f32.xlu0 %v53
  %v55 = vpop.xlane.xlu0 %54
  %v56 = vmul.f32 %v46, %v31
  %v57 = vmul.f32 %v49, %v31
  %v58 = vmul.f32 %v52, %v31
  %v59 = vmul.f32 %v55, %v31
  %v60 = vadd.f32 %v56, 1e-06
  %v61 = vadd.f32 %v57, 1e-06
  %v62 = vadd.f32 %v58, 1e-06
  %v63 = vadd.f32 %v59, 1e-06
  %v64 = vrsqrt.pop %v60
  %v65 = vrsqrt.pop %v61
  %v66 = vrsqrt.pop %v62
  %v67 = vrsqrt.pop %v63
  %v68 = vmul.f32 %v36, %v64
  %v69 = vmul.f32 %v37, %v65
  %v70 = vmul.f32 %v38, %v66
  %v71 = vmul.f32 %v39, %v67
  %v72 = vld [vmem:[%s1] sm:$0x1]
  %v74 = vlaneseq
  %v75 = vshrl.u32 %v74, 7
  %v76 = vsub.s32 0, %v75
  %v77 = vrot.slane %v72, %v76
  %v79 = vmul.f32 %v68, %v77
  %v80 = vmul.f32 %v69, %v77
  %v81 = vmul.f32 %v70, %v77
  %v82 = vmul.f32 %v71, %v77
  %v83 = vld [vmem:[%s2] sm:$0x1]
  %v85 = vlaneseq
  %v86 = vshrl.u32 %v85, 7
  %v87 = vsub.s32 0, %v86
  %v88 = vrot.slane %v83, %v87
  %v90 = vadd.f32 %v79, %v88
  %v91 = vadd.f32 %v80, %v88
  %v92 = vadd.f32 %v81, %v88
  %v93 = vadd.f32 %v82, %v88
  %94 = vst.msk [vmem:[%s3] sm:$0xff] %vm18, %v90
  %95 = vst.msk [vmem:[%s3 + $0x8] sm:$0xff] %vm18, %v91
  %96 = vst.msk [vmem:[%s3 + $0x10] sm:$0xff] %vm18, %v92
  %97 = vst.msk [vmem:[%s3 + $0x18] sm:$0xff] %vm18, %v93
  // Predicated region
  $region14: #{medsam_forward.75} parent=0 // pred_check
    _
  $region15: #{medsam_forward.75} parent=0 // pred_check_branch
    %99 = sbr.rel (0) target = $region17
  $region16: #{medsam_forward.75} parent=0 // pred_region
    _
  $region17: #{medsam_forward.75} parent=0 // pred_fallthru
    _
  // Predicated region
  $region18: #{medsam_forward.75} parent=0 // pred_check
    _
  $region19: #{medsam_forward.75} parent=0 // pred_check_branch
    %101 = sbr.rel (0) target = $region21
  $region20: #{medsam_forward.75} parent=0 // pred_region
    _
  $region21: #{medsam_forward.75} parent=0 // pred_fallthru
    _

// kernel: medsam_forward.74
$region0: #{medsam_forward.74}
  #allocation0 [shape = 'u32[]', space=smem, size = 0x4, offset = 0x4, fixed_abs, tag = 'smem constant byte address 0x4 - core index']
  #allocation1 [shape = 'u32[144,128]{1,0:T(1,128)}', space=vmem, size = 0x12000, scoped, tag = 'internal scratch']
  %s0 = inlined_call_operand.vmem [shape: bf16[32,768], index: 0, kind: input, shape index: {}]
  %s1 = inlined_call_operand.vmem [shape: bf16[64,768], index: 1, kind: input, shape index: {}]
  %s2 = inlined_call_operand.vmem [shape: f32[1,64], index: 2, kind: input, shape index: {}]
  %s3 = inlined_call_operand.vmem [shape: f32[32,64], index: 3, kind: output, shape index: {}]
  %s4 = sld [smem:[#allocation0]]
  $region22: #{medsam_forward.74} parent=0
    _
  %s6 = ssub.s32 1, %s4
  %s7 = scalar_select 0, %s6, %s4
  // Predicated region
  $region2: #{medsam_forward.74} parent=0 // pred_check
    _
  $region3: #{medsam_forward.74} parent=0 // pred_check_branch
    %9 = sbr.rel (0) target = $region5
  $region4: #{medsam_forward.74} parent=0 // pred_region
    _
  $region5: #{medsam_forward.74} parent=0 // pred_fallthru
    _
  // Predicated region
  $region6: #{medsam_forward.74} parent=0 // pred_check
    _
  $region7: #{medsam_forward.74} parent=0 // pred_check_branch
    %11 = sbr.rel (0) target = $region9
  $region8: #{medsam_forward.74} parent=0 // pred_region
    _
  $region9: #{medsam_forward.74} parent=0 // pred_fallthru
    _
  // Predicated region
  $region10: #{medsam_forward.74} parent=0 // pred_check
    _
  $region11: #{medsam_forward.74} parent=0 // pred_check_branch
    %13 = sbr.rel (0) target = $region13
  $region12: #{medsam_forward.74} parent=0 // pred_region
    _
  $region13: #{medsam_forward.74} parent=0 // pred_fallthru
    _
  %v15 = vld [vmem:[%s0] sm:$0xff]
  %v16 = vld [vmem:[%s0 + $0x8] sm:$0xff]
  %v17 = vld [vmem:[%s0 + $0x10] sm:$0xff]
  %v18 = vld [vmem:[%s0 + $0x18] sm:$0xff]
  %v19 = vld [vmem:[%s0 + $0x20] sm:$0xff]
  %v20 = vld [vmem:[%s0 + $0x28] sm:$0xff]
  %v21 = vld [vmem:[%s0 + $0x30] sm:$0xff]
  %v22 = vld [vmem:[%s0 + $0x38] sm:$0xff]
  %v23 = vld [vmem:[%s0 + $0x40] sm:$0xff]
  %v24 = vld [vmem:[%s0 + $0x48] sm:$0xff]
  %v25 = vld [vmem:[%s0 + $0x50] sm:$0xff]
  %v26 = vld [vmem:[%s0 + $0x58] sm:$0xff]
  %v27 = vld [vmem:[%s1] sm:$0xff]
  %v28 = vld [vmem:[%s1 + $0x8] sm:$0xff]
  %v29 = vld [vmem:[%s1 + $0x10] sm:$0xff]
  %v30 = vld [vmem:[%s1 + $0x18] sm:$0xff]
  %v31 = vld [vmem:[%s1 + $0x20] sm:$0xff]
  %v32 = vld [vmem:[%s1 + $0x28] sm:$0xff]
  %v33 = vld [vmem:[%s1 + $0x30] sm:$0xff]
  %v34 = vld [vmem:[%s1 + $0x38] sm:$0xff]
  %v35 = vld [vmem:[%s1 + $0x40] sm:$0xff]
  %v36 = vld [vmem:[%s1 + $0x48] sm:$0xff]
  %v37 = vld [vmem:[%s1 + $0x50] sm:$0xff]
  %v38 = vld [vmem:[%s1 + $0x58] sm:$0xff]
  %v39 = vld [vmem:[%s1 + $0x60] sm:$0xff]
  %v40 = vld [vmem:[%s1 + $0x68] sm:$0xff]
  %v41 = vld [vmem:[%s1 + $0x70] sm:$0xff]
  %v42 = vld [vmem:[%s1 + $0x78] sm:$0xff]
  %v43 = vld [vmem:[%s1 + $0x80] sm:$0xff]
  %v44 = vld [vmem:[%s1 + $0x88] sm:$0xff]
  %v45 = vld [vmem:[%s1 + $0x90] sm:$0xff]
  %v46 = vld [vmem:[%s1 + $0x98] sm:$0xff]
  %v47 = vld [vmem:[%s1 + $0xa0] sm:$0xff]
  %v48 = vld [vmem:[%s1 + $0xa8] sm:$0xff]
  %v49 = vld [vmem:[%s1 + $0xb0] sm:$0xff]
  %v50 = vld [vmem:[%s1 + $0xb8] sm:$0xff]
  %v51 = vld [vmem:[%s2] sm:$0x1]
  %v53 = vlaneseq
  %v54 = vshrl.u32 %v53, 7
  %v55 = vsub.s32 0, %v54
  %v56 = vrot.slane %v51, %v55
  %v70 = vunpack.c.l.b16 %v15
  %v71 = vunpack.c.h.b16 %v15
  %v72 = vunpack.c.l.b16 %v16
  %v73 = vunpack.c.h.b16 %v16
  %v74 = vunpack.c.l.b16 %v17
  %v75 = vunpack.c.h.b16 %v17
  %v76 = vunpack.c.l.b16 %v18
  %v77 = vunpack.c.h.b16 %v18
  %v78 = vunpack.c.l.b16 %v19
  %v79 = vunpack.c.h.b16 %v19
  %v80 = vunpack.c.l.b16 %v20
  %v81 = vunpack.c.h.b16 %v20
  %v82 = vunpack.c.l.b16 %v21
  %v83 = vunpack.c.h.b16 %v21
  %v84 = vunpack.c.l.b16 %v22
  %v85 = vunpack.c.h.b16 %v22
  %v86 = vunpack.c.l.b16 %v23
  %v87 = vunpack.c.h.b16 %v23
  %v88 = vunpack.c.l.b16 %v24
  %v89 = vunpack.c.h.b16 %v24
  %v90 = vunpack.c.l.b16 %v25
  %v91 = vunpack.c.h.b16 %v25
  %v92 = vunpack.c.l.b16 %v26
  %v93 = vunpack.c.h.b16 %v26
  %v94 = vpack.c.b16 %v76, %v70
  %v95 = vpack.c.b16 %v77, %v71
  %v96 = vpack.c.b16 %v78, %v72
  %v97 = vpack.c.b16 %v79, %v73
  %v98 = vpack.c.b16 %v80, %v74
  %v99 = vpack.c.b16 %v81, %v75
  %v100 = vpack.c.b16 %v88, %v82
  %v101 = vpack.c.b16 %v89, %v83
  %v102 = vpack.c.b16 %v90, %v84
  %v103 = vpack.c.b16 %v91, %v85
  %v104 = vpack.c.b16 %v92, %v86
  %v105 = vpack.c.b16 %v93, %v87
  %v142 = vunpack.c.l.b16 %v27
  %v143 = vunpack.c.h.b16 %v27
  %v144 = vunpack.c.l.b16 %v28
  %v145 = vunpack.c.h.b16 %v28
  %v146 = vunpack.c.l.b16 %v29
  %v147 = vunpack.c.h.b16 %v29
  %v148 = vunpack.c.l.b16 %v30
  %v149 = vunpack.c.h.b16 %v30
  %v150 = vunpack.c.l.b16 %v31
  %v151 = vunpack.c.h.b16 %v31
  %v152 = vunpack.c.l.b16 %v32
  %v153 = vunpack.c.h.b16 %v32
  %v154 = vunpack.c.l.b16 %v33
  %v155 = vunpack.c.h.b16 %v33
  %v156 = vunpack.c.l.b16 %v34
  %v157 = vunpack.c.h.b16 %v34
  %v158 = vunpack.c.l.b16 %v35
  %v159 = vunpack.c.h.b16 %v35
  %v160 = vunpack.c.l.b16 %v36
  %v161 = vunpack.c.h.b16 %v36
  %v162 = vunpack.c.l.b16 %v37
  %v163 = vunpack.c.h.b16 %v37
  %v164 = vunpack.c.l.b16 %v38
  %v165 = vunpack.c.h.b16 %v38
  %v166 = vunpack.c.l.b16 %v39
  %v167 = vunpack.c.h.b16 %v39
  %v168 = vunpack.c.l.b16 %v40
  %v169 = vunpack.c.h.b16 %v40
  %v170 = vunpack.c.l.b16 %v41
  %v171 = vunpack.c.h.b16 %v41
  %v172 = vunpack.c.l.b16 %v42
  %v173 = vunpack.c.h.b16 %v42
  %v174 = vunpack.c.l.b16 %v43
  %v175 = vunpack.c.h.b16 %v43
  %v176 = vunpack.c.l.b16 %v44
  %v177 = vunpack.c.h.b16 %v44
  %v178 = vunpack.c.l.b16 %v45
  %v179 = vunpack.c.h.b16 %v45
  %v180 = vunpack.c.l.b16 %v46
  %v181 = vunpack.c.h.b16 %v46
  %v182 = vunpack.c.l.b16 %v47
  %v183 = vunpack.c.h.b16 %v47
  %v184 = vunpack.c.l.b16 %v48
  %v185 = vunpack.c.h.b16 %v48
  %v186 = vunpack.c.l.b16 %v49
  %v187 = vunpack.c.h.b16 %v49
  %v188 = vunpack.c.l.b16 %v50
  %v189 = vunpack.c.h.b16 %v50
  %v190 = vpack.c.b16 %v148, %v142
  %v191 = vpack.c.b16 %v149, %v143
  %v192 = vpack.c.b16 %v150, %v144
  %v193 = vpack.c.b16 %v151, %v145
  %v194 = vpack.c.b16 %v152, %v146
  %v195 = vpack.c.b16 %v153, %v147
  %v196 = vpack.c.b16 %v160, %v154
  %v197 = vpack.c.b16 %v161, %v155
  %v198 = vpack.c.b16 %v162, %v156
  %v199 = vpack.c.b16 %v163, %v157
  %v200 = vpack.c.b16 %v164, %v158
  %v201 = vpack.c.b16 %v165, %v159
  %v202 = vpack.c.b16 %v172, %v166
  %v203 = vpack.c.b16 %v173, %v167
  %v204 = vpack.c.b16 %v174, %v168
  %v205 = vpack.c.b16 %v175, %v169
  %v206 = vpack.c.b16 %v176, %v170
  %v207 = vpack.c.b16 %v177, %v171
  %v208 = vpack.c.b16 %v184, %v178
  %v209 = vpack.c.b16 %v185, %v179
  %v210 = vpack.c.b16 %v186, %v180
  %v211 = vpack.c.b16 %v187, %v181
  %v212 = vpack.c.b16 %v188, %v182
  %v213 = vpack.c.b16 %v189, %v183
  %238 = vmatprep.subr.bf16.mxu0 0
  %239 = vmatpush1.bf16.xpose.msra.mxu0 0
  %240 = vmatprep.subr.bf16.mxu0 0
  %241 = vmatpush1.bf16.xpose.msra.mxu0 0
  %242 = vmatprep.subr.bf16.mxu0 0
  %243 = vmatpush1.bf16.xpose.msra.mxu0 0
  %244 = vmatprep.subr.bf16.mxu0 0
  %245 = vmatpush1.bf16.xpose.msra.mxu0 0
  %246 = vmatprep.subr.bf16.mxu0 %v209
  %247 = vmatpush1.bf16.xpose.msra.mxu0 %v208
  %248 = vmatprep.subr.bf16.mxu0 %v203
  %249 = vmatpush1.bf16.xpose.msra.mxu0 %v202
  %250 = vmatprep.subr.bf16.mxu0 %v197
  %251 = vmatpush1.bf16.xpose.msra.mxu0 %v196
  %252 = vmatprep.subr.bf16.mxu0 %v191
  %253 = vmatpush1.bf16.xpose.msra.mxu0 %v190
  %254 = vmatprep.subr.bf16.mxu0 0
  %255 = vmatpush2.bf16.xpose.msra.mxu0 0
  %256 = vmatprep.subr.bf16.mxu0 0
  %257 = vmatpush2.bf16.xpose.msra.mxu0 0
  %258 = vmatprep.subr.bf16.mxu0 0
  %259 = vmatpush2.bf16.xpose.msra.mxu0 0
  %260 = vmatprep.subr.bf16.mxu0 0
  %261 = vmatpush2.bf16.xpose.msra.mxu0 0
  %262 = vmatprep.subr.bf16.mxu0 0
  %263 = vmatpush2.bf16.xpose.msra.mxu0 0
  %264 = vmatprep.subr.bf16.mxu0 0
  %265 = vmatpush2.bf16.xpose.msra.mxu0 0
  %266 = vmatprep.subr.bf16.mxu0 0
  %267 = vmatpush2.bf16.xpose.msra.mxu0 0
  %268 = vmatprep.subr.bf16.mxu0 0
  %269 = vmatpush2.bf16.xpose.msra.mxu0 0
  %270 = vmatprep.mubr.bf16.mxu0 %v95
  %271 = vmatmul.mubr.bf16.gmra.mxu0 %v94
  %v272 = vpop.f32.mrf.mxu0
  %v273 = vadd.f32 %v56, %v272
  %v274 = vpop.f32.mrf.mxu0
  %v275 = vpop.f32.mrf.mxu0
  %v276 = vadd.f32 %v56, %v275
  %v277 = vpop.f32.mrf.mxu0
  %278 = vmatprep.mubr.bf16.mxu0 %v101
  %279 = vmatmul.mubr.bf16.gmra.mxu0 %v100
  %v280 = vpop.f32.mrf.mxu0
  %v281 = vadd.f32 %v56, %v280
  %v282 = vpop.f32.mrf.mxu0
  %v283 = vpop.f32.mrf.mxu0
  %v284 = vadd.f32 %v56, %v283
  %v285 = vpop.f32.mrf.mxu0
  %286 = vdwg.mxu0
  %287 = vmatprep.subr.bf16.mxu0 0
  %288 = vmatpush1.bf16.xpose.msra.mxu0 0
  %289 = vmatprep.subr.bf16.mxu0 0
  %290 = vmatpush1.bf16.xpose.msra.mxu0 0
  %291 = vmatprep.subr.bf16.mxu0 0
  %292 = vmatpush1.bf16.xpose.msra.mxu0 0
  %293 = vmatprep.subr.bf16.mxu0 0
  %294 = vmatpush1.bf16.xpose.msra.mxu0 0
  %295 = vmatprep.subr.bf16.mxu0 %v211
  %296 = vmatpush1.bf16.xpose.msra.mxu0 %v210
  %297 = vmatprep.subr.bf16.mxu0 %v205
  %298 = vmatpush1.bf16.xpose.msra.mxu0 %v204
  %299 = vmatprep.subr.bf16.mxu0 %v199
  %300 = vmatpush1.bf16.xpose.msra.mxu0 %v198
  %301 = vmatprep.subr.bf16.mxu0 %v193
  %302 = vmatpush1.bf16.xpose.msra.mxu0 %v192
  %303 = vmatprep.subr.bf16.mxu0 0
  %304 = vmatpush2.bf16.xpose.msra.mxu0 0
  %305 = vmatprep.subr.bf16.mxu0 0
  %306 = vmatpush2.bf16.xpose.msra.mxu0 0
  %307 = vmatprep.subr.bf16.mxu0 0
  %308 = vmatpush2.bf16.xpose.msra.mxu0 0
  %309 = vmatprep.subr.bf16.mxu0 0
  %310 = vmatpush2.bf16.xpose.msra.mxu0 0
  %311 = vmatprep.subr.bf16.mxu0 0
  %312 = vmatpush2.bf16.xpose.msra.mxu0 0
  %313 = vmatprep.subr.bf16.mxu0 0
  %314 = vmatpush2.bf16.xpose.msra.mxu0 0
  %315 = vmatprep.subr.bf16.mxu0 0
  %316 = vmatpush2.bf16.xpose.msra.mxu0 0
  %317 = vmatprep.subr.bf16.mxu0 0
  %318 = vmatpush2.bf16.xpose.msra.mxu0 0
  %319 = vmatprep.mubr.bf16.mxu0 %v97
  %320 = vmatmul.mubr.bf16.gmra.mxu0 %v96
  %v321 = vpop.f32.mrf.mxu0
  %v322 = vadd.f32 %v273, %v321
  %v323 = vpop.f32.mrf.mxu0
  %v324 = vpop.f32.mrf.mxu0
  %v325 = vadd.f32 %v276, %v324
  %v326 = vpop.f32.mrf.mxu0
  %327 = vmatprep.mubr.bf16.mxu0 %v103
  %328 = vmatmul.mubr.bf16.gmra.mxu0 %v102
  %v329 = vpop.f32.mrf.mxu0
  %v330 = vadd.f32 %v281, %v329
  %v331 = vpop.f32.mrf.mxu0
  %v332 = vpop.f32.mrf.mxu0
  %v333 = vadd.f32 %v284, %v332
  %v334 = vpop.f32.mrf.mxu0
  %335 = vdwg.mxu0
  %336 = vmatprep.subr.bf16.mxu0 0
  %337 = vmatpush1.bf16.xpose.msra.mxu0 0
  %338 = vmatprep.subr.bf16.mxu0 0
  %339 = vmatpush1.bf16.xpose.msra.mxu0 0
  %340 = vmatprep.subr.bf16.mxu0 0
  %341 = vmatpush1.bf16.xpose.msra.mxu0 0
  %342 = vmatprep.subr.bf16.mxu0 0
  %343 = vmatpush1.bf16.xpose.msra.mxu0 0
  %344 = vmatprep.subr.bf16.mxu0 %v213
  %345 = vmatpush1.bf16.xpose.msra.mxu0 %v212
  %346 = vmatprep.subr.bf16.mxu0 %v207
  %347 = vmatpush1.bf16.xpose.msra.mxu0 %v206
  %348 = vmatprep.subr.bf16.mxu0 %v201
  %349 = vmatpush1.bf16.xpose.msra.mxu0 %v200
  %350 = vmatprep.subr.bf16.mxu0 %v195
  %351 = vmatpush1.bf16.xpose.msra.mxu0 %v194
  %352 = vmatprep.subr.bf16.mxu0 0
  %353 = vmatpush2.bf16.xpose.msra.mxu0 0
  %354 = vmatprep.subr.bf16.mxu0 0
  %355 = vmatpush2.bf16.xpose.msra.mxu0 0
  %356 = vmatprep.subr.bf16.mxu0 0
  %357 = vmatpush2.bf16.xpose.msra.mxu0 0
  %358 = vmatprep.subr.bf16.mxu0 0
  %359 = vmatpush2.bf16.xpose.msra.mxu0 0
  %360 = vmatprep.subr.bf16.mxu0 0
  %361 = vmatpush2.bf16.xpose.msra.mxu0 0
  %362 = vmatprep.subr.bf16.mxu0 0
  %363 = vmatpush2.bf16.xpose.msra.mxu0 0
  %364 = vmatprep.subr.bf16.mxu0 0
  %365 = vmatpush2.bf16.xpose.msra.mxu0 0
  %366 = vmatprep.subr.bf16.mxu0 0
  %367 = vmatpush2.bf16.xpose.msra.mxu0 0
  %368 = vmatprep.mubr.bf16.mxu0 %v99
  %369 = vmatmul.mubr.bf16.gmra.mxu0 %v98
  %v370 = vpop.f32.mrf.mxu0
  %v371 = vadd.f32 %v322, %v370
  %v372 = vpop.f32.mrf.mxu0
  %v373 = vpop.f32.mrf.mxu0
  %v374 = vadd.f32 %v325, %v373
  %v375 = vpop.f32.mrf.mxu0
  %376 = vmatprep.mubr.bf16.mxu0 %v105
  %377 = vmatmul.mubr.bf16.gmra.mxu0 %v104
  %v378 = vpop.f32.mrf.mxu0
  %v379 = vadd.f32 %v330, %v378
  %v380 = vpop.f32.mrf.mxu0
  %v381 = vpop.f32.mrf.mxu0
  %v382 = vadd.f32 %v333, %v381
  %v383 = vpop.f32.mrf.mxu0
  %384 = vdwg.mxu0
  %vm385 = vcmask 523264
  %386 = vst.msk [vmem:[%s3] sm:$0xff] %vm385, %v371
  %387 = vst.msk [vmem:[%s3 + $0x8] sm:$0xff] %vm385, %v374
  %388 = vst.msk [vmem:[%s3 + $0x10] sm:$0xff] %vm385, %v379
  %389 = vst.msk [vmem:[%s3 + $0x18] sm:$0xff] %vm385, %v382
  // Predicated region
  $region14: #{medsam_forward.74} parent=0 // pred_check
    _
  $region15: #{medsam_forward.74} parent=0 // pred_check_branch
    %391 = sbr.rel (0) target = $region17
  $region16: #{medsam_forward.74} parent=0 // pred_region
    _
  $region17: #{medsam_forward.74} parent=0 // pred_fallthru
    _
  // Predicated region
  $region18: #{medsam_forward.74} parent=0 // pred_check
    _
  $region19: #{medsam_forward.74} parent=0 // pred_check_branch
    %393 = sbr.rel (0) target = $region21
  $region20: #{medsam_forward.74} parent=0 // pred_region
    _
  $region21: #{medsam_forward.74} parent=0 // pred_fallthru
    _

// kernel: medsam_forward.76
$region0: #{medsam_forward.76}
  #allocation0 [shape = 'u32[]', space=smem, size = 0x4, offset = 0x4, fixed_abs, tag = 'smem constant byte address 0x4 - core index']
  #allocation1 [shape = 'u32[144,128]{1,0:T(1,128)}', space=vmem, size = 0x12000, scoped, tag = 'internal scratch']
  %s0 = inlined_call_operand.vmem [shape: bf16[32,64], index: 0, kind: input, shape index: {}]
  %s1 = inlined_call_operand.vmem [shape: bf16[192,64], index: 1, kind: input, shape index: {}]
  %s2 = inlined_call_operand.vmem [shape: f32[1,192], index: 2, kind: input, shape index: {}]
  %s3 = inlined_call_operand.vmem [shape: f32[32,192], index: 3, kind: output, shape index: {}]
  %s4 = sld [smem:[#allocation0]]
  $region22: #{medsam_forward.76} parent=0
    _
  %s6 = ssub.s32 1, %s4
  %s7 = scalar_select 0, %s6, %s4
  // Predicated region
  $region2: #{medsam_forward.76} parent=0 // pred_check
    _
  $region3: #{medsam_forward.76} parent=0 // pred_check_branch
    %9 = sbr.rel (0) target = $region5
  $region4: #{medsam_forward.76} parent=0 // pred_region
    _
  $region5: #{medsam_forward.76} parent=0 // pred_fallthru
    _
  // Predicated region
  $region6: #{medsam_forward.76} parent=0 // pred_check
    _
  $region7: #{medsam_forward.76} parent=0 // pred_check_branch
    %11 = sbr.rel (0) target = $region9
  $region8: #{medsam_forward.76} parent=0 // pred_region
    _
  $region9: #{medsam_forward.76} parent=0 // pred_fallthru
    _
  // Predicated region
  $region10: #{medsam_forward.76} parent=0 // pred_check
    _
  $region11: #{medsam_forward.76} parent=0 // pred_check_branch
    %13 = sbr.rel (0) target = $region13
  $region12: #{medsam_forward.76} parent=0 // pred_region
    _
  $region13: #{medsam_forward.76} parent=0 // pred_fallthru
    _
  %v15 = vld [vmem:[%s0] sm:$0xf]
  %v16 = vld [vmem:[%s0 + $0x4] sm:$0xf]
  %v17 = vld [vmem:[%s0 + $0x8] sm:$0xf]
  %v18 = vld [vmem:[%s0 + $0xc] sm:$0xf]
  %v19 = vld [vmem:[%s1] sm:$0xf]
  %v20 = vld [vmem:[%s1 + $0x4] sm:$0xf]
  %v21 = vld [vmem:[%s1 + $0x8] sm:$0xf]
  %v22 = vld [vmem:[%s1 + $0xc] sm:$0xf]
  %v23 = vld [vmem:[%s1 + $0x10] sm:$0xf]
  %v24 = vld [vmem:[%s1 + $0x14] sm:$0xf]
  %v25 = vld [vmem:[%s1 + $0x18] sm:$0xf]
  %v26 = vld [vmem:[%s1 + $0x1c] sm:$0xf]
  %v27 = vld [vmem:[%s1 + $0x20] sm:$0xf]
  %v28 = vld [vmem:[%s1 + $0x24] sm:$0xf]
  %v29 = vld [vmem:[%s1 + $0x28] sm:$0xf]
  %v30 = vld [vmem:[%s1 + $0x2c] sm:$0xf]
  %v31 = vld [vmem:[%s1 + $0x30] sm:$0xf]
  %v32 = vld [vmem:[%s1 + $0x34] sm:$0xf]
  %v33 = vld [vmem:[%s1 + $0x38] sm:$0xf]
  %v34 = vld [vmem:[%s1 + $0x3c] sm:$0xf]
  %v35 = vld [vmem:[%s1 + $0x40] sm:$0xf]
  %v36 = vld [vmem:[%s1 + $0x44] sm:$0xf]
  %v37 = vld [vmem:[%s1 + $0x48] sm:$0xf]
  %v38 = vld [vmem:[%s1 + $0x4c] sm:$0xf]
  %v39 = vld [vmem:[%s1 + $0x50] sm:$0xf]
  %v40 = vld [vmem:[%s1 + $0x54] sm:$0xf]
  %v41 = vld [vmem:[%s1 + $0x58] sm:$0xf]
  %v42 = vld [vmem:[%s1 + $0x5c] sm:$0xf]
  %v43 = vld [vmem:[%s2] sm:$0x3]
  %v45 = vlaneseq
  %v46 = vshrl.u32 %v45, 7
  %v47 = vsub.s32 0, %v46
  %v48 = vrot.slane %v43, %v47
  %v49 = vlaneseq
  %v50 = vshrl.u32 %v49, 7
  %v51 = vsub.s32 1, %v50
  %v52 = vrot.slane %v43, %v51
  %v59 = vunpack.c.l.b16 %v15
  %v60 = vunpack.c.l.b16 %v16
  %v61 = vunpack.c.l.b16 %v17
  %v62 = vunpack.c.l.b16 %v18
  %v63 = vpack.c.b16 %v60, %v59
  %v64 = vpack.c.b16 %v62, %v61
  %v89 = vunpack.c.l.b16 %v19
  %v90 = vunpack.c.l.b16 %v20
  %v91 = vunpack.c.l.b16 %v21
  %v92 = vunpack.c.l.b16 %v22
  %v93 = vunpack.c.l.b16 %v23
  %v94 = vunpack.c.l.b16 %v24
  %v95 = vunpack.c.l.b16 %v25
  %v96 = vunpack.c.l.b16 %v26
  %v97 = vunpack.c.l.b16 %v27
  %v98 = vunpack.c.l.b16 %v28
  %v99 = vunpack.c.l.b16 %v29
  %v100 = vunpack.c.l.b16 %v30
  %v101 = vunpack.c.l.b16 %v31
  %v102 = vunpack.c.l.b16 %v32
  %v103 = vunpack.c.l.b16 %v33
  %v104 = vunpack.c.l.b16 %v34
  %v105 = vunpack.c.l.b16 %v35
  %v106 = vunpack.c.l.b16 %v36
  %v107 = vunpack.c.l.b16 %v37
  %v108 = vunpack.c.l.b16 %v38
  %v109 = vunpack.c.l.b16 %v39
  %v110 = vunpack.c.l.b16 %v40
  %v111 = vunpack.c.l.b16 %v41
  %v112 = vunpack.c.l.b16 %v42
  %v113 = vpack.c.b16 %v90, %v89
  %v114 = vpack.c.b16 %v92, %v91
  %v115 = vpack.c.b16 %v94, %v93
  %v116 = vpack.c.b16 %v96, %v95
  %v117 = vpack.c.b16 %v98, %v97
  %v118 = vpack.c.b16 %v100, %v99
  %v119 = vpack.c.b16 %v102, %v101
  %v120 = vpack.c.b16 %v104, %v103
  %v121 = vpack.c.b16 %v106, %v105
  %v122 = vpack.c.b16 %v108, %v107
  %v123 = vpack.c.b16 %v110, %v109
  %v124 = vpack.c.b16 %v112, %v111
  %vm125 = vcmask 523264
  %v127 = vsel %vm125, %v63, 0
  %v130 = vsel %vm125, %v64, 0
  %v133 = vsel %vm125, %v113, 0
  %v136 = vsel %vm125, %v114, 0
  %v139 = vsel %vm125, %v115, 0
  %v142 = vsel %vm125, %v116, 0
  %v145 = vsel %vm125, %v117, 0
  %v148 = vsel %vm125, %v118, 0
  %v151 = vsel %vm125, %v119, 0
  %v154 = vsel %vm125, %v120, 0
  %v157 = vsel %vm125, %v121, 0
  %v160 = vsel %vm125, %v122, 0
  %v163 = vsel %vm125, %v123, 0
  %v166 = vsel %vm125, %v124, 0
  %168 = vmatprep.subr.bf16.mxu0 0
  %169 = vmatpush1.bf16.xpose.msra.mxu0 %v154
  %170 = vmatprep.subr.bf16.mxu0 0
  %171 = vmatpush1.bf16.xpose.msra.mxu0 %v151
  %172 = vmatprep.subr.bf16.mxu0 0
  %173 = vmatpush1.bf16.xpose.msra.mxu0 %v148
  %174 = vmatprep.subr.bf16.mxu0 0
  %175 = vmatpush1.bf16.xpose.msra.mxu0 %v145
  %176 = vmatprep.subr.bf16.mxu0 0
  %177 = vmatpush1.bf16.xpose.msra.mxu0 %v142
  %178 = vmatprep.subr.bf16.mxu0 0
  %179 = vmatpush1.bf16.xpose.msra.mxu0 %v139
  %180 = vmatprep.subr.bf16.mxu0 0
  %181 = vmatpush1.bf16.xpose.msra.mxu0 %v136
  %182 = vmatprep.subr.bf16.mxu0 0
  %183 = vmatpush1.bf16.xpose.msra.mxu0 %v133
  %184 = vmatprep.subr.bf16.mxu0 0
  %185 = vmatpush2.bf16.xpose.msra.mxu0 0
  %186 = vmatprep.subr.bf16.mxu0 0
  %187 = vmatpush2.bf16.xpose.msra.mxu0 0
  %188 = vmatprep.subr.bf16.mxu0 0
  %189 = vmatpush2.bf16.xpose.msra.mxu0 0
  %190 = vmatprep.subr.bf16.mxu0 0
  %191 = vmatpush2.bf16.xpose.msra.mxu0 0
  %192 = vmatprep.subr.bf16.mxu0 0
  %193 = vmatpush2.bf16.xpose.msra.mxu0 %v166
  %194 = vmatprep.subr.bf16.mxu0 0
  %195 = vmatpush2.bf16.xpose.msra.mxu0 %v163
  %196 = vmatprep.subr.bf16.mxu0 0
  %197 = vmatpush2.bf16.xpose.msra.mxu0 %v160
  %198 = vmatprep.subr.bf16.mxu0 0
  %199 = vmatpush2.bf16.xpose.msra.mxu0 %v157
  %200 = vmatprep.mubr.bf16.mxu0 0
  %201 = vmatmul.mubr.bf16.gmra.mxu0 %v127
  %v202 = vpop.f32.mrf.mxu0
  %v203 = vadd.f32 %v48, %v202
  %v204 = vpop.f32.mrf.mxu0
  %v205 = vadd.f32 %v52, %v204
  %v206 = vpop.f32.mrf.mxu0
  %v207 = vadd.f32 %v48, %v206
  %v208 = vpop.f32.mrf.mxu0
  %v209 = vadd.f32 %v52, %v208
  %210 = vmatprep.mubr.bf16.mxu0 0
  %211 = vmatmul.mubr.bf16.gmra.mxu0 %v130
  %v212 = vpop.f32.mrf.mxu0
  %v213 = vadd.f32 %v48, %v212
  %v214 = vpop.f32.mrf.mxu0
  %v215 = vadd.f32 %v52, %v214
  %v216 = vpop.f32.mrf.mxu0
  %v217 = vadd.f32 %v48, %v216
  %v218 = vpop.f32.mrf.mxu0
  %v219 = vadd.f32 %v52, %v218
  %220 = vdwg.mxu0
  %221 = vst [vmem:[%s3] sm:$0xff] %v203
  %222 = vst.msk [vmem:[%s3 + $0x8] sm:$0xff] %vm125, %v205
  %223 = vst [vmem:[%s3 + $0x10] sm:$0xff] %v207
  %224 = vst.msk [vmem:[%s3 + $0x18] sm:$0xff] %vm125, %v209
  %225 = vst [vmem:[%s3 + $0x20] sm:$0xff] %v213
  %226 = vst.msk [vmem:[%s3 + $0x28] sm:$0xff] %vm125, %v215
  %227 = vst [vmem:[%s3 + $0x30] sm:$0xff] %v217
  %228 = vst.msk [vmem:[%s3 + $0x38] sm:$0xff] %vm125, %v219
  // Predicated region
  $region14: #{medsam_forward.76} parent=0 // pred_check
    _
  $region15: #{medsam_forward.76} parent=0 // pred_check_branch
    %230 = sbr.rel (0) target = $region17
  $region16: #{medsam_forward.76} parent=0 // pred_region
    _
  $region17: #{medsam_forward.76} parent=0 // pred_fallthru
    _
  // Predicated region
  $region18: #{medsam_forward.76} parent=0 // pred_check
    _
  $region19: #{medsam_forward.76} parent=0 // pred_check_branch
    %232 = sbr.rel (0) target = $region21
  $region20: #{medsam_forward.76} parent=0 // pred_region
    _
  $region21: #{medsam_forward.76} parent=0 // pred_fallthru
    _

// kernel: medsam_forward.78
$region0: #{medsam_forward.78}
  #allocation0 [shape = 'u32[]', space=smem, size = 0x4, offset = 0x4, fixed_abs, tag = 'smem constant byte address 0x4 - core index']
  #allocation1 [shape = 'u32[144,128]{1,0:T(1,128)}', space=vmem, size = 0x12000, scoped, tag = 'internal scratch']
  %s0 = inlined_call_operand.vmem [shape: bf16[32,64], index: 0, kind: input, shape index: {}]
  %s1 = inlined_call_operand.vmem [shape: bf16[64,64], index: 1, kind: input, shape index: {}]
  %s2 = inlined_call_operand.vmem [shape: f32[1,64], index: 2, kind: input, shape index: {}]
  %s3 = inlined_call_operand.vmem [shape: f32[32,64], index: 3, kind: output, shape index: {}]
  %s4 = sld [smem:[#allocation0]]
  $region22: #{medsam_forward.78} parent=0
    _
  %s6 = ssub.s32 1, %s4
  %s7 = scalar_select 0, %s6, %s4
  // Predicated region
  $region2: #{medsam_forward.78} parent=0 // pred_check
    _
  $region3: #{medsam_forward.78} parent=0 // pred_check_branch
    %9 = sbr.rel (0) target = $region5
  $region4: #{medsam_forward.78} parent=0 // pred_region
    _
  $region5: #{medsam_forward.78} parent=0 // pred_fallthru
    _
  // Predicated region
  $region6: #{medsam_forward.78} parent=0 // pred_check
    _
  $region7: #{medsam_forward.78} parent=0 // pred_check_branch
    %11 = sbr.rel (0) target = $region9
  $region8: #{medsam_forward.78} parent=0 // pred_region
    _
  $region9: #{medsam_forward.78} parent=0 // pred_fallthru
    _
  // Predicated region
  $region10: #{medsam_forward.78} parent=0 // pred_check
    _
  $region11: #{medsam_forward.78} parent=0 // pred_check_branch
    %13 = sbr.rel (0) target = $region13
  $region12: #{medsam_forward.78} parent=0 // pred_region
    _
  $region13: #{medsam_forward.78} parent=0 // pred_fallthru
    _
  %v15 = vld [vmem:[%s0] sm:$0xf]
  %v16 = vld [vmem:[%s0 + $0x4] sm:$0xf]
  %v17 = vld [vmem:[%s0 + $0x8] sm:$0xf]
  %v18 = vld [vmem:[%s0 + $0xc] sm:$0xf]
  %v19 = vld [vmem:[%s1] sm:$0xf]
  %v20 = vld [vmem:[%s1 + $0x4] sm:$0xf]
  %v21 = vld [vmem:[%s1 + $0x8] sm:$0xf]
  %v22 = vld [vmem:[%s1 + $0xc] sm:$0xf]
  %v23 = vld [vmem:[%s1 + $0x10] sm:$0xf]
  %v24 = vld [vmem:[%s1 + $0x14] sm:$0xf]
  %v25 = vld [vmem:[%s1 + $0x18] sm:$0xf]
  %v26 = vld [vmem:[%s1 + $0x1c] sm:$0xf]
  %v27 = vld [vmem:[%s2] sm:$0x1]
  %v29 = vlaneseq
  %v30 = vshrl.u32 %v29, 7
  %v31 = vsub.s32 0, %v30
  %v32 = vrot.slane %v27, %v31
  %v38 = vunpack.c.l.b16 %v15
  %v39 = vunpack.c.l.b16 %v16
  %v40 = vunpack.c.l.b16 %v17
  %v41 = vunpack.c.l.b16 %v18
  %v42 = vpack.c.b16 %v39, %v38
  %v43 = vpack.c.b16 %v41, %v40
  %v52 = vunpack.c.l.b16 %v19
  %v53 = vunpack.c.l.b16 %v20
  %v54 = vunpack.c.l.b16 %v21
  %v55 = vunpack.c.l.b16 %v22
  %v56 = vunpack.c.l.b16 %v23
  %v57 = vunpack.c.l.b16 %v24
  %v58 = vunpack.c.l.b16 %v25
  %v59 = vunpack.c.l.b16 %v26
  %v60 = vpack.c.b16 %v53, %v52
  %v61 = vpack.c.b16 %v55, %v54
  %v62 = vpack.c.b16 %v57, %v56
  %v63 = vpack.c.b16 %v59, %v58
  %vm64 = vcmask 523264
  %v66 = vsel %vm64, %v42, 0
  %v69 = vsel %vm64, %v43, 0
  %v72 = vsel %vm64, %v60, 0
  %v75 = vsel %vm64, %v61, 0
  %v78 = vsel %vm64, %v62, 0
  %v81 = vsel %vm64, %v63, 0
  %83 = vmatprep.subr.bf16.mxu0 0
  %84 = vmatpush1.bf16.xpose.msra.mxu0 0
  %85 = vmatprep.subr.bf16.mxu0 0
  %86 = vmatpush1.bf16.xpose.msra.mxu0 0
  %87 = vmatprep.subr.bf16.mxu0 0
  %88 = vmatpush1.bf16.xpose.msra.mxu0 0
  %89 = vmatprep.subr.bf16.mxu0 0
  %90 = vmatpush1.bf16.xpose.msra.mxu0 0
  %91 = vmatprep.subr.bf16.mxu0 0
  %92 = vmatpush1.bf16.xpose.msra.mxu0 %v81
  %93 = vmatprep.subr.bf16.mxu0 0
  %94 = vmatpush1.bf16.xpose.msra.mxu0 %v78
  %95 = vmatprep.subr.bf16.mxu0 0
  %96 = vmatpush1.bf16.xpose.msra.mxu0 %v75
  %97 = vmatprep.subr.bf16.mxu0 0
  %98 = vmatpush1.bf16.xpose.msra.mxu0 %v72
  %99 = vmatprep.subr.bf16.mxu0 0
  %100 = vmatpush2.bf16.xpose.msra.mxu0 0
  %101 = vmatprep.subr.bf16.mxu0 0
  %102 = vmatpush2.bf16.xpose.msra.mxu0 0
  %103 = vmatprep.subr.bf16.mxu0 0
  %104 = vmatpush2.bf16.xpose.msra.mxu0 0
  %105 = vmatprep.subr.bf16.mxu0 0
  %106 = vmatpush2.bf16.xpose.msra.mxu0 0
  %107 = vmatprep.subr.bf16.mxu0 0
  %108 = vmatpush2.bf16.xpose.msra.mxu0 0
  %109 = vmatprep.subr.bf16.mxu0 0
  %110 = vmatpush2.bf16.xpose.msra.mxu0 0
  %111 = vmatprep.subr.bf16.mxu0 0
  %112 = vmatpush2.bf16.xpose.msra.mxu0 0
  %113 = vmatprep.subr.bf16.mxu0 0
  %114 = vmatpush2.bf16.xpose.msra.mxu0 0
  %115 = vmatprep.mubr.bf16.mxu0 0
  %116 = vmatmul.mubr.bf16.gmra.mxu0 %v66
  %v117 = vpop.f32.mrf.mxu0
  %v118 = vadd.f32 %v32, %v117
  %v119 = vpop.f32.mrf.mxu0
  %v120 = vpop.f32.mrf.mxu0
  %v121 = vadd.f32 %v32, %v120
  %v122 = vpop.f32.mrf.mxu0
  %123 = vmatprep.mubr.bf16.mxu0 0
  %124 = vmatmul.mubr.bf16.gmra.mxu0 %v69
  %v125 = vpop.f32.mrf.mxu0
  %v126 = vadd.f32 %v32, %v125
  %v127 = vpop.f32.mrf.mxu0
  %v128 = vpop.f32.mrf.mxu0
  %v129 = vadd.f32 %v32, %v128
  %v130 = vpop.f32.mrf.mxu0
  %131 = vdwg.mxu0
  %132 = vst.msk [vmem:[%s3] sm:$0xff] %vm64, %v118
  %133 = vst.msk [vmem:[%s3 + $0x8] sm:$0xff] %vm64, %v121
  %134 = vst.msk [vmem:[%s3 + $0x10] sm:$0xff] %vm64, %v126
  %135 = vst.msk [vmem:[%s3 + $0x18] sm:$0xff] %vm64, %v129
  // Predicated region
  $region14: #{medsam_forward.78} parent=0 // pred_check
    _
  $region15: #{medsam_forward.78} parent=0 // pred_check_branch
    %137 = sbr.rel (0) target = $region17
  $region16: #{medsam_forward.78} parent=0 // pred_region
    _
  $region17: #{medsam_forward.78} parent=0 // pred_fallthru
    _
  // Predicated region
  $region18: #{medsam_forward.78} parent=0 // pred_check
    _
  $region19: #{medsam_forward.78} parent=0 // pred_check_branch
    %139 = sbr.rel (0) target = $region21
  $region20: #{medsam_forward.78} parent=0 // pred_region
    _
  $region21: #{medsam_forward.78} parent=0 // pred_fallthru
    _

// kernel: medsam_forward.77
$region0: #{medsam_forward.77}
  #allocation0 [shape = 'u32[]', space=smem, size = 0x4, offset = 0x4, fixed_abs, tag = 'smem constant byte address 0x4 - core index']
  #allocation1 [shape = 'u32[144,128]{1,0:T(1,128)}', space=vmem, size = 0x12000, scoped, tag = 'internal scratch']
  %s0 = inlined_call_operand.vmem [shape: bf16[2,16,64], index: 0, kind: input, shape index: {}]
  %s1 = inlined_call_operand.vmem [shape: bf16[2,16,64], index: 1, kind: input, shape index: {}]
  %s2 = inlined_call_operand.vmem [shape: bf16[2,16,64], index: 2, kind: input, shape index: {}]
  %s3 = inlined_call_operand.vmem [shape: f32[2,16,64], index: 3, kind: output, shape index: {}]
  %s4 = sld [smem:[#allocation0]]
  $region45: #{medsam_forward.77} parent=0
    _
  %s6 = ssub.s32 1, %s4
  %s7 = scalar_select 0, %s6, %s4
  loop: start=0, step=1, limit=4
  $region2: #{medsam_forward.77} parent=0 // loop_pre_header
    _
  $region3: #{medsam_forward.77} parent=0 // loop_header
    %s9 = sphi 0, %s13
    %p10 = scmp.ge.s32.totalorder %s9, 4
    %s19 = sphi 0, %s21
    %s22 = sphi 0, %s19
    %s23 = sphi 0, %s22
    %s39 = sphi 0, %s23
    %s45 = sphi 0, %s47
    %s48 = sphi 0, %s45
    %s49 = sphi 0, %s48
    %s65 = sphi 0, %s49
    %s71 = sphi 0, %s73
    %s74 = sphi 0, %s71
    %s75 = sphi 0, %s74
    %s91 = sphi 0, %s75
    %s97 = sphi 0, %s99
    %s100 = sphi 0, %s97
    %s101 = sphi 0, %s100
    %s117 = sphi 0, %s101
  $region4: #{medsam_forward.77} parent=0 // loop_header_branch
    %12 = sbr.rel (%p10) target = $region8
  $region5: #{medsam_forward.77} parent=0 // loop_body
    %s14 = ssub.s32 %s9, 1
    %s15 = ssub.s32 %s9, 2
    %s16 = sadd.s32 %s9, 1
    %s17 = ssub.s32 %s9, %s16
    %p18 = scmp.eq.s32.totalorder %s17, 0
    %s20 = sadd.s32 %s19, 1
    %s21 = scalar_select %p18, %s19, %s20
    %p24 = pneg %p18
    %p25 = scmp.eq.s32.totalorder %s9, 1
    %p26 = por %p24, %p25
    %p27 = scmp.ne.s32.totalorder %s19, %s22
    %p28 = scmp.eq.s32.totalorder %s9, 0
    %p29 = por %p27, %p28
    %p30 = scmp.ne.s32.totalorder %s19, %s22
    %p31 = scmp.eq.s32.totalorder %s14, 1
    %p32 = por %p30, %p31
    %p33 = scmp.ne.s32.totalorder %s22, %s23
    %p34 = scmp.eq.s32.totalorder %s14, 0
    %p35 = por %p33, %p34
    %p36 = scmp.ne.s32.totalorder %s22, %s23
    %p37 = scmp.eq.s32.totalorder %s15, 1
    %p38 = por %p36, %p37
    %p40 = scmp.ne.s32.totalorder %s23, %s39
    %p41 = scmp.eq.s32.totalorder %s15, 0
    %p42 = por %p40, %p41
    %s43 = ssub.s32 %s9, %s16
    %p44 = scmp.eq.s32.totalorder %s43, 0
    %s46 = sadd.s32 %s45, 1
    %s47 = scalar_select %p44, %s45, %s46
    %p50 = pneg %p44
    %p51 = scmp.eq.s32.totalorder %s9, 1
    %p52 = por %p50, %p51
    %p53 = scmp.ne.s32.totalorder %s45, %s48
    %p54 = scmp.eq.s32.totalorder %s9, 0
    %p55 = por %p53, %p54
    %p56 = scmp.ne.s32.totalorder %s45, %s48
    %p57 = scmp.eq.s32.totalorder %s14, 1
    %p58 = por %p56, %p57
    %p59 = scmp.ne.s32.totalorder %s48, %s49
    %p60 = scmp.eq.s32.totalorder %s14, 0
    %p61 = por %p59, %p60
    %p62 = scmp.ne.s32.totalorder %s48, %s49
    %p63 = scmp.eq.s32.totalorder %s15, 1
    %p64 = por %p62, %p63
    %p66 = scmp.ne.s32.totalorder %s49, %s65
    %p67 = scmp.eq.s32.totalorder %s15, 0
    %p68 = por %p66, %p67
    %s69 = ssub.s32 %s9, %s16
    %p70 = scmp.eq.s32.totalorder %s69, 0
    %s72 = sadd.s32 %s71, 1
    %s73 = scalar_select %p70, %s71, %s72
    %p76 = pneg %p70
    %p77 = scmp.eq.s32.totalorder %s9, 1
    %p78 = por %p76, %p77
    %p79 = scmp.ne.s32.totalorder %s71, %s74
    %p80 = scmp.eq.s32.totalorder %s9, 0
    %p81 = por %p79, %p80
    %p82 = scmp.ne.s32.totalorder %s71, %s74
    %p83 = scmp.eq.s32.totalorder %s14, 1
    %p84 = por %p82, %p83
    %p85 = scmp.ne.s32.totalorder %s74, %s75
    %p86 = scmp.eq.s32.totalorder %s14, 0
    %p87 = por %p85, %p86
    %p88 = scmp.ne.s32.totalorder %s74, %s75
    %p89 = scmp.eq.s32.totalorder %s15, 1
    %p90 = por %p88, %p89
    %p92 = scmp.ne.s32.totalorder %s75, %s91
    %p93 = scmp.eq.s32.totalorder %s15, 0
    %p94 = por %p92, %p93
    %s95 = ssub.s32 %s9, %s16
    %p96 = scmp.eq.s32.totalorder %s95, 0
    %s98 = sadd.s32 %s97, 1
    %s99 = scalar_select %p96, %s97, %s98
    %p102 = pneg %p96
    %p103 = scmp.eq.s32.totalorder %s9, 1
    %p104 = por %p102, %p103
    %p105 = scmp.ne.s32.totalorder %s97, %s100
    %p106 = scmp.eq.s32.totalorder %s9, 0
    %p107 = por %p105, %p106
    %p108 = scmp.ne.s32.totalorder %s97, %s100
    %p109 = scmp.eq.s32.totalorder %s14, 1
    %p110 = por %p108, %p109
    %p111 = scmp.ne.s32.totalorder %s100, %s101
    %p112 = scmp.eq.s32.totalorder %s14, 0
    %p113 = por %p111, %p112
    %p114 = scmp.ne.s32.totalorder %s100, %s101
    %p115 = scmp.eq.s32.totalorder %s15, 1
    %p116 = por %p114, %p115
    %p118 = scmp.ne.s32.totalorder %s101, %s117
    %p119 = scmp.eq.s32.totalorder %s15, 0
    %p120 = por %p118, %p119
    %p121 = scmp.le.s32.totalorder 1, %s9
    %p122 = scmp.lt.s32.totalorder %s9, 3
    %p123 = pnand %p121, %p122
    %p124 = pneg %p123
    // Predicated region
    $region9: #{medsam_forward.77} parent=5 // pred_check
      _
    $region10: #{medsam_forward.77} parent=5 // pred_check_branch
      %126 = sbr.rel (%p123) target = $region12
    $region11: #{medsam_forward.77} parent=5 // pred_region
      %s127 = ssub.s32 %s9, 1
    $region12: #{medsam_forward.77} parent=5 // pred_fallthru
      _
    %p128 = scmp.lt.s32.totalorder %s9, 2
    // Predicated region
    $region13: #{medsam_forward.77} parent=5 // pred_check
      %p129 = pneg %p128
    $region14: #{medsam_forward.77} parent=5 // pred_check_branch
      %131 = sbr.rel (%p129) target = $region16
    $region15: #{medsam_forward.77} parent=5 // pred_region
      // Predicated region
      $region17: #{medsam_forward.77} parent=15 // pred_check
        %p132 = pneg %p29
      $region18: #{medsam_forward.77} parent=15 // pred_check_branch
        %134 = sbr.rel (%p132) target = $region20
      $region19: #{medsam_forward.77} parent=15 // pred_region
        %p135 = scmp.lt.s32.totalorder %s9, 1
        %s136 = scalar_select %p135, %s9, 1
        %s137 = smul.addr %s136, 2
        %s138 = smul.addr %s137, 4
        %s139 = scalar_lea.vmem %s0, %s138
      $region20: #{medsam_forward.77} parent=15 // pred_fallthru
        _
      // Predicated region
      $region21: #{medsam_forward.77} parent=15 // pred_check
        %p140 = pneg %p55
      $region22: #{medsam_forward.77} parent=15 // pred_check_branch
        %142 = sbr.rel (%p140) target = $region24
      $region23: #{medsam_forward.77} parent=15 // pred_region
        %p143 = scmp.lt.s32.totalorder %s9, 1
        %s144 = scalar_select %p143, %s9, 1
        %s145 = smul.addr %s144, 2
        %s146 = smul.addr %s145, 4
        %s147 = scalar_lea.vmem %s1, %s146
      $region24: #{medsam_forward.77} parent=15 // pred_fallthru
        _
      // Predicated region
      $region25: #{medsam_forward.77} parent=15 // pred_check
        %p148 = pneg %p81
      $region26: #{medsam_forward.77} parent=15 // pred_check_branch
        %150 = sbr.rel (%p148) target = $region28
      $region27: #{medsam_forward.77} parent=15 // pred_region
        %p151 = scmp.lt.s32.totalorder %s9, 1
        %s152 = scalar_select %p151, %s9, 1
        %s153 = smul.addr %s152, 2
        %s154 = smul.addr %s153, 4
        %s155 = scalar_lea.vmem %s2, %s154
      $region28: #{medsam_forward.77} parent=15 // pred_fallthru
        _
    $region16: #{medsam_forward.77} parent=5 // pred_fallthru
      _
    %p156 = scmp.le.s32.totalorder 1, %s9
    %p157 = scmp.lt.s32.totalorder %s9, 3
    %p158 = pnand %p156, %p157
    %p159 = pneg %p158
    // Predicated region
    $region29: #{medsam_forward.77} parent=5 // pred_check
      _
    $region30: #{medsam_forward.77} parent=5 // pred_check_branch
      %161 = sbr.rel (%p158) target = $region32
    $region31: #{medsam_forward.77} parent=5 // pred_region
      %s162 = ssub.s32 %s9, 1
      %p163 = scmp.lt.s32.totalorder %s14, 1
      %s164 = scalar_select %p163, %s14, 1
      %s165 = smul.addr %s164, 2
      %s166 = smul.addr %s165, 4
      %s167 = scalar_lea.vmem %s0, %s166
      %p168 = pneg %p35
      %p169 = pneg %p32
      %p170 = scmp.lt.s32.totalorder %s14, 1
      %s171 = scalar_select %p170, %s14, 1
      %s172 = smul.addr %s171, 2
      %s173 = smul.addr %s172, 4
      %s174 = scalar_lea.vmem %s1, %s173
      %p175 = pneg %p61
      %p176 = pneg %p58
      %p177 = scmp.lt.s32.totalorder %s14, 1
      %s178 = scalar_select %p177, %s14, 1
      %s179 = smul.addr %s178, 2
      %s180 = smul.addr %s179, 4
      %s181 = scalar_lea.vmem %s2, %s180
      %p182 = pneg %p87
      %p183 = pneg %p84
      %p184 = pneg %p113
      %p185 = pneg %p110
      %p186 = scmp.lt.s32.totalorder %s14, 1
      %s187 = scalar_select %p186, %s14, 1
      %s188 = smul.addr %s187, 2
      %s189 = smul.addr %s188, 8
      %s190 = scalar_lea.vmem %s3, %s189
      %p191 = scmp.lt.s32.totalorder %s14, 1
      %s192 = scalar_select %p191, %s14, 1
      %s193 = smul.addr %s192, 2
      %s194 = smul.addr %s193, 4
      %s195 = scalar_lea.vmem %s0, %s194
      %p196 = scmp.lt.s32.totalorder %s14, 1
      %s197 = scalar_select %p196, %s14, 1
      %s198 = smul.addr %s197, 2
      %s199 = smul.addr %s198, 4
      %s200 = scalar_lea.vmem %s1, %s199
      %p201 = scmp.lt.s32.totalorder %s14, 1
      %s202 = scalar_select %p201, %s14, 1
      %s203 = smul.addr %s202, 2
      %s204 = smul.addr %s203, 4
      %s205 = scalar_lea.vmem %s2, %s204
      %p206 = scmp.lt.s32.totalorder %s14, 1
      %s207 = scalar_select %p206, %s14, 1
      %s208 = smul.addr %s207, 2
      %s209 = smul.addr %s208, 8
      %s210 = scalar_lea.vmem %s3, %s209
      %v212 = vld [vmem:[%s195] sm:$0xf]
      %v213 = vld [vmem:[%s195 + $0x4] sm:$0xf]
      %v214 = vld [vmem:[%s200] sm:$0xf]
      %v215 = vld [vmem:[%s200 + $0x4] sm:$0xf]
      %v216 = vld [vmem:[%s205] sm:$0xf]
      %v217 = vld [vmem:[%s205 + $0x4] sm:$0xf]
      %v220 = vunpack.c.l.b16 %v212
      %v221 = vunpack.c.l.b16 %v213
      %v222 = vpack.c.b16 %v221, %v220
      %v225 = vunpack.c.l.b16 %v214
      %v226 = vunpack.c.l.b16 %v215
      %v227 = vpack.c.b16 %v226, %v225
      %vm228 = vcmask 261120
      %v230 = vsel %vm228, %v222, 0
      %v233 = vsel %vm228, %v227, 0
      %235 = vmatprep.subr.bf16.mxu0 0
      %236 = vmatpush1.bf16.xpose.msra.mxu0 0
      %237 = vmatprep.subr.bf16.mxu0 0
      %238 = vmatpush1.bf16.xpose.msra.mxu0 0
      %239 = vmatprep.subr.bf16.mxu0 0
      %240 = vmatpush1.bf16.xpose.msra.mxu0 0
      %241 = vmatprep.subr.bf16.mxu0 0
      %242 = vmatpush1.bf16.xpose.msra.mxu0 0
      %243 = vmatprep.subr.bf16.mxu0 0
      %244 = vmatpush1.bf16.xpose.msra.mxu0 0
      %245 = vmatprep.subr.bf16.mxu0 0
      %246 = vmatpush1.bf16.xpose.msra.mxu0 0
      %247 = vmatprep.subr.bf16.mxu0 0
      %248 = vmatpush1.bf16.xpose.msra.mxu0 0
      %249 = vmatprep.subr.bf16.mxu0 0
      %250 = vmatpush1.bf16.xpose.msra.mxu0 %v233
      %251 = vmatprep.subr.bf16.mxu0 0
      %252 = vmatpush2.bf16.xpose.msra.mxu0 0
      %253 = vmatprep.subr.bf16.mxu0 0
      %254 = vmatpush2.bf16.xpose.msra.mxu0 0
      %255 = vmatprep.subr.bf16.mxu0 0
      %256 = vmatpush2.bf16.xpose.msra.mxu0 0
      %257 = vmatprep.subr.bf16.mxu0 0
      %258 = vmatpush2.bf16.xpose.msra.mxu0 0
      %259 = vmatprep.subr.bf16.mxu0 0
      %260 = vmatpush2.bf16.xpose.msra.mxu0 0
      %261 = vmatprep.subr.bf16.mxu0 0
      %262 = vmatpush2.bf16.xpose.msra.mxu0 0
      %263 = vmatprep.subr.bf16.mxu0 0
      %264 = vmatpush2.bf16.xpose.msra.mxu0 0
      %265 = vmatprep.subr.bf16.mxu0 0
      %266 = vmatpush2.bf16.xpose.msra.mxu0 0
      %267 = vmatprep.mubr.bf16.mxu0 0
      %268 = vmatmul.mubr.bf16.gmra.mxu0 %v230
      %v269 = vpop.f32.mrf.mxu0
      %v270 = vadd.f32 0.0, %v269
      %v271 = vpop.f32.mrf.mxu0
      %v272 = vpop.f32.mrf.mxu0
      %v273 = vadd.f32 0.0, %v272
      %v274 = vpop.f32.mrf.mxu0
      %275 = vdwg.mxu0
      %v276 = vmul.f32 %v270, 0.17677669
      %v277 = vmul.f32 %v273, 0.17677669
      %vm278 = vcmask 130048
      %v279 = vsel %vm278, %v276, -inf
      %280 = vmax.xlane.f32.xlu0 %v279
      %v281 = vpop.xlane.xlu0 %280
      %v282 = vsel %vm278, %v277, -inf
      %283 = vmax.xlane.f32.xlu0 %v282
      %v284 = vpop.xlane.xlu0 %283
      %v285 = vsub.f32 %v276, %v281
      %v286 = vsub.f32 %v277, %v284
      %v287 = vmul.f32 %v285, 1.442695
      %v288 = vpow.pop %v287
      %v289 = vmul.f32 %v286, 1.442695
      %v290 = vpow.pop %v289
      %v291 = vsel %vm278, %v288, 0.0
      %292 = vadd.xlane.f32.xlu0 %v291
      %v293 = vpop.xlane.xlu0 %292
      %v294 = vsel %vm278, %v290, 0.0
      %295 = vadd.xlane.f32.xlu0 %v294
      %v296 = vpop.xlane.xlu0 %295
      %v297 = vrcp.pop %v293
      %v298 = vrcp.pop %v296
      %v299 = vmul.f32 %v288, %v297
      %v300 = vmul.f32 %v290, %v298
      %v301 = vpack.c.bf16 %v300, %v299
      %v304 = vunpack.c.l.b16 %v216
      %v305 = vunpack.c.l.b16 %v217
      %v306 = vpack.c.b16 %v305, %v304
      %v309 = vsel %vm278, %v301, 0
      %311 = vmatprep.subr.bf16.mxu0 0
      %312 = vmatpush1.bf16.msra.mxu0 0
      %313 = vmatprep.subr.bf16.mxu0 0
      %314 = vmatpush1.bf16.msra.mxu0 0
      %315 = vmatprep.subr.bf16.mxu0 0
      %316 = vmatpush1.bf16.msra.mxu0 0
      %317 = vmatprep.subr.bf16.mxu0 0
      %318 = vmatpush1.bf16.msra.mxu0 0
      %319 = vmatprep.subr.bf16.mxu0 0
      %320 = vmatpush1.bf16.msra.mxu0 0
      %321 = vmatprep.subr.bf16.mxu0 0
      %322 = vmatpush1.bf16.msra.mxu0 0
      %323 = vmatprep.subr.bf16.mxu0 0
      %324 = vmatpush1.bf16.msra.mxu0 0
      %325 = vmatprep.subr.bf16.mxu0 0
      %326 = vmatpush1.bf16.msra.mxu0 %v306
      %327 = vmatprep.subr.bf16.mxu0 0
      %328 = vmatpush2.bf16.msra.mxu0 0
      %329 = vmatprep.subr.bf16.mxu0 0
      %330 = vmatpush2.bf16.msra.mxu0 0
      %331 = vmatprep.subr.bf16.mxu0 0
      %332 = vmatpush2.bf16.msra.mxu0 0
      %333 = vmatprep.subr.bf16.mxu0 0
      %334 = vmatpush2.bf16.msra.mxu0 0
      %335 = vmatprep.subr.bf16.mxu0 0
      %336 = vmatpush2.bf16.msra.mxu0 0
      %337 = vmatprep.subr.bf16.mxu0 0
      %338 = vmatpush2.bf16.msra.mxu0 0
      %339 = vmatprep.subr.bf16.mxu0 0
      %340 = vmatpush2.bf16.msra.mxu0 0
      %341 = vmatprep.subr.bf16.mxu0 0
      %342 = vmatpush2.bf16.msra.mxu0 0
      %343 = vmatprep.mubr.bf16.mxu0 0
      %344 = vmatmul.mubr.bf16.gmra.mxu0 %v309
      %v345 = vpop.f32.mrf.mxu0
      %v346 = vadd.f32 0.0, %v345
      %v347 = vpop.f32.mrf.mxu0
      %v348 = vpop.f32.mrf.mxu0
      %v349 = vadd.f32 0.0, %v348
      %v350 = vpop.f32.mrf.mxu0
      %351 = vdwg.mxu0
      %352 = vst.msk [vmem:[%s210] sm:$0xff] %vm228, %v346
      %353 = vst.msk [vmem:[%s210 + $0x8] sm:$0xff] %vm228, %v349
      %354 = vrot.lane.b32.xlu0 %v222, 96
      %v355 = vpop.permute.xlu0 %354
      %356 = vrot.lane.b32.xlu0 %v227, 96
      %v357 = vpop.permute.xlu0 %356
      %v359 = vsel %vm228, %v355, 0
      %v362 = vsel %vm228, %v357, 0
      %364 = vmatprep.subr.bf16.mxu0 0
      %365 = vmatpush1.bf16.xpose.msra.mxu0 0
      %366 = vmatprep.subr.bf16.mxu0 0
      %367 = vmatpush1.bf16.xpose.msra.mxu0 0
      %368 = vmatprep.subr.bf16.mxu0 0
      %369 = vmatpush1.bf16.xpose.msra.mxu0 0
      %370 = vmatprep.subr.bf16.mxu0 0
      %371 = vmatpush1.bf16.xpose.msra.mxu0 0
      %372 = vmatprep.subr.bf16.mxu0 0
      %373 = vmatpush1.bf16.xpose.msra.mxu0 0
      %374 = vmatprep.subr.bf16.mxu0 0
      %375 = vmatpush1.bf16.xpose.msra.mxu0 0
      %376 = vmatprep.subr.bf16.mxu0 0
      %377 = vmatpush1.bf16.xpose.msra.mxu0 0
      %378 = vmatprep.subr.bf16.mxu0 0
      %379 = vmatpush1.bf16.xpose.msra.mxu0 %v362
      %380 = vmatprep.subr.bf16.mxu0 0
      %381 = vmatpush2.bf16.xpose.msra.mxu0 0
      %382 = vmatprep.subr.bf16.mxu0 0
      %383 = vmatpush2.bf16.xpose.msra.mxu0 0
      %384 = vmatprep.subr.bf16.mxu0 0
      %385 = vmatpush2.bf16.xpose.msra.mxu0 0
      %386 = vmatprep.subr.bf16.mxu0 0
      %387 = vmatpush2.bf16.xpose.msra.mxu0 0
      %388 = vmatprep.subr.bf16.mxu0 0
      %389 = vmatpush2.bf16.xpose.msra.mxu0 0
      %390 = vmatprep.subr.bf16.mxu0 0
      %391 = vmatpush2.bf16.xpose.msra.mxu0 0
      %392 = vmatprep.subr.bf16.mxu0 0
      %393 = vmatpush2.bf16.xpose.msra.mxu0 0
      %394 = vmatprep.subr.bf16.mxu0 0
      %395 = vmatpush2.bf16.xpose.msra.mxu0 0
      %396 = vmatprep.mubr.bf16.mxu0 0
      %397 = vmatmul.mubr.bf16.gmra.mxu0 %v359
      %v398 = vpop.f32.mrf.mxu0
      %v399 = vadd.f32 0.0, %v398
      %v400 = vpop.f32.mrf.mxu0
      %v401 = vpop.f32.mrf.mxu0
      %v402 = vadd.f32 0.0, %v401
      %v403 = vpop.f32.mrf.mxu0
      %404 = vdwg.mxu0
      %v405 = vmul.f32 %v399, 0.17677669
      %v406 = vmul.f32 %v402, 0.17677669
      %v407 = vsel %vm278, %v405, -inf
      %408 = vmax.xlane.f32.xlu0 %v407
      %v409 = vpop.xlane.xlu0 %408
      %v410 = vsel %vm278, %v406, -inf
      %411 = vmax.xlane.f32.xlu0 %v410
      %v412 = vpop.xlane.xlu0 %411
      %v413 = vsub.f32 %v405, %v409
      %v414 = vsub.f32 %v406, %v412
      %v415 = vmul.f32 %v413, 1.442695
      %v416 = vpow.pop %v415
      %v417 = vmul.f32 %v414, 1.442695
      %v418 = vpow.pop %v417
      %v419 = vsel %vm278, %v416, 0.0
      %420 = vadd.xlane.f32.xlu0 %v419
      %v421 = vpop.xlane.xlu0 %420
      %v422 = vsel %vm278, %v418, 0.0
      %423 = vadd.xlane.f32.xlu0 %v422
      %v424 = vpop.xlane.xlu0 %423
      %v425 = vrcp.pop %v421
      %v426 = vrcp.pop %v424
      %v427 = vmul.f32 %v416, %v425
      %v428 = vmul.f32 %v418, %v426
      %v429 = vpack.c.bf16 %v428, %v427
      %430 = vrot.lane.b32.xlu0 %v306, 96
      %v431 = vpop.permute.xlu0 %430
      %v434 = vsel %vm278, %v429, 0
      %436 = vmatprep.subr.bf16.mxu0 0
      %437 = vmatpush1.bf16.msra.mxu0 0
      %438 = vmatprep.subr.bf16.mxu0 0
      %439 = vmatpush1.bf16.msra.mxu0 0
      %440 = vmatprep.subr.bf16.mxu0 0
      %441 = vmatpush1.bf16.msra.mxu0 0
      %442 = vmatprep.subr.bf16.mxu0 0
      %443 = vmatpush1.bf16.msra.mxu0 0
      %444 = vmatprep.subr.bf16.mxu0 0
      %445 = vmatpush1.bf16.msra.mxu0 0
      %446 = vmatprep.subr.bf16.mxu0 0
      %447 = vmatpush1.bf16.msra.mxu0 0
      %448 = vmatprep.subr.bf16.mxu0 0
      %449 = vmatpush1.bf16.msra.mxu0 0
      %450 = vmatprep.subr.bf16.mxu0 0
      %451 = vmatpush1.bf16.msra.mxu0 %v431
      %452 = vmatprep.subr.bf16.mxu0 0
      %453 = vmatpush2.bf16.msra.mxu0 0
      %454 = vmatprep.subr.bf16.mxu0 0
      %455 = vmatpush2.bf16.msra.mxu0 0
      %456 = vmatprep.subr.bf16.mxu0 0
      %457 = vmatpush2.bf16.msra.mxu0 0
      %458 = vmatprep.subr.bf16.mxu0 0
      %459 = vmatpush2.bf16.msra.mxu0 0
      %460 = vmatprep.subr.bf16.mxu0 0
      %461 = vmatpush2.bf16.msra.mxu0 0
      %462 = vmatprep.subr.bf16.mxu0 0
      %463 = vmatpush2.bf16.msra.mxu0 0
      %464 = vmatprep.subr.bf16.mxu0 0
      %465 = vmatpush2.bf16.msra.mxu0 0
      %466 = vmatprep.subr.bf16.mxu0 0
      %467 = vmatpush2.bf16.msra.mxu0 0
      %468 = vmatprep.mubr.bf16.mxu0 0
      %469 = vmatmul.mubr.bf16.gmra.mxu0 %v434
      %v470 = vpop.f32.mrf.mxu0
      %v471 = vadd.f32 0.0, %v470
      %v472 = vpop.f32.mrf.mxu0
      %v473 = vpop.f32.mrf.mxu0
      %v474 = vadd.f32 0.0, %v473
      %v475 = vpop.f32.mrf.mxu0
      %476 = vdwg.mxu0
      %479 = vrot.lane.b32.xlu0 %v471, 32
      %v480 = vpop.permute.xlu0 %479
      %481 = vrot.lane.b32.xlu0 %v474, 32
      %v482 = vpop.permute.xlu0 %481
      %vm485 = vcmask 523520
      %486 = vst.msk [vmem:[%s210] sm:$0xff] %vm485, %v480
      %487 = vst.msk [vmem:[%s210 + $0x8] sm:$0xff] %vm485, %v482
      %p488 = scmp.lt.s32.totalorder %s14, 1
      %s489 = scalar_select %p488, %s14, 1
      %s490 = smul.addr %s489, 2
      %s491 = smul.addr %s490, 8
      %s492 = scalar_lea.vmem %s3, %s491
      // Predicated region
      $region33: #{medsam_forward.77} parent=31 // pred_check
        %p493 = pneg %p110
      $region34: #{medsam_forward.77} parent=31 // pred_check_branch
        %495 = sbr.rel (%p493) target = $region36
      $region35: #{medsam_forward.77} parent=31 // pred_region
        _
      $region36: #{medsam_forward.77} parent=31 // pred_fallthru
        _
    $region32: #{medsam_forward.77} parent=5 // pred_fallthru
      _
    %p496 = scmp.le.s32.totalorder 2, %s9
    // Predicated region
    $region37: #{medsam_forward.77} parent=5 // pred_check
      %p497 = pneg %p496
    $region38: #{medsam_forward.77} parent=5 // pred_check_branch
      %499 = sbr.rel (%p497) target = $region40
    $region39: #{medsam_forward.77} parent=5 // pred_region
      %s500 = ssub.s32 %s9, 2
      // Predicated region
      $region41: #{medsam_forward.77} parent=39 // pred_check
        %p501 = pneg %p116
      $region42: #{medsam_forward.77} parent=39 // pred_check_branch
        %503 = sbr.rel (%p501) target = $region44
      $region43: #{medsam_forward.77} parent=39 // pred_region
        %p504 = scmp.lt.s32.totalorder %s15, 1
        %s505 = scalar_select %p504, %s15, 1
        %s506 = smul.addr %s505, 2
        %s507 = smul.addr %s506, 8
        %s508 = scalar_lea.vmem %s3, %s507
      $region44: #{medsam_forward.77} parent=39 // pred_fallthru
        _
    $region40: #{medsam_forward.77} parent=5 // pred_fallthru
      _
  $region6: #{medsam_forward.77} parent=0 // loop_footer
    %s13 = sadd.s32 1, %s9
  $region7: #{medsam_forward.77} parent=0 // loop_footer_branch
    %8 = sbr.rel target = $region3
  $region8: #{medsam_forward.77} parent=0 // loop_exit
    _

// kernel: medsam_forward.80
$region0: #{medsam_forward.80}
  #allocation0 [shape = 'u32[]', space=smem, size = 0x4, offset = 0x4, fixed_abs, tag = 'smem constant byte address 0x4 - core index']
  #allocation1 [shape = 'u32[144,128]{1,0:T(1,128)}', space=vmem, size = 0x12000, scoped, tag = 'internal scratch']
  %s0 = inlined_call_operand.vmem [shape: bf16[32,64], index: 0, kind: input, shape index: {}]
  %s1 = inlined_call_operand.vmem [shape: bf16[256,64], index: 1, kind: input, shape index: {}]
  %s2 = inlined_call_operand.vmem [shape: f32[1,256], index: 2, kind: input, shape index: {}]
  %s3 = inlined_call_operand.vmem [shape: f32[32,256], index: 3, kind: output, shape index: {}]
  %s4 = sld [smem:[#allocation0]]
  $region22: #{medsam_forward.80} parent=0
    _
  %s6 = ssub.s32 1, %s4
  %s7 = scalar_select 0, %s6, %s4
  // Predicated region
  $region2: #{medsam_forward.80} parent=0 // pred_check
    _
  $region3: #{medsam_forward.80} parent=0 // pred_check_branch
    %9 = sbr.rel (0) target = $region5
  $region4: #{medsam_forward.80} parent=0 // pred_region
    _
  $region5: #{medsam_forward.80} parent=0 // pred_fallthru
    _
  // Predicated region
  $region6: #{medsam_forward.80} parent=0 // pred_check
    _
  $region7: #{medsam_forward.80} parent=0 // pred_check_branch
    %11 = sbr.rel (0) target = $region9
  $region8: #{medsam_forward.80} parent=0 // pred_region
    _
  $region9: #{medsam_forward.80} parent=0 // pred_fallthru
    _
  // Predicated region
  $region10: #{medsam_forward.80} parent=0 // pred_check
    _
  $region11: #{medsam_forward.80} parent=0 // pred_check_branch
    %13 = sbr.rel (0) target = $region13
  $region12: #{medsam_forward.80} parent=0 // pred_region
    _
  $region13: #{medsam_forward.80} parent=0 // pred_fallthru
    _
  %v15 = vld [vmem:[%s0] sm:$0xf]
  %v16 = vld [vmem:[%s0 + $0x4] sm:$0xf]
  %v17 = vld [vmem:[%s0 + $0x8] sm:$0xf]
  %v18 = vld [vmem:[%s0 + $0xc] sm:$0xf]
  %v19 = vld [vmem:[%s1] sm:$0xf]
  %v20 = vld [vmem:[%s1 + $0x4] sm:$0xf]
  %v21 = vld [vmem:[%s1 + $0x8] sm:$0xf]
  %v22 = vld [vmem:[%s1 + $0xc] sm:$0xf]
  %v23 = vld [vmem:[%s1 + $0x10] sm:$0xf]
  %v24 = vld [vmem:[%s1 + $0x14] sm:$0xf]
  %v25 = vld [vmem:[%s1 + $0x18] sm:$0xf]
  %v26 = vld [vmem:[%s1 + $0x1c] sm:$0xf]
  %v27 = vld [vmem:[%s1 + $0x20] sm:$0xf]
  %v28 = vld [vmem:[%s1 + $0x24] sm:$0xf]
  %v29 = vld [vmem:[%s1 + $0x28] sm:$0xf]
  %v30 = vld [vmem:[%s1 + $0x2c] sm:$0xf]
  %v31 = vld [vmem:[%s1 + $0x30] sm:$0xf]
  %v32 = vld [vmem:[%s1 + $0x34] sm:$0xf]
  %v33 = vld [vmem:[%s1 + $0x38] sm:$0xf]
  %v34 = vld [vmem:[%s1 + $0x3c] sm:$0xf]
  %v35 = vld [vmem:[%s1 + $0x40] sm:$0xf]
  %v36 = vld [vmem:[%s1 + $0x44] sm:$0xf]
  %v37 = vld [vmem:[%s1 + $0x48] sm:$0xf]
  %v38 = vld [vmem:[%s1 + $0x4c] sm:$0xf]
  %v39 = vld [vmem:[%s1 + $0x50] sm:$0xf]
  %v40 = vld [vmem:[%s1 + $0x54] sm:$0xf]
  %v41 = vld [vmem:[%s1 + $0x58] sm:$0xf]
  %v42 = vld [vmem:[%s1 + $0x5c] sm:$0xf]
  %v43 = vld [vmem:[%s1 + $0x60] sm:$0xf]
  %v44 = vld [vmem:[%s1 + $0x64] sm:$0xf]
  %v45 = vld [vmem:[%s1 + $0x68] sm:$0xf]
  %v46 = vld [vmem:[%s1 + $0x6c] sm:$0xf]
  %v47 = vld [vmem:[%s1 + $0x70] sm:$0xf]
  %v48 = vld [vmem:[%s1 + $0x74] sm:$0xf]
  %v49 = vld [vmem:[%s1 + $0x78] sm:$0xf]
  %v50 = vld [vmem:[%s1 + $0x7c] sm:$0xf]
  %v51 = vld [vmem:[%s2] sm:$0x3]
  %v53 = vlaneseq
  %v54 = vshrl.u32 %v53, 7
  %v55 = vsub.s32 0, %v54
  %v56 = vrot.slane %v51, %v55
  %v57 = vlaneseq
  %v58 = vshrl.u32 %v57, 7
  %v59 = vsub.s32 1, %v58
  %v60 = vrot.slane %v51, %v59
  %v67 = vunpack.c.l.b16 %v15
  %v68 = vunpack.c.l.b16 %v16
  %v69 = vunpack.c.l.b16 %v17
  %v70 = vunpack.c.l.b16 %v18
  %v71 = vpack.c.b16 %v68, %v67
  %v72 = vpack.c.b16 %v70, %v69
  %v105 = vunpack.c.l.b16 %v19
  %v106 = vunpack.c.l.b16 %v20
  %v107 = vunpack.c.l.b16 %v21
  %v108 = vunpack.c.l.b16 %v22
  %v109 = vunpack.c.l.b16 %v23
  %v110 = vunpack.c.l.b16 %v24
  %v111 = vunpack.c.l.b16 %v25
  %v112 = vunpack.c.l.b16 %v26
  %v113 = vunpack.c.l.b16 %v27
  %v114 = vunpack.c.l.b16 %v28
  %v115 = vunpack.c.l.b16 %v29
  %v116 = vunpack.c.l.b16 %v30
  %v117 = vunpack.c.l.b16 %v31
  %v118 = vunpack.c.l.b16 %v32
  %v119 = vunpack.c.l.b16 %v33
  %v120 = vunpack.c.l.b16 %v34
  %v121 = vunpack.c.l.b16 %v35
  %v122 = vunpack.c.l.b16 %v36
  %v123 = vunpack.c.l.b16 %v37
  %v124 = vunpack.c.l.b16 %v38
  %v125 = vunpack.c.l.b16 %v39
  %v126 = vunpack.c.l.b16 %v40
  %v127 = vunpack.c.l.b16 %v41
  %v128 = vunpack.c.l.b16 %v42
  %v129 = vunpack.c.l.b16 %v43
  %v130 = vunpack.c.l.b16 %v44
  %v131 = vunpack.c.l.b16 %v45
  %v132 = vunpack.c.l.b16 %v46
  %v133 = vunpack.c.l.b16 %v47
  %v134 = vunpack.c.l.b16 %v48
  %v135 = vunpack.c.l.b16 %v49
  %v136 = vunpack.c.l.b16 %v50
  %v137 = vpack.c.b16 %v106, %v105
  %v138 = vpack.c.b16 %v108, %v107
  %v139 = vpack.c.b16 %v110, %v109
  %v140 = vpack.c.b16 %v112, %v111
  %v141 = vpack.c.b16 %v114, %v113
  %v142 = vpack.c.b16 %v116, %v115
  %v143 = vpack.c.b16 %v118, %v117
  %v144 = vpack.c.b16 %v120, %v119
  %v145 = vpack.c.b16 %v122, %v121
  %v146 = vpack.c.b16 %v124, %v123
  %v147 = vpack.c.b16 %v126, %v125
  %v148 = vpack.c.b16 %v128, %v127
  %v149 = vpack.c.b16 %v130, %v129
  %v150 = vpack.c.b16 %v132, %v131
  %v151 = vpack.c.b16 %v134, %v133
  %v152 = vpack.c.b16 %v136, %v135
  %vm153 = vcmask 523264
  %v155 = vsel %vm153, %v71, 0
  %v158 = vsel %vm153, %v72, 0
  %v161 = vsel %vm153, %v137, 0
  %v164 = vsel %vm153, %v138, 0
  %v167 = vsel %vm153, %v139, 0
  %v170 = vsel %vm153, %v140, 0
  %v173 = vsel %vm153, %v141, 0
  %v176 = vsel %vm153, %v142, 0
  %v179 = vsel %vm153, %v143, 0
  %v182 = vsel %vm153, %v144, 0
  %v185 = vsel %vm153, %v145, 0
  %v188 = vsel %vm153, %v146, 0
  %v191 = vsel %vm153, %v147, 0
  %v194 = vsel %vm153, %v148, 0
  %v197 = vsel %vm153, %v149, 0
  %v200 = vsel %vm153, %v150, 0
  %v203 = vsel %vm153, %v151, 0
  %v206 = vsel %vm153, %v152, 0
  %208 = vmatprep.subr.bf16.mxu0 0
  %209 = vmatpush1.bf16.xpose.msra.mxu0 %v182
  %210 = vmatprep.subr.bf16.mxu0 0
  %211 = vmatpush1.bf16.xpose.msra.mxu0 %v179
  %212 = vmatprep.subr.bf16.mxu0 0
  %213 = vmatpush1.bf16.xpose.msra.mxu0 %v176
  %214 = vmatprep.subr.bf16.mxu0 0
  %215 = vmatpush1.bf16.xpose.msra.mxu0 %v173
  %216 = vmatprep.subr.bf16.mxu0 0
  %217 = vmatpush1.bf16.xpose.msra.mxu0 %v170
  %218 = vmatprep.subr.bf16.mxu0 0
  %219 = vmatpush1.bf16.xpose.msra.mxu0 %v167
  %220 = vmatprep.subr.bf16.mxu0 0
  %221 = vmatpush1.bf16.xpose.msra.mxu0 %v164
  %222 = vmatprep.subr.bf16.mxu0 0
  %223 = vmatpush1.bf16.xpose.msra.mxu0 %v161
  %224 = vmatprep.subr.bf16.mxu0 0
  %225 = vmatpush2.bf16.xpose.msra.mxu0 %v206
  %226 = vmatprep.subr.bf16.mxu0 0
  %227 = vmatpush2.bf16.xpose.msra.mxu0 %v203
  %228 = vmatprep.subr.bf16.mxu0 0
  %229 = vmatpush2.bf16.xpose.msra.mxu0 %v200
  %230 = vmatprep.subr.bf16.mxu0 0
  %231 = vmatpush2.bf16.xpose.msra.mxu0 %v197
  %232 = vmatprep.subr.bf16.mxu0 0
  %233 = vmatpush2.bf16.xpose.msra.mxu0 %v194
  %234 = vmatprep.subr.bf16.mxu0 0
  %235 = vmatpush2.bf16.xpose.msra.mxu0 %v191
  %236 = vmatprep.subr.bf16.mxu0 0
  %237 = vmatpush2.bf16.xpose.msra.mxu0 %v188
  %238 = vmatprep.subr.bf16.mxu0 0
  %239 = vmatpush2.bf16.xpose.msra.mxu0 %v185
  %240 = vmatprep.mubr.bf16.mxu0 0
  %241 = vmatmul.mubr.bf16.gmra.mxu0 %v155
  %v242 = vpop.f32.mrf.mxu0
  %v243 = vadd.f32 %v56, %v242
  %v244 = vpop.f32.mrf.mxu0
  %v245 = vadd.f32 %v60, %v244
  %v246 = vpop.f32.mrf.mxu0
  %v247 = vadd.f32 %v56, %v246
  %v248 = vpop.f32.mrf.mxu0
  %v249 = vadd.f32 %v60, %v248
  %250 = vmatprep.mubr.bf16.mxu0 0
  %251 = vmatmul.mubr.bf16.gmra.mxu0 %v158
  %v252 = vpop.f32.mrf.mxu0
  %v253 = vadd.f32 %v56, %v252
  %v254 = vpop.f32.mrf.mxu0
  %v255 = vadd.f32 %v60, %v254
  %v256 = vpop.f32.mrf.mxu0
  %v257 = vadd.f32 %v56, %v256
  %v258 = vpop.f32.mrf.mxu0
  %v259 = vadd.f32 %v60, %v258
  %260 = vdwg.mxu0
  %v261 = vmul.f32 %v243, 0.5
  %v262 = vmul.f32 %v245, 0.5
  %v263 = vmul.f32 %v247, 0.5
  %v264 = vmul.f32 %v249, 0.5
  %v265 = vmul.f32 %v253, 0.5
  %v266 = vmul.f32 %v255, 0.5
  %v267 = vmul.f32 %v257, 0.5
  %v268 = vmul.f32 %v259, 0.5
  %v269 = vmul.f32 %v243, 0.044715
  %v270 = vmul.f32 %v245, 0.044715
  %v271 = vmul.f32 %v247, 0.044715
  %v272 = vmul.f32 %v249, 0.044715
  %v273 = vmul.f32 %v253, 0.044715
  %v274 = vmul.f32 %v255, 0.044715
  %v275 = vmul.f32 %v257, 0.044715
  %v276 = vmul.f32 %v259, 0.044715
  %v277 = vmul.f32 %v269, %v243
  %v278 = vmul.f32 %v270, %v245
  %v279 = vmul.f32 %v271, %v247
  %v280 = vmul.f32 %v272, %v249
  %v281 = vmul.f32 %v273, %v253
  %v282 = vmul.f32 %v274, %v255
  %v283 = vmul.f32 %v275, %v257
  %v284 = vmul.f32 %v276, %v259
  %v285 = vmul.f32 %v277, %v243
  %v286 = vmul.f32 %v278, %v245
  %v287 = vmul.f32 %v279, %v247
  %v288 = vmul.f32 %v280, %v249
  %v289 = vmul.f32 %v281, %v253
  %v290 = vmul.f32 %v282, %v255
  %v291 = vmul.f32 %v283, %v257
  %v292 = vmul.f32 %v284, %v259
  %v293 = vadd.f32 %v243, %v285
  %v294 = vadd.f32 %v245, %v286
  %v295 = vadd.f32 %v247, %v287
  %v296 = vadd.f32 %v249, %v288
  %v297 = vadd.f32 %v253, %v289
  %v298 = vadd.f32 %v255, %v290
  %v299 = vadd.f32 %v257, %v291
  %v300 = vadd.f32 %v259, %v292
  %v301 = vmul.f32 %v293, 0.7978846
  %v302 = vmul.f32 %v294, 0.7978846
  %v303 = vmul.f32 %v295, 0.7978846
  %v304 = vmul.f32 %v296, 0.7978846
  %v305 = vmul.f32 %v297, 0.7978846
  %v306 = vmul.f32 %v298, 0.7978846
  %v307 = vmul.f32 %v299, 0.7978846
  %v308 = vmul.f32 %v300, 0.7978846
  %v309 = vtanh.pop %v301
  %v310 = vtanh.pop %v302
  %v311 = vtanh.pop %v303
  %v312 = vtanh.pop %v304
  %v313 = vtanh.pop %v305
  %v314 = vtanh.pop %v306
  %v315 = vtanh.pop %v307
  %v316 = vtanh.pop %v308
  %v317 = vadd.f32 %v309, 1.0
  %v318 = vadd.f32 %v310, 1.0
  %v319 = vadd.f32 %v311, 1.0
  %v320 = vadd.f32 %v312, 1.0
  %v321 = vadd.f32 %v313, 1.0
  %v322 = vadd.f32 %v314, 1.0
  %v323 = vadd.f32 %v315, 1.0
  %v324 = vadd.f32 %v316, 1.0
  %v325 = vmul.f32 %v261, %v317
  %v326 = vmul.f32 %v262, %v318
  %v327 = vmul.f32 %v263, %v319
  %v328 = vmul.f32 %v264, %v320
  %v329 = vmul.f32 %v265, %v321
  %v330 = vmul.f32 %v266, %v322
  %v331 = vmul.f32 %v267, %v323
  %v332 = vmul.f32 %v268, %v324
  %333 = vst [vmem:[%s3] sm:$0xff] %v325
  %334 = vst [vmem:[%s3 + $0x8] sm:$0xff] %v326
  %335 = vst [vmem:[%s3 + $0x10] sm:$0xff] %v327
  %336 = vst [vmem:[%s3 + $0x18] sm:$0xff] %v328
  %337 = vst [vmem:[%s3 + $0x20] sm:$0xff] %v329
  %338 = vst [vmem:[%s3 + $0x28] sm:$0xff] %v330
  %339 = vst [vmem:[%s3 + $0x30] sm:$0xff] %v331
  %340 = vst [vmem:[%s3 + $0x38] sm:$0xff] %v332
  // Predicated region
  $region14: #{medsam_forward.80} parent=0 // pred_check
    _
  $region15: #{medsam_forward.80} parent=0 // pred_check_branch
    %342 = sbr.rel (0) target = $region17
  $region16: #{medsam_forward.80} parent=0 // pred_region
    _
  $region17: #{medsam_forward.80} parent=0 // pred_fallthru
    _
  // Predicated region
  $region18: #{medsam_forward.80} parent=0 // pred_check
    _
  $region19: #{medsam_forward.80} parent=0 // pred_check_branch
    %344 = sbr.rel (0) target = $region21
  $region20: #{medsam_forward.80} parent=0 // pred_region
    _
  $region21: #{medsam_forward.80} parent=0 // pred_fallthru
    _

// kernel: medsam_forward.81
$region0: #{medsam_forward.81}
  #allocation0 [shape = 'u32[]', space=smem, size = 0x4, offset = 0x4, fixed_abs, tag = 'smem constant byte address 0x4 - core index']
  #allocation1 [shape = 'u32[144,128]{1,0:T(1,128)}', space=vmem, size = 0x12000, scoped, tag = 'internal scratch']
  %s0 = inlined_call_operand.vmem [shape: bf16[32,256], index: 0, kind: input, shape index: {}]
  %s1 = inlined_call_operand.vmem [shape: bf16[64,256], index: 1, kind: input, shape index: {}]
  %s2 = inlined_call_operand.vmem [shape: f32[1,64], index: 2, kind: input, shape index: {}]
  %s3 = inlined_call_operand.vmem [shape: f32[32,64], index: 3, kind: output, shape index: {}]
  %s4 = sld [smem:[#allocation0]]
  $region22: #{medsam_forward.81} parent=0
    _
  %s6 = ssub.s32 1, %s4
  %s7 = scalar_select 0, %s6, %s4
  // Predicated region
  $region2: #{medsam_forward.81} parent=0 // pred_check
    _
  $region3: #{medsam_forward.81} parent=0 // pred_check_branch
    %9 = sbr.rel (0) target = $region5
  $region4: #{medsam_forward.81} parent=0 // pred_region
    _
  $region5: #{medsam_forward.81} parent=0 // pred_fallthru
    _
  // Predicated region
  $region6: #{medsam_forward.81} parent=0 // pred_check
    _
  $region7: #{medsam_forward.81} parent=0 // pred_check_branch
    %11 = sbr.rel (0) target = $region9
  $region8: #{medsam_forward.81} parent=0 // pred_region
    _
  $region9: #{medsam_forward.81} parent=0 // pred_fallthru
    _
  // Predicated region
  $region10: #{medsam_forward.81} parent=0 // pred_check
    _
  $region11: #{medsam_forward.81} parent=0 // pred_check_branch
    %13 = sbr.rel (0) target = $region13
  $region12: #{medsam_forward.81} parent=0 // pred_region
    _
  $region13: #{medsam_forward.81} parent=0 // pred_fallthru
    _
  %v15 = vld [vmem:[%s0] sm:$0xff]
  %v16 = vld [vmem:[%s0 + $0x8] sm:$0xff]
  %v17 = vld [vmem:[%s0 + $0x10] sm:$0xff]
  %v18 = vld [vmem:[%s0 + $0x18] sm:$0xff]
  %v19 = vld [vmem:[%s1] sm:$0xff]
  %v20 = vld [vmem:[%s1 + $0x8] sm:$0xff]
  %v21 = vld [vmem:[%s1 + $0x10] sm:$0xff]
  %v22 = vld [vmem:[%s1 + $0x18] sm:$0xff]
  %v23 = vld [vmem:[%s1 + $0x20] sm:$0xff]
  %v24 = vld [vmem:[%s1 + $0x28] sm:$0xff]
  %v25 = vld [vmem:[%s1 + $0x30] sm:$0xff]
  %v26 = vld [vmem:[%s1 + $0x38] sm:$0xff]
  %v27 = vld [vmem:[%s2] sm:$0x1]
  %v29 = vlaneseq
  %v30 = vshrl.u32 %v29, 7
  %v31 = vsub.s32 0, %v30
  %v32 = vrot.slane %v27, %v31
  %v38 = vunpack.c.l.b16 %v15
  %v39 = vunpack.c.h.b16 %v15
  %v40 = vunpack.c.l.b16 %v16
  %v41 = vunpack.c.h.b16 %v16
  %v42 = vunpack.c.l.b16 %v17
  %v43 = vunpack.c.h.b16 %v17
  %v44 = vunpack.c.l.b16 %v18
  %v45 = vunpack.c.h.b16 %v18
  %v46 = vpack.c.b16 %v40, %v38
  %v47 = vpack.c.b16 %v41, %v39
  %v48 = vpack.c.b16 %v44, %v42
  %v49 = vpack.c.b16 %v45, %v43
  %v62 = vunpack.c.l.b16 %v19
  %v63 = vunpack.c.h.b16 %v19
  %v64 = vunpack.c.l.b16 %v20
  %v65 = vunpack.c.h.b16 %v20
  %v66 = vunpack.c.l.b16 %v21
  %v67 = vunpack.c.h.b16 %v21
  %v68 = vunpack.c.l.b16 %v22
  %v69 = vunpack.c.h.b16 %v22
  %v70 = vunpack.c.l.b16 %v23
  %v71 = vunpack.c.h.b16 %v23
  %v72 = vunpack.c.l.b16 %v24
  %v73 = vunpack.c.h.b16 %v24
  %v74 = vunpack.c.l.b16 %v25
  %v75 = vunpack.c.h.b16 %v25
  %v76 = vunpack.c.l.b16 %v26
  %v77 = vunpack.c.h.b16 %v26
  %v78 = vpack.c.b16 %v64, %v62
  %v79 = vpack.c.b16 %v65, %v63
  %v80 = vpack.c.b16 %v68, %v66
  %v81 = vpack.c.b16 %v69, %v67
  %v82 = vpack.c.b16 %v72, %v70
  %v83 = vpack.c.b16 %v73, %v71
  %v84 = vpack.c.b16 %v76, %v74
  %v85 = vpack.c.b16 %v77, %v75
  %94 = vmatprep.subr.bf16.mxu0 0
  %95 = vmatpush1.bf16.xpose.msra.mxu0 0
  %96 = vmatprep.subr.bf16.mxu0 0
  %97 = vmatpush1.bf16.xpose.msra.mxu0 0
  %98 = vmatprep.subr.bf16.mxu0 0
  %99 = vmatpush1.bf16.xpose.msra.mxu0 0
  %100 = vmatprep.subr.bf16.mxu0 0
  %101 = vmatpush1.bf16.xpose.msra.mxu0 0
  %102 = vmatprep.subr.bf16.mxu0 %v85
  %103 = vmatpush1.bf16.xpose.msra.mxu0 %v84
  %104 = vmatprep.subr.bf16.mxu0 %v83
  %105 = vmatpush1.bf16.xpose.msra.mxu0 %v82
  %106 = vmatprep.subr.bf16.mxu0 %v81
  %107 = vmatpush1.bf16.xpose.msra.mxu0 %v80
  %108 = vmatprep.subr.bf16.mxu0 %v79
  %109 = vmatpush1.bf16.xpose.msra.mxu0 %v78
  %110 = vmatprep.subr.bf16.mxu0 0
  %111 = vmatpush2.bf16.xpose.msra.mxu0 0
  %112 = vmatprep.subr.bf16.mxu0 0
  %113 = vmatpush2.bf16.xpose.msra.mxu0 0
  %114 = vmatprep.subr.bf16.mxu0 0
  %115 = vmatpush2.bf16.xpose.msra.mxu0 0
  %116 = vmatprep.subr.bf16.mxu0 0
  %117 = vmatpush2.bf16.xpose.msra.mxu0 0
  %118 = vmatprep.subr.bf16.mxu0 0
  %119 = vmatpush2.bf16.xpose.msra.mxu0 0
  %120 = vmatprep.subr.bf16.mxu0 0
  %121 = vmatpush2.bf16.xpose.msra.mxu0 0
  %122 = vmatprep.subr.bf16.mxu0 0
  %123 = vmatpush2.bf16.xpose.msra.mxu0 0
  %124 = vmatprep.subr.bf16.mxu0 0
  %125 = vmatpush2.bf16.xpose.msra.mxu0 0
  %126 = vmatprep.mubr.bf16.mxu0 %v47
  %127 = vmatmul.mubr.bf16.gmra.mxu0 %v46
  %v128 = vpop.f32.mrf.mxu0
  %v129 = vadd.f32 %v32, %v128
  %v130 = vpop.f32.mrf.mxu0
  %v131 = vpop.f32.mrf.mxu0
  %v132 = vadd.f32 %v32, %v131
  %v133 = vpop.f32.mrf.mxu0
  %134 = vmatprep.mubr.bf16.mxu0 %v49
  %135 = vmatmul.mubr.bf16.gmra.mxu0 %v48
  %v136 = vpop.f32.mrf.mxu0
  %v137 = vadd.f32 %v32, %v136
  %v138 = vpop.f32.mrf.mxu0
  %v139 = vpop.f32.mrf.mxu0
  %v140 = vadd.f32 %v32, %v139
  %v141 = vpop.f32.mrf.mxu0
  %142 = vdwg.mxu0
  %vm143 = vcmask 523264
  %144 = vst.msk [vmem:[%s3] sm:$0xff] %vm143, %v129
  %145 = vst.msk [vmem:[%s3 + $0x8] sm:$0xff] %vm143, %v132
  %146 = vst.msk [vmem:[%s3 + $0x10] sm:$0xff] %vm143, %v137
  %147 = vst.msk [vmem:[%s3 + $0x18] sm:$0xff] %vm143, %v140
  // Predicated region
  $region14: #{medsam_forward.81} parent=0 // pred_check
    _
  $region15: #{medsam_forward.81} parent=0 // pred_check_branch
    %149 = sbr.rel (0) target = $region17
  $region16: #{medsam_forward.81} parent=0 // pred_region
    _
  $region17: #{medsam_forward.81} parent=0 // pred_fallthru
    _
  // Predicated region
  $region18: #{medsam_forward.81} parent=0 // pred_check
    _
  $region19: #{medsam_forward.81} parent=0 // pred_check_branch
    %151 = sbr.rel (0) target = $region21
  $region20: #{medsam_forward.81} parent=0 // pred_region
    _
  $region21: #{medsam_forward.81} parent=0 // pred_fallthru
    _

// kernel: medsam_forward.89
$region0: #{medsam_forward.89}
  #allocation0 [shape = 'u32[]', space=smem, size = 0x4, offset = 0x4, fixed_abs, tag = 'smem constant byte address 0x4 - core index']
  #allocation1 [shape = 'u32[144,128]{1,0:T(1,128)}', space=vmem, size = 0x12000, scoped, tag = 'internal scratch']
  %s0 = inlined_call_operand.vmem [shape: bf16[32,64], index: 0, kind: input, shape index: {}]
  %s1 = inlined_call_operand.vmem [shape: bf16[32,64], index: 1, kind: input, shape index: {}]
  %s2 = inlined_call_operand.vmem [shape: f32[1,32], index: 2, kind: input, shape index: {}]
  %s3 = inlined_call_operand.vmem [shape: f32[32,32], index: 3, kind: output, shape index: {}]
  %s4 = sld [smem:[#allocation0]]
  $region22: #{medsam_forward.89} parent=0
    _
  %s6 = ssub.s32 1, %s4
  %s7 = scalar_select 0, %s6, %s4
  // Predicated region
  $region2: #{medsam_forward.89} parent=0 // pred_check
    _
  $region3: #{medsam_forward.89} parent=0 // pred_check_branch
    %9 = sbr.rel (0) target = $region5
  $region4: #{medsam_forward.89} parent=0 // pred_region
    _
  $region5: #{medsam_forward.89} parent=0 // pred_fallthru
    _
  // Predicated region
  $region6: #{medsam_forward.89} parent=0 // pred_check
    _
  $region7: #{medsam_forward.89} parent=0 // pred_check_branch
    %11 = sbr.rel (0) target = $region9
  $region8: #{medsam_forward.89} parent=0 // pred_region
    _
  $region9: #{medsam_forward.89} parent=0 // pred_fallthru
    _
  // Predicated region
  $region10: #{medsam_forward.89} parent=0 // pred_check
    _
  $region11: #{medsam_forward.89} parent=0 // pred_check_branch
    %13 = sbr.rel (0) target = $region13
  $region12: #{medsam_forward.89} parent=0 // pred_region
    _
  $region13: #{medsam_forward.89} parent=0 // pred_fallthru
    _
  %v15 = vld [vmem:[%s0] sm:$0xf]
  %v16 = vld [vmem:[%s0 + $0x4] sm:$0xf]
  %v17 = vld [vmem:[%s0 + $0x8] sm:$0xf]
  %v18 = vld [vmem:[%s0 + $0xc] sm:$0xf]
  %v19 = vld [vmem:[%s1] sm:$0xf]
  %v20 = vld [vmem:[%s1 + $0x4] sm:$0xf]
  %v21 = vld [vmem:[%s1 + $0x8] sm:$0xf]
  %v22 = vld [vmem:[%s1 + $0xc] sm:$0xf]
  %v23 = vld [vmem:[%s2] sm:$0x1]
  %v25 = vlaneseq
  %v26 = vshrl.u32 %v25, 7
  %v27 = vsub.s32 0, %v26
  %v28 = vrot.slane %v23, %v27
  %v34 = vunpack.c.l.b16 %v15
  %v35 = vunpack.c.l.b16 %v16
  %v36 = vunpack.c.l.b16 %v17
  %v37 = vunpack.c.l.b16 %v18
  %v38 = vpack.c.b16 %v35, %v34
  %v39 = vpack.c.b16 %v37, %v36
  %v44 = vunpack.c.l.b16 %v19
  %v45 = vunpack.c.l.b16 %v20
  %v46 = vunpack.c.l.b16 %v21
  %v47 = vunpack.c.l.b16 %v22
  %v48 = vpack.c.b16 %v45, %v44
  %v49 = vpack.c.b16 %v47, %v46
  %vm50 = vcmask 523264
  %v52 = vsel %vm50, %v38, 0
  %v55 = vsel %vm50, %v39, 0
  %v58 = vsel %vm50, %v48, 0
  %v61 = vsel %vm50, %v49, 0
  %63 = vmatprep.subr.bf16.mxu0 0
  %64 = vmatpush1.bf16.xpose.msra.mxu0 0
  %65 = vmatprep.subr.bf16.mxu0 0
  %66 = vmatpush1.bf16.xpose.msra.mxu0 0
  %67 = vmatprep.subr.bf16.mxu0 0
  %68 = vmatpush1.bf16.xpose.msra.mxu0 0
  %69 = vmatprep.subr.bf16.mxu0 0
  %70 = vmatpush1.bf16.xpose.msra.mxu0 0
  %71 = vmatprep.subr.bf16.mxu0 0
  %72 = vmatpush1.bf16.xpose.msra.mxu0 0
  %73 = vmatprep.subr.bf16.mxu0 0
  %74 = vmatpush1.bf16.xpose.msra.mxu0 0
  %75 = vmatprep.subr.bf16.mxu0 0
  %76 = vmatpush1.bf16.xpose.msra.mxu0 %v61
  %77 = vmatprep.subr.bf16.mxu0 0
  %78 = vmatpush1.bf16.xpose.msra.mxu0 %v58
  %79 = vmatprep.subr.bf16.mxu0 0
  %80 = vmatpush2.bf16.xpose.msra.mxu0 0
  %81 = vmatprep.subr.bf16.mxu0 0
  %82 = vmatpush2.bf16.xpose.msra.mxu0 0
  %83 = vmatprep.subr.bf16.mxu0 0
  %84 = vmatpush2.bf16.xpose.msra.mxu0 0
  %85 = vmatprep.subr.bf16.mxu0 0
  %86 = vmatpush2.bf16.xpose.msra.mxu0 0
  %87 = vmatprep.subr.bf16.mxu0 0
  %88 = vmatpush2.bf16.xpose.msra.mxu0 0
  %89 = vmatprep.subr.bf16.mxu0 0
  %90 = vmatpush2.bf16.xpose.msra.mxu0 0
  %91 = vmatprep.subr.bf16.mxu0 0
  %92 = vmatpush2.bf16.xpose.msra.mxu0 0
  %93 = vmatprep.subr.bf16.mxu0 0
  %94 = vmatpush2.bf16.xpose.msra.mxu0 0
  %95 = vmatprep.mubr.bf16.mxu0 0
  %96 = vmatmul.mubr.bf16.gmra.mxu0 %v52
  %v97 = vpop.f32.mrf.mxu0
  %v98 = vadd.f32 %v28, %v97
  %v99 = vpop.f32.mrf.mxu0
  %v100 = vpop.f32.mrf.mxu0
  %v101 = vadd.f32 %v28, %v100
  %v102 = vpop.f32.mrf.mxu0
  %103 = vmatprep.mubr.bf16.mxu0 0
  %104 = vmatmul.mubr.bf16.gmra.mxu0 %v55
  %v105 = vpop.f32.mrf.mxu0
  %v106 = vadd.f32 %v28, %v105
  %v107 = vpop.f32.mrf.mxu0
  %v108 = vpop.f32.mrf.mxu0
  %v109 = vadd.f32 %v28, %v108
  %v110 = vpop.f32.mrf.mxu0
  %111 = vdwg.mxu0
  %vm112 = vcmask 261120
  %113 = vst.msk [vmem:[%s3] sm:$0xff] %vm112, %v98
  %114 = vst.msk [vmem:[%s3 + $0x8] sm:$0xff] %vm112, %v101
  %115 = vst.msk [vmem:[%s3 + $0x10] sm:$0xff] %vm112, %v106
  %116 = vst.msk [vmem:[%s3 + $0x18] sm:$0xff] %vm112, %v109
  // Predicated region
  $region14: #{medsam_forward.89} parent=0 // pred_check
    _
  $region15: #{medsam_forward.89} parent=0 // pred_check_branch
    %118 = sbr.rel (0) target = $region17
  $region16: #{medsam_forward.89} parent=0 // pred_region
    _
  $region17: #{medsam_forward.89} parent=0 // pred_fallthru
    _
  // Predicated region
  $region18: #{medsam_forward.89} parent=0 // pred_check
    _
  $region19: #{medsam_forward.89} parent=0 // pred_check_branch
    %120 = sbr.rel (0) target = $region21
  $region20: #{medsam_forward.89} parent=0 // pred_region
    _
  $region21: #{medsam_forward.89} parent=0 // pred_fallthru
    _

// kernel: medsam_forward.90
$region0: #{medsam_forward.90}
  #allocation0 [shape = 'u32[]', space=smem, size = 0x4, offset = 0x4, fixed_abs, tag = 'smem constant byte address 0x4 - core index']
  #allocation1 [shape = 'u32[144,128]{1,0:T(1,128)}', space=vmem, size = 0x12000, scoped, tag = 'internal scratch']
  %s0 = inlined_call_operand.vmem [shape: f32[32,32], index: 0, kind: input, shape index: {}]
  %s1 = inlined_call_operand.vmem [shape: f32[1,32], index: 1, kind: input, shape index: {}]
  %s2 = inlined_call_operand.vmem [shape: f32[1,32], index: 2, kind: input, shape index: {}]
  %s3 = inlined_call_operand.vmem [shape: f32[32,32], index: 3, kind: output, shape index: {}]
  %s4 = sld [smem:[#allocation0]]
  $region22: #{medsam_forward.90} parent=0
    _
  %s6 = ssub.s32 1, %s4
  %s7 = scalar_select 0, %s6, %s4
  // Predicated region
  $region2: #{medsam_forward.90} parent=0 // pred_check
    _
  $region3: #{medsam_forward.90} parent=0 // pred_check_branch
    %9 = sbr.rel (0) target = $region5
  $region4: #{medsam_forward.90} parent=0 // pred_region
    _
  $region5: #{medsam_forward.90} parent=0 // pred_fallthru
    _
  // Predicated region
  $region6: #{medsam_forward.90} parent=0 // pred_check
    _
  $region7: #{medsam_forward.90} parent=0 // pred_check_branch
    %11 = sbr.rel (0) target = $region9
  $region8: #{medsam_forward.90} parent=0 // pred_region
    _
  $region9: #{medsam_forward.90} parent=0 // pred_fallthru
    _
  // Predicated region
  $region10: #{medsam_forward.90} parent=0 // pred_check
    _
  $region11: #{medsam_forward.90} parent=0 // pred_check_branch
    %13 = sbr.rel (0) target = $region13
  $region12: #{medsam_forward.90} parent=0 // pred_region
    _
  $region13: #{medsam_forward.90} parent=0 // pred_fallthru
    _
  %v14 = vld [vmem:[%s0] sm:$0xff]
  %v15 = vld [vmem:[%s0 + $0x8] sm:$0xff]
  %v16 = vld [vmem:[%s0 + $0x10] sm:$0xff]
  %v17 = vld [vmem:[%s0 + $0x18] sm:$0xff]
  %vm18 = vcmask 261120
  %v19 = vsel %vm18, %v14, 0.0
  %20 = vadd.xlane.f32.xlu0 %v19
  %v21 = vpop.xlane.xlu0 %20
  %v22 = vsel %vm18, %v15, 0.0
  %23 = vadd.xlane.f32.xlu0 %v22
  %v24 = vpop.xlane.xlu0 %23
  %v25 = vsel %vm18, %v16, 0.0
  %26 = vadd.xlane.f32.xlu0 %v25
  %v27 = vpop.xlane.xlu0 %26
  %v28 = vsel %vm18, %v17, 0.0
  %29 = vadd.xlane.f32.xlu0 %v28
  %v30 = vpop.xlane.xlu0 %29
  %v31 = vrcp.pop 32.0
  %v32 = vmul.f32 %v21, %v31
  %v33 = vmul.f32 %v24, %v31
  %v34 = vmul.f32 %v27, %v31
  %v35 = vmul.f32 %v30, %v31
  %v36 = vsub.f32 %v14, %v32
  %v37 = vsub.f32 %v15, %v33
  %v38 = vsub.f32 %v16, %v34
  %v39 = vsub.f32 %v17, %v35
  %v40 = vmul.f32 %v36, %v36
  %v41 = vmul.f32 %v37, %v37
  %v42 = vmul.f32 %v38, %v38
  %v43 = vmul.f32 %v39, %v39
  %v44 = vsel %vm18, %v40, 0.0
  %45 = vadd.xlane.f32.xlu0 %v44
  %v46 = vpop.xlane.xlu0 %45
  %v47 = vsel %vm18, %v41, 0.0
  %48 = vadd.xlane.f32.xlu0 %v47
  %v49 = vpop.xlane.xlu0 %48
  %v50 = vsel %vm18, %v42, 0.0
  %51 = vadd.xlane.f32.xlu0 %v50
  %v52 = vpop.xlane.xlu0 %51
  %v53 = vsel %vm18, %v43, 0.0
  %54 = vadd.xlane.f32.xlu0 %v53
  %v55 = vpop.xlane.xlu0 %54
  %v56 = vmul.f32 %v46, %v31
  %v57 = vmul.f32 %v49, %v31
  %v58 = vmul.f32 %v52, %v31
  %v59 = vmul.f32 %v55, %v31
  %v60 = vadd.f32 %v56, 1e-06
  %v61 = vadd.f32 %v57, 1e-06
  %v62 = vadd.f32 %v58, 1e-06
  %v63 = vadd.f32 %v59, 1e-06
  %v64 = vrsqrt.pop %v60
  %v65 = vrsqrt.pop %v61
  %v66 = vrsqrt.pop %v62
  %v67 = vrsqrt.pop %v63
  %v68 = vmul.f32 %v36, %v64
  %v69 = vmul.f32 %v37, %v65
  %v70 = vmul.f32 %v38, %v66
  %v71 = vmul.f32 %v39, %v67
  %v72 = vld [vmem:[%s1] sm:$0x1]
  %v74 = vlaneseq
  %v75 = vshrl.u32 %v74, 7
  %v76 = vsub.s32 0, %v75
  %v77 = vrot.slane %v72, %v76
  %v79 = vmul.f32 %v68, %v77
  %v80 = vmul.f32 %v69, %v77
  %v81 = vmul.f32 %v70, %v77
  %v82 = vmul.f32 %v71, %v77
  %v83 = vld [vmem:[%s2] sm:$0x1]
  %v85 = vlaneseq
  %v86 = vshrl.u32 %v85, 7
  %v87 = vsub.s32 0, %v86
  %v88 = vrot.slane %v83, %v87
  %v90 = vadd.f32 %v79, %v88
  %v91 = vadd.f32 %v80, %v88
  %v92 = vadd.f32 %v81, %v88
  %v93 = vadd.f32 %v82, %v88
  %94 = vst.msk [vmem:[%s3] sm:$0xff] %vm18, %v90
  %95 = vst.msk [vmem:[%s3 + $0x8] sm:$0xff] %vm18, %v91
  %96 = vst.msk [vmem:[%s3 + $0x10] sm:$0xff] %vm18, %v92
  %97 = vst.msk [vmem:[%s3 + $0x18] sm:$0xff] %vm18, %v93
  // Predicated region
  $region14: #{medsam_forward.90} parent=0 // pred_check
    _
  $region15: #{medsam_forward.90} parent=0 // pred_check_branch
    %99 = sbr.rel (0) target = $region17
  $region16: #{medsam_forward.90} parent=0 // pred_region
    _
  $region17: #{medsam_forward.90} parent=0 // pred_fallthru
    _
  // Predicated region
  $region18: #{medsam_forward.90} parent=0 // pred_check
    _
  $region19: #{medsam_forward.90} parent=0 // pred_check_branch
    %101 = sbr.rel (0) target = $region21
  $region20: #{medsam_forward.90} parent=0 // pred_region
    _
  $region21: #{medsam_forward.90} parent=0 // pred_fallthru
    _

// kernel: medsam_forward.91
$region0: #{medsam_forward.91}
  #allocation0 [shape = 'u32[]', space=smem, size = 0x4, offset = 0x4, fixed_abs, tag = 'smem constant byte address 0x4 - core index']
  #allocation1 [shape = 'u32[144,128]{1,0:T(1,128)}', space=vmem, size = 0x12000, scoped, tag = 'internal scratch']
  %s0 = inlined_call_operand.vmem [shape: bf16[32,288], index: 0, kind: input, shape index: {}]
  %s1 = inlined_call_operand.vmem [shape: bf16[32,288], index: 1, kind: input, shape index: {}]
  %s2 = inlined_call_operand.vmem [shape: f32[1,32], index: 2, kind: input, shape index: {}]
  %s3 = inlined_call_operand.vmem [shape: f32[32,32], index: 3, kind: output, shape index: {}]
  %s4 = sld [smem:[#allocation0]]
  $region22: #{medsam_forward.91} parent=0
    _
  %s6 = ssub.s32 1, %s4
  %s7 = scalar_select 0, %s6, %s4
  // Predicated region
  $region2: #{medsam_forward.91} parent=0 // pred_check
    _
  $region3: #{medsam_forward.91} parent=0 // pred_check_branch
    %9 = sbr.rel (0) target = $region5
  $region4: #{medsam_forward.91} parent=0 // pred_region
    _
  $region5: #{medsam_forward.91} parent=0 // pred_fallthru
    _
  // Predicated region
  $region6: #{medsam_forward.91} parent=0 // pred_check
    _
  $region7: #{medsam_forward.91} parent=0 // pred_check_branch
    %11 = sbr.rel (0) target = $region9
  $region8: #{medsam_forward.91} parent=0 // pred_region
    _
  $region9: #{medsam_forward.91} parent=0 // pred_fallthru
    _
  // Predicated region
  $region10: #{medsam_forward.91} parent=0 // pred_check
    _
  $region11: #{medsam_forward.91} parent=0 // pred_check_branch
    %13 = sbr.rel (0) target = $region13
  $region12: #{medsam_forward.91} parent=0 // pred_region
    _
  $region13: #{medsam_forward.91} parent=0 // pred_fallthru
    _
  %v15 = vld [vmem:[%s0] sm:$0xff]
  %v16 = vld [vmem:[%s0 + $0x8] sm:$0xf]
  %v17 = vld [vmem:[%s0 + $0xc] sm:$0xff]
  %v18 = vld [vmem:[%s0 + $0x14] sm:$0xf]
  %v19 = vld [vmem:[%s0 + $0x18] sm:$0xff]
  %v20 = vld [vmem:[%s0 + $0x20] sm:$0xf]
  %v21 = vld [vmem:[%s0 + $0x24] sm:$0xff]
  %v22 = vld [vmem:[%s0 + $0x2c] sm:$0xf]
  %v23 = vld [vmem:[%s1] sm:$0xff]
  %v24 = vld [vmem:[%s1 + $0x8] sm:$0xf]
  %v25 = vld [vmem:[%s1 + $0xc] sm:$0xff]
  %v26 = vld [vmem:[%s1 + $0x14] sm:$0xf]
  %v27 = vld [vmem:[%s1 + $0x18] sm:$0xff]
  %v28 = vld [vmem:[%s1 + $0x20] sm:$0xf]
  %v29 = vld [vmem:[%s1 + $0x24] sm:$0xff]
  %v30 = vld [vmem:[%s1 + $0x2c] sm:$0xf]
  %v31 = vld [vmem:[%s2] sm:$0x1]
  %v33 = vlaneseq
  %v34 = vshrl.u32 %v33, 7
  %v35 = vsub.s32 0, %v34
  %v36 = vrot.slane %v31, %v35
  %v46 = vunpack.c.l.b16 %v15
  %v47 = vunpack.c.h.b16 %v15
  %v48 = vunpack.c.l.b16 %v16
  %v49 = vunpack.c.l.b16 %v17
  %v50 = vunpack.c.h.b16 %v17
  %v51 = vunpack.c.l.b16 %v18
  %v52 = vunpack.c.l.b16 %v19
  %v53 = vunpack.c.h.b16 %v19
  %v54 = vunpack.c.l.b16 %v20
  %v55 = vunpack.c.l.b16 %v21
  %v56 = vunpack.c.h.b16 %v21
  %v57 = vunpack.c.l.b16 %v22
  %v58 = vpack.c.b16 %v49, %v46
  %v59 = vpack.c.b16 %v50, %v47
  %v60 = vpack.c.b16 %v51, %v48
  %v61 = vpack.c.b16 %v55, %v52
  %v62 = vpack.c.b16 %v56, %v53
  %v63 = vpack.c.b16 %v57, %v54
  %v76 = vunpack.c.l.b16 %v23
  %v77 = vunpack.c.h.b16 %v23
  %v78 = vunpack.c.l.b16 %v24
  %v79 = vunpack.c.l.b16 %v25
  %v80 = vunpack.c.h.b16 %v25
  %v81 = vunpack.c.l.b16 %v26
  %v82 = vunpack.c.l.b16 %v27
  %v83 = vunpack.c.h.b16 %v27
  %v84 = vunpack.c.l.b16 %v28
  %v85 = vunpack.c.l.b16 %v29
  %v86 = vunpack.c.h.b16 %v29
  %v87 = vunpack.c.l.b16 %v30
  %v88 = vpack.c.b16 %v79, %v76
  %v89 = vpack.c.b16 %v80, %v77
  %v90 = vpack.c.b16 %v81, %v78
  %v91 = vpack.c.b16 %v85, %v82
  %v92 = vpack.c.b16 %v86, %v83
  %v93 = vpack.c.b16 %v87, %v84
  %vm98 = vcmask 261120
  %v100 = vsel %vm98, %v60, 0
  %v103 = vsel %vm98, %v63, 0
  %v106 = vsel %vm98, %v90, 0
  %v109 = vsel %vm98, %v93, 0
  %111 = vmatprep.subr.bf16.mxu0 0
  %112 = vmatpush1.bf16.xpose.msra.mxu0 0
  %113 = vmatprep.subr.bf16.mxu0 0
  %114 = vmatpush1.bf16.xpose.msra.mxu0 0
  %115 = vmatprep.subr.bf16.mxu0 0
  %116 = vmatpush1.bf16.xpose.msra.mxu0 0
  %117 = vmatprep.subr.bf16.mxu0 0
  %118 = vmatpush1.bf16.xpose.msra.mxu0 0
  %119 = vmatprep.subr.bf16.mxu0 0
  %120 = vmatpush1.bf16.xpose.msra.mxu0 0
  %121 = vmatprep.subr.bf16.mxu0 0
  %122 = vmatpush1.bf16.xpose.msra.mxu0 0
  %123 = vmatprep.subr.bf16.mxu0 %v92
  %124 = vmatpush1.bf16.xpose.msra.mxu0 %v91
  %125 = vmatprep.subr.bf16.mxu0 %v89
  %126 = vmatpush1.bf16.xpose.msra.mxu0 %v88
  %127 = vmatprep.subr.bf16.mxu0 0
  %128 = vmatpush2.bf16.xpose.msra.mxu0 0
  %129 = vmatprep.subr.bf16.mxu0 0
  %130 = vmatpush2.bf16.xpose.msra.mxu0 0
  %131 = vmatprep.subr.bf16.mxu0 0
  %132 = vmatpush2.bf16.xpose.msra.mxu0 0
  %133 = vmatprep.subr.bf16.mxu0 0
  %134 = vmatpush2.bf16.xpose.msra.mxu0 0
  %135 = vmatprep.subr.bf16.mxu0 0
  %136 = vmatpush2.bf16.xpose.msra.mxu0 0
  %137 = vmatprep.subr.bf16.mxu0 0
  %138 = vmatpush2.bf16.xpose.msra.mxu0 0
  %139 = vmatprep.subr.bf16.mxu0 0
  %140 = vmatpush2.bf16.xpose.msra.mxu0 0
  %141 = vmatprep.subr.bf16.mxu0 0
  %142 = vmatpush2.bf16.xpose.msra.mxu0 0
  %143 = vmatprep.mubr.bf16.mxu0 %v59
  %144 = vmatmul.mubr.bf16.gmra.mxu0 %v58
  %v145 = vpop.f32.mrf.mxu0
  %v146 = vadd.f32 %v36, %v145
  %v147 = vpop.f32.mrf.mxu0
  %v148 = vpop.f32.mrf.mxu0
  %v149 = vadd.f32 %v36, %v148
  %v150 = vpop.f32.mrf.mxu0
  %151 = vmatprep.mubr.bf16.mxu0 %v62
  %152 = vmatmul.mubr.bf16.gmra.mxu0 %v61
  %v153 = vpop.f32.mrf.mxu0
  %v154 = vadd.f32 %v36, %v153
  %v155 = vpop.f32.mrf.mxu0
  %v156 = vpop.f32.mrf.mxu0
  %v157 = vadd.f32 %v36, %v156
  %v158 = vpop.f32.mrf.mxu0
  %159 = vdwg.mxu0
  %160 = vmatprep.subr.bf16.mxu0 0
  %161 = vmatpush1.bf16.xpose.msra.mxu0 0
  %162 = vmatprep.subr.bf16.mxu0 0
  %163 = vmatpush1.bf16.xpose.msra.mxu0 0
  %164 = vmatprep.subr.bf16.mxu0 0
  %165 = vmatpush1.bf16.xpose.msra.mxu0 0
  %166 = vmatprep.subr.bf16.mxu0 0
  %167 = vmatpush1.bf16.xpose.msra.mxu0 0
  %168 = vmatprep.subr.bf16.mxu0 0
  %169 = vmatpush1.bf16.xpose.msra.mxu0 0
  %170 = vmatprep.subr.bf16.mxu0 0
  %171 = vmatpush1.bf16.xpose.msra.mxu0 0
  %172 = vmatprep.subr.bf16.mxu0 0
  %173 = vmatpush1.bf16.xpose.msra.mxu0 %v109
  %174 = vmatprep.subr.bf16.mxu0 0
  %175 = vmatpush1.bf16.xpose.msra.mxu0 %v106
  %176 = vmatprep.subr.bf16.mxu0 0
  %177 = vmatpush2.bf16.xpose.msra.mxu0 0
  %178 = vmatprep.subr.bf16.mxu0 0
  %179 = vmatpush2.bf16.xpose.msra.mxu0 0
  %180 = vmatprep.subr.bf16.mxu0 0
  %181 = vmatpush2.bf16.xpose.msra.mxu0 0
  %182 = vmatprep.subr.bf16.mxu0 0
  %183 = vmatpush2.bf16.xpose.msra.mxu0 0
  %184 = vmatprep.subr.bf16.mxu0 0
  %185 = vmatpush2.bf16.xpose.msra.mxu0 0
  %186 = vmatprep.subr.bf16.mxu0 0
  %187 = vmatpush2.bf16.xpose.msra.mxu0 0
  %188 = vmatprep.subr.bf16.mxu0 0
  %189 = vmatpush2.bf16.xpose.msra.mxu0 0
  %190 = vmatprep.subr.bf16.mxu0 0
  %191 = vmatpush2.bf16.xpose.msra.mxu0 0
  %192 = vmatprep.mubr.bf16.mxu0 0
  %193 = vmatmul.mubr.bf16.gmra.mxu0 %v100
  %v194 = vpop.f32.mrf.mxu0
  %v195 = vadd.f32 %v146, %v194
  %v196 = vpop.f32.mrf.mxu0
  %v197 = vpop.f32.mrf.mxu0
  %v198 = vadd.f32 %v149, %v197
  %v199 = vpop.f32.mrf.mxu0
  %200 = vmatprep.mubr.bf16.mxu0 0
  %201 = vmatmul.mubr.bf16.gmra.mxu0 %v103
  %v202 = vpop.f32.mrf.mxu0
  %v203 = vadd.f32 %v154, %v202
  %v204 = vpop.f32.mrf.mxu0
  %v205 = vpop.f32.mrf.mxu0
  %v206 = vadd.f32 %v157, %v205
  %v207 = vpop.f32.mrf.mxu0
  %208 = vdwg.mxu0
  %209 = vst.msk [vmem:[%s3] sm:$0xff] %vm98, %v195
  %210 = vst.msk [vmem:[%s3 + $0x8] sm:$0xff] %vm98, %v198
  %211 = vst.msk [vmem:[%s3 + $0x10] sm:$0xff] %vm98, %v203
  %212 = vst.msk [vmem:[%s3 + $0x18] sm:$0xff] %vm98, %v206
  // Predicated region
  $region14: #{medsam_forward.91} parent=0 // pred_check
    _
  $region15: #{medsam_forward.91} parent=0 // pred_check_branch
    %214 = sbr.rel (0) target = $region17
  $region16: #{medsam_forward.91} parent=0 // pred_region
    _
  $region17: #{medsam_forward.91} parent=0 // pred_fallthru
    _
  // Predicated region
  $region18: #{medsam_forward.91} parent=0 // pred_check
    _
  $region19: #{medsam_forward.91} parent=0 // pred_check_branch
    %216 = sbr.rel (0) target = $region21
  $region20: #{medsam_forward.91} parent=0 // pred_region
    _
  $region21: #{medsam_forward.91} parent=0 // pred_fallthru
    _

// kernel: medsam_forward.100
$region0: #{medsam_forward.100}
  #allocation0 [shape = 'u32[]', space=smem, size = 0x4, offset = 0x4, fixed_abs, tag = 'smem constant byte address 0x4 - core index']
  #allocation1 [shape = 'u32[144,128]{1,0:T(1,128)}', space=vmem, size = 0x12000, scoped, tag = 'internal scratch']
  %s0 = inlined_call_operand.vmem [shape: bf16[32,32], index: 0, kind: input, shape index: {}]
  %s1 = inlined_call_operand.vmem [shape: bf16[16,32], index: 1, kind: input, shape index: {}]
  %s2 = inlined_call_operand.vmem [shape: f32[1,16], index: 2, kind: input, shape index: {}]
  %s3 = inlined_call_operand.vmem [shape: f32[32,16], index: 3, kind: output, shape index: {}]
  %s4 = sld [smem:[#allocation0]]
  $region22: #{medsam_forward.100} parent=0
    _
  %s6 = ssub.s32 1, %s4
  %s7 = scalar_select 0, %s6, %s4
  // Predicated region
  $region2: #{medsam_forward.100} parent=0 // pred_check
    _
  $region3: #{medsam_forward.100} parent=0 // pred_check_branch
    %9 = sbr.rel (0) target = $region5
  $region4: #{medsam_forward.100} parent=0 // pred_region
    _
  $region5: #{medsam_forward.100} parent=0 // pred_fallthru
    _
  // Predicated region
  $region6: #{medsam_forward.100} parent=0 // pred_check
    _
  $region7: #{medsam_forward.100} parent=0 // pred_check_branch
    %11 = sbr.rel (0) target = $region9
  $region8: #{medsam_forward.100} parent=0 // pred_region
    _
  $region9: #{medsam_forward.100} parent=0 // pred_fallthru
    _
  // Predicated region
  $region10: #{medsam_forward.100} parent=0 // pred_check
    _
  $region11: #{medsam_forward.100} parent=0 // pred_check_branch
    %13 = sbr.rel (0) target = $region13
  $region12: #{medsam_forward.100} parent=0 // pred_region
    _
  $region13: #{medsam_forward.100} parent=0 // pred_fallthru
    _
  %v15 = vld [vmem:[%s0] sm:$0xf]
  %v16 = vld [vmem:[%s0 + $0x4] sm:$0xf]
  %v17 = vld [vmem:[%s0 + $0x8] sm:$0xf]
  %v18 = vld [vmem:[%s0 + $0xc] sm:$0xf]
  %v19 = vld [vmem:[%s1] sm:$0xf]
  %v20 = vld [vmem:[%s1 + $0x4] sm:$0xf]
  %v21 = vld [vmem:[%s2] sm:$0x1]
  %v23 = vlaneseq
  %v24 = vshrl.u32 %v23, 7
  %v25 = vsub.s32 0, %v24
  %v26 = vrot.slane %v21, %v25
  %v32 = vunpack.c.l.b16 %v15
  %v33 = vunpack.c.l.b16 %v16
  %v34 = vunpack.c.l.b16 %v17
  %v35 = vunpack.c.l.b16 %v18
  %v36 = vpack.c.b16 %v33, %v32
  %v37 = vpack.c.b16 %v35, %v34
  %v40 = vunpack.c.l.b16 %v19
  %v41 = vunpack.c.l.b16 %v20
  %v42 = vpack.c.b16 %v41, %v40
  %vm43 = vcmask 261120
  %v45 = vsel %vm43, %v36, 0
  %v48 = vsel %vm43, %v37, 0
  %v51 = vsel %vm43, %v42, 0
  %53 = vmatprep.subr.bf16.mxu0 0
  %54 = vmatpush1.bf16.xpose.msra.mxu0 0
  %55 = vmatprep.subr.bf16.mxu0 0
  %56 = vmatpush1.bf16.xpose.msra.mxu0 0
  %57 = vmatprep.subr.bf16.mxu0 0
  %58 = vmatpush1.bf16.xpose.msra.mxu0 0
  %59 = vmatprep.subr.bf16.mxu0 0
  %60 = vmatpush1.bf16.xpose.msra.mxu0 0
  %61 = vmatprep.subr.bf16.mxu0 0
  %62 = vmatpush1.bf16.xpose.msra.mxu0 0
  %63 = vmatprep.subr.bf16.mxu0 0
  %64 = vmatpush1.bf16.xpose.msra.mxu0 0
  %65 = vmatprep.subr.bf16.mxu0 0
  %66 = vmatpush1.bf16.xpose.msra.mxu0 0
  %67 = vmatprep.subr.bf16.mxu0 0
  %68 = vmatpush1.bf16.xpose.msra.mxu0 %v51
  %69 = vmatprep.subr.bf16.mxu0 0
  %70 = vmatpush2.bf16.xpose.msra.mxu0 0
  %71 = vmatprep.subr.bf16.mxu0 0
  %72 = vmatpush2.bf16.xpose.msra.mxu0 0
  %73 = vmatprep.subr.bf16.mxu0 0
  %74 = vmatpush2.bf16.xpose.msra.mxu0 0
  %75 = vmatprep.subr.bf16.mxu0 0
  %76 = vmatpush2.bf16.xpose.msra.mxu0 0
  %77 = vmatprep.subr.bf16.mxu0 0
  %78 = vmatpush2.bf16.xpose.msra.mxu0 0
  %79 = vmatprep.subr.bf16.mxu0 0
  %80 = vmatpush2.bf16.xpose.msra.mxu0 0
  %81 = vmatprep.subr.bf16.mxu0 0
  %82 = vmatpush2.bf16.xpose.msra.mxu0 0
  %83 = vmatprep.subr.bf16.mxu0 0
  %84 = vmatpush2.bf16.xpose.msra.mxu0 0
  %85 = vmatprep.mubr.bf16.mxu0 0
  %86 = vmatmul.mubr.bf16.gmra.mxu0 %v45
  %v87 = vpop.f32.mrf.mxu0
  %v88 = vadd.f32 %v26, %v87
  %v89 = vpop.f32.mrf.mxu0
  %v90 = vpop.f32.mrf.mxu0
  %v91 = vadd.f32 %v26, %v90
  %v92 = vpop.f32.mrf.mxu0
  %93 = vmatprep.mubr.bf16.mxu0 0
  %94 = vmatmul.mubr.bf16.gmra.mxu0 %v48
  %v95 = vpop.f32.mrf.mxu0
  %v96 = vadd.f32 %v26, %v95
  %v97 = vpop.f32.mrf.mxu0
  %v98 = vpop.f32.mrf.mxu0
  %v99 = vadd.f32 %v26, %v98
  %v100 = vpop.f32.mrf.mxu0
  %101 = vdwg.mxu0
  %vm102 = vcmask 130048
  %103 = vst.msk [vmem:[%s3] sm:$0xff] %vm102, %v88
  %104 = vst.msk [vmem:[%s3 + $0x8] sm:$0xff] %vm102, %v91
  %105 = vst.msk [vmem:[%s3 + $0x10] sm:$0xff] %vm102, %v96
  %106 = vst.msk [vmem:[%s3 + $0x18] sm:$0xff] %vm102, %v99
  // Predicated region
  $region14: #{medsam_forward.100} parent=0 // pred_check
    _
  $region15: #{medsam_forward.100} parent=0 // pred_check_branch
    %108 = sbr.rel (0) target = $region17
  $region16: #{medsam_forward.100} parent=0 // pred_region
    _
  $region17: #{medsam_forward.100} parent=0 // pred_fallthru
    _
  // Predicated region
  $region18: #{medsam_forward.100} parent=0 // pred_check
    _
  $region19: #{medsam_forward.100} parent=0 // pred_check_branch
    %110 = sbr.rel (0) target = $region21
  $region20: #{medsam_forward.100} parent=0 // pred_region
    _
  $region21: #{medsam_forward.100} parent=0 // pred_fallthru
    _

// kernel: medsam_forward.93
$region0: #{medsam_forward.93}
  #allocation0 [shape = 'u32[]', space=smem, size = 0x4, offset = 0x4, fixed_abs, tag = 'smem constant byte address 0x4 - core index']
  #allocation1 [shape = 'u32[144,128]{1,0:T(1,128)}', space=vmem, size = 0x12000, scoped, tag = 'internal scratch']
  %s0 = inlined_call_operand.vmem [shape: bf16[16,32], index: 0, kind: input, shape index: {}]
  %s1 = inlined_call_operand.vmem [shape: bf16[32,32], index: 1, kind: input, shape index: {}]
  %s2 = inlined_call_operand.vmem [shape: f32[1,32], index: 2, kind: input, shape index: {}]
  %s3 = inlined_call_operand.vmem [shape: f32[16,32], index: 3, kind: output, shape index: {}]
  %s4 = sld [smem:[#allocation0]]
  $region22: #{medsam_forward.93} parent=0
    _
  %s6 = ssub.s32 1, %s4
  %s7 = scalar_select 0, %s6, %s4
  // Predicated region
  $region2: #{medsam_forward.93} parent=0 // pred_check
    _
  $region3: #{medsam_forward.93} parent=0 // pred_check_branch
    %9 = sbr.rel (0) target = $region5
  $region4: #{medsam_forward.93} parent=0 // pred_region
    _
  $region5: #{medsam_forward.93} parent=0 // pred_fallthru
    _
  // Predicated region
  $region6: #{medsam_forward.93} parent=0 // pred_check
    _
  $region7: #{medsam_forward.93} parent=0 // pred_check_branch
    %11 = sbr.rel (0) target = $region9
  $region8: #{medsam_forward.93} parent=0 // pred_region
    _
  $region9: #{medsam_forward.93} parent=0 // pred_fallthru
    _
  // Predicated region
  $region10: #{medsam_forward.93} parent=0 // pred_check
    _
  $region11: #{medsam_forward.93} parent=0 // pred_check_branch
    %13 = sbr.rel (0) target = $region13
  $region12: #{medsam_forward.93} parent=0 // pred_region
    _
  $region13: #{medsam_forward.93} parent=0 // pred_fallthru
    _
  %v15 = vld [vmem:[%s0] sm:$0xf]
  %v16 = vld [vmem:[%s0 + $0x4] sm:$0xf]
  %v17 = vld [vmem:[%s1] sm:$0xf]
  %v18 = vld [vmem:[%s1 + $0x4] sm:$0xf]
  %v19 = vld [vmem:[%s1 + $0x8] sm:$0xf]
  %v20 = vld [vmem:[%s1 + $0xc] sm:$0xf]
  %v21 = vld [vmem:[%s2] sm:$0x1]
  %v23 = vlaneseq
  %v24 = vshrl.u32 %v23, 7
  %v25 = vsub.s32 0, %v24
  %v26 = vrot.slane %v21, %v25
  %v30 = vunpack.c.l.b16 %v15
  %v31 = vunpack.c.l.b16 %v16
  %v32 = vpack.c.b16 %v31, %v30
  %v37 = vunpack.c.l.b16 %v17
  %v38 = vunpack.c.l.b16 %v18
  %v39 = vunpack.c.l.b16 %v19
  %v40 = vunpack.c.l.b16 %v20
  %v41 = vpack.c.b16 %v38, %v37
  %v42 = vpack.c.b16 %v40, %v39
  %vm43 = vcmask 261120
  %v45 = vsel %vm43, %v32, 0
  %v48 = vsel %vm43, %v41, 0
  %v51 = vsel %vm43, %v42, 0
  %53 = vmatprep.subr.bf16.mxu0 0
  %54 = vmatpush1.bf16.xpose.msra.mxu0 0
  %55 = vmatprep.subr.bf16.mxu0 0
  %56 = vmatpush1.bf16.xpose.msra.mxu0 0
  %57 = vmatprep.subr.bf16.mxu0 0
  %58 = vmatpush1.bf16.xpose.msra.mxu0 0
  %59 = vmatprep.subr.bf16.mxu0 0
  %60 = vmatpush1.bf16.xpose.msra.mxu0 0
  %61 = vmatprep.subr.bf16.mxu0 0
  %62 = vmatpush1.bf16.xpose.msra.mxu0 0
  %63 = vmatprep.subr.bf16.mxu0 0
  %64 = vmatpush1.bf16.xpose.msra.mxu0 0
  %65 = vmatprep.subr.bf16.mxu0 0
  %66 = vmatpush1.bf16.xpose.msra.mxu0 %v51
  %67 = vmatprep.subr.bf16.mxu0 0
  %68 = vmatpush1.bf16.xpose.msra.mxu0 %v48
  %69 = vmatprep.subr.bf16.mxu0 0
  %70 = vmatpush2.bf16.xpose.msra.mxu0 0
  %71 = vmatprep.subr.bf16.mxu0 0
  %72 = vmatpush2.bf16.xpose.msra.mxu0 0
  %73 = vmatprep.subr.bf16.mxu0 0
  %74 = vmatpush2.bf16.xpose.msra.mxu0 0
  %75 = vmatprep.subr.bf16.mxu0 0
  %76 = vmatpush2.bf16.xpose.msra.mxu0 0
  %77 = vmatprep.subr.bf16.mxu0 0
  %78 = vmatpush2.bf16.xpose.msra.mxu0 0
  %79 = vmatprep.subr.bf16.mxu0 0
  %80 = vmatpush2.bf16.xpose.msra.mxu0 0
  %81 = vmatprep.subr.bf16.mxu0 0
  %82 = vmatpush2.bf16.xpose.msra.mxu0 0
  %83 = vmatprep.subr.bf16.mxu0 0
  %84 = vmatpush2.bf16.xpose.msra.mxu0 0
  %85 = vmatprep.mubr.bf16.mxu0 0
  %86 = vmatmul.mubr.bf16.gmra.mxu0 %v45
  %v87 = vpop.f32.mrf.mxu0
  %v88 = vadd.f32 %v26, %v87
  %v89 = vpop.f32.mrf.mxu0
  %v90 = vpop.f32.mrf.mxu0
  %v91 = vadd.f32 %v26, %v90
  %v92 = vpop.f32.mrf.mxu0
  %93 = vdwg.mxu0
  %94 = vst.msk [vmem:[%s3] sm:$0xff] %vm43, %v88
  %95 = vst.msk [vmem:[%s3 + $0x8] sm:$0xff] %vm43, %v91
  // Predicated region
  $region14: #{medsam_forward.93} parent=0 // pred_check
    _
  $region15: #{medsam_forward.93} parent=0 // pred_check_branch
    %97 = sbr.rel (0) target = $region17
  $region16: #{medsam_forward.93} parent=0 // pred_region
    _
  $region17: #{medsam_forward.93} parent=0 // pred_fallthru
    _
  // Predicated region
  $region18: #{medsam_forward.93} parent=0 // pred_check
    _
  $region19: #{medsam_forward.93} parent=0 // pred_check_branch
    %99 = sbr.rel (0) target = $region21
  $region20: #{medsam_forward.93} parent=0 // pred_region
    _
  $region21: #{medsam_forward.93} parent=0 // pred_fallthru
    _

// kernel: medsam_forward.96
$region0: #{medsam_forward.96}
  #allocation0 [shape = 'u32[]', space=smem, size = 0x4, offset = 0x4, fixed_abs, tag = 'smem constant byte address 0x4 - core index']
  #allocation1 [shape = 'u32[144,128]{1,0:T(1,128)}', space=vmem, size = 0x12000, scoped, tag = 'internal scratch']
  %s0 = inlined_call_operand.vmem [shape: bf16[2,7,32], index: 0, kind: input, shape index: {}]
  %s1 = inlined_call_operand.vmem [shape: bf16[2,7,32], index: 1, kind: input, shape index: {}]
  %s2 = inlined_call_operand.vmem [shape: bf16[2,7,32], index: 2, kind: input, shape index: {}]
  %s3 = inlined_call_operand.vmem [shape: f32[2,7,32], index: 3, kind: output, shape index: {}]
  %s4 = sld [smem:[#allocation0]]
  $region45: #{medsam_forward.96} parent=0
    _
  %s6 = ssub.s32 1, %s4
  %s7 = scalar_select 0, %s6, %s4
  loop: start=0, step=1, limit=4
  $region2: #{medsam_forward.96} parent=0 // loop_pre_header
    _
  $region3: #{medsam_forward.96} parent=0 // loop_header
    %s9 = sphi 0, %s13
    %p10 = scmp.ge.s32.totalorder %s9, 4
    %s19 = sphi 0, %s21
    %s22 = sphi 0, %s19
    %s23 = sphi 0, %s22
    %s39 = sphi 0, %s23
    %s45 = sphi 0, %s47
    %s48 = sphi 0, %s45
    %s49 = sphi 0, %s48
    %s65 = sphi 0, %s49
    %s71 = sphi 0, %s73
    %s74 = sphi 0, %s71
    %s75 = sphi 0, %s74
    %s91 = sphi 0, %s75
    %s97 = sphi 0, %s99
    %s100 = sphi 0, %s97
    %s101 = sphi 0, %s100
    %s117 = sphi 0, %s101
  $region4: #{medsam_forward.96} parent=0 // loop_header_branch
    %12 = sbr.rel (%p10) target = $region8
  $region5: #{medsam_forward.96} parent=0 // loop_body
    %s14 = ssub.s32 %s9, 1
    %s15 = ssub.s32 %s9, 2
    %s16 = sadd.s32 %s9, 1
    %s17 = ssub.s32 %s9, %s16
    %p18 = scmp.eq.s32.totalorder %s17, 0
    %s20 = sadd.s32 %s19, 1
    %s21 = scalar_select %p18, %s19, %s20
    %p24 = pneg %p18
    %p25 = scmp.eq.s32.totalorder %s9, 1
    %p26 = por %p24, %p25
    %p27 = scmp.ne.s32.totalorder %s19, %s22
    %p28 = scmp.eq.s32.totalorder %s9, 0
    %p29 = por %p27, %p28
    %p30 = scmp.ne.s32.totalorder %s19, %s22
    %p31 = scmp.eq.s32.totalorder %s14, 1
    %p32 = por %p30, %p31
    %p33 = scmp.ne.s32.totalorder %s22, %s23
    %p34 = scmp.eq.s32.totalorder %s14, 0
    %p35 = por %p33, %p34
    %p36 = scmp.ne.s32.totalorder %s22, %s23
    %p37 = scmp.eq.s32.totalorder %s15, 1
    %p38 = por %p36, %p37
    %p40 = scmp.ne.s32.totalorder %s23, %s39
    %p41 = scmp.eq.s32.totalorder %s15, 0
    %p42 = por %p40, %p41
    %s43 = ssub.s32 %s9, %s16
    %p44 = scmp.eq.s32.totalorder %s43, 0
    %s46 = sadd.s32 %s45, 1
    %s47 = scalar_select %p44, %s45, %s46
    %p50 = pneg %p44
    %p51 = scmp.eq.s32.totalorder %s9, 1
    %p52 = por %p50, %p51
    %p53 = scmp.ne.s32.totalorder %s45, %s48
    %p54 = scmp.eq.s32.totalorder %s9, 0
    %p55 = por %p53, %p54
    %p56 = scmp.ne.s32.totalorder %s45, %s48
    %p57 = scmp.eq.s32.totalorder %s14, 1
    %p58 = por %p56, %p57
    %p59 = scmp.ne.s32.totalorder %s48, %s49
    %p60 = scmp.eq.s32.totalorder %s14, 0
    %p61 = por %p59, %p60
    %p62 = scmp.ne.s32.totalorder %s48, %s49
    %p63 = scmp.eq.s32.totalorder %s15, 1
    %p64 = por %p62, %p63
    %p66 = scmp.ne.s32.totalorder %s49, %s65
    %p67 = scmp.eq.s32.totalorder %s15, 0
    %p68 = por %p66, %p67
    %s69 = ssub.s32 %s9, %s16
    %p70 = scmp.eq.s32.totalorder %s69, 0
    %s72 = sadd.s32 %s71, 1
    %s73 = scalar_select %p70, %s71, %s72
    %p76 = pneg %p70
    %p77 = scmp.eq.s32.totalorder %s9, 1
    %p78 = por %p76, %p77
    %p79 = scmp.ne.s32.totalorder %s71, %s74
    %p80 = scmp.eq.s32.totalorder %s9, 0
    %p81 = por %p79, %p80
    %p82 = scmp.ne.s32.totalorder %s71, %s74
    %p83 = scmp.eq.s32.totalorder %s14, 1
    %p84 = por %p82, %p83
    %p85 = scmp.ne.s32.totalorder %s74, %s75
    %p86 = scmp.eq.s32.totalorder %s14, 0
    %p87 = por %p85, %p86
    %p88 = scmp.ne.s32.totalorder %s74, %s75
    %p89 = scmp.eq.s32.totalorder %s15, 1
    %p90 = por %p88, %p89
    %p92 = scmp.ne.s32.totalorder %s75, %s91
    %p93 = scmp.eq.s32.totalorder %s15, 0
    %p94 = por %p92, %p93
    %s95 = ssub.s32 %s9, %s16
    %p96 = scmp.eq.s32.totalorder %s95, 0
    %s98 = sadd.s32 %s97, 1
    %s99 = scalar_select %p96, %s97, %s98
    %p102 = pneg %p96
    %p103 = scmp.eq.s32.totalorder %s9, 1
    %p104 = por %p102, %p103
    %p105 = scmp.ne.s32.totalorder %s97, %s100
    %p106 = scmp.eq.s32.totalorder %s9, 0
    %p107 = por %p105, %p106
    %p108 = scmp.ne.s32.totalorder %s97, %s100
    %p109 = scmp.eq.s32.totalorder %s14, 1
    %p110 = por %p108, %p109
    %p111 = scmp.ne.s32.totalorder %s100, %s101
    %p112 = scmp.eq.s32.totalorder %s14, 0
    %p113 = por %p111, %p112
    %p114 = scmp.ne.s32.totalorder %s100, %s101
    %p115 = scmp.eq.s32.totalorder %s15, 1
    %p116 = por %p114, %p115
    %p118 = scmp.ne.s32.totalorder %s101, %s117
    %p119 = scmp.eq.s32.totalorder %s15, 0
    %p120 = por %p118, %p119
    %p121 = scmp.le.s32.totalorder 1, %s9
    %p122 = scmp.lt.s32.totalorder %s9, 3
    %p123 = pnand %p121, %p122
    %p124 = pneg %p123
    // Predicated region
    $region9: #{medsam_forward.96} parent=5 // pred_check
      _
    $region10: #{medsam_forward.96} parent=5 // pred_check_branch
      %126 = sbr.rel (%p123) target = $region12
    $region11: #{medsam_forward.96} parent=5 // pred_region
      %s127 = ssub.s32 %s9, 1
    $region12: #{medsam_forward.96} parent=5 // pred_fallthru
      _
    %p128 = scmp.lt.s32.totalorder %s9, 2
    // Predicated region
    $region13: #{medsam_forward.96} parent=5 // pred_check
      %p129 = pneg %p128
    $region14: #{medsam_forward.96} parent=5 // pred_check_branch
      %131 = sbr.rel (%p129) target = $region16
    $region15: #{medsam_forward.96} parent=5 // pred_region
      // Predicated region
      $region17: #{medsam_forward.96} parent=15 // pred_check
        %p132 = pneg %p29
      $region18: #{medsam_forward.96} parent=15 // pred_check_branch
        %134 = sbr.rel (%p132) target = $region20
      $region19: #{medsam_forward.96} parent=15 // pred_region
        %p135 = scmp.lt.s32.totalorder %s9, 1
        %s136 = scalar_select %p135, %s9, 1
        %s137 = smul.addr %s136, 4
        %s138 = scalar_lea.vmem %s0, %s137
      $region20: #{medsam_forward.96} parent=15 // pred_fallthru
        _
      // Predicated region
      $region21: #{medsam_forward.96} parent=15 // pred_check
        %p139 = pneg %p55
      $region22: #{medsam_forward.96} parent=15 // pred_check_branch
        %141 = sbr.rel (%p139) target = $region24
      $region23: #{medsam_forward.96} parent=15 // pred_region
        %p142 = scmp.lt.s32.totalorder %s9, 1
        %s143 = scalar_select %p142, %s9, 1
        %s144 = smul.addr %s143, 4
        %s145 = scalar_lea.vmem %s1, %s144
      $region24: #{medsam_forward.96} parent=15 // pred_fallthru
        _
      // Predicated region
      $region25: #{medsam_forward.96} parent=15 // pred_check
        %p146 = pneg %p81
      $region26: #{medsam_forward.96} parent=15 // pred_check_branch
        %148 = sbr.rel (%p146) target = $region28
      $region27: #{medsam_forward.96} parent=15 // pred_region
        %p149 = scmp.lt.s32.totalorder %s9, 1
        %s150 = scalar_select %p149, %s9, 1
        %s151 = smul.addr %s150, 4
        %s152 = scalar_lea.vmem %s2, %s151
      $region28: #{medsam_forward.96} parent=15 // pred_fallthru
        _
    $region16: #{medsam_forward.96} parent=5 // pred_fallthru
      _
    %p153 = scmp.le.s32.totalorder 1, %s9
    %p154 = scmp.lt.s32.totalorder %s9, 3
    %p155 = pnand %p153, %p154
    %p156 = pneg %p155
    // Predicated region
    $region29: #{medsam_forward.96} parent=5 // pred_check
      _
    $region30: #{medsam_forward.96} parent=5 // pred_check_branch
      %158 = sbr.rel (%p155) target = $region32
    $region31: #{medsam_forward.96} parent=5 // pred_region
      %s159 = ssub.s32 %s9, 1
      %p160 = scmp.lt.s32.totalorder %s14, 1
      %s161 = scalar_select %p160, %s14, 1
      %s162 = smul.addr %s161, 4
      %s163 = scalar_lea.vmem %s0, %s162
      %p164 = pneg %p35
      %p165 = pneg %p32
      %p166 = scmp.lt.s32.totalorder %s14, 1
      %s167 = scalar_select %p166, %s14, 1
      %s168 = smul.addr %s167, 4
      %s169 = scalar_lea.vmem %s1, %s168
      %p170 = pneg %p61
      %p171 = pneg %p58
      %p172 = scmp.lt.s32.totalorder %s14, 1
      %s173 = scalar_select %p172, %s14, 1
      %s174 = smul.addr %s173, 4
      %s175 = scalar_lea.vmem %s2, %s174
      %p176 = pneg %p87
      %p177 = pneg %p84
      %p178 = pneg %p113
      %p179 = pneg %p110
      %p180 = scmp.lt.s32.totalorder %s14, 1
      %s181 = scalar_select %p180, %s14, 1
      %s182 = smul.addr %s181, 8
      %s183 = scalar_lea.vmem %s3, %s182
      %p184 = scmp.lt.s32.totalorder %s14, 1
      %s185 = scalar_select %p184, %s14, 1
      %s186 = smul.addr %s185, 4
      %s187 = scalar_lea.vmem %s0, %s186
      %p188 = scmp.lt.s32.totalorder %s14, 1
      %s189 = scalar_select %p188, %s14, 1
      %s190 = smul.addr %s189, 4
      %s191 = scalar_lea.vmem %s1, %s190
      %p192 = scmp.lt.s32.totalorder %s14, 1
      %s193 = scalar_select %p192, %s14, 1
      %s194 = smul.addr %s193, 4
      %s195 = scalar_lea.vmem %s2, %s194
      %p196 = scmp.lt.s32.totalorder %s14, 1
      %s197 = scalar_select %p196, %s14, 1
      %s198 = smul.addr %s197, 8
      %s199 = scalar_lea.vmem %s3, %s198
      %v201 = vld [vmem:[%s187] sm:$0xf]
      %v202 = vld [vmem:[%s191] sm:$0xf]
      %v203 = vld [vmem:[%s195] sm:$0xf]
      %vm204 = vcmask 130048
      %v206 = vsel %vm204, %v201, 0
      %v209 = vsel %vm204, %v202, 0
      %211 = vmatprep.subr.bf16.mxu0 0
      %212 = vmatpush1.bf16.xpose.msra.mxu0 0
      %213 = vmatprep.subr.bf16.mxu0 0
      %214 = vmatpush1.bf16.xpose.msra.mxu0 0
      %215 = vmatprep.subr.bf16.mxu0 0
      %216 = vmatpush1.bf16.xpose.msra.mxu0 0
      %217 = vmatprep.subr.bf16.mxu0 0
      %218 = vmatpush1.bf16.xpose.msra.mxu0 0
      %219 = vmatprep.subr.bf16.mxu0 0
      %220 = vmatpush1.bf16.xpose.msra.mxu0 0
      %221 = vmatprep.subr.bf16.mxu0 0
      %222 = vmatpush1.bf16.xpose.msra.mxu0 0
      %223 = vmatprep.subr.bf16.mxu0 0
      %224 = vmatpush1.bf16.xpose.msra.mxu0 0
      %225 = vmatprep.subr.bf16.mxu0 0
      %226 = vmatpush1.bf16.xpose.msra.mxu0 %v209
      %227 = vmatprep.subr.bf16.mxu0 0
      %228 = vmatpush2.bf16.xpose.msra.mxu0 0
      %229 = vmatprep.subr.bf16.mxu0 0
      %230 = vmatpush2.bf16.xpose.msra.mxu0 0
      %231 = vmatprep.subr.bf16.mxu0 0
      %232 = vmatpush2.bf16.xpose.msra.mxu0 0
      %233 = vmatprep.subr.bf16.mxu0 0
      %234 = vmatpush2.bf16.xpose.msra.mxu0 0
      %235 = vmatprep.subr.bf16.mxu0 0
      %236 = vmatpush2.bf16.xpose.msra.mxu0 0
      %237 = vmatprep.subr.bf16.mxu0 0
      %238 = vmatpush2.bf16.xpose.msra.mxu0 0
      %239 = vmatprep.subr.bf16.mxu0 0
      %240 = vmatpush2.bf16.xpose.msra.mxu0 0
      %241 = vmatprep.subr.bf16.mxu0 0
      %242 = vmatpush2.bf16.xpose.msra.mxu0 0
      %243 = vmatprep.mubr.bf16.mxu0 0
      %244 = vmatmul.mubr.bf16.gmra.mxu0 %v206
      %v245 = vpop.f32.mrf.mxu0
      %v246 = vadd.f32 0.0, %v245
      %v247 = vpop.f32.mrf.mxu0
      %v248 = vpop.f32.mrf.mxu0
      %v249 = vpop.f32.mrf.mxu0
      %250 = vdwg.mxu0
      %v251 = vmul.f32 %v246, 0.25
      %vm252 = vcmask 55296
      %v253 = vsel %vm252, %v251, -inf
      %254 = vmax.xlane.f32.xlu0 %v253
      %v255 = vpop.xlane.xlu0 %254
      %v256 = vsub.f32 %v251, %v255
      %v257 = vmul.f32 %v256, 1.442695
      %v258 = vpow.pop %v257
      %v259 = vsel %vm252, %v258, 0.0
      %260 = vadd.xlane.f32.xlu0 %v259
      %v261 = vpop.xlane.xlu0 %260
      %v262 = vrcp.pop %v261
      %v263 = vmul.f32 %v258, %v262
      %v264 = vpack.c.bf16 %v263, %v263
      %vm265 = vcmask 56320
      %v267 = vsel %vm265, %v264, 0
      %vm269 = vcmask 1042432
      %vm270 = vcmask 1043456
      %v271 = vsel %vm269, 4294967295, 65535
      %v272 = vsel %vm270, %v271, 0
      %v274 = vand.u32 %v203, %v272
      %276 = vmatprep.subr.bf16.mxu0 0
      %277 = vmatpush1.bf16.msra.mxu0 0
      %278 = vmatprep.subr.bf16.mxu0 0
      %279 = vmatpush1.bf16.msra.mxu0 0
      %280 = vmatprep.subr.bf16.mxu0 0
      %281 = vmatpush1.bf16.msra.mxu0 0
      %282 = vmatprep.subr.bf16.mxu0 0
      %283 = vmatpush1.bf16.msra.mxu0 0
      %284 = vmatprep.subr.bf16.mxu0 0
      %285 = vmatpush1.bf16.msra.mxu0 0
      %286 = vmatprep.subr.bf16.mxu0 0
      %287 = vmatpush1.bf16.msra.mxu0 0
      %288 = vmatprep.subr.bf16.mxu0 0
      %289 = vmatpush1.bf16.msra.mxu0 0
      %290 = vmatprep.subr.bf16.mxu0 0
      %291 = vmatpush1.bf16.msra.mxu0 %v274
      %292 = vmatprep.subr.bf16.mxu0 0
      %293 = vmatpush2.bf16.msra.mxu0 0
      %294 = vmatprep.subr.bf16.mxu0 0
      %295 = vmatpush2.bf16.msra.mxu0 0
      %296 = vmatprep.subr.bf16.mxu0 0
      %297 = vmatpush2.bf16.msra.mxu0 0
      %298 = vmatprep.subr.bf16.mxu0 0
      %299 = vmatpush2.bf16.msra.mxu0 0
      %300 = vmatprep.subr.bf16.mxu0 0
      %301 = vmatpush2.bf16.msra.mxu0 0
      %302 = vmatprep.subr.bf16.mxu0 0
      %303 = vmatpush2.bf16.msra.mxu0 0
      %304 = vmatprep.subr.bf16.mxu0 0
      %305 = vmatpush2.bf16.msra.mxu0 0
      %306 = vmatprep.subr.bf16.mxu0 0
      %307 = vmatpush2.bf16.msra.mxu0 0
      %308 = vmatprep.mubr.bf16.mxu0 0
      %309 = vmatmul.mubr.bf16.gmra.mxu0 %v267
      %v310 = vpop.f32.mrf.mxu0
      %v311 = vadd.f32 0.0, %v310
      %v312 = vpop.f32.mrf.mxu0
      %v313 = vpop.f32.mrf.mxu0
      %v314 = vpop.f32.mrf.mxu0
      %315 = vdwg.mxu0
      %vm316 = vcmask 129024
      %317 = vst.msk [vmem:[%s199] sm:$0x7f] %vm316, %v311
      %v319 = vunpack.c.l.b16 %v201
      %v320 = vpack.c.b16 %v319, %v319
      %321 = vrot.lane.b32.xlu0 %v320, 112
      %v322 = vpop.permute.xlu0 %321
      %v324 = vunpack.c.l.b16 %v202
      %v325 = vpack.c.b16 %v324, %v324
      %326 = vrot.lane.b32.xlu0 %v325, 112
      %v327 = vpop.permute.xlu0 %326
      %v329 = vsel %vm204, %v322, 0
      %v332 = vsel %vm204, %v327, 0
      %334 = vmatprep.subr.bf16.mxu0 0
      %335 = vmatpush1.bf16.xpose.msra.mxu0 0
      %336 = vmatprep.subr.bf16.mxu0 0
      %337 = vmatpush1.bf16.xpose.msra.mxu0 0
      %338 = vmatprep.subr.bf16.mxu0 0
      %339 = vmatpush1.bf16.xpose.msra.mxu0 0
      %340 = vmatprep.subr.bf16.mxu0 0
      %341 = vmatpush1.bf16.xpose.msra.mxu0 0
      %342 = vmatprep.subr.bf16.mxu0 0
      %343 = vmatpush1.bf16.xpose.msra.mxu0 0
      %344 = vmatprep.subr.bf16.mxu0 0
      %345 = vmatpush1.bf16.xpose.msra.mxu0 0
      %346 = vmatprep.subr.bf16.mxu0 0
      %347 = vmatpush1.bf16.xpose.msra.mxu0 0
      %348 = vmatprep.subr.bf16.mxu0 0
      %349 = vmatpush1.bf16.xpose.msra.mxu0 %v332
      %350 = vmatprep.subr.bf16.mxu0 0
      %351 = vmatpush2.bf16.xpose.msra.mxu0 0
      %352 = vmatprep.subr.bf16.mxu0 0
      %353 = vmatpush2.bf16.xpose.msra.mxu0 0
      %354 = vmatprep.subr.bf16.mxu0 0
      %355 = vmatpush2.bf16.xpose.msra.mxu0 0
      %356 = vmatprep.subr.bf16.mxu0 0
      %357 = vmatpush2.bf16.xpose.msra.mxu0 0
      %358 = vmatprep.subr.bf16.mxu0 0
      %359 = vmatpush2.bf16.xpose.msra.mxu0 0
      %360 = vmatprep.subr.bf16.mxu0 0
      %361 = vmatpush2.bf16.xpose.msra.mxu0 0
      %362 = vmatprep.subr.bf16.mxu0 0
      %363 = vmatpush2.bf16.xpose.msra.mxu0 0
      %364 = vmatprep.subr.bf16.mxu0 0
      %365 = vmatpush2.bf16.xpose.msra.mxu0 0
      %366 = vmatprep.mubr.bf16.mxu0 0
      %367 = vmatmul.mubr.bf16.gmra.mxu0 %v329
      %v368 = vpop.f32.mrf.mxu0
      %v369 = vadd.f32 0.0, %v368
      %v370 = vpop.f32.mrf.mxu0
      %v371 = vpop.f32.mrf.mxu0
      %v372 = vpop.f32.mrf.mxu0
      %373 = vdwg.mxu0
      %v374 = vmul.f32 %v369, 0.25
      %v375 = vsel %vm252, %v374, -inf
      %376 = vmax.xlane.f32.xlu0 %v375
      %v377 = vpop.xlane.xlu0 %376
      %v378 = vsub.f32 %v374, %v377
      %v379 = vmul.f32 %v378, 1.442695
      %v380 = vpow.pop %v379
      %v381 = vsel %vm252, %v380, 0.0
      %382 = vadd.xlane.f32.xlu0 %v381
      %v383 = vpop.xlane.xlu0 %382
      %v384 = vrcp.pop %v383
      %v385 = vmul.f32 %v380, %v384
      %v386 = vpack.c.bf16 %v385, %v385
      %v388 = vunpack.c.l.b16 %v203
      %v389 = vpack.c.b16 %v388, %v388
      %390 = vrot.lane.b32.xlu0 %v389, 112
      %v391 = vpop.permute.xlu0 %390
      %v393 = vsel %vm265, %v386, 0
      %v396 = vand.u32 %v391, %v272
      %398 = vmatprep.subr.bf16.mxu0 0
      %399 = vmatpush1.bf16.msra.mxu0 0
      %400 = vmatprep.subr.bf16.mxu0 0
      %401 = vmatpush1.bf16.msra.mxu0 0
      %402 = vmatprep.subr.bf16.mxu0 0
      %403 = vmatpush1.bf16.msra.mxu0 0
      %404 = vmatprep.subr.bf16.mxu0 0
      %405 = vmatpush1.bf16.msra.mxu0 0
      %406 = vmatprep.subr.bf16.mxu0 0
      %407 = vmatpush1.bf16.msra.mxu0 0
      %408 = vmatprep.subr.bf16.mxu0 0
      %409 = vmatpush1.bf16.msra.mxu0 0
      %410 = vmatprep.subr.bf16.mxu0 0
      %411 = vmatpush1.bf16.msra.mxu0 0
      %412 = vmatprep.subr.bf16.mxu0 0
      %413 = vmatpush1.bf16.msra.mxu0 %v396
      %414 = vmatprep.subr.bf16.mxu0 0
      %415 = vmatpush2.bf16.msra.mxu0 0
      %416 = vmatprep.subr.bf16.mxu0 0
      %417 = vmatpush2.bf16.msra.mxu0 0
      %418 = vmatprep.subr.bf16.mxu0 0
      %419 = vmatpush2.bf16.msra.mxu0 0
      %420 = vmatprep.subr.bf16.mxu0 0
      %421 = vmatpush2.bf16.msra.mxu0 0
      %422 = vmatprep.subr.bf16.mxu0 0
      %423 = vmatpush2.bf16.msra.mxu0 0
      %424 = vmatprep.subr.bf16.mxu0 0
      %425 = vmatpush2.bf16.msra.mxu0 0
      %426 = vmatprep.subr.bf16.mxu0 0
      %427 = vmatpush2.bf16.msra.mxu0 0
      %428 = vmatprep.subr.bf16.mxu0 0
      %429 = vmatpush2.bf16.msra.mxu0 0
      %430 = vmatprep.mubr.bf16.mxu0 0
      %431 = vmatmul.mubr.bf16.gmra.mxu0 %v393
      %v432 = vpop.f32.mrf.mxu0
      %v433 = vadd.f32 0.0, %v432
      %v434 = vpop.f32.mrf.mxu0
      %v435 = vpop.f32.mrf.mxu0
      %v436 = vpop.f32.mrf.mxu0
      %437 = vdwg.mxu0
      %439 = vrot.lane.b32.xlu0 %v433, 16
      %v440 = vpop.permute.xlu0 %439
      %vm442 = vcmask 260224
      %443 = vst.msk [vmem:[%s199] sm:$0x7f] %vm442, %v440
      %p444 = scmp.lt.s32.totalorder %s14, 1
      %s445 = scalar_select %p444, %s14, 1
      %s446 = smul.addr %s445, 8
      %s447 = scalar_lea.vmem %s3, %s446
      // Predicated region
      $region33: #{medsam_forward.96} parent=31 // pred_check
        %p448 = pneg %p110
      $region34: #{medsam_forward.96} parent=31 // pred_check_branch
        %450 = sbr.rel (%p448) target = $region36
      $region35: #{medsam_forward.96} parent=31 // pred_region
        _
      $region36: #{medsam_forward.96} parent=31 // pred_fallthru
        _
    $region32: #{medsam_forward.96} parent=5 // pred_fallthru
      _
    %p451 = scmp.le.s32.totalorder 2, %s9
    // Predicated region
    $region37: #{medsam_forward.96} parent=5 // pred_check
      %p452 = pneg %p451
    $region38: #{medsam_forward.96} parent=5 // pred_check_branch
      %454 = sbr.rel (%p452) target = $region40
    $region39: #{medsam_forward.96} parent=5 // pred_region
      %s455 = ssub.s32 %s9, 2
      // Predicated region
      $region41: #{medsam_forward.96} parent=39 // pred_check
        %p456 = pneg %p116
      $region42: #{medsam_forward.96} parent=39 // pred_check_branch
        %458 = sbr.rel (%p456) target = $region44
      $region43: #{medsam_forward.96} parent=39 // pred_region
        %p459 = scmp.lt.s32.totalorder %s15, 1
        %s460 = scalar_select %p459, %s15, 1
        %s461 = smul.addr %s460, 8
        %s462 = scalar_lea.vmem %s3, %s461
      $region44: #{medsam_forward.96} parent=39 // pred_fallthru
        _
    $region40: #{medsam_forward.96} parent=5 // pred_fallthru
      _
  $region6: #{medsam_forward.96} parent=0 // loop_footer
    %s13 = sadd.s32 1, %s9
  $region7: #{medsam_forward.96} parent=0 // loop_footer_branch
    %8 = sbr.rel target = $region3
  $region8: #{medsam_forward.96} parent=0 // loop_exit
    _

// kernel: medsam_forward.99
$region0: #{medsam_forward.99}
  #allocation0 [shape = 'u32[]', space=smem, size = 0x4, offset = 0x4, fixed_abs, tag = 'smem constant byte address 0x4 - core index']
  #allocation1 [shape = 'u32[144,128]{1,0:T(1,128)}', space=vmem, size = 0x12000, scoped, tag = 'internal scratch']
  %s0 = inlined_call_operand.vmem [shape: bf16[16,32], index: 0, kind: input, shape index: {}]
  %s1 = inlined_call_operand.vmem [shape: bf16[16,32], index: 1, kind: input, shape index: {}]
  %s2 = inlined_call_operand.vmem [shape: f32[1,16], index: 2, kind: input, shape index: {}]
  %s3 = inlined_call_operand.vmem [shape: f32[16,16], index: 3, kind: output, shape index: {}]
  %s4 = sld [smem:[#allocation0]]
  $region22: #{medsam_forward.99} parent=0
    _
  %s6 = ssub.s32 1, %s4
  %s7 = scalar_select 0, %s6, %s4
  // Predicated region
  $region2: #{medsam_forward.99} parent=0 // pred_check
    _
  $region3: #{medsam_forward.99} parent=0 // pred_check_branch
    %9 = sbr.rel (0) target = $region5
  $region4: #{medsam_forward.99} parent=0 // pred_region
    _
  $region5: #{medsam_forward.99} parent=0 // pred_fallthru
    _
  // Predicated region
  $region6: #{medsam_forward.99} parent=0 // pred_check
    _
  $region7: #{medsam_forward.99} parent=0 // pred_check_branch
    %11 = sbr.rel (0) target = $region9
  $region8: #{medsam_forward.99} parent=0 // pred_region
    _
  $region9: #{medsam_forward.99} parent=0 // pred_fallthru
    _
  // Predicated region
  $region10: #{medsam_forward.99} parent=0 // pred_check
    _
  $region11: #{medsam_forward.99} parent=0 // pred_check_branch
    %13 = sbr.rel (0) target = $region13
  $region12: #{medsam_forward.99} parent=0 // pred_region
    _
  $region13: #{medsam_forward.99} parent=0 // pred_fallthru
    _
  %v15 = vld [vmem:[%s0] sm:$0xf]
  %v16 = vld [vmem:[%s0 + $0x4] sm:$0xf]
  %v17 = vld [vmem:[%s1] sm:$0xf]
  %v18 = vld [vmem:[%s1 + $0x4] sm:$0xf]
  %v19 = vld [vmem:[%s2] sm:$0x1]
  %v21 = vlaneseq
  %v22 = vshrl.u32 %v21, 7
  %v23 = vsub.s32 0, %v22
  %v24 = vrot.slane %v19, %v23
  %v28 = vunpack.c.l.b16 %v15
  %v29 = vunpack.c.l.b16 %v16
  %v30 = vpack.c.b16 %v29, %v28
  %v33 = vunpack.c.l.b16 %v17
  %v34 = vunpack.c.l.b16 %v18
  %v35 = vpack.c.b16 %v34, %v33
  %vm36 = vcmask 261120
  %v38 = vsel %vm36, %v30, 0
  %v41 = vsel %vm36, %v35, 0
  %43 = vmatprep.subr.bf16.mxu0 0
  %44 = vmatpush1.bf16.xpose.msra.mxu0 0
  %45 = vmatprep.subr.bf16.mxu0 0
  %46 = vmatpush1.bf16.xpose.msra.mxu0 0
  %47 = vmatprep.subr.bf16.mxu0 0
  %48 = vmatpush1.bf16.xpose.msra.mxu0 0
  %49 = vmatprep.subr.bf16.mxu0 0
  %50 = vmatpush1.bf16.xpose.msra.mxu0 0
  %51 = vmatprep.subr.bf16.mxu0 0
  %52 = vmatpush1.bf16.xpose.msra.mxu0 0
  %53 = vmatprep.subr.bf16.mxu0 0
  %54 = vmatpush1.bf16.xpose.msra.mxu0 0
  %55 = vmatprep.subr.bf16.mxu0 0
  %56 = vmatpush1.bf16.xpose.msra.mxu0 0
  %57 = vmatprep.subr.bf16.mxu0 0
  %58 = vmatpush1.bf16.xpose.msra.mxu0 %v41
  %59 = vmatprep.subr.bf16.mxu0 0
  %60 = vmatpush2.bf16.xpose.msra.mxu0 0
  %61 = vmatprep.subr.bf16.mxu0 0
  %62 = vmatpush2.bf16.xpose.msra.mxu0 0
  %63 = vmatprep.subr.bf16.mxu0 0
  %64 = vmatpush2.bf16.xpose.msra.mxu0 0
  %65 = vmatprep.subr.bf16.mxu0 0
  %66 = vmatpush2.bf16.xpose.msra.mxu0 0
  %67 = vmatprep.subr.bf16.mxu0 0
  %68 = vmatpush2.bf16.xpose.msra.mxu0 0
  %69 = vmatprep.subr.bf16.mxu0 0
  %70 = vmatpush2.bf16.xpose.msra.mxu0 0
  %71 = vmatprep.subr.bf16.mxu0 0
  %72 = vmatpush2.bf16.xpose.msra.mxu0 0
  %73 = vmatprep.subr.bf16.mxu0 0
  %74 = vmatpush2.bf16.xpose.msra.mxu0 0
  %75 = vmatprep.mubr.bf16.mxu0 0
  %76 = vmatmul.mubr.bf16.gmra.mxu0 %v38
  %v77 = vpop.f32.mrf.mxu0
  %v78 = vadd.f32 %v24, %v77
  %v79 = vpop.f32.mrf.mxu0
  %v80 = vpop.f32.mrf.mxu0
  %v81 = vadd.f32 %v24, %v80
  %v82 = vpop.f32.mrf.mxu0
  %83 = vdwg.mxu0
  %vm84 = vcmask 130048
  %85 = vst.msk [vmem:[%s3] sm:$0xff] %vm84, %v78
  %86 = vst.msk [vmem:[%s3 + $0x8] sm:$0xff] %vm84, %v81
  // Predicated region
  $region14: #{medsam_forward.99} parent=0 // pred_check
    _
  $region15: #{medsam_forward.99} parent=0 // pred_check_branch
    %88 = sbr.rel (0) target = $region17
  $region16: #{medsam_forward.99} parent=0 // pred_region
    _
  $region17: #{medsam_forward.99} parent=0 // pred_fallthru
    _
  // Predicated region
  $region18: #{medsam_forward.99} parent=0 // pred_check
    _
  $region19: #{medsam_forward.99} parent=0 // pred_check_branch
    %90 = sbr.rel (0) target = $region21
  $region20: #{medsam_forward.99} parent=0 // pred_region
    _
  $region21: #{medsam_forward.99} parent=0 // pred_fallthru
    _

// kernel: medsam_forward.98
$region0: #{medsam_forward.98}
  #allocation0 [shape = 'u32[]', space=smem, size = 0x4, offset = 0x4, fixed_abs, tag = 'smem constant byte address 0x4 - core index']
  #allocation1 [shape = 'u32[144,128]{1,0:T(1,128)}', space=vmem, size = 0x12000, scoped, tag = 'internal scratch']
  %s0 = inlined_call_operand.vmem [shape: f32[16,32], index: 0, kind: input, shape index: {}]
  %s1 = inlined_call_operand.vmem [shape: f32[1,32], index: 1, kind: input, shape index: {}]
  %s2 = inlined_call_operand.vmem [shape: f32[1,32], index: 2, kind: input, shape index: {}]
  %s3 = inlined_call_operand.vmem [shape: f32[16,32], index: 3, kind: output, shape index: {}]
  %s4 = sld [smem:[#allocation0]]
  $region22: #{medsam_forward.98} parent=0
    _
  %s6 = ssub.s32 1, %s4
  %s7 = scalar_select 0, %s6, %s4
  // Predicated region
  $region2: #{medsam_forward.98} parent=0 // pred_check
    _
  $region3: #{medsam_forward.98} parent=0 // pred_check_branch
    %9 = sbr.rel (0) target = $region5
  $region4: #{medsam_forward.98} parent=0 // pred_region
    _
  $region5: #{medsam_forward.98} parent=0 // pred_fallthru
    _
  // Predicated region
  $region6: #{medsam_forward.98} parent=0 // pred_check
    _
  $region7: #{medsam_forward.98} parent=0 // pred_check_branch
    %11 = sbr.rel (0) target = $region9
  $region8: #{medsam_forward.98} parent=0 // pred_region
    _
  $region9: #{medsam_forward.98} parent=0 // pred_fallthru
    _
  // Predicated region
  $region10: #{medsam_forward.98} parent=0 // pred_check
    _
  $region11: #{medsam_forward.98} parent=0 // pred_check_branch
    %13 = sbr.rel (0) target = $region13
  $region12: #{medsam_forward.98} parent=0 // pred_region
    _
  $region13: #{medsam_forward.98} parent=0 // pred_fallthru
    _
  %v14 = vld [vmem:[%s0] sm:$0xff]
  %v15 = vld [vmem:[%s0 + $0x8] sm:$0xff]
  %vm16 = vcmask 261120
  %v17 = vsel %vm16, %v14, 0.0
  %18 = vadd.xlane.f32.xlu0 %v17
  %v19 = vpop.xlane.xlu0 %18
  %v20 = vsel %vm16, %v15, 0.0
  %21 = vadd.xlane.f32.xlu0 %v20
  %v22 = vpop.xlane.xlu0 %21
  %v23 = vrcp.pop 32.0
  %v24 = vmul.f32 %v19, %v23
  %v25 = vmul.f32 %v22, %v23
  %v26 = vsub.f32 %v14, %v24
  %v27 = vsub.f32 %v15, %v25
  %v28 = vmul.f32 %v26, %v26
  %v29 = vmul.f32 %v27, %v27
  %v30 = vsel %vm16, %v28, 0.0
  %31 = vadd.xlane.f32.xlu0 %v30
  %v32 = vpop.xlane.xlu0 %31
  %v33 = vsel %vm16, %v29, 0.0
  %34 = vadd.xlane.f32.xlu0 %v33
  %v35 = vpop.xlane.xlu0 %34
  %v36 = vmul.f32 %v32, %v23
  %v37 = vmul.f32 %v35, %v23
  %v38 = vadd.f32 %v36, 1e-05
  %v39 = vadd.f32 %v37, 1e-05
  %v40 = vrsqrt.pop %v38
  %v41 = vrsqrt.pop %v39
  %v42 = vmul.f32 %v26, %v40
  %v43 = vmul.f32 %v27, %v41
  %v44 = vld [vmem:[%s1] sm:$0x1]
  %v46 = vlaneseq
  %v47 = vshrl.u32 %v46, 7
  %v48 = vsub.s32 0, %v47
  %v49 = vrot.slane %v44, %v48
  %v51 = vmul.f32 %v42, %v49
  %v52 = vmul.f32 %v43, %v49
  %v53 = vld [vmem:[%s2] sm:$0x1]
  %v55 = vlaneseq
  %v56 = vshrl.u32 %v55, 7
  %v57 = vsub.s32 0, %v56
  %v58 = vrot.slane %v53, %v57
  %v60 = vadd.f32 %v51, %v58
  %v61 = vadd.f32 %v52, %v58
  %62 = vst.msk [vmem:[%s3] sm:$0xff] %vm16, %v60
  %63 = vst.msk [vmem:[%s3 + $0x8] sm:$0xff] %vm16, %v61
  // Predicated region
  $region14: #{medsam_forward.98} parent=0 // pred_check
    _
  $region15: #{medsam_forward.98} parent=0 // pred_check_branch
    %65 = sbr.rel (0) target = $region17
  $region16: #{medsam_forward.98} parent=0 // pred_region
    _
  $region17: #{medsam_forward.98} parent=0 // pred_fallthru
    _
  // Predicated region
  $region18: #{medsam_forward.98} parent=0 // pred_check
    _
  $region19: #{medsam_forward.98} parent=0 // pred_check_branch
    %67 = sbr.rel (0) target = $region21
  $region20: #{medsam_forward.98} parent=0 // pred_region
    _
  $region21: #{medsam_forward.98} parent=0 // pred_fallthru
    _

// kernel: medsam_forward.102
$region0: #{medsam_forward.102}
  #allocation0 [shape = 'u32[]', space=smem, size = 0x4, offset = 0x4, fixed_abs, tag = 'smem constant byte address 0x4 - core index']
  #allocation1 [shape = 'u32[144,128]{1,0:T(1,128)}', space=vmem, size = 0x12000, scoped, tag = 'internal scratch']
  %s0 = inlined_call_operand.vmem [shape: bf16[2,7,16], index: 0, kind: input, shape index: {}]
  %s1 = inlined_call_operand.vmem [shape: bf16[2,16,16], index: 1, kind: input, shape index: {}]
  %s2 = inlined_call_operand.vmem [shape: bf16[2,16,16], index: 2, kind: input, shape index: {}]
  %s3 = inlined_call_operand.vmem [shape: f32[2,7,16], index: 3, kind: output, shape index: {}]
  %s4 = sld [smem:[#allocation0]]
  $region45: #{medsam_forward.102} parent=0
    _
  %s6 = ssub.s32 1, %s4
  %s7 = scalar_select 0, %s6, %s4
  loop: start=0, step=1, limit=4
  $region2: #{medsam_forward.102} parent=0 // loop_pre_header
    _
  $region3: #{medsam_forward.102} parent=0 // loop_header
    %s9 = sphi 0, %s13
    %p10 = scmp.ge.s32.totalorder %s9, 4
    %s19 = sphi 0, %s21
    %s22 = sphi 0, %s19
    %s23 = sphi 0, %s22
    %s39 = sphi 0, %s23
    %s45 = sphi 0, %s47
    %s48 = sphi 0, %s45
    %s49 = sphi 0, %s48
    %s65 = sphi 0, %s49
    %s71 = sphi 0, %s73
    %s74 = sphi 0, %s71
    %s75 = sphi 0, %s74
    %s91 = sphi 0, %s75
    %s97 = sphi 0, %s99
    %s100 = sphi 0, %s97
    %s101 = sphi 0, %s100
    %s117 = sphi 0, %s101
  $region4: #{medsam_forward.102} parent=0 // loop_header_branch
    %12 = sbr.rel (%p10) target = $region8
  $region5: #{medsam_forward.102} parent=0 // loop_body
    %s14 = ssub.s32 %s9, 1
    %s15 = ssub.s32 %s9, 2
    %s16 = sadd.s32 %s9, 1
    %s17 = ssub.s32 %s9, %s16
    %p18 = scmp.eq.s32.totalorder %s17, 0
    %s20 = sadd.s32 %s19, 1
    %s21 = scalar_select %p18, %s19, %s20
    %p24 = pneg %p18
    %p25 = scmp.eq.s32.totalorder %s9, 1
    %p26 = por %p24, %p25
    %p27 = scmp.ne.s32.totalorder %s19, %s22
    %p28 = scmp.eq.s32.totalorder %s9, 0
    %p29 = por %p27, %p28
    %p30 = scmp.ne.s32.totalorder %s19, %s22
    %p31 = scmp.eq.s32.totalorder %s14, 1
    %p32 = por %p30, %p31
    %p33 = scmp.ne.s32.totalorder %s22, %s23
    %p34 = scmp.eq.s32.totalorder %s14, 0
    %p35 = por %p33, %p34
    %p36 = scmp.ne.s32.totalorder %s22, %s23
    %p37 = scmp.eq.s32.totalorder %s15, 1
    %p38 = por %p36, %p37
    %p40 = scmp.ne.s32.totalorder %s23, %s39
    %p41 = scmp.eq.s32.totalorder %s15, 0
    %p42 = por %p40, %p41
    %s43 = ssub.s32 %s9, %s16
    %p44 = scmp.eq.s32.totalorder %s43, 0
    %s46 = sadd.s32 %s45, 1
    %s47 = scalar_select %p44, %s45, %s46
    %p50 = pneg %p44
    %p51 = scmp.eq.s32.totalorder %s9, 1
    %p52 = por %p50, %p51
    %p53 = scmp.ne.s32.totalorder %s45, %s48
    %p54 = scmp.eq.s32.totalorder %s9, 0
    %p55 = por %p53, %p54
    %p56 = scmp.ne.s32.totalorder %s45, %s48
    %p57 = scmp.eq.s32.totalorder %s14, 1
    %p58 = por %p56, %p57
    %p59 = scmp.ne.s32.totalorder %s48, %s49
    %p60 = scmp.eq.s32.totalorder %s14, 0
    %p61 = por %p59, %p60
    %p62 = scmp.ne.s32.totalorder %s48, %s49
    %p63 = scmp.eq.s32.totalorder %s15, 1
    %p64 = por %p62, %p63
    %p66 = scmp.ne.s32.totalorder %s49, %s65
    %p67 = scmp.eq.s32.totalorder %s15, 0
    %p68 = por %p66, %p67
    %s69 = ssub.s32 %s9, %s16
    %p70 = scmp.eq.s32.totalorder %s69, 0
    %s72 = sadd.s32 %s71, 1
    %s73 = scalar_select %p70, %s71, %s72
    %p76 = pneg %p70
    %p77 = scmp.eq.s32.totalorder %s9, 1
    %p78 = por %p76, %p77
    %p79 = scmp.ne.s32.totalorder %s71, %s74
    %p80 = scmp.eq.s32.totalorder %s9, 0
    %p81 = por %p79, %p80
    %p82 = scmp.ne.s32.totalorder %s71, %s74
    %p83 = scmp.eq.s32.totalorder %s14, 1
    %p84 = por %p82, %p83
    %p85 = scmp.ne.s32.totalorder %s74, %s75
    %p86 = scmp.eq.s32.totalorder %s14, 0
    %p87 = por %p85, %p86
    %p88 = scmp.ne.s32.totalorder %s74, %s75
    %p89 = scmp.eq.s32.totalorder %s15, 1
    %p90 = por %p88, %p89
    %p92 = scmp.ne.s32.totalorder %s75, %s91
    %p93 = scmp.eq.s32.totalorder %s15, 0
    %p94 = por %p92, %p93
    %s95 = ssub.s32 %s9, %s16
    %p96 = scmp.eq.s32.totalorder %s95, 0
    %s98 = sadd.s32 %s97, 1
    %s99 = scalar_select %p96, %s97, %s98
    %p102 = pneg %p96
    %p103 = scmp.eq.s32.totalorder %s9, 1
    %p104 = por %p102, %p103
    %p105 = scmp.ne.s32.totalorder %s97, %s100
    %p106 = scmp.eq.s32.totalorder %s9, 0
    %p107 = por %p105, %p106
    %p108 = scmp.ne.s32.totalorder %s97, %s100
    %p109 = scmp.eq.s32.totalorder %s14, 1
    %p110 = por %p108, %p109
    %p111 = scmp.ne.s32.totalorder %s100, %s101
    %p112 = scmp.eq.s32.totalorder %s14, 0
    %p113 = por %p111, %p112
    %p114 = scmp.ne.s32.totalorder %s100, %s101
    %p115 = scmp.eq.s32.totalorder %s15, 1
    %p116 = por %p114, %p115
    %p118 = scmp.ne.s32.totalorder %s101, %s117
    %p119 = scmp.eq.s32.totalorder %s15, 0
    %p120 = por %p118, %p119
    %p121 = scmp.le.s32.totalorder 1, %s9
    %p122 = scmp.lt.s32.totalorder %s9, 3
    %p123 = pnand %p121, %p122
    %p124 = pneg %p123
    // Predicated region
    $region9: #{medsam_forward.102} parent=5 // pred_check
      _
    $region10: #{medsam_forward.102} parent=5 // pred_check_branch
      %126 = sbr.rel (%p123) target = $region12
    $region11: #{medsam_forward.102} parent=5 // pred_region
      %s127 = ssub.s32 %s9, 1
    $region12: #{medsam_forward.102} parent=5 // pred_fallthru
      _
    %p128 = scmp.lt.s32.totalorder %s9, 2
    // Predicated region
    $region13: #{medsam_forward.102} parent=5 // pred_check
      %p129 = pneg %p128
    $region14: #{medsam_forward.102} parent=5 // pred_check_branch
      %131 = sbr.rel (%p129) target = $region16
    $region15: #{medsam_forward.102} parent=5 // pred_region
      // Predicated region
      $region17: #{medsam_forward.102} parent=15 // pred_check
        %p132 = pneg %p29
      $region18: #{medsam_forward.102} parent=15 // pred_check_branch
        %134 = sbr.rel (%p132) target = $region20
      $region19: #{medsam_forward.102} parent=15 // pred_region
        %p135 = scmp.lt.s32.totalorder %s9, 1
        %s136 = scalar_select %p135, %s9, 1
        %s137 = smul.addr %s136, 4
        %s138 = scalar_lea.vmem %s0, %s137
      $region20: #{medsam_forward.102} parent=15 // pred_fallthru
        _
      // Predicated region
      $region21: #{medsam_forward.102} parent=15 // pred_check
        %p139 = pneg %p55
      $region22: #{medsam_forward.102} parent=15 // pred_check_branch
        %141 = sbr.rel (%p139) target = $region24
      $region23: #{medsam_forward.102} parent=15 // pred_region
        %p142 = scmp.lt.s32.totalorder %s9, 1
        %s143 = scalar_select %p142, %s9, 1
        %s144 = smul.addr %s143, 2
        %s145 = smul.addr %s144, 4
        %s146 = scalar_lea.vmem %s1, %s145
      $region24: #{medsam_forward.102} parent=15 // pred_fallthru
        _
      // Predicated region
      $region25: #{medsam_forward.102} parent=15 // pred_check
        %p147 = pneg %p81
      $region26: #{medsam_forward.102} parent=15 // pred_check_branch
        %149 = sbr.rel (%p147) target = $region28
      $region27: #{medsam_forward.102} parent=15 // pred_region
        %p150 = scmp.lt.s32.totalorder %s9, 1
        %s151 = scalar_select %p150, %s9, 1
        %s152 = smul.addr %s151, 2
        %s153 = smul.addr %s152, 4
        %s154 = scalar_lea.vmem %s2, %s153
      $region28: #{medsam_forward.102} parent=15 // pred_fallthru
        _
    $region16: #{medsam_forward.102} parent=5 // pred_fallthru
      _
    %p155 = scmp.le.s32.totalorder 1, %s9
    %p156 = scmp.lt.s32.totalorder %s9, 3
    %p157 = pnand %p155, %p156
    %p158 = pneg %p157
    // Predicated region
    $region29: #{medsam_forward.102} parent=5 // pred_check
      _
    $region30: #{medsam_forward.102} parent=5 // pred_check_branch
      %160 = sbr.rel (%p157) target = $region32
    $region31: #{medsam_forward.102} parent=5 // pred_region
      %s161 = ssub.s32 %s9, 1
      %p162 = scmp.lt.s32.totalorder %s14, 1
      %s163 = scalar_select %p162, %s14, 1
      %s164 = smul.addr %s163, 4
      %s165 = scalar_lea.vmem %s0, %s164
      %p166 = pneg %p35
      %p167 = pneg %p32
      %p168 = scmp.lt.s32.totalorder %s14, 1
      %s169 = scalar_select %p168, %s14, 1
      %s170 = smul.addr %s169, 2
      %s171 = smul.addr %s170, 4
      %s172 = scalar_lea.vmem %s1, %s171
      %p173 = pneg %p61
      %p174 = pneg %p58
      %p175 = scmp.lt.s32.totalorder %s14, 1
      %s176 = scalar_select %p175, %s14, 1
      %s177 = smul.addr %s176, 2
      %s178 = smul.addr %s177, 4
      %s179 = scalar_lea.vmem %s2, %s178
      %p180 = pneg %p87
      %p181 = pneg %p84
      %p182 = pneg %p113
      %p183 = pneg %p110
      %p184 = scmp.lt.s32.totalorder %s14, 1
      %s185 = scalar_select %p184, %s14, 1
      %s186 = smul.addr %s185, 8
      %s187 = scalar_lea.vmem %s3, %s186
      %p188 = scmp.lt.s32.totalorder %s14, 1
      %s189 = scalar_select %p188, %s14, 1
      %s190 = smul.addr %s189, 4
      %s191 = scalar_lea.vmem %s0, %s190
      %p192 = scmp.lt.s32.totalorder %s14, 1
      %s193 = scalar_select %p192, %s14, 1
      %s194 = smul.addr %s193, 2
      %s195 = smul.addr %s194, 4
      %s196 = scalar_lea.vmem %s1, %s195
      %p197 = scmp.lt.s32.totalorder %s14, 1
      %s198 = scalar_select %p197, %s14, 1
      %s199 = smul.addr %s198, 2
      %s200 = smul.addr %s199, 4
      %s201 = scalar_lea.vmem %s2, %s200
      %p202 = scmp.lt.s32.totalorder %s14, 1
      %s203 = scalar_select %p202, %s14, 1
      %s204 = smul.addr %s203, 8
      %s205 = scalar_lea.vmem %s3, %s204
      %v207 = vld [vmem:[%s191] sm:$0xf]
      %v208 = vld [vmem:[%s196] sm:$0xf]
      %v209 = vld [vmem:[%s196 + $0x4] sm:$0xf]
      %v210 = vld [vmem:[%s201] sm:$0xf]
      %v211 = vld [vmem:[%s201 + $0x4] sm:$0xf]
      %v214 = vunpack.c.l.b16 %v208
      %v215 = vunpack.c.l.b16 %v209
      %v216 = vpack.c.b16 %v215, %v214
      %vm217 = vcmask 64512
      %v219 = vsel %vm217, %v207, 0
      %v222 = vsel %vm217, %v216, 0
      %224 = vmatprep.subr.bf16.mxu0 0
      %225 = vmatpush1.bf16.xpose.msra.mxu0 0
      %226 = vmatprep.subr.bf16.mxu0 0
      %227 = vmatpush1.bf16.xpose.msra.mxu0 0
      %228 = vmatprep.subr.bf16.mxu0 0
      %229 = vmatpush1.bf16.xpose.msra.mxu0 0
      %230 = vmatprep.subr.bf16.mxu0 0
      %231 = vmatpush1.bf16.xpose.msra.mxu0 0
      %232 = vmatprep.subr.bf16.mxu0 0
      %233 = vmatpush1.bf16.xpose.msra.mxu0 0
      %234 = vmatprep.subr.bf16.mxu0 0
      %235 = vmatpush1.bf16.xpose.msra.mxu0 0
      %236 = vmatprep.subr.bf16.mxu0 0
      %237 = vmatpush1.bf16.xpose.msra.mxu0 0
      %238 = vmatprep.subr.bf16.mxu0 0
      %239 = vmatpush1.bf16.xpose.msra.mxu0 %v222
      %240 = vmatprep.subr.bf16.mxu0 0
      %241 = vmatpush2.bf16.xpose.msra.mxu0 0
      %242 = vmatprep.subr.bf16.mxu0 0
      %243 = vmatpush2.bf16.xpose.msra.mxu0 0
      %244 = vmatprep.subr.bf16.mxu0 0
      %245 = vmatpush2.bf16.xpose.msra.mxu0 0
      %246 = vmatprep.subr.bf16.mxu0 0
      %247 = vmatpush2.bf16.xpose.msra.mxu0 0
      %248 = vmatprep.subr.bf16.mxu0 0
      %249 = vmatpush2.bf16.xpose.msra.mxu0 0
      %250 = vmatprep.subr.bf16.mxu0 0
      %251 = vmatpush2.bf16.xpose.msra.mxu0 0
      %252 = vmatprep.subr.bf16.mxu0 0
      %253 = vmatpush2.bf16.xpose.msra.mxu0 0
      %254 = vmatprep.subr.bf16.mxu0 0
      %255 = vmatpush2.bf16.xpose.msra.mxu0 0
      %256 = vmatprep.mubr.bf16.mxu0 0
      %257 = vmatmul.mubr.bf16.gmra.mxu0 %v219
      %v258 = vpop.f32.mrf.mxu0
      %v259 = vadd.f32 0.0, %v258
      %v260 = vpop.f32.mrf.mxu0
      %v261 = vpop.f32.mrf.mxu0
      %v262 = vpop.f32.mrf.mxu0
      %263 = vdwg.mxu0
      %v264 = vmul.f32 %v259, 0.35355338
      %vm265 = vcmask 129024
      %v266 = vsel %vm265, %v264, -inf
      %267 = vmax.xlane.f32.xlu0 %v266
      %v268 = vpop.xlane.xlu0 %267
      %v269 = vsub.f32 %v264, %v268
      %v270 = vmul.f32 %v269, 1.442695
      %v271 = vpow.pop %v270
      %v272 = vsel %vm265, %v271, 0.0
      %273 = vadd.xlane.f32.xlu0 %v272
      %v274 = vpop.xlane.xlu0 %273
      %v275 = vrcp.pop %v274
      %v276 = vmul.f32 %v271, %v275
      %v277 = vpack.c.bf16 %v276, %v276
      %v280 = vunpack.c.l.b16 %v210
      %v281 = vunpack.c.l.b16 %v211
      %v282 = vpack.c.b16 %v281, %v280
      %vm284 = vcmask 130048
      %v286 = vsel %vm284, %v277, 0
      %288 = vmatprep.subr.bf16.mxu0 0
      %289 = vmatpush1.bf16.msra.mxu0 0
      %290 = vmatprep.subr.bf16.mxu0 0
      %291 = vmatpush1.bf16.msra.mxu0 0
      %292 = vmatprep.subr.bf16.mxu0 0
      %293 = vmatpush1.bf16.msra.mxu0 0
      %294 = vmatprep.subr.bf16.mxu0 0
      %295 = vmatpush1.bf16.msra.mxu0 0
      %296 = vmatprep.subr.bf16.mxu0 0
      %297 = vmatpush1.bf16.msra.mxu0 0
      %298 = vmatprep.subr.bf16.mxu0 0
      %299 = vmatpush1.bf16.msra.mxu0 0
      %300 = vmatprep.subr.bf16.mxu0 0
      %301 = vmatpush1.bf16.msra.mxu0 0
      %302 = vmatprep.subr.bf16.mxu0 0
      %303 = vmatpush1.bf16.msra.mxu0 %v282
      %304 = vmatprep.subr.bf16.mxu0 0
      %305 = vmatpush2.bf16.msra.mxu0 0
      %306 = vmatprep.subr.bf16.mxu0 0
      %307 = vmatpush2.bf16.msra.mxu0 0
      %308 = vmatprep.subr.bf16.mxu0 0
      %309 = vmatpush2.bf16.msra.mxu0 0
      %310 = vmatprep.subr.bf16.mxu0 0
      %311 = vmatpush2.bf16.msra.mxu0 0
      %312 = vmatprep.subr.bf16.mxu0 0
      %313 = vmatpush2.bf16.msra.mxu0 0
      %314 = vmatprep.subr.bf16.mxu0 0
      %315 = vmatpush2.bf16.msra.mxu0 0
      %316 = vmatprep.subr.bf16.mxu0 0
      %317 = vmatpush2.bf16.msra.mxu0 0
      %318 = vmatprep.subr.bf16.mxu0 0
      %319 = vmatpush2.bf16.msra.mxu0 0
      %320 = vmatprep.mubr.bf16.mxu0 0
      %321 = vmatmul.mubr.bf16.gmra.mxu0 %v286
      %v322 = vpop.f32.mrf.mxu0
      %v323 = vadd.f32 0.0, %v322
      %v324 = vpop.f32.mrf.mxu0
      %v325 = vpop.f32.mrf.mxu0
      %v326 = vpop.f32.mrf.mxu0
      %327 = vdwg.mxu0
      %vm328 = vcmask 63488
      %329 = vst.msk [vmem:[%s205] sm:$0x7f] %vm328, %v323
      %v331 = vunpack.c.l.b16 %v207
      %v332 = vpack.c.b16 %v331, %v331
      %333 = vrot.lane.b32.xlu0 %v332, 120
      %v334 = vpop.permute.xlu0 %333
      %335 = vrot.lane.b32.xlu0 %v216, 120
      %v336 = vpop.permute.xlu0 %335
      %v338 = vsel %vm217, %v334, 0
      %v341 = vsel %vm217, %v336, 0
      %343 = vmatprep.subr.bf16.mxu0 0
      %344 = vmatpush1.bf16.xpose.msra.mxu0 0
      %345 = vmatprep.subr.bf16.mxu0 0
      %346 = vmatpush1.bf16.xpose.msra.mxu0 0
      %347 = vmatprep.subr.bf16.mxu0 0
      %348 = vmatpush1.bf16.xpose.msra.mxu0 0
      %349 = vmatprep.subr.bf16.mxu0 0
      %350 = vmatpush1.bf16.xpose.msra.mxu0 0
      %351 = vmatprep.subr.bf16.mxu0 0
      %352 = vmatpush1.bf16.xpose.msra.mxu0 0
      %353 = vmatprep.subr.bf16.mxu0 0
      %354 = vmatpush1.bf16.xpose.msra.mxu0 0
      %355 = vmatprep.subr.bf16.mxu0 0
      %356 = vmatpush1.bf16.xpose.msra.mxu0 0
      %357 = vmatprep.subr.bf16.mxu0 0
      %358 = vmatpush1.bf16.xpose.msra.mxu0 %v341
      %359 = vmatprep.subr.bf16.mxu0 0
      %360 = vmatpush2.bf16.xpose.msra.mxu0 0
      %361 = vmatprep.subr.bf16.mxu0 0
      %362 = vmatpush2.bf16.xpose.msra.mxu0 0
      %363 = vmatprep.subr.bf16.mxu0 0
      %364 = vmatpush2.bf16.xpose.msra.mxu0 0
      %365 = vmatprep.subr.bf16.mxu0 0
      %366 = vmatpush2.bf16.xpose.msra.mxu0 0
      %367 = vmatprep.subr.bf16.mxu0 0
      %368 = vmatpush2.bf16.xpose.msra.mxu0 0
      %369 = vmatprep.subr.bf16.mxu0 0
      %370 = vmatpush2.bf16.xpose.msra.mxu0 0
      %371 = vmatprep.subr.bf16.mxu0 0
      %372 = vmatpush2.bf16.xpose.msra.mxu0 0
      %373 = vmatprep.subr.bf16.mxu0 0
      %374 = vmatpush2.bf16.xpose.msra.mxu0 0
      %375 = vmatprep.mubr.bf16.mxu0 0
      %376 = vmatmul.mubr.bf16.gmra.mxu0 %v338
      %v377 = vpop.f32.mrf.mxu0
      %v378 = vadd.f32 0.0, %v377
      %v379 = vpop.f32.mrf.mxu0
      %v380 = vpop.f32.mrf.mxu0
      %v381 = vpop.f32.mrf.mxu0
      %382 = vdwg.mxu0
      %v383 = vmul.f32 %v378, 0.35355338
      %v384 = vsel %vm265, %v383, -inf
      %385 = vmax.xlane.f32.xlu0 %v384
      %v386 = vpop.xlane.xlu0 %385
      %v387 = vsub.f32 %v383, %v386
      %v388 = vmul.f32 %v387, 1.442695
      %v389 = vpow.pop %v388
      %v390 = vsel %vm265, %v389, 0.0
      %391 = vadd.xlane.f32.xlu0 %v390
      %v392 = vpop.xlane.xlu0 %391
      %v393 = vrcp.pop %v392
      %v394 = vmul.f32 %v389, %v393
      %v395 = vpack.c.bf16 %v394, %v394
      %396 = vrot.lane.b32.xlu0 %v282, 120
      %v397 = vpop.permute.xlu0 %396
      %v400 = vsel %vm284, %v395, 0
      %402 = vmatprep.subr.bf16.mxu0 0
      %403 = vmatpush1.bf16.msra.mxu0 0
      %404 = vmatprep.subr.bf16.mxu0 0
      %405 = vmatpush1.bf16.msra.mxu0 0
      %406 = vmatprep.subr.bf16.mxu0 0
      %407 = vmatpush1.bf16.msra.mxu0 0
      %408 = vmatprep.subr.bf16.mxu0 0
      %409 = vmatpush1.bf16.msra.mxu0 0
      %410 = vmatprep.subr.bf16.mxu0 0
      %411 = vmatpush1.bf16.msra.mxu0 0
      %412 = vmatprep.subr.bf16.mxu0 0
      %413 = vmatpush1.bf16.msra.mxu0 0
      %414 = vmatprep.subr.bf16.mxu0 0
      %415 = vmatpush1.bf16.msra.mxu0 0
      %416 = vmatprep.subr.bf16.mxu0 0
      %417 = vmatpush1.bf16.msra.mxu0 %v397
      %418 = vmatprep.subr.bf16.mxu0 0
      %419 = vmatpush2.bf16.msra.mxu0 0
      %420 = vmatprep.subr.bf16.mxu0 0
      %421 = vmatpush2.bf16.msra.mxu0 0
      %422 = vmatprep.subr.bf16.mxu0 0
      %423 = vmatpush2.bf16.msra.mxu0 0
      %424 = vmatprep.subr.bf16.mxu0 0
      %425 = vmatpush2.bf16.msra.mxu0 0
      %426 = vmatprep.subr.bf16.mxu0 0
      %427 = vmatpush2.bf16.msra.mxu0 0
      %428 = vmatprep.subr.bf16.mxu0 0
      %429 = vmatpush2.bf16.msra.mxu0 0
      %430 = vmatprep.subr.bf16.mxu0 0
      %431 = vmatpush2.bf16.msra.mxu0 0
      %432 = vmatprep.subr.bf16.mxu0 0
      %433 = vmatpush2.bf16.msra.mxu0 0
      %434 = vmatprep.mubr.bf16.mxu0 0
      %435 = vmatmul.mubr.bf16.gmra.mxu0 %v400
      %v436 = vpop.f32.mrf.mxu0
      %v437 = vadd.f32 0.0, %v436
      %v438 = vpop.f32.mrf.mxu0
      %v439 = vpop.f32.mrf.mxu0
      %v440 = vpop.f32.mrf.mxu0
      %441 = vdwg.mxu0
      %443 = vrot.lane.b32.xlu0 %v437, 8
      %v444 = vpop.permute.xlu0 %443
      %vm446 = vcmask 129088
      %447 = vst.msk [vmem:[%s205] sm:$0x7f] %vm446, %v444
      %p448 = scmp.lt.s32.totalorder %s14, 1
      %s449 = scalar_select %p448, %s14, 1
      %s450 = smul.addr %s449, 8
      %s451 = scalar_lea.vmem %s3, %s450
      // Predicated region
      $region33: #{medsam_forward.102} parent=31 // pred_check
        %p452 = pneg %p110
      $region34: #{medsam_forward.102} parent=31 // pred_check_branch
        %454 = sbr.rel (%p452) target = $region36
      $region35: #{medsam_forward.102} parent=31 // pred_region
        _
      $region36: #{medsam_forward.102} parent=31 // pred_fallthru
        _
    $region32: #{medsam_forward.102} parent=5 // pred_fallthru
      _
    %p455 = scmp.le.s32.totalorder 2, %s9
    // Predicated region
    $region37: #{medsam_forward.102} parent=5 // pred_check
      %p456 = pneg %p455
    $region38: #{medsam_forward.102} parent=5 // pred_check_branch
      %458 = sbr.rel (%p456) target = $region40
    $region39: #{medsam_forward.102} parent=5 // pred_region
      %s459 = ssub.s32 %s9, 2
      // Predicated region
      $region41: #{medsam_forward.102} parent=39 // pred_check
        %p460 = pneg %p116
      $region42: #{medsam_forward.102} parent=39 // pred_check_branch
        %462 = sbr.rel (%p460) target = $region44
      $region43: #{medsam_forward.102} parent=39 // pred_region
        %p463 = scmp.lt.s32.totalorder %s15, 1
        %s464 = scalar_select %p463, %s15, 1
        %s465 = smul.addr %s464, 8
        %s466 = scalar_lea.vmem %s3, %s465
      $region44: #{medsam_forward.102} parent=39 // pred_fallthru
        _
    $region40: #{medsam_forward.102} parent=5 // pred_fallthru
      _
  $region6: #{medsam_forward.102} parent=0 // loop_footer
    %s13 = sadd.s32 1, %s9
  $region7: #{medsam_forward.102} parent=0 // loop_footer_branch
    %8 = sbr.rel target = $region3
  $region8: #{medsam_forward.102} parent=0 // loop_exit
    _

// kernel: medsam_forward.105
$region0: #{medsam_forward.105}
  #allocation0 [shape = 'u32[]', space=smem, size = 0x4, offset = 0x4, fixed_abs, tag = 'smem constant byte address 0x4 - core index']
  #allocation1 [shape = 'u32[144,128]{1,0:T(1,128)}', space=vmem, size = 0x12000, scoped, tag = 'internal scratch']
  %s0 = inlined_call_operand.vmem [shape: bf16[16,32], index: 0, kind: input, shape index: {}]
  %s1 = inlined_call_operand.vmem [shape: bf16[64,32], index: 1, kind: input, shape index: {}]
  %s2 = inlined_call_operand.vmem [shape: f32[1,64], index: 2, kind: input, shape index: {}]
  %s3 = inlined_call_operand.vmem [shape: f32[16,64], index: 3, kind: output, shape index: {}]
  %s4 = sld [smem:[#allocation0]]
  $region22: #{medsam_forward.105} parent=0
    _
  %s6 = ssub.s32 1, %s4
  %s7 = scalar_select 0, %s6, %s4
  // Predicated region
  $region2: #{medsam_forward.105} parent=0 // pred_check
    _
  $region3: #{medsam_forward.105} parent=0 // pred_check_branch
    %9 = sbr.rel (0) target = $region5
  $region4: #{medsam_forward.105} parent=0 // pred_region
    _
  $region5: #{medsam_forward.105} parent=0 // pred_fallthru
    _
  // Predicated region
  $region6: #{medsam_forward.105} parent=0 // pred_check
    _
  $region7: #{medsam_forward.105} parent=0 // pred_check_branch
    %11 = sbr.rel (0) target = $region9
  $region8: #{medsam_forward.105} parent=0 // pred_region
    _
  $region9: #{medsam_forward.105} parent=0 // pred_fallthru
    _
  // Predicated region
  $region10: #{medsam_forward.105} parent=0 // pred_check
    _
  $region11: #{medsam_forward.105} parent=0 // pred_check_branch
    %13 = sbr.rel (0) target = $region13
  $region12: #{medsam_forward.105} parent=0 // pred_region
    _
  $region13: #{medsam_forward.105} parent=0 // pred_fallthru
    _
  %v15 = vld [vmem:[%s0] sm:$0xf]
  %v16 = vld [vmem:[%s0 + $0x4] sm:$0xf]
  %v17 = vld [vmem:[%s1] sm:$0xf]
  %v18 = vld [vmem:[%s1 + $0x4] sm:$0xf]
  %v19 = vld [vmem:[%s1 + $0x8] sm:$0xf]
  %v20 = vld [vmem:[%s1 + $0xc] sm:$0xf]
  %v21 = vld [vmem:[%s1 + $0x10] sm:$0xf]
  %v22 = vld [vmem:[%s1 + $0x14] sm:$0xf]
  %v23 = vld [vmem:[%s1 + $0x18] sm:$0xf]
  %v24 = vld [vmem:[%s1 + $0x1c] sm:$0xf]
  %v25 = vld [vmem:[%s2] sm:$0x1]
  %v27 = vlaneseq
  %v28 = vshrl.u32 %v27, 7
  %v29 = vsub.s32 0, %v28
  %v30 = vrot.slane %v25, %v29
  %v34 = vunpack.c.l.b16 %v15
  %v35 = vunpack.c.l.b16 %v16
  %v36 = vpack.c.b16 %v35, %v34
  %v45 = vunpack.c.l.b16 %v17
  %v46 = vunpack.c.l.b16 %v18
  %v47 = vunpack.c.l.b16 %v19
  %v48 = vunpack.c.l.b16 %v20
  %v49 = vunpack.c.l.b16 %v21
  %v50 = vunpack.c.l.b16 %v22
  %v51 = vunpack.c.l.b16 %v23
  %v52 = vunpack.c.l.b16 %v24
  %v53 = vpack.c.b16 %v46, %v45
  %v54 = vpack.c.b16 %v48, %v47
  %v55 = vpack.c.b16 %v50, %v49
  %v56 = vpack.c.b16 %v52, %v51
  %vm57 = vcmask 261120
  %v59 = vsel %vm57, %v36, 0
  %v62 = vsel %vm57, %v53, 0
  %v65 = vsel %vm57, %v54, 0
  %v68 = vsel %vm57, %v55, 0
  %v71 = vsel %vm57, %v56, 0
  %73 = vmatprep.subr.bf16.mxu0 0
  %74 = vmatpush1.bf16.xpose.msra.mxu0 0
  %75 = vmatprep.subr.bf16.mxu0 0
  %76 = vmatpush1.bf16.xpose.msra.mxu0 0
  %77 = vmatprep.subr.bf16.mxu0 0
  %78 = vmatpush1.bf16.xpose.msra.mxu0 0
  %79 = vmatprep.subr.bf16.mxu0 0
  %80 = vmatpush1.bf16.xpose.msra.mxu0 0
  %81 = vmatprep.subr.bf16.mxu0 0
  %82 = vmatpush1.bf16.xpose.msra.mxu0 %v71
  %83 = vmatprep.subr.bf16.mxu0 0
  %84 = vmatpush1.bf16.xpose.msra.mxu0 %v68
  %85 = vmatprep.subr.bf16.mxu0 0
  %86 = vmatpush1.bf16.xpose.msra.mxu0 %v65
  %87 = vmatprep.subr.bf16.mxu0 0
  %88 = vmatpush1.bf16.xpose.msra.mxu0 %v62
  %89 = vmatprep.subr.bf16.mxu0 0
  %90 = vmatpush2.bf16.xpose.msra.mxu0 0
  %91 = vmatprep.subr.bf16.mxu0 0
  %92 = vmatpush2.bf16.xpose.msra.mxu0 0
  %93 = vmatprep.subr.bf16.mxu0 0
  %94 = vmatpush2.bf16.xpose.msra.mxu0 0
  %95 = vmatprep.subr.bf16.mxu0 0
  %96 = vmatpush2.bf16.xpose.msra.mxu0 0
  %97 = vmatprep.subr.bf16.mxu0 0
  %98 = vmatpush2.bf16.xpose.msra.mxu0 0
  %99 = vmatprep.subr.bf16.mxu0 0
  %100 = vmatpush2.bf16.xpose.msra.mxu0 0
  %101 = vmatprep.subr.bf16.mxu0 0
  %102 = vmatpush2.bf16.xpose.msra.mxu0 0
  %103 = vmatprep.subr.bf16.mxu0 0
  %104 = vmatpush2.bf16.xpose.msra.mxu0 0
  %105 = vmatprep.mubr.bf16.mxu0 0
  %106 = vmatmul.mubr.bf16.gmra.mxu0 %v59
  %v107 = vpop.f32.mrf.mxu0
  %v108 = vadd.f32 %v30, %v107
  %v109 = vpop.f32.mrf.mxu0
  %v110 = vpop.f32.mrf.mxu0
  %v111 = vadd.f32 %v30, %v110
  %v112 = vpop.f32.mrf.mxu0
  %113 = vdwg.mxu0
  %v114 = vmax.f32 %v108, 0.0
  %v115 = vmax.f32 %v111, 0.0
  %vm116 = vcmask 523264
  %117 = vst.msk [vmem:[%s3] sm:$0xff] %vm116, %v114
  %118 = vst.msk [vmem:[%s3 + $0x8] sm:$0xff] %vm116, %v115
  // Predicated region
  $region14: #{medsam_forward.105} parent=0 // pred_check
    _
  $region15: #{medsam_forward.105} parent=0 // pred_check_branch
    %120 = sbr.rel (0) target = $region17
  $region16: #{medsam_forward.105} parent=0 // pred_region
    _
  $region17: #{medsam_forward.105} parent=0 // pred_fallthru
    _
  // Predicated region
  $region18: #{medsam_forward.105} parent=0 // pred_check
    _
  $region19: #{medsam_forward.105} parent=0 // pred_check_branch
    %122 = sbr.rel (0) target = $region21
  $region20: #{medsam_forward.105} parent=0 // pred_region
    _
  $region21: #{medsam_forward.105} parent=0 // pred_fallthru
    _

// kernel: medsam_forward.103
$region0: #{medsam_forward.103}
  #allocation0 [shape = 'u32[]', space=smem, size = 0x4, offset = 0x4, fixed_abs, tag = 'smem constant byte address 0x4 - core index']
  #allocation1 [shape = 'u32[144,128]{1,0:T(1,128)}', space=vmem, size = 0x12000, scoped, tag = 'internal scratch']
  %s0 = inlined_call_operand.vmem [shape: bf16[16,16], index: 0, kind: input, shape index: {}]
  %s1 = inlined_call_operand.vmem [shape: bf16[32,16], index: 1, kind: input, shape index: {}]
  %s2 = inlined_call_operand.vmem [shape: f32[1,32], index: 2, kind: input, shape index: {}]
  %s3 = inlined_call_operand.vmem [shape: f32[16,32], index: 3, kind: output, shape index: {}]
  %s4 = sld [smem:[#allocation0]]
  $region22: #{medsam_forward.103} parent=0
    _
  %s6 = ssub.s32 1, %s4
  %s7 = scalar_select 0, %s6, %s4
  // Predicated region
  $region2: #{medsam_forward.103} parent=0 // pred_check
    _
  $region3: #{medsam_forward.103} parent=0 // pred_check_branch
    %9 = sbr.rel (0) target = $region5
  $region4: #{medsam_forward.103} parent=0 // pred_region
    _
  $region5: #{medsam_forward.103} parent=0 // pred_fallthru
    _
  // Predicated region
  $region6: #{medsam_forward.103} parent=0 // pred_check
    _
  $region7: #{medsam_forward.103} parent=0 // pred_check_branch
    %11 = sbr.rel (0) target = $region9
  $region8: #{medsam_forward.103} parent=0 // pred_region
    _
  $region9: #{medsam_forward.103} parent=0 // pred_fallthru
    _
  // Predicated region
  $region10: #{medsam_forward.103} parent=0 // pred_check
    _
  $region11: #{medsam_forward.103} parent=0 // pred_check_branch
    %13 = sbr.rel (0) target = $region13
  $region12: #{medsam_forward.103} parent=0 // pred_region
    _
  $region13: #{medsam_forward.103} parent=0 // pred_fallthru
    _
  %v15 = vld [vmem:[%s0] sm:$0xf]
  %v16 = vld [vmem:[%s0 + $0x4] sm:$0xf]
  %v17 = vld [vmem:[%s1] sm:$0xf]
  %v18 = vld [vmem:[%s1 + $0x4] sm:$0xf]
  %v19 = vld [vmem:[%s1 + $0x8] sm:$0xf]
  %v20 = vld [vmem:[%s1 + $0xc] sm:$0xf]
  %v21 = vld [vmem:[%s2] sm:$0x1]
  %v23 = vlaneseq
  %v24 = vshrl.u32 %v23, 7
  %v25 = vsub.s32 0, %v24
  %v26 = vrot.slane %v21, %v25
  %v30 = vunpack.c.l.b16 %v15
  %v31 = vunpack.c.l.b16 %v16
  %v32 = vpack.c.b16 %v31, %v30
  %v37 = vunpack.c.l.b16 %v17
  %v38 = vunpack.c.l.b16 %v18
  %v39 = vunpack.c.l.b16 %v19
  %v40 = vunpack.c.l.b16 %v20
  %v41 = vpack.c.b16 %v38, %v37
  %v42 = vpack.c.b16 %v40, %v39
  %vm43 = vcmask 130048
  %v45 = vsel %vm43, %v32, 0
  %v48 = vsel %vm43, %v41, 0
  %v51 = vsel %vm43, %v42, 0
  %53 = vmatprep.subr.bf16.mxu0 0
  %54 = vmatpush1.bf16.xpose.msra.mxu0 0
  %55 = vmatprep.subr.bf16.mxu0 0
  %56 = vmatpush1.bf16.xpose.msra.mxu0 0
  %57 = vmatprep.subr.bf16.mxu0 0
  %58 = vmatpush1.bf16.xpose.msra.mxu0 0
  %59 = vmatprep.subr.bf16.mxu0 0
  %60 = vmatpush1.bf16.xpose.msra.mxu0 0
  %61 = vmatprep.subr.bf16.mxu0 0
  %62 = vmatpush1.bf16.xpose.msra.mxu0 0
  %63 = vmatprep.subr.bf16.mxu0 0
  %64 = vmatpush1.bf16.xpose.msra.mxu0 0
  %65 = vmatprep.subr.bf16.mxu0 0
  %66 = vmatpush1.bf16.xpose.msra.mxu0 %v51
  %67 = vmatprep.subr.bf16.mxu0 0
  %68 = vmatpush1.bf16.xpose.msra.mxu0 %v48
  %69 = vmatprep.subr.bf16.mxu0 0
  %70 = vmatpush2.bf16.xpose.msra.mxu0 0
  %71 = vmatprep.subr.bf16.mxu0 0
  %72 = vmatpush2.bf16.xpose.msra.mxu0 0
  %73 = vmatprep.subr.bf16.mxu0 0
  %74 = vmatpush2.bf16.xpose.msra.mxu0 0
  %75 = vmatprep.subr.bf16.mxu0 0
  %76 = vmatpush2.bf16.xpose.msra.mxu0 0
  %77 = vmatprep.subr.bf16.mxu0 0
  %78 = vmatpush2.bf16.xpose.msra.mxu0 0
  %79 = vmatprep.subr.bf16.mxu0 0
  %80 = vmatpush2.bf16.xpose.msra.mxu0 0
  %81 = vmatprep.subr.bf16.mxu0 0
  %82 = vmatpush2.bf16.xpose.msra.mxu0 0
  %83 = vmatprep.subr.bf16.mxu0 0
  %84 = vmatpush2.bf16.xpose.msra.mxu0 0
  %85 = vmatprep.mubr.bf16.mxu0 0
  %86 = vmatmul.mubr.bf16.gmra.mxu0 %v45
  %v87 = vpop.f32.mrf.mxu0
  %v88 = vadd.f32 %v26, %v87
  %v89 = vpop.f32.mrf.mxu0
  %v90 = vpop.f32.mrf.mxu0
  %v91 = vadd.f32 %v26, %v90
  %v92 = vpop.f32.mrf.mxu0
  %93 = vdwg.mxu0
  %vm94 = vcmask 261120
  %95 = vst.msk [vmem:[%s3] sm:$0xff] %vm94, %v88
  %96 = vst.msk [vmem:[%s3 + $0x8] sm:$0xff] %vm94, %v91
  // Predicated region
  $region14: #{medsam_forward.103} parent=0 // pred_check
    _
  $region15: #{medsam_forward.103} parent=0 // pred_check_branch
    %98 = sbr.rel (0) target = $region17
  $region16: #{medsam_forward.103} parent=0 // pred_region
    _
  $region17: #{medsam_forward.103} parent=0 // pred_fallthru
    _
  // Predicated region
  $region18: #{medsam_forward.103} parent=0 // pred_check
    _
  $region19: #{medsam_forward.103} parent=0 // pred_check_branch
    %100 = sbr.rel (0) target = $region21
  $region20: #{medsam_forward.103} parent=0 // pred_region
    _
  $region21: #{medsam_forward.103} parent=0 // pred_fallthru
    _

// kernel: medsam_forward.106
$region0: #{medsam_forward.106}
  #allocation0 [shape = 'u32[]', space=smem, size = 0x4, offset = 0x4, fixed_abs, tag = 'smem constant byte address 0x4 - core index']
  #allocation1 [shape = 'u32[144,128]{1,0:T(1,128)}', space=vmem, size = 0x12000, scoped, tag = 'internal scratch']
  %s0 = inlined_call_operand.vmem [shape: bf16[16,64], index: 0, kind: input, shape index: {}]
  %s1 = inlined_call_operand.vmem [shape: bf16[32,64], index: 1, kind: input, shape index: {}]
  %s2 = inlined_call_operand.vmem [shape: f32[1,32], index: 2, kind: input, shape index: {}]
  %s3 = inlined_call_operand.vmem [shape: f32[16,32], index: 3, kind: output, shape index: {}]
  %s4 = sld [smem:[#allocation0]]
  $region22: #{medsam_forward.106} parent=0
    _
  %s6 = ssub.s32 1, %s4
  %s7 = scalar_select 0, %s6, %s4
  // Predicated region
  $region2: #{medsam_forward.106} parent=0 // pred_check
    _
  $region3: #{medsam_forward.106} parent=0 // pred_check_branch
    %9 = sbr.rel (0) target = $region5
  $region4: #{medsam_forward.106} parent=0 // pred_region
    _
  $region5: #{medsam_forward.106} parent=0 // pred_fallthru
    _
  // Predicated region
  $region6: #{medsam_forward.106} parent=0 // pred_check
    _
  $region7: #{medsam_forward.106} parent=0 // pred_check_branch
    %11 = sbr.rel (0) target = $region9
  $region8: #{medsam_forward.106} parent=0 // pred_region
    _
  $region9: #{medsam_forward.106} parent=0 // pred_fallthru
    _
  // Predicated region
  $region10: #{medsam_forward.106} parent=0 // pred_check
    _
  $region11: #{medsam_forward.106} parent=0 // pred_check_branch
    %13 = sbr.rel (0) target = $region13
  $region12: #{medsam_forward.106} parent=0 // pred_region
    _
  $region13: #{medsam_forward.106} parent=0 // pred_fallthru
    _
  %v15 = vld [vmem:[%s0] sm:$0xf]
  %v16 = vld [vmem:[%s0 + $0x4] sm:$0xf]
  %v17 = vld [vmem:[%s1] sm:$0xf]
  %v18 = vld [vmem:[%s1 + $0x4] sm:$0xf]
  %v19 = vld [vmem:[%s1 + $0x8] sm:$0xf]
  %v20 = vld [vmem:[%s1 + $0xc] sm:$0xf]
  %v21 = vld [vmem:[%s2] sm:$0x1]
  %v23 = vlaneseq
  %v24 = vshrl.u32 %v23, 7
  %v25 = vsub.s32 0, %v24
  %v26 = vrot.slane %v21, %v25
  %v30 = vunpack.c.l.b16 %v15
  %v31 = vunpack.c.l.b16 %v16
  %v32 = vpack.c.b16 %v31, %v30
  %v37 = vunpack.c.l.b16 %v17
  %v38 = vunpack.c.l.b16 %v18
  %v39 = vunpack.c.l.b16 %v19
  %v40 = vunpack.c.l.b16 %v20
  %v41 = vpack.c.b16 %v38, %v37
  %v42 = vpack.c.b16 %v40, %v39
  %vm43 = vcmask 523264
  %v45 = vsel %vm43, %v32, 0
  %v48 = vsel %vm43, %v41, 0
  %v51 = vsel %vm43, %v42, 0
  %53 = vmatprep.subr.bf16.mxu0 0
  %54 = vmatpush1.bf16.xpose.msra.mxu0 0
  %55 = vmatprep.subr.bf16.mxu0 0
  %56 = vmatpush1.bf16.xpose.msra.mxu0 0
  %57 = vmatprep.subr.bf16.mxu0 0
  %58 = vmatpush1.bf16.xpose.msra.mxu0 0
  %59 = vmatprep.subr.bf16.mxu0 0
  %60 = vmatpush1.bf16.xpose.msra.mxu0 0
  %61 = vmatprep.subr.bf16.mxu0 0
  %62 = vmatpush1.bf16.xpose.msra.mxu0 0
  %63 = vmatprep.subr.bf16.mxu0 0
  %64 = vmatpush1.bf16.xpose.msra.mxu0 0
  %65 = vmatprep.subr.bf16.mxu0 0
  %66 = vmatpush1.bf16.xpose.msra.mxu0 %v51
  %67 = vmatprep.subr.bf16.mxu0 0
  %68 = vmatpush1.bf16.xpose.msra.mxu0 %v48
  %69 = vmatprep.subr.bf16.mxu0 0
  %70 = vmatpush2.bf16.xpose.msra.mxu0 0
  %71 = vmatprep.subr.bf16.mxu0 0
  %72 = vmatpush2.bf16.xpose.msra.mxu0 0
  %73 = vmatprep.subr.bf16.mxu0 0
  %74 = vmatpush2.bf16.xpose.msra.mxu0 0
  %75 = vmatprep.subr.bf16.mxu0 0
  %76 = vmatpush2.bf16.xpose.msra.mxu0 0
  %77 = vmatprep.subr.bf16.mxu0 0
  %78 = vmatpush2.bf16.xpose.msra.mxu0 0
  %79 = vmatprep.subr.bf16.mxu0 0
  %80 = vmatpush2.bf16.xpose.msra.mxu0 0
  %81 = vmatprep.subr.bf16.mxu0 0
  %82 = vmatpush2.bf16.xpose.msra.mxu0 0
  %83 = vmatprep.subr.bf16.mxu0 0
  %84 = vmatpush2.bf16.xpose.msra.mxu0 0
  %85 = vmatprep.mubr.bf16.mxu0 0
  %86 = vmatmul.mubr.bf16.gmra.mxu0 %v45
  %v87 = vpop.f32.mrf.mxu0
  %v88 = vadd.f32 %v26, %v87
  %v89 = vpop.f32.mrf.mxu0
  %v90 = vpop.f32.mrf.mxu0
  %v91 = vadd.f32 %v26, %v90
  %v92 = vpop.f32.mrf.mxu0
  %93 = vdwg.mxu0
  %vm94 = vcmask 261120
  %95 = vst.msk [vmem:[%s3] sm:$0xff] %vm94, %v88
  %96 = vst.msk [vmem:[%s3 + $0x8] sm:$0xff] %vm94, %v91
  // Predicated region
  $region14: #{medsam_forward.106} parent=0 // pred_check
    _
  $region15: #{medsam_forward.106} parent=0 // pred_check_branch
    %98 = sbr.rel (0) target = $region17
  $region16: #{medsam_forward.106} parent=0 // pred_region
    _
  $region17: #{medsam_forward.106} parent=0 // pred_fallthru
    _
  // Predicated region
  $region18: #{medsam_forward.106} parent=0 // pred_check
    _
  $region19: #{medsam_forward.106} parent=0 // pred_check_branch
    %100 = sbr.rel (0) target = $region21
  $region20: #{medsam_forward.106} parent=0 // pred_region
    _
  $region21: #{medsam_forward.106} parent=0 // pred_fallthru
    _

// kernel: medsam_forward.112
$region0: #{medsam_forward.112}
  #allocation0 [shape = 'u32[]', space=smem, size = 0x4, offset = 0x4, fixed_abs, tag = 'smem constant byte address 0x4 - core index']
  #allocation1 [shape = 'u32[144,128]{1,0:T(1,128)}', space=vmem, size = 0x12000, scoped, tag = 'internal scratch']
  %s0 = inlined_call_operand.vmem [shape: bf16[32,16], index: 0, kind: input, shape index: {}]
  %s1 = inlined_call_operand.vmem [shape: bf16[32,16], index: 1, kind: input, shape index: {}]
  %s2 = inlined_call_operand.vmem [shape: f32[1,32], index: 2, kind: input, shape index: {}]
  %s3 = inlined_call_operand.vmem [shape: f32[32,32], index: 3, kind: output, shape index: {}]
  %s4 = sld [smem:[#allocation0]]
  $region22: #{medsam_forward.112} parent=0
    _
  %s6 = ssub.s32 1, %s4
  %s7 = scalar_select 0, %s6, %s4
  // Predicated region
  $region2: #{medsam_forward.112} parent=0 // pred_check
    _
  $region3: #{medsam_forward.112} parent=0 // pred_check_branch
    %9 = sbr.rel (0) target = $region5
  $region4: #{medsam_forward.112} parent=0 // pred_region
    _
  $region5: #{medsam_forward.112} parent=0 // pred_fallthru
    _
  // Predicated region
  $region6: #{medsam_forward.112} parent=0 // pred_check
    _
  $region7: #{medsam_forward.112} parent=0 // pred_check_branch
    %11 = sbr.rel (0) target = $region9
  $region8: #{medsam_forward.112} parent=0 // pred_region
    _
  $region9: #{medsam_forward.112} parent=0 // pred_fallthru
    _
  // Predicated region
  $region10: #{medsam_forward.112} parent=0 // pred_check
    _
  $region11: #{medsam_forward.112} parent=0 // pred_check_branch
    %13 = sbr.rel (0) target = $region13
  $region12: #{medsam_forward.112} parent=0 // pred_region
    _
  $region13: #{medsam_forward.112} parent=0 // pred_fallthru
    _
  %v15 = vld [vmem:[%s0] sm:$0xf]
  %v16 = vld [vmem:[%s0 + $0x4] sm:$0xf]
  %v17 = vld [vmem:[%s0 + $0x8] sm:$0xf]
  %v18 = vld [vmem:[%s0 + $0xc] sm:$0xf]
  %v19 = vld [vmem:[%s1] sm:$0xf]
  %v20 = vld [vmem:[%s1 + $0x4] sm:$0xf]
  %v21 = vld [vmem:[%s1 + $0x8] sm:$0xf]
  %v22 = vld [vmem:[%s1 + $0xc] sm:$0xf]
  %v23 = vld [vmem:[%s2] sm:$0x1]
  %v25 = vlaneseq
  %v26 = vshrl.u32 %v25, 7
  %v27 = vsub.s32 0, %v26
  %v28 = vrot.slane %v23, %v27
  %v34 = vunpack.c.l.b16 %v15
  %v35 = vunpack.c.l.b16 %v16
  %v36 = vunpack.c.l.b16 %v17
  %v37 = vunpack.c.l.b16 %v18
  %v38 = vpack.c.b16 %v35, %v34
  %v39 = vpack.c.b16 %v37, %v36
  %v44 = vunpack.c.l.b16 %v19
  %v45 = vunpack.c.l.b16 %v20
  %v46 = vunpack.c.l.b16 %v21
  %v47 = vunpack.c.l.b16 %v22
  %v48 = vpack.c.b16 %v45, %v44
  %v49 = vpack.c.b16 %v47, %v46
  %vm50 = vcmask 130048
  %v52 = vsel %vm50, %v38, 0
  %v55 = vsel %vm50, %v39, 0
  %v58 = vsel %vm50, %v48, 0
  %v61 = vsel %vm50, %v49, 0
  %63 = vmatprep.subr.bf16.mxu0 0
  %64 = vmatpush1.bf16.xpose.msra.mxu0 0
  %65 = vmatprep.subr.bf16.mxu0 0
  %66 = vmatpush1.bf16.xpose.msra.mxu0 0
  %67 = vmatprep.subr.bf16.mxu0 0
  %68 = vmatpush1.bf16.xpose.msra.mxu0 0
  %69 = vmatprep.subr.bf16.mxu0 0
  %70 = vmatpush1.bf16.xpose.msra.mxu0 0
  %71 = vmatprep.subr.bf16.mxu0 0
  %72 = vmatpush1.bf16.xpose.msra.mxu0 0
  %73 = vmatprep.subr.bf16.mxu0 0
  %74 = vmatpush1.bf16.xpose.msra.mxu0 0
  %75 = vmatprep.subr.bf16.mxu0 0
  %76 = vmatpush1.bf16.xpose.msra.mxu0 %v61
  %77 = vmatprep.subr.bf16.mxu0 0
  %78 = vmatpush1.bf16.xpose.msra.mxu0 %v58
  %79 = vmatprep.subr.bf16.mxu0 0
  %80 = vmatpush2.bf16.xpose.msra.mxu0 0
  %81 = vmatprep.subr.bf16.mxu0 0
  %82 = vmatpush2.bf16.xpose.msra.mxu0 0
  %83 = vmatprep.subr.bf16.mxu0 0
  %84 = vmatpush2.bf16.xpose.msra.mxu0 0
  %85 = vmatprep.subr.bf16.mxu0 0
  %86 = vmatpush2.bf16.xpose.msra.mxu0 0
  %87 = vmatprep.subr.bf16.mxu0 0
  %88 = vmatpush2.bf16.xpose.msra.mxu0 0
  %89 = vmatprep.subr.bf16.mxu0 0
  %90 = vmatpush2.bf16.xpose.msra.mxu0 0
  %91 = vmatprep.subr.bf16.mxu0 0
  %92 = vmatpush2.bf16.xpose.msra.mxu0 0
  %93 = vmatprep.subr.bf16.mxu0 0
  %94 = vmatpush2.bf16.xpose.msra.mxu0 0
  %95 = vmatprep.mubr.bf16.mxu0 0
  %96 = vmatmul.mubr.bf16.gmra.mxu0 %v52
  %v97 = vpop.f32.mrf.mxu0
  %v98 = vadd.f32 %v28, %v97
  %v99 = vpop.f32.mrf.mxu0
  %v100 = vpop.f32.mrf.mxu0
  %v101 = vadd.f32 %v28, %v100
  %v102 = vpop.f32.mrf.mxu0
  %103 = vmatprep.mubr.bf16.mxu0 0
  %104 = vmatmul.mubr.bf16.gmra.mxu0 %v55
  %v105 = vpop.f32.mrf.mxu0
  %v106 = vadd.f32 %v28, %v105
  %v107 = vpop.f32.mrf.mxu0
  %v108 = vpop.f32.mrf.mxu0
  %v109 = vadd.f32 %v28, %v108
  %v110 = vpop.f32.mrf.mxu0
  %111 = vdwg.mxu0
  %vm112 = vcmask 261120
  %113 = vst.msk [vmem:[%s3] sm:$0xff] %vm112, %v98
  %114 = vst.msk [vmem:[%s3 + $0x8] sm:$0xff] %vm112, %v101
  %115 = vst.msk [vmem:[%s3 + $0x10] sm:$0xff] %vm112, %v106
  %116 = vst.msk [vmem:[%s3 + $0x18] sm:$0xff] %vm112, %v109
  // Predicated region
  $region14: #{medsam_forward.112} parent=0 // pred_check
    _
  $region15: #{medsam_forward.112} parent=0 // pred_check_branch
    %118 = sbr.rel (0) target = $region17
  $region16: #{medsam_forward.112} parent=0 // pred_region
    _
  $region17: #{medsam_forward.112} parent=0 // pred_fallthru
    _
  // Predicated region
  $region18: #{medsam_forward.112} parent=0 // pred_check
    _
  $region19: #{medsam_forward.112} parent=0 // pred_check_branch
    %120 = sbr.rel (0) target = $region21
  $region20: #{medsam_forward.112} parent=0 // pred_region
    _
  $region21: #{medsam_forward.112} parent=0 // pred_fallthru
    _

// kernel: medsam_forward.111
$region0: #{medsam_forward.111}
  #allocation0 [shape = 'u32[]', space=smem, size = 0x4, offset = 0x4, fixed_abs, tag = 'smem constant byte address 0x4 - core index']
  #allocation1 [shape = 'u32[144,128]{1,0:T(1,128)}', space=vmem, size = 0x12000, scoped, tag = 'internal scratch']
  %s0 = inlined_call_operand.vmem [shape: bf16[2,16,16], index: 0, kind: input, shape index: {}]
  %s1 = inlined_call_operand.vmem [shape: bf16[2,7,16], index: 1, kind: input, shape index: {}]
  %s2 = inlined_call_operand.vmem [shape: bf16[2,7,16], index: 2, kind: input, shape index: {}]
  %s3 = inlined_call_operand.vmem [shape: f32[2,16,16], index: 3, kind: output, shape index: {}]
  %s4 = sld [smem:[#allocation0]]
  $region45: #{medsam_forward.111} parent=0
    _
  %s6 = ssub.s32 1, %s4
  %s7 = scalar_select 0, %s6, %s4
  loop: start=0, step=1, limit=4
  $region2: #{medsam_forward.111} parent=0 // loop_pre_header
    _
  $region3: #{medsam_forward.111} parent=0 // loop_header
    %s9 = sphi 0, %s13
    %p10 = scmp.ge.s32.totalorder %s9, 4
    %s19 = sphi 0, %s21
    %s22 = sphi 0, %s19
    %s23 = sphi 0, %s22
    %s39 = sphi 0, %s23
    %s45 = sphi 0, %s47
    %s48 = sphi 0, %s45
    %s49 = sphi 0, %s48
    %s65 = sphi 0, %s49
    %s71 = sphi 0, %s73
    %s74 = sphi 0, %s71
    %s75 = sphi 0, %s74
    %s91 = sphi 0, %s75
    %s97 = sphi 0, %s99
    %s100 = sphi 0, %s97
    %s101 = sphi 0, %s100
    %s117 = sphi 0, %s101
  $region4: #{medsam_forward.111} parent=0 // loop_header_branch
    %12 = sbr.rel (%p10) target = $region8
  $region5: #{medsam_forward.111} parent=0 // loop_body
    %s14 = ssub.s32 %s9, 1
    %s15 = ssub.s32 %s9, 2
    %s16 = sadd.s32 %s9, 1
    %s17 = ssub.s32 %s9, %s16
    %p18 = scmp.eq.s32.totalorder %s17, 0
    %s20 = sadd.s32 %s19, 1
    %s21 = scalar_select %p18, %s19, %s20
    %p24 = pneg %p18
    %p25 = scmp.eq.s32.totalorder %s9, 1
    %p26 = por %p24, %p25
    %p27 = scmp.ne.s32.totalorder %s19, %s22
    %p28 = scmp.eq.s32.totalorder %s9, 0
    %p29 = por %p27, %p28
    %p30 = scmp.ne.s32.totalorder %s19, %s22
    %p31 = scmp.eq.s32.totalorder %s14, 1
    %p32 = por %p30, %p31
    %p33 = scmp.ne.s32.totalorder %s22, %s23
    %p34 = scmp.eq.s32.totalorder %s14, 0
    %p35 = por %p33, %p34
    %p36 = scmp.ne.s32.totalorder %s22, %s23
    %p37 = scmp.eq.s32.totalorder %s15, 1
    %p38 = por %p36, %p37
    %p40 = scmp.ne.s32.totalorder %s23, %s39
    %p41 = scmp.eq.s32.totalorder %s15, 0
    %p42 = por %p40, %p41
    %s43 = ssub.s32 %s9, %s16
    %p44 = scmp.eq.s32.totalorder %s43, 0
    %s46 = sadd.s32 %s45, 1
    %s47 = scalar_select %p44, %s45, %s46
    %p50 = pneg %p44
    %p51 = scmp.eq.s32.totalorder %s9, 1
    %p52 = por %p50, %p51
    %p53 = scmp.ne.s32.totalorder %s45, %s48
    %p54 = scmp.eq.s32.totalorder %s9, 0
    %p55 = por %p53, %p54
    %p56 = scmp.ne.s32.totalorder %s45, %s48
    %p57 = scmp.eq.s32.totalorder %s14, 1
    %p58 = por %p56, %p57
    %p59 = scmp.ne.s32.totalorder %s48, %s49
    %p60 = scmp.eq.s32.totalorder %s14, 0
    %p61 = por %p59, %p60
    %p62 = scmp.ne.s32.totalorder %s48, %s49
    %p63 = scmp.eq.s32.totalorder %s15, 1
    %p64 = por %p62, %p63
    %p66 = scmp.ne.s32.totalorder %s49, %s65
    %p67 = scmp.eq.s32.totalorder %s15, 0
    %p68 = por %p66, %p67
    %s69 = ssub.s32 %s9, %s16
    %p70 = scmp.eq.s32.totalorder %s69, 0
    %s72 = sadd.s32 %s71, 1
    %s73 = scalar_select %p70, %s71, %s72
    %p76 = pneg %p70
    %p77 = scmp.eq.s32.totalorder %s9, 1
    %p78 = por %p76, %p77
    %p79 = scmp.ne.s32.totalorder %s71, %s74
    %p80 = scmp.eq.s32.totalorder %s9, 0
    %p81 = por %p79, %p80
    %p82 = scmp.ne.s32.totalorder %s71, %s74
    %p83 = scmp.eq.s32.totalorder %s14, 1
    %p84 = por %p82, %p83
    %p85 = scmp.ne.s32.totalorder %s74, %s75
    %p86 = scmp.eq.s32.totalorder %s14, 0
    %p87 = por %p85, %p86
    %p88 = scmp.ne.s32.totalorder %s74, %s75
    %p89 = scmp.eq.s32.totalorder %s15, 1
    %p90 = por %p88, %p89
    %p92 = scmp.ne.s32.totalorder %s75, %s91
    %p93 = scmp.eq.s32.totalorder %s15, 0
    %p94 = por %p92, %p93
    %s95 = ssub.s32 %s9, %s16
    %p96 = scmp.eq.s32.totalorder %s95, 0
    %s98 = sadd.s32 %s97, 1
    %s99 = scalar_select %p96, %s97, %s98
    %p102 = pneg %p96
    %p103 = scmp.eq.s32.totalorder %s9, 1
    %p104 = por %p102, %p103
    %p105 = scmp.ne.s32.totalorder %s97, %s100
    %p106 = scmp.eq.s32.totalorder %s9, 0
    %p107 = por %p105, %p106
    %p108 = scmp.ne.s32.totalorder %s97, %s100
    %p109 = scmp.eq.s32.totalorder %s14, 1
    %p110 = por %p108, %p109
    %p111 = scmp.ne.s32.totalorder %s100, %s101
    %p112 = scmp.eq.s32.totalorder %s14, 0
    %p113 = por %p111, %p112
    %p114 = scmp.ne.s32.totalorder %s100, %s101
    %p115 = scmp.eq.s32.totalorder %s15, 1
    %p116 = por %p114, %p115
    %p118 = scmp.ne.s32.totalorder %s101, %s117
    %p119 = scmp.eq.s32.totalorder %s15, 0
    %p120 = por %p118, %p119
    %p121 = scmp.le.s32.totalorder 1, %s9
    %p122 = scmp.lt.s32.totalorder %s9, 3
    %p123 = pnand %p121, %p122
    %p124 = pneg %p123
    // Predicated region
    $region9: #{medsam_forward.111} parent=5 // pred_check
      _
    $region10: #{medsam_forward.111} parent=5 // pred_check_branch
      %126 = sbr.rel (%p123) target = $region12
    $region11: #{medsam_forward.111} parent=5 // pred_region
      %s127 = ssub.s32 %s9, 1
    $region12: #{medsam_forward.111} parent=5 // pred_fallthru
      _
    %p128 = scmp.lt.s32.totalorder %s9, 2
    // Predicated region
    $region13: #{medsam_forward.111} parent=5 // pred_check
      %p129 = pneg %p128
    $region14: #{medsam_forward.111} parent=5 // pred_check_branch
      %131 = sbr.rel (%p129) target = $region16
    $region15: #{medsam_forward.111} parent=5 // pred_region
      // Predicated region
      $region17: #{medsam_forward.111} parent=15 // pred_check
        %p132 = pneg %p29
      $region18: #{medsam_forward.111} parent=15 // pred_check_branch
        %134 = sbr.rel (%p132) target = $region20
      $region19: #{medsam_forward.111} parent=15 // pred_region
        %p135 = scmp.lt.s32.totalorder %s9, 1
        %s136 = scalar_select %p135, %s9, 1
        %s137 = smul.addr %s136, 2
        %s138 = smul.addr %s137, 4
        %s139 = scalar_lea.vmem %s0, %s138
      $region20: #{medsam_forward.111} parent=15 // pred_fallthru
        _
      // Predicated region
      $region21: #{medsam_forward.111} parent=15 // pred_check
        %p140 = pneg %p55
      $region22: #{medsam_forward.111} parent=15 // pred_check_branch
        %142 = sbr.rel (%p140) target = $region24
      $region23: #{medsam_forward.111} parent=15 // pred_region
        %p143 = scmp.lt.s32.totalorder %s9, 1
        %s144 = scalar_select %p143, %s9, 1
        %s145 = smul.addr %s144, 4
        %s146 = scalar_lea.vmem %s1, %s145
      $region24: #{medsam_forward.111} parent=15 // pred_fallthru
        _
      // Predicated region
      $region25: #{medsam_forward.111} parent=15 // pred_check
        %p147 = pneg %p81
      $region26: #{medsam_forward.111} parent=15 // pred_check_branch
        %149 = sbr.rel (%p147) target = $region28
      $region27: #{medsam_forward.111} parent=15 // pred_region
        %p150 = scmp.lt.s32.totalorder %s9, 1
        %s151 = scalar_select %p150, %s9, 1
        %s152 = smul.addr %s151, 4
        %s153 = scalar_lea.vmem %s2, %s152
      $region28: #{medsam_forward.111} parent=15 // pred_fallthru
        _
    $region16: #{medsam_forward.111} parent=5 // pred_fallthru
      _
    %p154 = scmp.le.s32.totalorder 1, %s9
    %p155 = scmp.lt.s32.totalorder %s9, 3
    %p156 = pnand %p154, %p155
    %p157 = pneg %p156
    // Predicated region
    $region29: #{medsam_forward.111} parent=5 // pred_check
      _
    $region30: #{medsam_forward.111} parent=5 // pred_check_branch
      %159 = sbr.rel (%p156) target = $region32
    $region31: #{medsam_forward.111} parent=5 // pred_region
      %s160 = ssub.s32 %s9, 1
      %p161 = scmp.lt.s32.totalorder %s14, 1
      %s162 = scalar_select %p161, %s14, 1
      %s163 = smul.addr %s162, 2
      %s164 = smul.addr %s163, 4
      %s165 = scalar_lea.vmem %s0, %s164
      %p166 = pneg %p35
      %p167 = pneg %p32
      %p168 = scmp.lt.s32.totalorder %s14, 1
      %s169 = scalar_select %p168, %s14, 1
      %s170 = smul.addr %s169, 4
      %s171 = scalar_lea.vmem %s1, %s170
      %p172 = pneg %p61
      %p173 = pneg %p58
      %p174 = scmp.lt.s32.totalorder %s14, 1
      %s175 = scalar_select %p174, %s14, 1
      %s176 = smul.addr %s175, 4
      %s177 = scalar_lea.vmem %s2, %s176
      %p178 = pneg %p87
      %p179 = pneg %p84
      %p180 = pneg %p113
      %p181 = pneg %p110
      %p182 = scmp.lt.s32.totalorder %s14, 1
      %s183 = scalar_select %p182, %s14, 1
      %s184 = smul.addr %s183, 2
      %s185 = smul.addr %s184, 8
      %s186 = scalar_lea.vmem %s3, %s185
      %p187 = scmp.lt.s32.totalorder %s14, 1
      %s188 = scalar_select %p187, %s14, 1
      %s189 = smul.addr %s188, 2
      %s190 = smul.addr %s189, 4
      %s191 = scalar_lea.vmem %s0, %s190
      %p192 = scmp.lt.s32.totalorder %s14, 1
      %s193 = scalar_select %p192, %s14, 1
      %s194 = smul.addr %s193, 4
      %s195 = scalar_lea.vmem %s1, %s194
      %p196 = scmp.lt.s32.totalorder %s14, 1
      %s197 = scalar_select %p196, %s14, 1
      %s198 = smul.addr %s197, 4
      %s199 = scalar_lea.vmem %s2, %s198
      %p200 = scmp.lt.s32.totalorder %s14, 1
      %s201 = scalar_select %p200, %s14, 1
      %s202 = smul.addr %s201, 2
      %s203 = smul.addr %s202, 8
      %s204 = scalar_lea.vmem %s3, %s203
      %v206 = vld [vmem:[%s191] sm:$0xf]
      %v207 = vld [vmem:[%s191 + $0x4] sm:$0xf]
      %v208 = vld [vmem:[%s195] sm:$0xf]
      %v209 = vld [vmem:[%s199] sm:$0xf]
      %v212 = vunpack.c.l.b16 %v206
      %v213 = vunpack.c.l.b16 %v207
      %v214 = vpack.c.b16 %v213, %v212
      %vm215 = vcmask 64512
      %v217 = vsel %vm215, %v214, 0
      %v220 = vsel %vm215, %v208, 0
      %222 = vmatprep.subr.bf16.mxu0 0
      %223 = vmatpush1.bf16.xpose.msra.mxu0 0
      %224 = vmatprep.subr.bf16.mxu0 0
      %225 = vmatpush1.bf16.xpose.msra.mxu0 0
      %226 = vmatprep.subr.bf16.mxu0 0
      %227 = vmatpush1.bf16.xpose.msra.mxu0 0
      %228 = vmatprep.subr.bf16.mxu0 0
      %229 = vmatpush1.bf16.xpose.msra.mxu0 0
      %230 = vmatprep.subr.bf16.mxu0 0
      %231 = vmatpush1.bf16.xpose.msra.mxu0 0
      %232 = vmatprep.subr.bf16.mxu0 0
      %233 = vmatpush1.bf16.xpose.msra.mxu0 0
      %234 = vmatprep.subr.bf16.mxu0 0
      %235 = vmatpush1.bf16.xpose.msra.mxu0 0
      %236 = vmatprep.subr.bf16.mxu0 0
      %237 = vmatpush1.bf16.xpose.msra.mxu0 %v220
      %238 = vmatprep.subr.bf16.mxu0 0
      %239 = vmatpush2.bf16.xpose.msra.mxu0 0
      %240 = vmatprep.subr.bf16.mxu0 0
      %241 = vmatpush2.bf16.xpose.msra.mxu0 0
      %242 = vmatprep.subr.bf16.mxu0 0
      %243 = vmatpush2.bf16.xpose.msra.mxu0 0
      %244 = vmatprep.subr.bf16.mxu0 0
      %245 = vmatpush2.bf16.xpose.msra.mxu0 0
      %246 = vmatprep.subr.bf16.mxu0 0
      %247 = vmatpush2.bf16.xpose.msra.mxu0 0
      %248 = vmatprep.subr.bf16.mxu0 0
      %249 = vmatpush2.bf16.xpose.msra.mxu0 0
      %250 = vmatprep.subr.bf16.mxu0 0
      %251 = vmatpush2.bf16.xpose.msra.mxu0 0
      %252 = vmatprep.subr.bf16.mxu0 0
      %253 = vmatpush2.bf16.xpose.msra.mxu0 0
      %254 = vmatprep.mubr.bf16.mxu0 0
      %255 = vmatmul.mubr.bf16.gmra.mxu0 %v217
      %v256 = vpop.f32.mrf.mxu0
      %v257 = vadd.f32 0.0, %v256
      %v258 = vpop.f32.mrf.mxu0
      %v259 = vpop.f32.mrf.mxu0
      %v260 = vadd.f32 0.0, %v259
      %v261 = vpop.f32.mrf.mxu0
      %262 = vdwg.mxu0
      %v263 = vmul.f32 %v257, 0.35355338
      %v264 = vmul.f32 %v260, 0.35355338
      %vm265 = vcmask 56320
      %v266 = vsel %vm265, %v263, -inf
      %267 = vmax.xlane.f32.xlu0 %v266
      %v268 = vpop.xlane.xlu0 %267
      %v269 = vsel %vm265, %v264, -inf
      %270 = vmax.xlane.f32.xlu0 %v269
      %v271 = vpop.xlane.xlu0 %270
      %v272 = vsub.f32 %v263, %v268
      %v273 = vsub.f32 %v264, %v271
      %v274 = vmul.f32 %v272, 1.442695
      %v275 = vpow.pop %v274
      %v276 = vmul.f32 %v273, 1.442695
      %v277 = vpow.pop %v276
      %v278 = vsel %vm265, %v275, 0.0
      %279 = vadd.xlane.f32.xlu0 %v278
      %v280 = vpop.xlane.xlu0 %279
      %v281 = vsel %vm265, %v277, 0.0
      %282 = vadd.xlane.f32.xlu0 %v281
      %v283 = vpop.xlane.xlu0 %282
      %v284 = vrcp.pop %v280
      %v285 = vrcp.pop %v283
      %v286 = vmul.f32 %v275, %v284
      %v287 = vmul.f32 %v277, %v285
      %v288 = vpack.c.bf16 %v287, %v286
      %v290 = vsel %vm265, %v288, 0
      %vm292 = vcmask 1042432
      %vm293 = vcmask 1043456
      %v294 = vsel %vm292, 4294967295, 65535
      %v295 = vsel %vm293, %v294, 0
      %v297 = vand.u32 %v209, %v295
      %299 = vmatprep.subr.bf16.mxu0 0
      %300 = vmatpush1.bf16.msra.mxu0 0
      %301 = vmatprep.subr.bf16.mxu0 0
      %302 = vmatpush1.bf16.msra.mxu0 0
      %303 = vmatprep.subr.bf16.mxu0 0
      %304 = vmatpush1.bf16.msra.mxu0 0
      %305 = vmatprep.subr.bf16.mxu0 0
      %306 = vmatpush1.bf16.msra.mxu0 0
      %307 = vmatprep.subr.bf16.mxu0 0
      %308 = vmatpush1.bf16.msra.mxu0 0
      %309 = vmatprep.subr.bf16.mxu0 0
      %310 = vmatpush1.bf16.msra.mxu0 0
      %311 = vmatprep.subr.bf16.mxu0 0
      %312 = vmatpush1.bf16.msra.mxu0 0
      %313 = vmatprep.subr.bf16.mxu0 0
      %314 = vmatpush1.bf16.msra.mxu0 %v297
      %315 = vmatprep.subr.bf16.mxu0 0
      %316 = vmatpush2.bf16.msra.mxu0 0
      %317 = vmatprep.subr.bf16.mxu0 0
      %318 = vmatpush2.bf16.msra.mxu0 0
      %319 = vmatprep.subr.bf16.mxu0 0
      %320 = vmatpush2.bf16.msra.mxu0 0
      %321 = vmatprep.subr.bf16.mxu0 0
      %322 = vmatpush2.bf16.msra.mxu0 0
      %323 = vmatprep.subr.bf16.mxu0 0
      %324 = vmatpush2.bf16.msra.mxu0 0
      %325 = vmatprep.subr.bf16.mxu0 0
      %326 = vmatpush2.bf16.msra.mxu0 0
      %327 = vmatprep.subr.bf16.mxu0 0
      %328 = vmatpush2.bf16.msra.mxu0 0
      %329 = vmatprep.subr.bf16.mxu0 0
      %330 = vmatpush2.bf16.msra.mxu0 0
      %331 = vmatprep.mubr.bf16.mxu0 0
      %332 = vmatmul.mubr.bf16.gmra.mxu0 %v290
      %v333 = vpop.f32.mrf.mxu0
      %v334 = vadd.f32 0.0, %v333
      %v335 = vpop.f32.mrf.mxu0
      %v336 = vpop.f32.mrf.mxu0
      %v337 = vadd.f32 0.0, %v336
      %v338 = vpop.f32.mrf.mxu0
      %339 = vdwg.mxu0
      %340 = vst.msk [vmem:[%s204] sm:$0xff] %vm215, %v334
      %341 = vst.msk [vmem:[%s204 + $0x8] sm:$0xff] %vm215, %v337
      %342 = vrot.lane.b32.xlu0 %v214, 120
      %v343 = vpop.permute.xlu0 %342
      %v345 = vunpack.c.l.b16 %v208
      %v346 = vpack.c.b16 %v345, %v345
      %347 = vrot.lane.b32.xlu0 %v346, 120
      %v348 = vpop.permute.xlu0 %347
      %v350 = vsel %vm215, %v343, 0
      %v353 = vsel %vm215, %v348, 0
      %355 = vmatprep.subr.bf16.mxu0 0
      %356 = vmatpush1.bf16.xpose.msra.mxu0 0
      %357 = vmatprep.subr.bf16.mxu0 0
      %358 = vmatpush1.bf16.xpose.msra.mxu0 0
      %359 = vmatprep.subr.bf16.mxu0 0
      %360 = vmatpush1.bf16.xpose.msra.mxu0 0
      %361 = vmatprep.subr.bf16.mxu0 0
      %362 = vmatpush1.bf16.xpose.msra.mxu0 0
      %363 = vmatprep.subr.bf16.mxu0 0
      %364 = vmatpush1.bf16.xpose.msra.mxu0 0
      %365 = vmatprep.subr.bf16.mxu0 0
      %366 = vmatpush1.bf16.xpose.msra.mxu0 0
      %367 = vmatprep.subr.bf16.mxu0 0
      %368 = vmatpush1.bf16.xpose.msra.mxu0 0
      %369 = vmatprep.subr.bf16.mxu0 0
      %370 = vmatpush1.bf16.xpose.msra.mxu0 %v353
      %371 = vmatprep.subr.bf16.mxu0 0
      %372 = vmatpush2.bf16.xpose.msra.mxu0 0
      %373 = vmatprep.subr.bf16.mxu0 0
      %374 = vmatpush2.bf16.xpose.msra.mxu0 0
      %375 = vmatprep.subr.bf16.mxu0 0
      %376 = vmatpush2.bf16.xpose.msra.mxu0 0
      %377 = vmatprep.subr.bf16.mxu0 0
      %378 = vmatpush2.bf16.xpose.msra.mxu0 0
      %379 = vmatprep.subr.bf16.mxu0 0
      %380 = vmatpush2.bf16.xpose.msra.mxu0 0
      %381 = vmatprep.subr.bf16.mxu0 0
      %382 = vmatpush2.bf16.xpose.msra.mxu0 0
      %383 = vmatprep.subr.bf16.mxu0 0
      %384 = vmatpush2.bf16.xpose.msra.mxu0 0
      %385 = vmatprep.subr.bf16.mxu0 0
      %386 = vmatpush2.bf16.xpose.msra.mxu0 0
      %387 = vmatprep.mubr.bf16.mxu0 0
      %388 = vmatmul.mubr.bf16.gmra.mxu0 %v350
      %v389 = vpop.f32.mrf.mxu0
      %v390 = vadd.f32 0.0, %v389
      %v391 = vpop.f32.mrf.mxu0
      %v392 = vpop.f32.mrf.mxu0
      %v393 = vadd.f32 0.0, %v392
      %v394 = vpop.f32.mrf.mxu0
      %395 = vdwg.mxu0
      %v396 = vmul.f32 %v390, 0.35355338
      %v397 = vmul.f32 %v393, 0.35355338
      %v398 = vsel %vm265, %v396, -inf
      %399 = vmax.xlane.f32.xlu0 %v398
      %v400 = vpop.xlane.xlu0 %399
      %v401 = vsel %vm265, %v397, -inf
      %402 = vmax.xlane.f32.xlu0 %v401
      %v403 = vpop.xlane.xlu0 %402
      %v404 = vsub.f32 %v396, %v400
      %v405 = vsub.f32 %v397, %v403
      %v406 = vmul.f32 %v404, 1.442695
      %v407 = vpow.pop %v406
      %v408 = vmul.f32 %v405, 1.442695
      %v409 = vpow.pop %v408
      %v410 = vsel %vm265, %v407, 0.0
      %411 = vadd.xlane.f32.xlu0 %v410
      %v412 = vpop.xlane.xlu0 %411
      %v413 = vsel %vm265, %v409, 0.0
      %414 = vadd.xlane.f32.xlu0 %v413
      %v415 = vpop.xlane.xlu0 %414
      %v416 = vrcp.pop %v412
      %v417 = vrcp.pop %v415
      %v418 = vmul.f32 %v407, %v416
      %v419 = vmul.f32 %v409, %v417
      %v420 = vpack.c.bf16 %v419, %v418
      %v422 = vunpack.c.l.b16 %v209
      %v423 = vpack.c.b16 %v422, %v422
      %424 = vrot.lane.b32.xlu0 %v423, 120
      %v425 = vpop.permute.xlu0 %424
      %v427 = vsel %vm265, %v420, 0
      %v430 = vand.u32 %v425, %v295
      %432 = vmatprep.subr.bf16.mxu0 0
      %433 = vmatpush1.bf16.msra.mxu0 0
      %434 = vmatprep.subr.bf16.mxu0 0
      %435 = vmatpush1.bf16.msra.mxu0 0
      %436 = vmatprep.subr.bf16.mxu0 0
      %437 = vmatpush1.bf16.msra.mxu0 0
      %438 = vmatprep.subr.bf16.mxu0 0
      %439 = vmatpush1.bf16.msra.mxu0 0
      %440 = vmatprep.subr.bf16.mxu0 0
      %441 = vmatpush1.bf16.msra.mxu0 0
      %442 = vmatprep.subr.bf16.mxu0 0
      %443 = vmatpush1.bf16.msra.mxu0 0
      %444 = vmatprep.subr.bf16.mxu0 0
      %445 = vmatpush1.bf16.msra.mxu0 0
      %446 = vmatprep.subr.bf16.mxu0 0
      %447 = vmatpush1.bf16.msra.mxu0 %v430
      %448 = vmatprep.subr.bf16.mxu0 0
      %449 = vmatpush2.bf16.msra.mxu0 0
      %450 = vmatprep.subr.bf16.mxu0 0
      %451 = vmatpush2.bf16.msra.mxu0 0
      %452 = vmatprep.subr.bf16.mxu0 0
      %453 = vmatpush2.bf16.msra.mxu0 0
      %454 = vmatprep.subr.bf16.mxu0 0
      %455 = vmatpush2.bf16.msra.mxu0 0
      %456 = vmatprep.subr.bf16.mxu0 0
      %457 = vmatpush2.bf16.msra.mxu0 0
      %458 = vmatprep.subr.bf16.mxu0 0
      %459 = vmatpush2.bf16.msra.mxu0 0
      %460 = vmatprep.subr.bf16.mxu0 0
      %461 = vmatpush2.bf16.msra.mxu0 0
      %462 = vmatprep.subr.bf16.mxu0 0
      %463 = vmatpush2.bf16.msra.mxu0 0
      %464 = vmatprep.mubr.bf16.mxu0 0
      %465 = vmatmul.mubr.bf16.gmra.mxu0 %v427
      %v466 = vpop.f32.mrf.mxu0
      %v467 = vadd.f32 0.0, %v466
      %v468 = vpop.f32.mrf.mxu0
      %v469 = vpop.f32.mrf.mxu0
      %v470 = vadd.f32 0.0, %v469
      %v471 = vpop.f32.mrf.mxu0
      %472 = vdwg.mxu0
      %475 = vrot.lane.b32.xlu0 %v467, 8
      %v476 = vpop.permute.xlu0 %475
      %477 = vrot.lane.b32.xlu0 %v470, 8
      %v478 = vpop.permute.xlu0 %477
      %vm481 = vcmask 130112
      %482 = vst.msk [vmem:[%s204] sm:$0xff] %vm481, %v476
      %483 = vst.msk [vmem:[%s204 + $0x8] sm:$0xff] %vm481, %v478
      %p484 = scmp.lt.s32.totalorder %s14, 1
      %s485 = scalar_select %p484, %s14, 1
      %s486 = smul.addr %s485, 2
      %s487 = smul.addr %s486, 8
      %s488 = scalar_lea.vmem %s3, %s487
      // Predicated region
      $region33: #{medsam_forward.111} parent=31 // pred_check
        %p489 = pneg %p110
      $region34: #{medsam_forward.111} parent=31 // pred_check_branch
        %491 = sbr.rel (%p489) target = $region36
      $region35: #{medsam_forward.111} parent=31 // pred_region
        _
      $region36: #{medsam_forward.111} parent=31 // pred_fallthru
        _
    $region32: #{medsam_forward.111} parent=5 // pred_fallthru
      _
    %p492 = scmp.le.s32.totalorder 2, %s9
    // Predicated region
    $region37: #{medsam_forward.111} parent=5 // pred_check
      %p493 = pneg %p492
    $region38: #{medsam_forward.111} parent=5 // pred_check_branch
      %495 = sbr.rel (%p493) target = $region40
    $region39: #{medsam_forward.111} parent=5 // pred_region
      %s496 = ssub.s32 %s9, 2
      // Predicated region
      $region41: #{medsam_forward.111} parent=39 // pred_check
        %p497 = pneg %p116
      $region42: #{medsam_forward.111} parent=39 // pred_check_branch
        %499 = sbr.rel (%p497) target = $region44
      $region43: #{medsam_forward.111} parent=39 // pred_region
        %p500 = scmp.lt.s32.totalorder %s15, 1
        %s501 = scalar_select %p500, %s15, 1
        %s502 = smul.addr %s501, 2
        %s503 = smul.addr %s502, 8
        %s504 = scalar_lea.vmem %s3, %s503
      $region44: #{medsam_forward.111} parent=39 // pred_fallthru
        _
    $region40: #{medsam_forward.111} parent=5 // pred_fallthru
      _
  $region6: #{medsam_forward.111} parent=0 // loop_footer
    %s13 = sadd.s32 1, %s9
  $region7: #{medsam_forward.111} parent=0 // loop_footer_branch
    %8 = sbr.rel target = $region3
  $region8: #{medsam_forward.111} parent=0 // loop_exit
    _

// kernel: medsam_forward.113
$region0: #{medsam_forward.113}
  #allocation0 [shape = 'u32[]', space=smem, size = 0x4, offset = 0x4, fixed_abs, tag = 'smem constant byte address 0x4 - core index']
  #allocation1 [shape = 'u32[144,128]{1,0:T(1,128)}', space=vmem, size = 0x12000, scoped, tag = 'internal scratch']
  %s0 = inlined_call_operand.vmem [shape: f32[32,32], index: 0, kind: input, shape index: {}]
  %s1 = inlined_call_operand.vmem [shape: f32[1,32], index: 1, kind: input, shape index: {}]
  %s2 = inlined_call_operand.vmem [shape: f32[1,32], index: 2, kind: input, shape index: {}]
  %s3 = inlined_call_operand.vmem [shape: f32[32,32], index: 3, kind: output, shape index: {}]
  %s4 = sld [smem:[#allocation0]]
  $region22: #{medsam_forward.113} parent=0
    _
  %s6 = ssub.s32 1, %s4
  %s7 = scalar_select 0, %s6, %s4
  // Predicated region
  $region2: #{medsam_forward.113} parent=0 // pred_check
    _
  $region3: #{medsam_forward.113} parent=0 // pred_check_branch
    %9 = sbr.rel (0) target = $region5
  $region4: #{medsam_forward.113} parent=0 // pred_region
    _
  $region5: #{medsam_forward.113} parent=0 // pred_fallthru
    _
  // Predicated region
  $region6: #{medsam_forward.113} parent=0 // pred_check
    _
  $region7: #{medsam_forward.113} parent=0 // pred_check_branch
    %11 = sbr.rel (0) target = $region9
  $region8: #{medsam_forward.113} parent=0 // pred_region
    _
  $region9: #{medsam_forward.113} parent=0 // pred_fallthru
    _
  // Predicated region
  $region10: #{medsam_forward.113} parent=0 // pred_check
    _
  $region11: #{medsam_forward.113} parent=0 // pred_check_branch
    %13 = sbr.rel (0) target = $region13
  $region12: #{medsam_forward.113} parent=0 // pred_region
    _
  $region13: #{medsam_forward.113} parent=0 // pred_fallthru
    _
  %v14 = vld [vmem:[%s0] sm:$0xff]
  %v15 = vld [vmem:[%s0 + $0x8] sm:$0xff]
  %v16 = vld [vmem:[%s0 + $0x10] sm:$0xff]
  %v17 = vld [vmem:[%s0 + $0x18] sm:$0xff]
  %vm18 = vcmask 261120
  %v19 = vsel %vm18, %v14, 0.0
  %20 = vadd.xlane.f32.xlu0 %v19
  %v21 = vpop.xlane.xlu0 %20
  %v22 = vsel %vm18, %v15, 0.0
  %23 = vadd.xlane.f32.xlu0 %v22
  %v24 = vpop.xlane.xlu0 %23
  %v25 = vsel %vm18, %v16, 0.0
  %26 = vadd.xlane.f32.xlu0 %v25
  %v27 = vpop.xlane.xlu0 %26
  %v28 = vsel %vm18, %v17, 0.0
  %29 = vadd.xlane.f32.xlu0 %v28
  %v30 = vpop.xlane.xlu0 %29
  %v31 = vrcp.pop 32.0
  %v32 = vmul.f32 %v21, %v31
  %v33 = vmul.f32 %v24, %v31
  %v34 = vmul.f32 %v27, %v31
  %v35 = vmul.f32 %v30, %v31
  %v36 = vsub.f32 %v14, %v32
  %v37 = vsub.f32 %v15, %v33
  %v38 = vsub.f32 %v16, %v34
  %v39 = vsub.f32 %v17, %v35
  %v40 = vmul.f32 %v36, %v36
  %v41 = vmul.f32 %v37, %v37
  %v42 = vmul.f32 %v38, %v38
  %v43 = vmul.f32 %v39, %v39
  %v44 = vsel %vm18, %v40, 0.0
  %45 = vadd.xlane.f32.xlu0 %v44
  %v46 = vpop.xlane.xlu0 %45
  %v47 = vsel %vm18, %v41, 0.0
  %48 = vadd.xlane.f32.xlu0 %v47
  %v49 = vpop.xlane.xlu0 %48
  %v50 = vsel %vm18, %v42, 0.0
  %51 = vadd.xlane.f32.xlu0 %v50
  %v52 = vpop.xlane.xlu0 %51
  %v53 = vsel %vm18, %v43, 0.0
  %54 = vadd.xlane.f32.xlu0 %v53
  %v55 = vpop.xlane.xlu0 %54
  %v56 = vmul.f32 %v46, %v31
  %v57 = vmul.f32 %v49, %v31
  %v58 = vmul.f32 %v52, %v31
  %v59 = vmul.f32 %v55, %v31
  %v60 = vadd.f32 %v56, 1e-05
  %v61 = vadd.f32 %v57, 1e-05
  %v62 = vadd.f32 %v58, 1e-05
  %v63 = vadd.f32 %v59, 1e-05
  %v64 = vrsqrt.pop %v60
  %v65 = vrsqrt.pop %v61
  %v66 = vrsqrt.pop %v62
  %v67 = vrsqrt.pop %v63
  %v68 = vmul.f32 %v36, %v64
  %v69 = vmul.f32 %v37, %v65
  %v70 = vmul.f32 %v38, %v66
  %v71 = vmul.f32 %v39, %v67
  %v72 = vld [vmem:[%s1] sm:$0x1]
  %v74 = vlaneseq
  %v75 = vshrl.u32 %v74, 7
  %v76 = vsub.s32 0, %v75
  %v77 = vrot.slane %v72, %v76
  %v79 = vmul.f32 %v68, %v77
  %v80 = vmul.f32 %v69, %v77
  %v81 = vmul.f32 %v70, %v77
  %v82 = vmul.f32 %v71, %v77
  %v83 = vld [vmem:[%s2] sm:$0x1]
  %v85 = vlaneseq
  %v86 = vshrl.u32 %v85, 7
  %v87 = vsub.s32 0, %v86
  %v88 = vrot.slane %v83, %v87
  %v90 = vadd.f32 %v79, %v88
  %v91 = vadd.f32 %v80, %v88
  %v92 = vadd.f32 %v81, %v88
  %v93 = vadd.f32 %v82, %v88
  %94 = vst.msk [vmem:[%s3] sm:$0xff] %vm18, %v90
  %95 = vst.msk [vmem:[%s3 + $0x8] sm:$0xff] %vm18, %v91
  %96 = vst.msk [vmem:[%s3 + $0x10] sm:$0xff] %vm18, %v92
  %97 = vst.msk [vmem:[%s3 + $0x18] sm:$0xff] %vm18, %v93
  // Predicated region
  $region14: #{medsam_forward.113} parent=0 // pred_check
    _
  $region15: #{medsam_forward.113} parent=0 // pred_check_branch
    %99 = sbr.rel (0) target = $region17
  $region16: #{medsam_forward.113} parent=0 // pred_region
    _
  $region17: #{medsam_forward.113} parent=0 // pred_fallthru
    _
  // Predicated region
  $region18: #{medsam_forward.113} parent=0 // pred_check
    _
  $region19: #{medsam_forward.113} parent=0 // pred_check_branch
    %101 = sbr.rel (0) target = $region21
  $region20: #{medsam_forward.113} parent=0 // pred_region
    _
  $region21: #{medsam_forward.113} parent=0 // pred_fallthru
    _

// kernel: medsam_forward.141
$region0: #{medsam_forward.141}
  #allocation0 [shape = 'u32[]', space=smem, size = 0x4, offset = 0x4, fixed_abs, tag = 'smem constant byte address 0x4 - core index']
  #allocation1 [shape = 'u32[144,128]{1,0:T(1,128)}', space=vmem, size = 0x12000, scoped, tag = 'internal scratch']
  %s0 = inlined_call_operand.vmem [shape: bf16[32,32], index: 0, kind: input, shape index: {}]
  %s1 = inlined_call_operand.vmem [shape: bf16[32,32], index: 1, kind: input, shape index: {}]
  %s2 = inlined_call_operand.vmem [shape: f32[1,32], index: 2, kind: input, shape index: {}]
  %s3 = inlined_call_operand.vmem [shape: f32[32,32], index: 3, kind: output, shape index: {}]
  %s4 = sld [smem:[#allocation0]]
  $region22: #{medsam_forward.141} parent=0
    _
  %s6 = ssub.s32 1, %s4
  %s7 = scalar_select 0, %s6, %s4
  // Predicated region
  $region2: #{medsam_forward.141} parent=0 // pred_check
    _
  $region3: #{medsam_forward.141} parent=0 // pred_check_branch
    %9 = sbr.rel (0) target = $region5
  $region4: #{medsam_forward.141} parent=0 // pred_region
    _
  $region5: #{medsam_forward.141} parent=0 // pred_fallthru
    _
  // Predicated region
  $region6: #{medsam_forward.141} parent=0 // pred_check
    _
  $region7: #{medsam_forward.141} parent=0 // pred_check_branch
    %11 = sbr.rel (0) target = $region9
  $region8: #{medsam_forward.141} parent=0 // pred_region
    _
  $region9: #{medsam_forward.141} parent=0 // pred_fallthru
    _
  // Predicated region
  $region10: #{medsam_forward.141} parent=0 // pred_check
    _
  $region11: #{medsam_forward.141} parent=0 // pred_check_branch
    %13 = sbr.rel (0) target = $region13
  $region12: #{medsam_forward.141} parent=0 // pred_region
    _
  $region13: #{medsam_forward.141} parent=0 // pred_fallthru
    _
  %v15 = vld [vmem:[%s0] sm:$0xf]
  %v16 = vld [vmem:[%s0 + $0x4] sm:$0xf]
  %v17 = vld [vmem:[%s0 + $0x8] sm:$0xf]
  %v18 = vld [vmem:[%s0 + $0xc] sm:$0xf]
  %v19 = vld [vmem:[%s1] sm:$0xf]
  %v20 = vld [vmem:[%s1 + $0x4] sm:$0xf]
  %v21 = vld [vmem:[%s1 + $0x8] sm:$0xf]
  %v22 = vld [vmem:[%s1 + $0xc] sm:$0xf]
  %v23 = vld [vmem:[%s2] sm:$0x1]
  %v25 = vlaneseq
  %v26 = vshrl.u32 %v25, 7
  %v27 = vsub.s32 0, %v26
  %v28 = vrot.slane %v23, %v27
  %v34 = vunpack.c.l.b16 %v15
  %v35 = vunpack.c.l.b16 %v16
  %v36 = vunpack.c.l.b16 %v17
  %v37 = vunpack.c.l.b16 %v18
  %v38 = vpack.c.b16 %v35, %v34
  %v39 = vpack.c.b16 %v37, %v36
  %v44 = vunpack.c.l.b16 %v19
  %v45 = vunpack.c.l.b16 %v20
  %v46 = vunpack.c.l.b16 %v21
  %v47 = vunpack.c.l.b16 %v22
  %v48 = vpack.c.b16 %v45, %v44
  %v49 = vpack.c.b16 %v47, %v46
  %vm52 = vcmask 261120
  %v54 = vsel %vm52, %v38, 0
  %v57 = vsel %vm52, %v39, 0
  %59 = vmatprep.subr.bf16.mxu0 0
  %60 = vmatpush1.bf16.msra.mxu0 0
  %61 = vmatprep.subr.bf16.mxu0 0
  %62 = vmatpush1.bf16.msra.mxu0 0
  %63 = vmatprep.subr.bf16.mxu0 0
  %64 = vmatpush1.bf16.msra.mxu0 0
  %65 = vmatprep.subr.bf16.mxu0 0
  %66 = vmatpush1.bf16.msra.mxu0 0
  %67 = vmatprep.subr.bf16.mxu0 0
  %68 = vmatpush1.bf16.msra.mxu0 0
  %69 = vmatprep.subr.bf16.mxu0 0
  %70 = vmatpush1.bf16.msra.mxu0 0
  %71 = vmatprep.subr.bf16.mxu0 0
  %72 = vmatpush1.bf16.msra.mxu0 %v49
  %73 = vmatprep.subr.bf16.mxu0 0
  %74 = vmatpush1.bf16.msra.mxu0 %v48
  %75 = vmatprep.subr.bf16.mxu0 0
  %76 = vmatpush2.bf16.msra.mxu0 0
  %77 = vmatprep.subr.bf16.mxu0 0
  %78 = vmatpush2.bf16.msra.mxu0 0
  %79 = vmatprep.subr.bf16.mxu0 0
  %80 = vmatpush2.bf16.msra.mxu0 0
  %81 = vmatprep.subr.bf16.mxu0 0
  %82 = vmatpush2.bf16.msra.mxu0 0
  %83 = vmatprep.subr.bf16.mxu0 0
  %84 = vmatpush2.bf16.msra.mxu0 0
  %85 = vmatprep.subr.bf16.mxu0 0
  %86 = vmatpush2.bf16.msra.mxu0 0
  %87 = vmatprep.subr.bf16.mxu0 0
  %88 = vmatpush2.bf16.msra.mxu0 0
  %89 = vmatprep.subr.bf16.mxu0 0
  %90 = vmatpush2.bf16.msra.mxu0 0
  %91 = vmatprep.mubr.bf16.mxu0 0
  %92 = vmatmul.mubr.bf16.gmra.mxu0 %v54
  %v93 = vpop.f32.mrf.mxu0
  %v94 = vadd.f32 %v28, %v93
  %v95 = vpop.f32.mrf.mxu0
  %v96 = vpop.f32.mrf.mxu0
  %v97 = vadd.f32 %v28, %v96
  %v98 = vpop.f32.mrf.mxu0
  %99 = vmatprep.mubr.bf16.mxu0 0
  %100 = vmatmul.mubr.bf16.gmra.mxu0 %v57
  %v101 = vpop.f32.mrf.mxu0
  %v102 = vadd.f32 %v28, %v101
  %v103 = vpop.f32.mrf.mxu0
  %v104 = vpop.f32.mrf.mxu0
  %v105 = vadd.f32 %v28, %v104
  %v106 = vpop.f32.mrf.mxu0
  %107 = vdwg.mxu0
  %108 = vst.msk [vmem:[%s3] sm:$0xff] %vm52, %v94
  %109 = vst.msk [vmem:[%s3 + $0x8] sm:$0xff] %vm52, %v97
  %110 = vst.msk [vmem:[%s3 + $0x10] sm:$0xff] %vm52, %v102
  %111 = vst.msk [vmem:[%s3 + $0x18] sm:$0xff] %vm52, %v105
  // Predicated region
  $region14: #{medsam_forward.141} parent=0 // pred_check
    _
  $region15: #{medsam_forward.141} parent=0 // pred_check_branch
    %113 = sbr.rel (0) target = $region17
  $region16: #{medsam_forward.141} parent=0 // pred_region
    _
  $region17: #{medsam_forward.141} parent=0 // pred_fallthru
    _
  // Predicated region
  $region18: #{medsam_forward.141} parent=0 // pred_check
    _
  $region19: #{medsam_forward.141} parent=0 // pred_check_branch
    %115 = sbr.rel (0) target = $region21
  $region20: #{medsam_forward.141} parent=0 // pred_region
    _
  $region21: #{medsam_forward.141} parent=0 // pred_fallthru
    _

// kernel: medsam_forward.142
$region0: #{medsam_forward.142}
  #allocation0 [shape = 'u32[]', space=smem, size = 0x4, offset = 0x4, fixed_abs, tag = 'smem constant byte address 0x4 - core index']
  #allocation1 [shape = 'u32[144,128]{1,0:T(1,128)}', space=vmem, size = 0x12000, scoped, tag = 'internal scratch']
  %s0 = inlined_call_operand.vmem [shape: f32[128,8], index: 0, kind: input, shape index: {}]
  %s1 = inlined_call_operand.vmem [shape: f32[1,8], index: 1, kind: input, shape index: {}]
  %s2 = inlined_call_operand.vmem [shape: f32[1,8], index: 2, kind: input, shape index: {}]
  %s3 = inlined_call_operand.vmem [shape: f32[128,8], index: 3, kind: output, shape index: {}]
  %s4 = sld [smem:[#allocation0]]
  $region22: #{medsam_forward.142} parent=0
    _
  %s6 = ssub.s32 1, %s4
  %s7 = scalar_select 0, %s6, %s4
  // Predicated region
  $region2: #{medsam_forward.142} parent=0 // pred_check
    _
  $region3: #{medsam_forward.142} parent=0 // pred_check_branch
    %9 = sbr.rel (0) target = $region5
  $region4: #{medsam_forward.142} parent=0 // pred_region
    _
  $region5: #{medsam_forward.142} parent=0 // pred_fallthru
    _
  // Predicated region
  $region6: #{medsam_forward.142} parent=0 // pred_check
    _
  $region7: #{medsam_forward.142} parent=0 // pred_check_branch
    %11 = sbr.rel (0) target = $region9
  $region8: #{medsam_forward.142} parent=0 // pred_region
    _
  $region9: #{medsam_forward.142} parent=0 // pred_fallthru
    _
  // Predicated region
  $region10: #{medsam_forward.142} parent=0 // pred_check
    _
  $region11: #{medsam_forward.142} parent=0 // pred_check_branch
    %13 = sbr.rel (0) target = $region13
  $region12: #{medsam_forward.142} parent=0 // pred_region
    _
  $region13: #{medsam_forward.142} parent=0 // pred_fallthru
    _
  %v14 = vld [vmem:[%s0] sm:$0xff]
  %v15 = vld [vmem:[%s0 + $0x8] sm:$0xff]
  %v16 = vld [vmem:[%s0 + $0x10] sm:$0xff]
  %v17 = vld [vmem:[%s0 + $0x18] sm:$0xff]
  %v18 = vld [vmem:[%s0 + $0x20] sm:$0xff]
  %v19 = vld [vmem:[%s0 + $0x28] sm:$0xff]
  %v20 = vld [vmem:[%s0 + $0x30] sm:$0xff]
  %v21 = vld [vmem:[%s0 + $0x38] sm:$0xff]
  %v22 = vld [vmem:[%s0 + $0x40] sm:$0xff]
  %v23 = vld [vmem:[%s0 + $0x48] sm:$0xff]
  %v24 = vld [vmem:[%s0 + $0x50] sm:$0xff]
  %v25 = vld [vmem:[%s0 + $0x58] sm:$0xff]
  %v26 = vld [vmem:[%s0 + $0x60] sm:$0xff]
  %v27 = vld [vmem:[%s0 + $0x68] sm:$0xff]
  %v28 = vld [vmem:[%s0 + $0x70] sm:$0xff]
  %v29 = vld [vmem:[%s0 + $0x78] sm:$0xff]
  %vm30 = vcmask 64512
  %v31 = vsel %vm30, %v14, 0.0
  %32 = vadd.xlane.f32.xlu0 %v31
  %v33 = vpop.xlane.xlu0 %32
  %v34 = vsel %vm30, %v15, 0.0
  %35 = vadd.xlane.f32.xlu0 %v34
  %v36 = vpop.xlane.xlu0 %35
  %v37 = vsel %vm30, %v16, 0.0
  %38 = vadd.xlane.f32.xlu0 %v37
  %v39 = vpop.xlane.xlu0 %38
  %v40 = vsel %vm30, %v17, 0.0
  %41 = vadd.xlane.f32.xlu0 %v40
  %v42 = vpop.xlane.xlu0 %41
  %v43 = vsel %vm30, %v18, 0.0
  %44 = vadd.xlane.f32.xlu0 %v43
  %v45 = vpop.xlane.xlu0 %44
  %v46 = vsel %vm30, %v19, 0.0
  %47 = vadd.xlane.f32.xlu0 %v46
  %v48 = vpop.xlane.xlu0 %47
  %v49 = vsel %vm30, %v20, 0.0
  %50 = vadd.xlane.f32.xlu0 %v49
  %v51 = vpop.xlane.xlu0 %50
  %v52 = vsel %vm30, %v21, 0.0
  %53 = vadd.xlane.f32.xlu0 %v52
  %v54 = vpop.xlane.xlu0 %53
  %v55 = vsel %vm30, %v22, 0.0
  %56 = vadd.xlane.f32.xlu0 %v55
  %v57 = vpop.xlane.xlu0 %56
  %v58 = vsel %vm30, %v23, 0.0
  %59 = vadd.xlane.f32.xlu0 %v58
  %v60 = vpop.xlane.xlu0 %59
  %v61 = vsel %vm30, %v24, 0.0
  %62 = vadd.xlane.f32.xlu0 %v61
  %v63 = vpop.xlane.xlu0 %62
  %v64 = vsel %vm30, %v25, 0.0
  %65 = vadd.xlane.f32.xlu0 %v64
  %v66 = vpop.xlane.xlu0 %65
  %v67 = vsel %vm30, %v26, 0.0
  %68 = vadd.xlane.f32.xlu0 %v67
  %v69 = vpop.xlane.xlu0 %68
  %v70 = vsel %vm30, %v27, 0.0
  %71 = vadd.xlane.f32.xlu0 %v70
  %v72 = vpop.xlane.xlu0 %71
  %v73 = vsel %vm30, %v28, 0.0
  %74 = vadd.xlane.f32.xlu0 %v73
  %v75 = vpop.xlane.xlu0 %74
  %v76 = vsel %vm30, %v29, 0.0
  %77 = vadd.xlane.f32.xlu0 %v76
  %v78 = vpop.xlane.xlu0 %77
  %v79 = vrcp.pop 8.0
  %v80 = vmul.f32 %v33, %v79
  %v81 = vmul.f32 %v36, %v79
  %v82 = vmul.f32 %v39, %v79
  %v83 = vmul.f32 %v42, %v79
  %v84 = vmul.f32 %v45, %v79
  %v85 = vmul.f32 %v48, %v79
  %v86 = vmul.f32 %v51, %v79
  %v87 = vmul.f32 %v54, %v79
  %v88 = vmul.f32 %v57, %v79
  %v89 = vmul.f32 %v60, %v79
  %v90 = vmul.f32 %v63, %v79
  %v91 = vmul.f32 %v66, %v79
  %v92 = vmul.f32 %v69, %v79
  %v93 = vmul.f32 %v72, %v79
  %v94 = vmul.f32 %v75, %v79
  %v95 = vmul.f32 %v78, %v79
  %v96 = vsub.f32 %v14, %v80
  %v97 = vsub.f32 %v15, %v81
  %v98 = vsub.f32 %v16, %v82
  %v99 = vsub.f32 %v17, %v83
  %v100 = vsub.f32 %v18, %v84
  %v101 = vsub.f32 %v19, %v85
  %v102 = vsub.f32 %v20, %v86
  %v103 = vsub.f32 %v21, %v87
  %v104 = vsub.f32 %v22, %v88
  %v105 = vsub.f32 %v23, %v89
  %v106 = vsub.f32 %v24, %v90
  %v107 = vsub.f32 %v25, %v91
  %v108 = vsub.f32 %v26, %v92
  %v109 = vsub.f32 %v27, %v93
  %v110 = vsub.f32 %v28, %v94
  %v111 = vsub.f32 %v29, %v95
  %v112 = vmul.f32 %v96, %v96
  %v113 = vmul.f32 %v97, %v97
  %v114 = vmul.f32 %v98, %v98
  %v115 = vmul.f32 %v99, %v99
  %v116 = vmul.f32 %v100, %v100
  %v117 = vmul.f32 %v101, %v101
  %v118 = vmul.f32 %v102, %v102
  %v119 = vmul.f32 %v103, %v103
  %v120 = vmul.f32 %v104, %v104
  %v121 = vmul.f32 %v105, %v105
  %v122 = vmul.f32 %v106, %v106
  %v123 = vmul.f32 %v107, %v107
  %v124 = vmul.f32 %v108, %v108
  %v125 = vmul.f32 %v109, %v109
  %v126 = vmul.f32 %v110, %v110
  %v127 = vmul.f32 %v111, %v111
  %v128 = vsel %vm30, %v112, 0.0
  %129 = vadd.xlane.f32.xlu0 %v128
  %v130 = vpop.xlane.xlu0 %129
  %v131 = vsel %vm30, %v113, 0.0
  %132 = vadd.xlane.f32.xlu0 %v131
  %v133 = vpop.xlane.xlu0 %132
  %v134 = vsel %vm30, %v114, 0.0
  %135 = vadd.xlane.f32.xlu0 %v134
  %v136 = vpop.xlane.xlu0 %135
  %v137 = vsel %vm30, %v115, 0.0
  %138 = vadd.xlane.f32.xlu0 %v137
  %v139 = vpop.xlane.xlu0 %138
  %v140 = vsel %vm30, %v116, 0.0
  %141 = vadd.xlane.f32.xlu0 %v140
  %v142 = vpop.xlane.xlu0 %141
  %v143 = vsel %vm30, %v117, 0.0
  %144 = vadd.xlane.f32.xlu0 %v143
  %v145 = vpop.xlane.xlu0 %144
  %v146 = vsel %vm30, %v118, 0.0
  %147 = vadd.xlane.f32.xlu0 %v146
  %v148 = vpop.xlane.xlu0 %147
  %v149 = vsel %vm30, %v119, 0.0
  %150 = vadd.xlane.f32.xlu0 %v149
  %v151 = vpop.xlane.xlu0 %150
  %v152 = vsel %vm30, %v120, 0.0
  %153 = vadd.xlane.f32.xlu0 %v152
  %v154 = vpop.xlane.xlu0 %153
  %v155 = vsel %vm30, %v121, 0.0
  %156 = vadd.xlane.f32.xlu0 %v155
  %v157 = vpop.xlane.xlu0 %156
  %v158 = vsel %vm30, %v122, 0.0
  %159 = vadd.xlane.f32.xlu0 %v158
  %v160 = vpop.xlane.xlu0 %159
  %v161 = vsel %vm30, %v123, 0.0
  %162 = vadd.xlane.f32.xlu0 %v161
  %v163 = vpop.xlane.xlu0 %162
  %v164 = vsel %vm30, %v124, 0.0
  %165 = vadd.xlane.f32.xlu0 %v164
  %v166 = vpop.xlane.xlu0 %165
  %v167 = vsel %vm30, %v125, 0.0
  %168 = vadd.xlane.f32.xlu0 %v167
  %v169 = vpop.xlane.xlu0 %168
  %v170 = vsel %vm30, %v126, 0.0
  %171 = vadd.xlane.f32.xlu0 %v170
  %v172 = vpop.xlane.xlu0 %171
  %v173 = vsel %vm30, %v127, 0.0
  %174 = vadd.xlane.f32.xlu0 %v173
  %v175 = vpop.xlane.xlu0 %174
  %v176 = vmul.f32 %v130, %v79
  %v177 = vmul.f32 %v133, %v79
  %v178 = vmul.f32 %v136, %v79
  %v179 = vmul.f32 %v139, %v79
  %v180 = vmul.f32 %v142, %v79
  %v181 = vmul.f32 %v145, %v79
  %v182 = vmul.f32 %v148, %v79
  %v183 = vmul.f32 %v151, %v79
  %v184 = vmul.f32 %v154, %v79
  %v185 = vmul.f32 %v157, %v79
  %v186 = vmul.f32 %v160, %v79
  %v187 = vmul.f32 %v163, %v79
  %v188 = vmul.f32 %v166, %v79
  %v189 = vmul.f32 %v169, %v79
  %v190 = vmul.f32 %v172, %v79
  %v191 = vmul.f32 %v175, %v79
  %v192 = vadd.f32 %v176, 1e-06
  %v193 = vadd.f32 %v177, 1e-06
  %v194 = vadd.f32 %v178, 1e-06
  %v195 = vadd.f32 %v179, 1e-06
  %v196 = vadd.f32 %v180, 1e-06
  %v197 = vadd.f32 %v181, 1e-06
  %v198 = vadd.f32 %v182, 1e-06
  %v199 = vadd.f32 %v183, 1e-06
  %v200 = vadd.f32 %v184, 1e-06
  %v201 = vadd.f32 %v185, 1e-06
  %v202 = vadd.f32 %v186, 1e-06
  %v203 = vadd.f32 %v187, 1e-06
  %v204 = vadd.f32 %v188, 1e-06
  %v205 = vadd.f32 %v189, 1e-06
  %v206 = vadd.f32 %v190, 1e-06
  %v207 = vadd.f32 %v191, 1e-06
  %v208 = vrsqrt.pop %v192
  %v209 = vrsqrt.pop %v193
  %v210 = vrsqrt.pop %v194
  %v211 = vrsqrt.pop %v195
  %v212 = vrsqrt.pop %v196
  %v213 = vrsqrt.pop %v197
  %v214 = vrsqrt.pop %v198
  %v215 = vrsqrt.pop %v199
  %v216 = vrsqrt.pop %v200
  %v217 = vrsqrt.pop %v201
  %v218 = vrsqrt.pop %v202
  %v219 = vrsqrt.pop %v203
  %v220 = vrsqrt.pop %v204
  %v221 = vrsqrt.pop %v205
  %v222 = vrsqrt.pop %v206
  %v223 = vrsqrt.pop %v207
  %v224 = vmul.f32 %v96, %v208
  %v225 = vmul.f32 %v97, %v209
  %v226 = vmul.f32 %v98, %v210
  %v227 = vmul.f32 %v99, %v211
  %v228 = vmul.f32 %v100, %v212
  %v229 = vmul.f32 %v101, %v213
  %v230 = vmul.f32 %v102, %v214
  %v231 = vmul.f32 %v103, %v215
  %v232 = vmul.f32 %v104, %v216
  %v233 = vmul.f32 %v105, %v217
  %v234 = vmul.f32 %v106, %v218
  %v235 = vmul.f32 %v107, %v219
  %v236 = vmul.f32 %v108, %v220
  %v237 = vmul.f32 %v109, %v221
  %v238 = vmul.f32 %v110, %v222
  %v239 = vmul.f32 %v111, %v223
  %v240 = vld [vmem:[%s1] sm:$0x1]
  %v242 = vlaneseq
  %v243 = vshrl.u32 %v242, 7
  %v244 = vsub.s32 0, %v243
  %v245 = vrot.slane %v240, %v244
  %v247 = vmul.f32 %v224, %v245
  %v248 = vmul.f32 %v225, %v245
  %v249 = vmul.f32 %v226, %v245
  %v250 = vmul.f32 %v227, %v245
  %v251 = vmul.f32 %v228, %v245
  %v252 = vmul.f32 %v229, %v245
  %v253 = vmul.f32 %v230, %v245
  %v254 = vmul.f32 %v231, %v245
  %v255 = vmul.f32 %v232, %v245
  %v256 = vmul.f32 %v233, %v245
  %v257 = vmul.f32 %v234, %v245
  %v258 = vmul.f32 %v235, %v245
  %v259 = vmul.f32 %v236, %v245
  %v260 = vmul.f32 %v237, %v245
  %v261 = vmul.f32 %v238, %v245
  %v262 = vmul.f32 %v239, %v245
  %v263 = vld [vmem:[%s2] sm:$0x1]
  %v265 = vlaneseq
  %v266 = vshrl.u32 %v265, 7
  %v267 = vsub.s32 0, %v266
  %v268 = vrot.slane %v263, %v267
  %v270 = vadd.f32 %v247, %v268
  %v271 = vadd.f32 %v248, %v268
  %v272 = vadd.f32 %v249, %v268
  %v273 = vadd.f32 %v250, %v268
  %v274 = vadd.f32 %v251, %v268
  %v275 = vadd.f32 %v252, %v268
  %v276 = vadd.f32 %v253, %v268
  %v277 = vadd.f32 %v254, %v268
  %v278 = vadd.f32 %v255, %v268
  %v279 = vadd.f32 %v256, %v268
  %v280 = vadd.f32 %v257, %v268
  %v281 = vadd.f32 %v258, %v268
  %v282 = vadd.f32 %v259, %v268
  %v283 = vadd.f32 %v260, %v268
  %v284 = vadd.f32 %v261, %v268
  %v285 = vadd.f32 %v262, %v268
  %v286 = vmul.f32 %v270, 0.5
  %v287 = vmul.f32 %v271, 0.5
  %v288 = vmul.f32 %v272, 0.5
  %v289 = vmul.f32 %v273, 0.5
  %v290 = vmul.f32 %v274, 0.5
  %v291 = vmul.f32 %v275, 0.5
  %v292 = vmul.f32 %v276, 0.5
  %v293 = vmul.f32 %v277, 0.5
  %v294 = vmul.f32 %v278, 0.5
  %v295 = vmul.f32 %v279, 0.5
  %v296 = vmul.f32 %v280, 0.5
  %v297 = vmul.f32 %v281, 0.5
  %v298 = vmul.f32 %v282, 0.5
  %v299 = vmul.f32 %v283, 0.5
  %v300 = vmul.f32 %v284, 0.5
  %v301 = vmul.f32 %v285, 0.5
  %v302 = vmul.f32 %v270, 0.044715
  %v303 = vmul.f32 %v271, 0.044715
  %v304 = vmul.f32 %v272, 0.044715
  %v305 = vmul.f32 %v273, 0.044715
  %v306 = vmul.f32 %v274, 0.044715
  %v307 = vmul.f32 %v275, 0.044715
  %v308 = vmul.f32 %v276, 0.044715
  %v309 = vmul.f32 %v277, 0.044715
  %v310 = vmul.f32 %v278, 0.044715
  %v311 = vmul.f32 %v279, 0.044715
  %v312 = vmul.f32 %v280, 0.044715
  %v313 = vmul.f32 %v281, 0.044715
  %v314 = vmul.f32 %v282, 0.044715
  %v315 = vmul.f32 %v283, 0.044715
  %v316 = vmul.f32 %v284, 0.044715
  %v317 = vmul.f32 %v285, 0.044715
  %v318 = vmul.f32 %v302, %v270
  %v319 = vmul.f32 %v303, %v271
  %v320 = vmul.f32 %v304, %v272
  %v321 = vmul.f32 %v305, %v273
  %v322 = vmul.f32 %v306, %v274
  %v323 = vmul.f32 %v307, %v275
  %v324 = vmul.f32 %v308, %v276
  %v325 = vmul.f32 %v309, %v277
  %v326 = vmul.f32 %v310, %v278
  %v327 = vmul.f32 %v311, %v279
  %v328 = vmul.f32 %v312, %v280
  %v329 = vmul.f32 %v313, %v281
  %v330 = vmul.f32 %v314, %v282
  %v331 = vmul.f32 %v315, %v283
  %v332 = vmul.f32 %v316, %v284
  %v333 = vmul.f32 %v317, %v285
  %v334 = vmul.f32 %v318, %v270
  %v335 = vmul.f32 %v319, %v271
  %v336 = vmul.f32 %v320, %v272
  %v337 = vmul.f32 %v321, %v273
  %v338 = vmul.f32 %v322, %v274
  %v339 = vmul.f32 %v323, %v275
  %v340 = vmul.f32 %v324, %v276
  %v341 = vmul.f32 %v325, %v277
  %v342 = vmul.f32 %v326, %v278
  %v343 = vmul.f32 %v327, %v279
  %v344 = vmul.f32 %v328, %v280
  %v345 = vmul.f32 %v329, %v281
  %v346 = vmul.f32 %v330, %v282
  %v347 = vmul.f32 %v331, %v283
  %v348 = vmul.f32 %v332, %v284
  %v349 = vmul.f32 %v333, %v285
  %v350 = vadd.f32 %v270, %v334
  %v351 = vadd.f32 %v271, %v335
  %v352 = vadd.f32 %v272, %v336
  %v353 = vadd.f32 %v273, %v337
  %v354 = vadd.f32 %v274, %v338
  %v355 = vadd.f32 %v275, %v339
  %v356 = vadd.f32 %v276, %v340
  %v357 = vadd.f32 %v277, %v341
  %v358 = vadd.f32 %v278, %v342
  %v359 = vadd.f32 %v279, %v343
  %v360 = vadd.f32 %v280, %v344
  %v361 = vadd.f32 %v281, %v345
  %v362 = vadd.f32 %v282, %v346
  %v363 = vadd.f32 %v283, %v347
  %v364 = vadd.f32 %v284, %v348
  %v365 = vadd.f32 %v285, %v349
  %v366 = vmul.f32 %v350, 0.7978846
  %v367 = vmul.f32 %v351, 0.7978846
  %v368 = vmul.f32 %v352, 0.7978846
  %v369 = vmul.f32 %v353, 0.7978846
  %v370 = vmul.f32 %v354, 0.7978846
  %v371 = vmul.f32 %v355, 0.7978846
  %v372 = vmul.f32 %v356, 0.7978846
  %v373 = vmul.f32 %v357, 0.7978846
  %v374 = vmul.f32 %v358, 0.7978846
  %v375 = vmul.f32 %v359, 0.7978846
  %v376 = vmul.f32 %v360, 0.7978846
  %v377 = vmul.f32 %v361, 0.7978846
  %v378 = vmul.f32 %v362, 0.7978846
  %v379 = vmul.f32 %v363, 0.7978846
  %v380 = vmul.f32 %v364, 0.7978846
  %v381 = vmul.f32 %v365, 0.7978846
  %v382 = vtanh.pop %v366
  %v383 = vtanh.pop %v367
  %v384 = vtanh.pop %v368
  %v385 = vtanh.pop %v369
  %v386 = vtanh.pop %v370
  %v387 = vtanh.pop %v371
  %v388 = vtanh.pop %v372
  %v389 = vtanh.pop %v373
  %v390 = vtanh.pop %v374
  %v391 = vtanh.pop %v375
  %v392 = vtanh.pop %v376
  %v393 = vtanh.pop %v377
  %v394 = vtanh.pop %v378
  %v395 = vtanh.pop %v379
  %v396 = vtanh.pop %v380
  %v397 = vtanh.pop %v381
  %v398 = vadd.f32 %v382, 1.0
  %v399 = vadd.f32 %v383, 1.0
  %v400 = vadd.f32 %v384, 1.0
  %v401 = vadd.f32 %v385, 1.0
  %v402 = vadd.f32 %v386, 1.0
  %v403 = vadd.f32 %v387, 1.0
  %v404 = vadd.f32 %v388, 1.0
  %v405 = vadd.f32 %v389, 1.0
  %v406 = vadd.f32 %v390, 1.0
  %v407 = vadd.f32 %v391, 1.0
  %v408 = vadd.f32 %v392, 1.0
  %v409 = vadd.f32 %v393, 1.0
  %v410 = vadd.f32 %v394, 1.0
  %v411 = vadd.f32 %v395, 1.0
  %v412 = vadd.f32 %v396, 1.0
  %v413 = vadd.f32 %v397, 1.0
  %v414 = vmul.f32 %v286, %v398
  %v415 = vmul.f32 %v287, %v399
  %v416 = vmul.f32 %v288, %v400
  %v417 = vmul.f32 %v289, %v401
  %v418 = vmul.f32 %v290, %v402
  %v419 = vmul.f32 %v291, %v403
  %v420 = vmul.f32 %v292, %v404
  %v421 = vmul.f32 %v293, %v405
  %v422 = vmul.f32 %v294, %v406
  %v423 = vmul.f32 %v295, %v407
  %v424 = vmul.f32 %v296, %v408
  %v425 = vmul.f32 %v297, %v409
  %v426 = vmul.f32 %v298, %v410
  %v427 = vmul.f32 %v299, %v411
  %v428 = vmul.f32 %v300, %v412
  %v429 = vmul.f32 %v301, %v413
  %430 = vst.msk [vmem:[%s3] sm:$0xff] %vm30, %v414
  %431 = vst.msk [vmem:[%s3 + $0x8] sm:$0xff] %vm30, %v415
  %432 = vst.msk [vmem:[%s3 + $0x10] sm:$0xff] %vm30, %v416
  %433 = vst.msk [vmem:[%s3 + $0x18] sm:$0xff] %vm30, %v417
  %434 = vst.msk [vmem:[%s3 + $0x20] sm:$0xff] %vm30, %v418
  %435 = vst.msk [vmem:[%s3 + $0x28] sm:$0xff] %vm30, %v419
  %436 = vst.msk [vmem:[%s3 + $0x30] sm:$0xff] %vm30, %v420
  %437 = vst.msk [vmem:[%s3 + $0x38] sm:$0xff] %vm30, %v421
  %438 = vst.msk [vmem:[%s3 + $0x40] sm:$0xff] %vm30, %v422
  %439 = vst.msk [vmem:[%s3 + $0x48] sm:$0xff] %vm30, %v423
  %440 = vst.msk [vmem:[%s3 + $0x50] sm:$0xff] %vm30, %v424
  %441 = vst.msk [vmem:[%s3 + $0x58] sm:$0xff] %vm30, %v425
  %442 = vst.msk [vmem:[%s3 + $0x60] sm:$0xff] %vm30, %v426
  %443 = vst.msk [vmem:[%s3 + $0x68] sm:$0xff] %vm30, %v427
  %444 = vst.msk [vmem:[%s3 + $0x70] sm:$0xff] %vm30, %v428
  %445 = vst.msk [vmem:[%s3 + $0x78] sm:$0xff] %vm30, %v429
  // Predicated region
  $region14: #{medsam_forward.142} parent=0 // pred_check
    _
  $region15: #{medsam_forward.142} parent=0 // pred_check_branch
    %447 = sbr.rel (0) target = $region17
  $region16: #{medsam_forward.142} parent=0 // pred_region
    _
  $region17: #{medsam_forward.142} parent=0 // pred_fallthru
    _
  // Predicated region
  $region18: #{medsam_forward.142} parent=0 // pred_check
    _
  $region19: #{medsam_forward.142} parent=0 // pred_check_branch
    %449 = sbr.rel (0) target = $region21
  $region20: #{medsam_forward.142} parent=0 // pred_region
    _
  $region21: #{medsam_forward.142} parent=0 // pred_fallthru
    _

// kernel: medsam_forward.143
$region0: #{medsam_forward.143}
  #allocation0 [shape = 'u32[]', space=smem, size = 0x4, offset = 0x4, fixed_abs, tag = 'smem constant byte address 0x4 - core index']
  #allocation1 [shape = 'u32[144,128]{1,0:T(1,128)}', space=vmem, size = 0x12000, scoped, tag = 'internal scratch']
  %s0 = inlined_call_operand.vmem [shape: bf16[128,8], index: 0, kind: input, shape index: {}]
  %s1 = inlined_call_operand.vmem [shape: bf16[8,16], index: 1, kind: input, shape index: {}]
  %s2 = inlined_call_operand.vmem [shape: f32[1,16], index: 2, kind: input, shape index: {}]
  %s3 = inlined_call_operand.vmem [shape: f32[128,16], index: 3, kind: output, shape index: {}]
  %s4 = sld [smem:[#allocation0]]
  $region22: #{medsam_forward.143} parent=0
    _
  %s6 = ssub.s32 1, %s4
  %s7 = scalar_select 0, %s6, %s4
  // Predicated region
  $region2: #{medsam_forward.143} parent=0 // pred_check
    _
  $region3: #{medsam_forward.143} parent=0 // pred_check_branch
    %9 = sbr.rel (0) target = $region5
  $region4: #{medsam_forward.143} parent=0 // pred_region
    _
  $region5: #{medsam_forward.143} parent=0 // pred_fallthru
    _
  // Predicated region
  $region6: #{medsam_forward.143} parent=0 // pred_check
    _
  $region7: #{medsam_forward.143} parent=0 // pred_check_branch
    %11 = sbr.rel (0) target = $region9
  $region8: #{medsam_forward.143} parent=0 // pred_region
    _
  $region9: #{medsam_forward.143} parent=0 // pred_fallthru
    _
  // Predicated region
  $region10: #{medsam_forward.143} parent=0 // pred_check
    _
  $region11: #{medsam_forward.143} parent=0 // pred_check_branch
    %13 = sbr.rel (0) target = $region13
  $region12: #{medsam_forward.143} parent=0 // pred_region
    _
  $region13: #{medsam_forward.143} parent=0 // pred_fallthru
    _
  %v15 = vld [vmem:[%s0] sm:$0xf]
  %v16 = vld [vmem:[%s0 + $0x4] sm:$0xf]
  %v17 = vld [vmem:[%s0 + $0x8] sm:$0xf]
  %v18 = vld [vmem:[%s0 + $0xc] sm:$0xf]
  %v19 = vld [vmem:[%s0 + $0x10] sm:$0xf]
  %v20 = vld [vmem:[%s0 + $0x14] sm:$0xf]
  %v21 = vld [vmem:[%s0 + $0x18] sm:$0xf]
  %v22 = vld [vmem:[%s0 + $0x1c] sm:$0xf]
  %v23 = vld [vmem:[%s0 + $0x20] sm:$0xf]
  %v24 = vld [vmem:[%s0 + $0x24] sm:$0xf]
  %v25 = vld [vmem:[%s0 + $0x28] sm:$0xf]
  %v26 = vld [vmem:[%s0 + $0x2c] sm:$0xf]
  %v27 = vld [vmem:[%s0 + $0x30] sm:$0xf]
  %v28 = vld [vmem:[%s0 + $0x34] sm:$0xf]
  %v29 = vld [vmem:[%s0 + $0x38] sm:$0xf]
  %v30 = vld [vmem:[%s0 + $0x3c] sm:$0xf]
  %v31 = vld [vmem:[%s1] sm:$0xf]
  %v32 = vld [vmem:[%s2] sm:$0x1]
  %v34 = vlaneseq
  %v35 = vshrl.u32 %v34, 7
  %v36 = vsub.s32 0, %v35
  %v37 = vrot.slane %v32, %v36
  %v55 = vunpack.c.l.b16 %v15
  %v56 = vunpack.c.l.b16 %v16
  %v57 = vunpack.c.l.b16 %v17
  %v58 = vunpack.c.l.b16 %v18
  %v59 = vunpack.c.l.b16 %v19
  %v60 = vunpack.c.l.b16 %v20
  %v61 = vunpack.c.l.b16 %v21
  %v62 = vunpack.c.l.b16 %v22
  %v63 = vunpack.c.l.b16 %v23
  %v64 = vunpack.c.l.b16 %v24
  %v65 = vunpack.c.l.b16 %v25
  %v66 = vunpack.c.l.b16 %v26
  %v67 = vunpack.c.l.b16 %v27
  %v68 = vunpack.c.l.b16 %v28
  %v69 = vunpack.c.l.b16 %v29
  %v70 = vunpack.c.l.b16 %v30
  %v71 = vpack.c.b16 %v56, %v55
  %v72 = vpack.c.b16 %v58, %v57
  %v73 = vpack.c.b16 %v60, %v59
  %v74 = vpack.c.b16 %v62, %v61
  %v75 = vpack.c.b16 %v64, %v63
  %v76 = vpack.c.b16 %v66, %v65
  %v77 = vpack.c.b16 %v68, %v67
  %v78 = vpack.c.b16 %v70, %v69
  %vm79 = vcmask 64512
  %v81 = vsel %vm79, %v71, 0
  %v84 = vsel %vm79, %v72, 0
  %v87 = vsel %vm79, %v73, 0
  %v90 = vsel %vm79, %v74, 0
  %v93 = vsel %vm79, %v75, 0
  %v96 = vsel %vm79, %v76, 0
  %v99 = vsel %vm79, %v77, 0
  %v102 = vsel %vm79, %v78, 0
  %vm104 = vcmask 1043456
  %v106 = vsel %vm104, %v31, 0
  %108 = vmatprep.subr.bf16.mxu0 0
  %109 = vmatpush1.bf16.msra.mxu0 0
  %110 = vmatprep.subr.bf16.mxu0 0
  %111 = vmatpush1.bf16.msra.mxu0 0
  %112 = vmatprep.subr.bf16.mxu0 0
  %113 = vmatpush1.bf16.msra.mxu0 0
  %114 = vmatprep.subr.bf16.mxu0 0
  %115 = vmatpush1.bf16.msra.mxu0 0
  %116 = vmatprep.subr.bf16.mxu0 0
  %117 = vmatpush1.bf16.msra.mxu0 0
  %118 = vmatprep.subr.bf16.mxu0 0
  %119 = vmatpush1.bf16.msra.mxu0 0
  %120 = vmatprep.subr.bf16.mxu0 0
  %121 = vmatpush1.bf16.msra.mxu0 0
  %122 = vmatprep.subr.bf16.mxu0 0
  %123 = vmatpush1.bf16.msra.mxu0 %v106
  %124 = vmatprep.subr.bf16.mxu0 0
  %125 = vmatpush2.bf16.msra.mxu0 0
  %126 = vmatprep.subr.bf16.mxu0 0
  %127 = vmatpush2.bf16.msra.mxu0 0
  %128 = vmatprep.subr.bf16.mxu0 0
  %129 = vmatpush2.bf16.msra.mxu0 0
  %130 = vmatprep.subr.bf16.mxu0 0
  %131 = vmatpush2.bf16.msra.mxu0 0
  %132 = vmatprep.subr.bf16.mxu0 0
  %133 = vmatpush2.bf16.msra.mxu0 0
  %134 = vmatprep.subr.bf16.mxu0 0
  %135 = vmatpush2.bf16.msra.mxu0 0
  %136 = vmatprep.subr.bf16.mxu0 0
  %137 = vmatpush2.bf16.msra.mxu0 0
  %138 = vmatprep.subr.bf16.mxu0 0
  %139 = vmatpush2.bf16.msra.mxu0 0
  %140 = vmatprep.mubr.bf16.mxu0 0
  %141 = vmatmul.mubr.bf16.gmra.mxu0 %v81
  %v142 = vpop.f32.mrf.mxu0
  %v143 = vadd.f32 %v37, %v142
  %v144 = vpop.f32.mrf.mxu0
  %v145 = vpop.f32.mrf.mxu0
  %v146 = vadd.f32 %v37, %v145
  %v147 = vpop.f32.mrf.mxu0
  %148 = vmatprep.mubr.bf16.mxu0 0
  %149 = vmatmul.mubr.bf16.gmra.mxu0 %v84
  %v150 = vpop.f32.mrf.mxu0
  %v151 = vadd.f32 %v37, %v150
  %v152 = vpop.f32.mrf.mxu0
  %v153 = vpop.f32.mrf.mxu0
  %v154 = vadd.f32 %v37, %v153
  %v155 = vpop.f32.mrf.mxu0
  %156 = vmatprep.mubr.bf16.mxu0 0
  %157 = vmatmul.mubr.bf16.gmra.mxu0 %v87
  %v158 = vpop.f32.mrf.mxu0
  %v159 = vadd.f32 %v37, %v158
  %v160 = vpop.f32.mrf.mxu0
  %v161 = vpop.f32.mrf.mxu0
  %v162 = vadd.f32 %v37, %v161
  %v163 = vpop.f32.mrf.mxu0
  %164 = vmatprep.mubr.bf16.mxu0 0
  %165 = vmatmul.mubr.bf16.gmra.mxu0 %v90
  %v166 = vpop.f32.mrf.mxu0
  %v167 = vadd.f32 %v37, %v166
  %v168 = vpop.f32.mrf.mxu0
  %v169 = vpop.f32.mrf.mxu0
  %v170 = vadd.f32 %v37, %v169
  %v171 = vpop.f32.mrf.mxu0
  %172 = vmatprep.mubr.bf16.mxu0 0
  %173 = vmatmul.mubr.bf16.gmra.mxu0 %v93
  %v174 = vpop.f32.mrf.mxu0
  %v175 = vadd.f32 %v37, %v174
  %v176 = vpop.f32.mrf.mxu0
  %v177 = vpop.f32.mrf.mxu0
  %v178 = vadd.f32 %v37, %v177
  %v179 = vpop.f32.mrf.mxu0
  %180 = vmatprep.mubr.bf16.mxu0 0
  %181 = vmatmul.mubr.bf16.gmra.mxu0 %v96
  %v182 = vpop.f32.mrf.mxu0
  %v183 = vadd.f32 %v37, %v182
  %v184 = vpop.f32.mrf.mxu0
  %v185 = vpop.f32.mrf.mxu0
  %v186 = vadd.f32 %v37, %v185
  %v187 = vpop.f32.mrf.mxu0
  %188 = vmatprep.mubr.bf16.mxu0 0
  %189 = vmatmul.mubr.bf16.gmra.mxu0 %v99
  %v190 = vpop.f32.mrf.mxu0
  %v191 = vadd.f32 %v37, %v190
  %v192 = vpop.f32.mrf.mxu0
  %v193 = vpop.f32.mrf.mxu0
  %v194 = vadd.f32 %v37, %v193
  %v195 = vpop.f32.mrf.mxu0
  %196 = vmatprep.mubr.bf16.mxu0 0
  %197 = vmatmul.mubr.bf16.gmra.mxu0 %v102
  %v198 = vpop.f32.mrf.mxu0
  %v199 = vadd.f32 %v37, %v198
  %v200 = vpop.f32.mrf.mxu0
  %v201 = vpop.f32.mrf.mxu0
  %v202 = vadd.f32 %v37, %v201
  %v203 = vpop.f32.mrf.mxu0
  %204 = vdwg.mxu0
  %v205 = vmul.f32 %v143, 0.5
  %v206 = vmul.f32 %v146, 0.5
  %v207 = vmul.f32 %v151, 0.5
  %v208 = vmul.f32 %v154, 0.5
  %v209 = vmul.f32 %v159, 0.5
  %v210 = vmul.f32 %v162, 0.5
  %v211 = vmul.f32 %v167, 0.5
  %v212 = vmul.f32 %v170, 0.5
  %v213 = vmul.f32 %v175, 0.5
  %v214 = vmul.f32 %v178, 0.5
  %v215 = vmul.f32 %v183, 0.5
  %v216 = vmul.f32 %v186, 0.5
  %v217 = vmul.f32 %v191, 0.5
  %v218 = vmul.f32 %v194, 0.5
  %v219 = vmul.f32 %v199, 0.5
  %v220 = vmul.f32 %v202, 0.5
  %v221 = vmul.f32 %v143, 0.044715
  %v222 = vmul.f32 %v146, 0.044715
  %v223 = vmul.f32 %v151, 0.044715
  %v224 = vmul.f32 %v154, 0.044715
  %v225 = vmul.f32 %v159, 0.044715
  %v226 = vmul.f32 %v162, 0.044715
  %v227 = vmul.f32 %v167, 0.044715
  %v228 = vmul.f32 %v170, 0.044715
  %v229 = vmul.f32 %v175, 0.044715
  %v230 = vmul.f32 %v178, 0.044715
  %v231 = vmul.f32 %v183, 0.044715
  %v232 = vmul.f32 %v186, 0.044715
  %v233 = vmul.f32 %v191, 0.044715
  %v234 = vmul.f32 %v194, 0.044715
  %v235 = vmul.f32 %v199, 0.044715
  %v236 = vmul.f32 %v202, 0.044715
  %v237 = vmul.f32 %v221, %v143
  %v238 = vmul.f32 %v222, %v146
  %v239 = vmul.f32 %v223, %v151
  %v240 = vmul.f32 %v224, %v154
  %v241 = vmul.f32 %v225, %v159
  %v242 = vmul.f32 %v226, %v162
  %v243 = vmul.f32 %v227, %v167
  %v244 = vmul.f32 %v228, %v170
  %v245 = vmul.f32 %v229, %v175
  %v246 = vmul.f32 %v230, %v178
  %v247 = vmul.f32 %v231, %v183
  %v248 = vmul.f32 %v232, %v186
  %v249 = vmul.f32 %v233, %v191
  %v250 = vmul.f32 %v234, %v194
  %v251 = vmul.f32 %v235, %v199
  %v252 = vmul.f32 %v236, %v202
  %v253 = vmul.f32 %v237, %v143
  %v254 = vmul.f32 %v238, %v146
  %v255 = vmul.f32 %v239, %v151
  %v256 = vmul.f32 %v240, %v154
  %v257 = vmul.f32 %v241, %v159
  %v258 = vmul.f32 %v242, %v162
  %v259 = vmul.f32 %v243, %v167
  %v260 = vmul.f32 %v244, %v170
  %v261 = vmul.f32 %v245, %v175
  %v262 = vmul.f32 %v246, %v178
  %v263 = vmul.f32 %v247, %v183
  %v264 = vmul.f32 %v248, %v186
  %v265 = vmul.f32 %v249, %v191
  %v266 = vmul.f32 %v250, %v194
  %v267 = vmul.f32 %v251, %v199
  %v268 = vmul.f32 %v252, %v202
  %v269 = vadd.f32 %v143, %v253
  %v270 = vadd.f32 %v146, %v254
  %v271 = vadd.f32 %v151, %v255
  %v272 = vadd.f32 %v154, %v256
  %v273 = vadd.f32 %v159, %v257
  %v274 = vadd.f32 %v162, %v258
  %v275 = vadd.f32 %v167, %v259
  %v276 = vadd.f32 %v170, %v260
  %v277 = vadd.f32 %v175, %v261
  %v278 = vadd.f32 %v178, %v262
  %v279 = vadd.f32 %v183, %v263
  %v280 = vadd.f32 %v186, %v264
  %v281 = vadd.f32 %v191, %v265
  %v282 = vadd.f32 %v194, %v266
  %v283 = vadd.f32 %v199, %v267
  %v284 = vadd.f32 %v202, %v268
  %v285 = vmul.f32 %v269, 0.7978846
  %v286 = vmul.f32 %v270, 0.7978846
  %v287 = vmul.f32 %v271, 0.7978846
  %v288 = vmul.f32 %v272, 0.7978846
  %v289 = vmul.f32 %v273, 0.7978846
  %v290 = vmul.f32 %v274, 0.7978846
  %v291 = vmul.f32 %v275, 0.7978846
  %v292 = vmul.f32 %v276, 0.7978846
  %v293 = vmul.f32 %v277, 0.7978846
  %v294 = vmul.f32 %v278, 0.7978846
  %v295 = vmul.f32 %v279, 0.7978846
  %v296 = vmul.f32 %v280, 0.7978846
  %v297 = vmul.f32 %v281, 0.7978846
  %v298 = vmul.f32 %v282, 0.7978846
  %v299 = vmul.f32 %v283, 0.7978846
  %v300 = vmul.f32 %v284, 0.7978846
  %v301 = vtanh.pop %v285
  %v302 = vtanh.pop %v286
  %v303 = vtanh.pop %v287
  %v304 = vtanh.pop %v288
  %v305 = vtanh.pop %v289
  %v306 = vtanh.pop %v290
  %v307 = vtanh.pop %v291
  %v308 = vtanh.pop %v292
  %v309 = vtanh.pop %v293
  %v310 = vtanh.pop %v294
  %v311 = vtanh.pop %v295
  %v312 = vtanh.pop %v296
  %v313 = vtanh.pop %v297
  %v314 = vtanh.pop %v298
  %v315 = vtanh.pop %v299
  %v316 = vtanh.pop %v300
  %v317 = vadd.f32 %v301, 1.0
  %v318 = vadd.f32 %v302, 1.0
  %v319 = vadd.f32 %v303, 1.0
  %v320 = vadd.f32 %v304, 1.0
  %v321 = vadd.f32 %v305, 1.0
  %v322 = vadd.f32 %v306, 1.0
  %v323 = vadd.f32 %v307, 1.0
  %v324 = vadd.f32 %v308, 1.0
  %v325 = vadd.f32 %v309, 1.0
  %v326 = vadd.f32 %v310, 1.0
  %v327 = vadd.f32 %v311, 1.0
  %v328 = vadd.f32 %v312, 1.0
  %v329 = vadd.f32 %v313, 1.0
  %v330 = vadd.f32 %v314, 1.0
  %v331 = vadd.f32 %v315, 1.0
  %v332 = vadd.f32 %v316, 1.0
  %v333 = vmul.f32 %v205, %v317
  %v334 = vmul.f32 %v206, %v318
  %v335 = vmul.f32 %v207, %v319
  %v336 = vmul.f32 %v208, %v320
  %v337 = vmul.f32 %v209, %v321
  %v338 = vmul.f32 %v210, %v322
  %v339 = vmul.f32 %v211, %v323
  %v340 = vmul.f32 %v212, %v324
  %v341 = vmul.f32 %v213, %v325
  %v342 = vmul.f32 %v214, %v326
  %v343 = vmul.f32 %v215, %v327
  %v344 = vmul.f32 %v216, %v328
  %v345 = vmul.f32 %v217, %v329
  %v346 = vmul.f32 %v218, %v330
  %v347 = vmul.f32 %v219, %v331
  %v348 = vmul.f32 %v220, %v332
  %vm349 = vcmask 130048
  %350 = vst.msk [vmem:[%s3] sm:$0xff] %vm349, %v333
  %351 = vst.msk [vmem:[%s3 + $0x8] sm:$0xff] %vm349, %v334
  %352 = vst.msk [vmem:[%s3 + $0x10] sm:$0xff] %vm349, %v335
  %353 = vst.msk [vmem:[%s3 + $0x18] sm:$0xff] %vm349, %v336
  %354 = vst.msk [vmem:[%s3 + $0x20] sm:$0xff] %vm349, %v337
  %355 = vst.msk [vmem:[%s3 + $0x28] sm:$0xff] %vm349, %v338
  %356 = vst.msk [vmem:[%s3 + $0x30] sm:$0xff] %vm349, %v339
  %357 = vst.msk [vmem:[%s3 + $0x38] sm:$0xff] %vm349, %v340
  %358 = vst.msk [vmem:[%s3 + $0x40] sm:$0xff] %vm349, %v341
  %359 = vst.msk [vmem:[%s3 + $0x48] sm:$0xff] %vm349, %v342
  %360 = vst.msk [vmem:[%s3 + $0x50] sm:$0xff] %vm349, %v343
  %361 = vst.msk [vmem:[%s3 + $0x58] sm:$0xff] %vm349, %v344
  %362 = vst.msk [vmem:[%s3 + $0x60] sm:$0xff] %vm349, %v345
  %363 = vst.msk [vmem:[%s3 + $0x68] sm:$0xff] %vm349, %v346
  %364 = vst.msk [vmem:[%s3 + $0x70] sm:$0xff] %vm349, %v347
  %365 = vst.msk [vmem:[%s3 + $0x78] sm:$0xff] %vm349, %v348
  // Predicated region
  $region14: #{medsam_forward.143} parent=0 // pred_check
    _
  $region15: #{medsam_forward.143} parent=0 // pred_check_branch
    %367 = sbr.rel (0) target = $region17
  $region16: #{medsam_forward.143} parent=0 // pred_region
    _
  $region17: #{medsam_forward.143} parent=0 // pred_fallthru
    _
  // Predicated region
  $region18: #{medsam_forward.143} parent=0 // pred_check
    _
  $region19: #{medsam_forward.143} parent=0 // pred_check_branch
    %369 = sbr.rel (0) target = $region21
  $region20: #{medsam_forward.143} parent=0 // pred_region
    _
  $region21: #{medsam_forward.143} parent=0 // pred_fallthru
    _

// kernel: medsam_forward.144
$region0: #{medsam_forward.144}
  #allocation0 [shape = 'u32[]', space=smem, size = 0x4, offset = 0x4, fixed_abs, tag = 'smem constant byte address 0x4 - core index']
  #allocation1 [shape = 'u32[144,128]{1,0:T(1,128)}', space=vmem, size = 0x12000, scoped, tag = 'internal scratch']
  %s0 = inlined_call_operand.vmem [shape: bf16[4,2,32], index: 0, kind: input, shape index: {}]
  %s1 = inlined_call_operand.vmem [shape: bf16[4,32,32], index: 1, kind: input, shape index: {}]
  %s2 = inlined_call_operand.vmem [shape: f32[4,1,32], index: 2, kind: input, shape index: {}]
  %s3 = inlined_call_operand.vmem [shape: f32[4,2,32], index: 3, kind: output, shape index: {}]
  %s4 = sld [smem:[#allocation0]]
  $region45: #{medsam_forward.144} parent=0
    _
  %s6 = ssub.s32 1, %s4
  %s7 = scalar_select 0, %s6, %s4
  loop: start=0, step=1, limit=6
  $region2: #{medsam_forward.144} parent=0 // loop_pre_header
    _
  $region3: #{medsam_forward.144} parent=0 // loop_header
    %s9 = sphi 0, %s13
    %p10 = scmp.ge.s32.totalorder %s9, 6
    %s19 = sphi 0, %s21
    %s22 = sphi 0, %s19
    %s23 = sphi 0, %s22
    %s39 = sphi 0, %s23
    %s45 = sphi 0, %s47
    %s48 = sphi 0, %s45
    %s49 = sphi 0, %s48
    %s65 = sphi 0, %s49
    %s71 = sphi 0, %s73
    %s74 = sphi 0, %s71
    %s75 = sphi 0, %s74
    %s91 = sphi 0, %s75
    %s97 = sphi 0, %s99
    %s100 = sphi 0, %s97
    %s101 = sphi 0, %s100
    %s117 = sphi 0, %s101
  $region4: #{medsam_forward.144} parent=0 // loop_header_branch
    %12 = sbr.rel (%p10) target = $region8
  $region5: #{medsam_forward.144} parent=0 // loop_body
    %s14 = ssub.s32 %s9, 1
    %s15 = ssub.s32 %s9, 2
    %s16 = sadd.s32 %s9, 1
    %s17 = ssub.s32 %s9, %s16
    %p18 = scmp.eq.s32.totalorder %s17, 0
    %s20 = sadd.s32 %s19, 1
    %s21 = scalar_select %p18, %s19, %s20
    %p24 = pneg %p18
    %p25 = scmp.eq.s32.totalorder %s9, 3
    %p26 = por %p24, %p25
    %p27 = scmp.ne.s32.totalorder %s19, %s22
    %p28 = scmp.eq.s32.totalorder %s9, 0
    %p29 = por %p27, %p28
    %p30 = scmp.ne.s32.totalorder %s19, %s22
    %p31 = scmp.eq.s32.totalorder %s14, 3
    %p32 = por %p30, %p31
    %p33 = scmp.ne.s32.totalorder %s22, %s23
    %p34 = scmp.eq.s32.totalorder %s14, 0
    %p35 = por %p33, %p34
    %p36 = scmp.ne.s32.totalorder %s22, %s23
    %p37 = scmp.eq.s32.totalorder %s15, 3
    %p38 = por %p36, %p37
    %p40 = scmp.ne.s32.totalorder %s23, %s39
    %p41 = scmp.eq.s32.totalorder %s15, 0
    %p42 = por %p40, %p41
    %s43 = ssub.s32 %s9, %s16
    %p44 = scmp.eq.s32.totalorder %s43, 0
    %s46 = sadd.s32 %s45, 1
    %s47 = scalar_select %p44, %s45, %s46
    %p50 = pneg %p44
    %p51 = scmp.eq.s32.totalorder %s9, 3
    %p52 = por %p50, %p51
    %p53 = scmp.ne.s32.totalorder %s45, %s48
    %p54 = scmp.eq.s32.totalorder %s9, 0
    %p55 = por %p53, %p54
    %p56 = scmp.ne.s32.totalorder %s45, %s48
    %p57 = scmp.eq.s32.totalorder %s14, 3
    %p58 = por %p56, %p57
    %p59 = scmp.ne.s32.totalorder %s48, %s49
    %p60 = scmp.eq.s32.totalorder %s14, 0
    %p61 = por %p59, %p60
    %p62 = scmp.ne.s32.totalorder %s48, %s49
    %p63 = scmp.eq.s32.totalorder %s15, 3
    %p64 = por %p62, %p63
    %p66 = scmp.ne.s32.totalorder %s49, %s65
    %p67 = scmp.eq.s32.totalorder %s15, 0
    %p68 = por %p66, %p67
    %s69 = ssub.s32 %s9, %s16
    %p70 = scmp.eq.s32.totalorder %s69, 0
    %s72 = sadd.s32 %s71, 1
    %s73 = scalar_select %p70, %s71, %s72
    %p76 = pneg %p70
    %p77 = scmp.eq.s32.totalorder %s9, 3
    %p78 = por %p76, %p77
    %p79 = scmp.ne.s32.totalorder %s71, %s74
    %p80 = scmp.eq.s32.totalorder %s9, 0
    %p81 = por %p79, %p80
    %p82 = scmp.ne.s32.totalorder %s71, %s74
    %p83 = scmp.eq.s32.totalorder %s14, 3
    %p84 = por %p82, %p83
    %p85 = scmp.ne.s32.totalorder %s74, %s75
    %p86 = scmp.eq.s32.totalorder %s14, 0
    %p87 = por %p85, %p86
    %p88 = scmp.ne.s32.totalorder %s74, %s75
    %p89 = scmp.eq.s32.totalorder %s15, 3
    %p90 = por %p88, %p89
    %p92 = scmp.ne.s32.totalorder %s75, %s91
    %p93 = scmp.eq.s32.totalorder %s15, 0
    %p94 = por %p92, %p93
    %s95 = ssub.s32 %s9, %s16
    %p96 = scmp.eq.s32.totalorder %s95, 0
    %s98 = sadd.s32 %s97, 1
    %s99 = scalar_select %p96, %s97, %s98
    %p102 = pneg %p96
    %p103 = scmp.eq.s32.totalorder %s9, 3
    %p104 = por %p102, %p103
    %p105 = scmp.ne.s32.totalorder %s97, %s100
    %p106 = scmp.eq.s32.totalorder %s9, 0
    %p107 = por %p105, %p106
    %p108 = scmp.ne.s32.totalorder %s97, %s100
    %p109 = scmp.eq.s32.totalorder %s14, 3
    %p110 = por %p108, %p109
    %p111 = scmp.ne.s32.totalorder %s100, %s101
    %p112 = scmp.eq.s32.totalorder %s14, 0
    %p113 = por %p111, %p112
    %p114 = scmp.ne.s32.totalorder %s100, %s101
    %p115 = scmp.eq.s32.totalorder %s15, 3
    %p116 = por %p114, %p115
    %p118 = scmp.ne.s32.totalorder %s101, %s117
    %p119 = scmp.eq.s32.totalorder %s15, 0
    %p120 = por %p118, %p119
    %p121 = scmp.le.s32.totalorder 1, %s9
    %p122 = scmp.lt.s32.totalorder %s9, 5
    %p123 = pnand %p121, %p122
    %p124 = pneg %p123
    // Predicated region
    $region9: #{medsam_forward.144} parent=5 // pred_check
      _
    $region10: #{medsam_forward.144} parent=5 // pred_check_branch
      %126 = sbr.rel (%p123) target = $region12
    $region11: #{medsam_forward.144} parent=5 // pred_region
      %s127 = ssub.s32 %s9, 1
    $region12: #{medsam_forward.144} parent=5 // pred_fallthru
      _
    %p128 = scmp.lt.s32.totalorder %s9, 4
    // Predicated region
    $region13: #{medsam_forward.144} parent=5 // pred_check
      %p129 = pneg %p128
    $region14: #{medsam_forward.144} parent=5 // pred_check_branch
      %131 = sbr.rel (%p129) target = $region16
    $region15: #{medsam_forward.144} parent=5 // pred_region
      // Predicated region
      $region17: #{medsam_forward.144} parent=15 // pred_check
        %p132 = pneg %p29
      $region18: #{medsam_forward.144} parent=15 // pred_check_branch
        %134 = sbr.rel (%p132) target = $region20
      $region19: #{medsam_forward.144} parent=15 // pred_region
        %p135 = scmp.lt.s32.totalorder %s9, 3
        %s136 = scalar_select %p135, %s9, 3
        %s137 = scalar_lea.vmem %s0, %s136
      $region20: #{medsam_forward.144} parent=15 // pred_fallthru
        _
      // Predicated region
      $region21: #{medsam_forward.144} parent=15 // pred_check
        %p138 = pneg %p55
      $region22: #{medsam_forward.144} parent=15 // pred_check_branch
        %140 = sbr.rel (%p138) target = $region24
      $region23: #{medsam_forward.144} parent=15 // pred_region
        %p141 = scmp.lt.s32.totalorder %s9, 3
        %s142 = scalar_select %p141, %s9, 3
        %s143 = smul.addr %s142, 4
        %s144 = smul.addr %s143, 4
        %s145 = scalar_lea.vmem %s1, %s144
      $region24: #{medsam_forward.144} parent=15 // pred_fallthru
        _
      // Predicated region
      $region25: #{medsam_forward.144} parent=15 // pred_check
        %p146 = pneg %p81
      $region26: #{medsam_forward.144} parent=15 // pred_check_branch
        %148 = sbr.rel (%p146) target = $region28
      $region27: #{medsam_forward.144} parent=15 // pred_region
        %p149 = scmp.lt.s32.totalorder %s9, 3
        %s150 = scalar_select %p149, %s9, 3
        %s151 = scalar_lea.vmem %s2, %s150
      $region28: #{medsam_forward.144} parent=15 // pred_fallthru
        _
    $region16: #{medsam_forward.144} parent=5 // pred_fallthru
      _
    %p152 = scmp.le.s32.totalorder 1, %s9
    %p153 = scmp.lt.s32.totalorder %s9, 5
    %p154 = pnand %p152, %p153
    %p155 = pneg %p154
    // Predicated region
    $region29: #{medsam_forward.144} parent=5 // pred_check
      _
    $region30: #{medsam_forward.144} parent=5 // pred_check_branch
      %157 = sbr.rel (%p154) target = $region32
    $region31: #{medsam_forward.144} parent=5 // pred_region
      %s158 = ssub.s32 %s9, 1
      %p159 = scmp.lt.s32.totalorder %s14, 3
      %s160 = scalar_select %p159, %s14, 3
      %s161 = scalar_lea.vmem %s0, %s160
      %p162 = pneg %p35
      %p163 = pneg %p32
      %p164 = scmp.lt.s32.totalorder %s14, 3
      %s165 = scalar_select %p164, %s14, 3
      %s166 = smul.addr %s165, 4
      %s167 = smul.addr %s166, 4
      %s168 = scalar_lea.vmem %s1, %s167
      %p169 = pneg %p61
      %p170 = pneg %p58
      %p171 = scmp.lt.s32.totalorder %s14, 3
      %s172 = scalar_select %p171, %s14, 3
      %s173 = scalar_lea.vmem %s2, %s172
      %p174 = pneg %p87
      %p175 = pneg %p84
      %p176 = pneg %p113
      %p177 = pneg %p110
      %p178 = scmp.lt.s32.totalorder %s14, 3
      %s179 = scalar_select %p178, %s14, 3
      %s180 = smul.addr %s179, 2
      %s181 = scalar_lea.vmem %s3, %s180
      %p182 = scmp.lt.s32.totalorder %s14, 3
      %s183 = scalar_select %p182, %s14, 3
      %s184 = scalar_lea.vmem %s0, %s183
      %p185 = scmp.lt.s32.totalorder %s14, 3
      %s186 = scalar_select %p185, %s14, 3
      %s187 = smul.addr %s186, 4
      %s188 = smul.addr %s187, 4
      %s189 = scalar_lea.vmem %s1, %s188
      %p190 = scmp.lt.s32.totalorder %s14, 3
      %s191 = scalar_select %p190, %s14, 3
      %s192 = scalar_lea.vmem %s2, %s191
      %p193 = scmp.lt.s32.totalorder %s14, 3
      %s194 = scalar_select %p193, %s14, 3
      %s195 = smul.addr %s194, 2
      %s196 = scalar_lea.vmem %s3, %s195
      %v198 = vld [vmem:[%s184] sm:$0x1]
      %v199 = vld [vmem:[%s189] sm:$0xf]
      %v200 = vld [vmem:[%s189 + $0x4] sm:$0xf]
      %v201 = vld [vmem:[%s189 + $0x8] sm:$0xf]
      %v202 = vld [vmem:[%s189 + $0xc] sm:$0xf]
      %v203 = vld [vmem:[%s192] sm:$0x1]
      %v205 = vlaneseq
      %v206 = vshrl.u32 %v205, 7
      %v207 = vsub.s32 0, %v206
      %v208 = vrot.slane %v203, %v207
      %v214 = vunpack.c.l.b16 %v199
      %v215 = vunpack.c.l.b16 %v200
      %v216 = vunpack.c.l.b16 %v201
      %v217 = vunpack.c.l.b16 %v202
      %v218 = vpack.c.b16 %v215, %v214
      %v219 = vpack.c.b16 %v217, %v216
      %vm220 = vcmask 261120
      %v222 = vsel %vm220, %v198, 0
      %v225 = vsel %vm220, %v218, 0
      %v228 = vsel %vm220, %v219, 0
      %230 = vmatprep.subr.bf16.mxu0 0
      %231 = vmatpush1.bf16.xpose.msra.mxu0 0
      %232 = vmatprep.subr.bf16.mxu0 0
      %233 = vmatpush1.bf16.xpose.msra.mxu0 0
      %234 = vmatprep.subr.bf16.mxu0 0
      %235 = vmatpush1.bf16.xpose.msra.mxu0 0
      %236 = vmatprep.subr.bf16.mxu0 0
      %237 = vmatpush1.bf16.xpose.msra.mxu0 0
      %238 = vmatprep.subr.bf16.mxu0 0
      %239 = vmatpush1.bf16.xpose.msra.mxu0 0
      %240 = vmatprep.subr.bf16.mxu0 0
      %241 = vmatpush1.bf16.xpose.msra.mxu0 0
      %242 = vmatprep.subr.bf16.mxu0 0
      %243 = vmatpush1.bf16.xpose.msra.mxu0 %v228
      %244 = vmatprep.subr.bf16.mxu0 0
      %245 = vmatpush1.bf16.xpose.msra.mxu0 %v225
      %246 = vmatprep.subr.bf16.mxu0 0
      %247 = vmatpush2.bf16.xpose.msra.mxu0 0
      %248 = vmatprep.subr.bf16.mxu0 0
      %249 = vmatpush2.bf16.xpose.msra.mxu0 0
      %250 = vmatprep.subr.bf16.mxu0 0
      %251 = vmatpush2.bf16.xpose.msra.mxu0 0
      %252 = vmatprep.subr.bf16.mxu0 0
      %253 = vmatpush2.bf16.xpose.msra.mxu0 0
      %254 = vmatprep.subr.bf16.mxu0 0
      %255 = vmatpush2.bf16.xpose.msra.mxu0 0
      %256 = vmatprep.subr.bf16.mxu0 0
      %257 = vmatpush2.bf16.xpose.msra.mxu0 0
      %258 = vmatprep.subr.bf16.mxu0 0
      %259 = vmatpush2.bf16.xpose.msra.mxu0 0
      %260 = vmatprep.subr.bf16.mxu0 0
      %261 = vmatpush2.bf16.xpose.msra.mxu0 0
      %262 = vmatprep.mubr.bf16.mxu0 0
      %263 = vmatmul.mubr.bf16.gmra.mxu0 %v222
      %v264 = vpop.f32.mrf.mxu0
      %v265 = vadd.f32 %v208, %v264
      %v266 = vpop.f32.mrf.mxu0
      %v267 = vpop.f32.mrf.mxu0
      %v268 = vpop.f32.mrf.mxu0
      %269 = vdwg.mxu0
      %v270 = vmax.f32 %v265, 0.0
      %vm271 = vcmask 254976
      %272 = vst.msk [vmem:[%s196] sm:$0x3] %vm271, %v270
      %p273 = scmp.lt.s32.totalorder %s14, 3
      %s274 = scalar_select %p273, %s14, 3
      %s275 = smul.addr %s274, 2
      %s276 = scalar_lea.vmem %s3, %s275
      // Predicated region
      $region33: #{medsam_forward.144} parent=31 // pred_check
        %p277 = pneg %p110
      $region34: #{medsam_forward.144} parent=31 // pred_check_branch
        %279 = sbr.rel (%p277) target = $region36
      $region35: #{medsam_forward.144} parent=31 // pred_region
        _
      $region36: #{medsam_forward.144} parent=31 // pred_fallthru
        _
    $region32: #{medsam_forward.144} parent=5 // pred_fallthru
      _
    %p280 = scmp.le.s32.totalorder 2, %s9
    // Predicated region
    $region37: #{medsam_forward.144} parent=5 // pred_check
      %p281 = pneg %p280
    $region38: #{medsam_forward.144} parent=5 // pred_check_branch
      %283 = sbr.rel (%p281) target = $region40
    $region39: #{medsam_forward.144} parent=5 // pred_region
      %s284 = ssub.s32 %s9, 2
      // Predicated region
      $region41: #{medsam_forward.144} parent=39 // pred_check
        %p285 = pneg %p116
      $region42: #{medsam_forward.144} parent=39 // pred_check_branch
        %287 = sbr.rel (%p285) target = $region44
      $region43: #{medsam_forward.144} parent=39 // pred_region
        %p288 = scmp.lt.s32.totalorder %s15, 3
        %s289 = scalar_select %p288, %s15, 3
        %s290 = smul.addr %s289, 2
        %s291 = scalar_lea.vmem %s3, %s290
      $region44: #{medsam_forward.144} parent=39 // pred_fallthru
        _
    $region40: #{medsam_forward.144} parent=5 // pred_fallthru
      _
  $region6: #{medsam_forward.144} parent=0 // loop_footer
    %s13 = sadd.s32 1, %s9
  $region7: #{medsam_forward.144} parent=0 // loop_footer_branch
    %8 = sbr.rel target = $region3
  $region8: #{medsam_forward.144} parent=0 // loop_exit
    _

// kernel: medsam_forward.146
$region0: #{medsam_forward.146}
  #allocation0 [shape = 'u32[]', space=smem, size = 0x4, offset = 0x4, fixed_abs, tag = 'smem constant byte address 0x4 - core index']
  #allocation1 [shape = 'u32[144,128]{1,0:T(1,128)}', space=vmem, size = 0x12000, scoped, tag = 'internal scratch']
  %s0 = inlined_call_operand.vmem [shape: bf16[4,2,32], index: 0, kind: input, shape index: {}]
  %s1 = inlined_call_operand.vmem [shape: bf16[4,4,32], index: 1, kind: input, shape index: {}]
  %s2 = inlined_call_operand.vmem [shape: f32[4,1,4], index: 2, kind: input, shape index: {}]
  %s3 = inlined_call_operand.vmem [shape: f32[4,2,4], index: 3, kind: output, shape index: {}]
  %s4 = sld [smem:[#allocation0]]
  $region45: #{medsam_forward.146} parent=0
    _
  %s6 = ssub.s32 1, %s4
  %s7 = scalar_select 0, %s6, %s4
  loop: start=0, step=1, limit=6
  $region2: #{medsam_forward.146} parent=0 // loop_pre_header
    _
  $region3: #{medsam_forward.146} parent=0 // loop_header
    %s9 = sphi 0, %s13
    %p10 = scmp.ge.s32.totalorder %s9, 6
    %s19 = sphi 0, %s21
    %s22 = sphi 0, %s19
    %s23 = sphi 0, %s22
    %s39 = sphi 0, %s23
    %s45 = sphi 0, %s47
    %s48 = sphi 0, %s45
    %s49 = sphi 0, %s48
    %s65 = sphi 0, %s49
    %s71 = sphi 0, %s73
    %s74 = sphi 0, %s71
    %s75 = sphi 0, %s74
    %s91 = sphi 0, %s75
    %s97 = sphi 0, %s99
    %s100 = sphi 0, %s97
    %s101 = sphi 0, %s100
    %s117 = sphi 0, %s101
  $region4: #{medsam_forward.146} parent=0 // loop_header_branch
    %12 = sbr.rel (%p10) target = $region8
  $region5: #{medsam_forward.146} parent=0 // loop_body
    %s14 = ssub.s32 %s9, 1
    %s15 = ssub.s32 %s9, 2
    %s16 = sadd.s32 %s9, 1
    %s17 = ssub.s32 %s9, %s16
    %p18 = scmp.eq.s32.totalorder %s17, 0
    %s20 = sadd.s32 %s19, 1
    %s21 = scalar_select %p18, %s19, %s20
    %p24 = pneg %p18
    %p25 = scmp.eq.s32.totalorder %s9, 3
    %p26 = por %p24, %p25
    %p27 = scmp.ne.s32.totalorder %s19, %s22
    %p28 = scmp.eq.s32.totalorder %s9, 0
    %p29 = por %p27, %p28
    %p30 = scmp.ne.s32.totalorder %s19, %s22
    %p31 = scmp.eq.s32.totalorder %s14, 3
    %p32 = por %p30, %p31
    %p33 = scmp.ne.s32.totalorder %s22, %s23
    %p34 = scmp.eq.s32.totalorder %s14, 0
    %p35 = por %p33, %p34
    %p36 = scmp.ne.s32.totalorder %s22, %s23
    %p37 = scmp.eq.s32.totalorder %s15, 3
    %p38 = por %p36, %p37
    %p40 = scmp.ne.s32.totalorder %s23, %s39
    %p41 = scmp.eq.s32.totalorder %s15, 0
    %p42 = por %p40, %p41
    %s43 = ssub.s32 %s9, %s16
    %p44 = scmp.eq.s32.totalorder %s43, 0
    %s46 = sadd.s32 %s45, 1
    %s47 = scalar_select %p44, %s45, %s46
    %p50 = pneg %p44
    %p51 = scmp.eq.s32.totalorder %s9, 3
    %p52 = por %p50, %p51
    %p53 = scmp.ne.s32.totalorder %s45, %s48
    %p54 = scmp.eq.s32.totalorder %s9, 0
    %p55 = por %p53, %p54
    %p56 = scmp.ne.s32.totalorder %s45, %s48
    %p57 = scmp.eq.s32.totalorder %s14, 3
    %p58 = por %p56, %p57
    %p59 = scmp.ne.s32.totalorder %s48, %s49
    %p60 = scmp.eq.s32.totalorder %s14, 0
    %p61 = por %p59, %p60
    %p62 = scmp.ne.s32.totalorder %s48, %s49
    %p63 = scmp.eq.s32.totalorder %s15, 3
    %p64 = por %p62, %p63
    %p66 = scmp.ne.s32.totalorder %s49, %s65
    %p67 = scmp.eq.s32.totalorder %s15, 0
    %p68 = por %p66, %p67
    %s69 = ssub.s32 %s9, %s16
    %p70 = scmp.eq.s32.totalorder %s69, 0
    %s72 = sadd.s32 %s71, 1
    %s73 = scalar_select %p70, %s71, %s72
    %p76 = pneg %p70
    %p77 = scmp.eq.s32.totalorder %s9, 3
    %p78 = por %p76, %p77
    %p79 = scmp.ne.s32.totalorder %s71, %s74
    %p80 = scmp.eq.s32.totalorder %s9, 0
    %p81 = por %p79, %p80
    %p82 = scmp.ne.s32.totalorder %s71, %s74
    %p83 = scmp.eq.s32.totalorder %s14, 3
    %p84 = por %p82, %p83
    %p85 = scmp.ne.s32.totalorder %s74, %s75
    %p86 = scmp.eq.s32.totalorder %s14, 0
    %p87 = por %p85, %p86
    %p88 = scmp.ne.s32.totalorder %s74, %s75
    %p89 = scmp.eq.s32.totalorder %s15, 3
    %p90 = por %p88, %p89
    %p92 = scmp.ne.s32.totalorder %s75, %s91
    %p93 = scmp.eq.s32.totalorder %s15, 0
    %p94 = por %p92, %p93
    %s95 = ssub.s32 %s9, %s16
    %p96 = scmp.eq.s32.totalorder %s95, 0
    %s98 = sadd.s32 %s97, 1
    %s99 = scalar_select %p96, %s97, %s98
    %p102 = pneg %p96
    %p103 = scmp.eq.s32.totalorder %s9, 3
    %p104 = por %p102, %p103
    %p105 = scmp.ne.s32.totalorder %s97, %s100
    %p106 = scmp.eq.s32.totalorder %s9, 0
    %p107 = por %p105, %p106
    %p108 = scmp.ne.s32.totalorder %s97, %s100
    %p109 = scmp.eq.s32.totalorder %s14, 3
    %p110 = por %p108, %p109
    %p111 = scmp.ne.s32.totalorder %s100, %s101
    %p112 = scmp.eq.s32.totalorder %s14, 0
    %p113 = por %p111, %p112
    %p114 = scmp.ne.s32.totalorder %s100, %s101
    %p115 = scmp.eq.s32.totalorder %s15, 3
    %p116 = por %p114, %p115
    %p118 = scmp.ne.s32.totalorder %s101, %s117
    %p119 = scmp.eq.s32.totalorder %s15, 0
    %p120 = por %p118, %p119
    %p121 = scmp.le.s32.totalorder 1, %s9
    %p122 = scmp.lt.s32.totalorder %s9, 5
    %p123 = pnand %p121, %p122
    %p124 = pneg %p123
    // Predicated region
    $region9: #{medsam_forward.146} parent=5 // pred_check
      _
    $region10: #{medsam_forward.146} parent=5 // pred_check_branch
      %126 = sbr.rel (%p123) target = $region12
    $region11: #{medsam_forward.146} parent=5 // pred_region
      %s127 = ssub.s32 %s9, 1
    $region12: #{medsam_forward.146} parent=5 // pred_fallthru
      _
    %p128 = scmp.lt.s32.totalorder %s9, 4
    // Predicated region
    $region13: #{medsam_forward.146} parent=5 // pred_check
      %p129 = pneg %p128
    $region14: #{medsam_forward.146} parent=5 // pred_check_branch
      %131 = sbr.rel (%p129) target = $region16
    $region15: #{medsam_forward.146} parent=5 // pred_region
      // Predicated region
      $region17: #{medsam_forward.146} parent=15 // pred_check
        %p132 = pneg %p29
      $region18: #{medsam_forward.146} parent=15 // pred_check_branch
        %134 = sbr.rel (%p132) target = $region20
      $region19: #{medsam_forward.146} parent=15 // pred_region
        %p135 = scmp.lt.s32.totalorder %s9, 3
        %s136 = scalar_select %p135, %s9, 3
        %s137 = scalar_lea.vmem %s0, %s136
      $region20: #{medsam_forward.146} parent=15 // pred_fallthru
        _
      // Predicated region
      $region21: #{medsam_forward.146} parent=15 // pred_check
        %p138 = pneg %p55
      $region22: #{medsam_forward.146} parent=15 // pred_check_branch
        %140 = sbr.rel (%p138) target = $region24
      $region23: #{medsam_forward.146} parent=15 // pred_region
        %p141 = scmp.lt.s32.totalorder %s9, 3
        %s142 = scalar_select %p141, %s9, 3
        %s143 = smul.addr %s142, 2
        %s144 = scalar_lea.vmem %s1, %s143
      $region24: #{medsam_forward.146} parent=15 // pred_fallthru
        _
      // Predicated region
      $region25: #{medsam_forward.146} parent=15 // pred_check
        %p145 = pneg %p81
      $region26: #{medsam_forward.146} parent=15 // pred_check_branch
        %147 = sbr.rel (%p145) target = $region28
      $region27: #{medsam_forward.146} parent=15 // pred_region
        %p148 = scmp.lt.s32.totalorder %s9, 3
        %s149 = scalar_select %p148, %s9, 3
        %s150 = scalar_lea.vmem %s2, %s149
      $region28: #{medsam_forward.146} parent=15 // pred_fallthru
        _
    $region16: #{medsam_forward.146} parent=5 // pred_fallthru
      _
    %p151 = scmp.le.s32.totalorder 1, %s9
    %p152 = scmp.lt.s32.totalorder %s9, 5
    %p153 = pnand %p151, %p152
    %p154 = pneg %p153
    // Predicated region
    $region29: #{medsam_forward.146} parent=5 // pred_check
      _
    $region30: #{medsam_forward.146} parent=5 // pred_check_branch
      %156 = sbr.rel (%p153) target = $region32
    $region31: #{medsam_forward.146} parent=5 // pred_region
      %s157 = ssub.s32 %s9, 1
      %p158 = scmp.lt.s32.totalorder %s14, 3
      %s159 = scalar_select %p158, %s14, 3
      %s160 = scalar_lea.vmem %s0, %s159
      %p161 = pneg %p35
      %p162 = pneg %p32
      %p163 = scmp.lt.s32.totalorder %s14, 3
      %s164 = scalar_select %p163, %s14, 3
      %s165 = smul.addr %s164, 2
      %s166 = scalar_lea.vmem %s1, %s165
      %p167 = pneg %p61
      %p168 = pneg %p58
      %p169 = scmp.lt.s32.totalorder %s14, 3
      %s170 = scalar_select %p169, %s14, 3
      %s171 = scalar_lea.vmem %s2, %s170
      %p172 = pneg %p87
      %p173 = pneg %p84
      %p174 = pneg %p113
      %p175 = pneg %p110
      %p176 = scmp.lt.s32.totalorder %s14, 3
      %s177 = scalar_select %p176, %s14, 3
      %s178 = smul.addr %s177, 2
      %s179 = scalar_lea.vmem %s3, %s178
      %p180 = scmp.lt.s32.totalorder %s14, 3
      %s181 = scalar_select %p180, %s14, 3
      %s182 = scalar_lea.vmem %s0, %s181
      %p183 = scmp.lt.s32.totalorder %s14, 3
      %s184 = scalar_select %p183, %s14, 3
      %s185 = smul.addr %s184, 2
      %s186 = scalar_lea.vmem %s1, %s185
      %p187 = scmp.lt.s32.totalorder %s14, 3
      %s188 = scalar_select %p187, %s14, 3
      %s189 = scalar_lea.vmem %s2, %s188
      %p190 = scmp.lt.s32.totalorder %s14, 3
      %s191 = scalar_select %p190, %s14, 3
      %s192 = smul.addr %s191, 2
      %s193 = scalar_lea.vmem %s3, %s192
      %v195 = vld [vmem:[%s182] sm:$0x1]
      %v196 = vld [vmem:[%s186] sm:$0x3]
      %v197 = vld [vmem:[%s189] sm:$0x1]
      %v199 = vlaneseq
      %v200 = vshrl.u32 %v199, 7
      %v201 = vsub.s32 0, %v200
      %v202 = vrot.slane %v197, %v201
      %vm204 = vcmask 261120
      %v206 = vsel %vm204, %v195, 0
      %v209 = vsel %vm204, %v196, 0
      %211 = vmatprep.subr.bf16.mxu0 0
      %212 = vmatpush1.bf16.xpose.msra.mxu0 0
      %213 = vmatprep.subr.bf16.mxu0 0
      %214 = vmatpush1.bf16.xpose.msra.mxu0 0
      %215 = vmatprep.subr.bf16.mxu0 0
      %216 = vmatpush1.bf16.xpose.msra.mxu0 0
      %217 = vmatprep.subr.bf16.mxu0 0
      %218 = vmatpush1.bf16.xpose.msra.mxu0 0
      %219 = vmatprep.subr.bf16.mxu0 0
      %220 = vmatpush1.bf16.xpose.msra.mxu0 0
      %221 = vmatprep.subr.bf16.mxu0 0
      %222 = vmatpush1.bf16.xpose.msra.mxu0 0
      %223 = vmatprep.subr.bf16.mxu0 0
      %224 = vmatpush1.bf16.xpose.msra.mxu0 0
      %225 = vmatprep.subr.bf16.mxu0 0
      %226 = vmatpush1.bf16.xpose.msra.mxu0 %v209
      %227 = vmatprep.subr.bf16.mxu0 0
      %228 = vmatpush2.bf16.xpose.msra.mxu0 0
      %229 = vmatprep.subr.bf16.mxu0 0
      %230 = vmatpush2.bf16.xpose.msra.mxu0 0
      %231 = vmatprep.subr.bf16.mxu0 0
      %232 = vmatpush2.bf16.xpose.msra.mxu0 0
      %233 = vmatprep.subr.bf16.mxu0 0
      %234 = vmatpush2.bf16.xpose.msra.mxu0 0
      %235 = vmatprep.subr.bf16.mxu0 0
      %236 = vmatpush2.bf16.xpose.msra.mxu0 0
      %237 = vmatprep.subr.bf16.mxu0 0
      %238 = vmatpush2.bf16.xpose.msra.mxu0 0
      %239 = vmatprep.subr.bf16.mxu0 0
      %240 = vmatpush2.bf16.xpose.msra.mxu0 0
      %241 = vmatprep.subr.bf16.mxu0 0
      %242 = vmatpush2.bf16.xpose.msra.mxu0 0
      %243 = vmatprep.mubr.bf16.mxu0 0
      %244 = vmatmul.mubr.bf16.gmra.mxu0 %v206
      %v245 = vpop.f32.mrf.mxu0
      %v246 = vadd.f32 %v202, %v245
      %v247 = vpop.f32.mrf.mxu0
      %v248 = vpop.f32.mrf.mxu0
      %v249 = vpop.f32.mrf.mxu0
      %250 = vdwg.mxu0
      %vm251 = vcmask 25600
      %252 = vst.msk [vmem:[%s193] sm:$0x3] %vm251, %v246
      %p253 = scmp.lt.s32.totalorder %s14, 3
      %s254 = scalar_select %p253, %s14, 3
      %s255 = smul.addr %s254, 2
      %s256 = scalar_lea.vmem %s3, %s255
      // Predicated region
      $region33: #{medsam_forward.146} parent=31 // pred_check
        %p257 = pneg %p110
      $region34: #{medsam_forward.146} parent=31 // pred_check_branch
        %259 = sbr.rel (%p257) target = $region36
      $region35: #{medsam_forward.146} parent=31 // pred_region
        _
      $region36: #{medsam_forward.146} parent=31 // pred_fallthru
        _
    $region32: #{medsam_forward.146} parent=5 // pred_fallthru
      _
    %p260 = scmp.le.s32.totalorder 2, %s9
    // Predicated region
    $region37: #{medsam_forward.146} parent=5 // pred_check
      %p261 = pneg %p260
    $region38: #{medsam_forward.146} parent=5 // pred_check_branch
      %263 = sbr.rel (%p261) target = $region40
    $region39: #{medsam_forward.146} parent=5 // pred_region
      %s264 = ssub.s32 %s9, 2
      // Predicated region
      $region41: #{medsam_forward.146} parent=39 // pred_check
        %p265 = pneg %p116
      $region42: #{medsam_forward.146} parent=39 // pred_check_branch
        %267 = sbr.rel (%p265) target = $region44
      $region43: #{medsam_forward.146} parent=39 // pred_region
        %p268 = scmp.lt.s32.totalorder %s15, 3
        %s269 = scalar_select %p268, %s15, 3
        %s270 = smul.addr %s269, 2
        %s271 = scalar_lea.vmem %s3, %s270
      $region44: #{medsam_forward.146} parent=39 // pred_fallthru
        _
    $region40: #{medsam_forward.146} parent=5 // pred_fallthru
      _
  $region6: #{medsam_forward.146} parent=0 // loop_footer
    %s13 = sadd.s32 1, %s9
  $region7: #{medsam_forward.146} parent=0 // loop_footer_branch
    %8 = sbr.rel target = $region3
  $region8: #{medsam_forward.146} parent=0 // loop_exit
    _

// kernel: medsam_forward.147
$region0: #{medsam_forward.147}
  #allocation0 [shape = 'u32[]', space=smem, size = 0x4, offset = 0x4, fixed_abs, tag = 'smem constant byte address 0x4 - core index']
  #allocation1 [shape = 'u32[144,128]{1,0:T(1,128)}', space=vmem, size = 0x12000, scoped, tag = 'internal scratch']
  %s0 = inlined_call_operand.vmem [shape: bf16[2,4,4], index: 0, kind: input, shape index: {}]
  %s1 = inlined_call_operand.vmem [shape: bf16[2,256,4], index: 1, kind: input, shape index: {}]
  %s2 = inlined_call_operand.vmem [shape: f32[2,1,256], index: 2, kind: input, shape index: {}]
  %s3 = inlined_call_operand.vmem [shape: f32[2,4,256], index: 3, kind: output, shape index: {}]
  %s4 = sld [smem:[#allocation0]]
  $region45: #{medsam_forward.147} parent=0
    _
  %s6 = ssub.s32 1, %s4
  %s7 = scalar_select 0, %s6, %s4
  loop: start=0, step=1, limit=4
  $region2: #{medsam_forward.147} parent=0 // loop_pre_header
    _
  $region3: #{medsam_forward.147} parent=0 // loop_header
    %s9 = sphi 0, %s13
    %p10 = scmp.ge.s32.totalorder %s9, 4
    %s19 = sphi 0, %s21
    %s22 = sphi 0, %s19
    %s23 = sphi 0, %s22
    %s39 = sphi 0, %s23
    %s45 = sphi 0, %s47
    %s48 = sphi 0, %s45
    %s49 = sphi 0, %s48
    %s65 = sphi 0, %s49
    %s71 = sphi 0, %s73
    %s74 = sphi 0, %s71
    %s75 = sphi 0, %s74
    %s91 = sphi 0, %s75
    %s97 = sphi 0, %s99
    %s100 = sphi 0, %s97
    %s101 = sphi 0, %s100
    %s117 = sphi 0, %s101
  $region4: #{medsam_forward.147} parent=0 // loop_header_branch
    %12 = sbr.rel (%p10) target = $region8
  $region5: #{medsam_forward.147} parent=0 // loop_body
    %s14 = ssub.s32 %s9, 1
    %s15 = ssub.s32 %s9, 2
    %s16 = sadd.s32 %s9, 1
    %s17 = ssub.s32 %s9, %s16
    %p18 = scmp.eq.s32.totalorder %s17, 0
    %s20 = sadd.s32 %s19, 1
    %s21 = scalar_select %p18, %s19, %s20
    %p24 = pneg %p18
    %p25 = scmp.eq.s32.totalorder %s9, 1
    %p26 = por %p24, %p25
    %p27 = scmp.ne.s32.totalorder %s19, %s22
    %p28 = scmp.eq.s32.totalorder %s9, 0
    %p29 = por %p27, %p28
    %p30 = scmp.ne.s32.totalorder %s19, %s22
    %p31 = scmp.eq.s32.totalorder %s14, 1
    %p32 = por %p30, %p31
    %p33 = scmp.ne.s32.totalorder %s22, %s23
    %p34 = scmp.eq.s32.totalorder %s14, 0
    %p35 = por %p33, %p34
    %p36 = scmp.ne.s32.totalorder %s22, %s23
    %p37 = scmp.eq.s32.totalorder %s15, 1
    %p38 = por %p36, %p37
    %p40 = scmp.ne.s32.totalorder %s23, %s39
    %p41 = scmp.eq.s32.totalorder %s15, 0
    %p42 = por %p40, %p41
    %s43 = ssub.s32 %s9, %s16
    %p44 = scmp.eq.s32.totalorder %s43, 0
    %s46 = sadd.s32 %s45, 1
    %s47 = scalar_select %p44, %s45, %s46
    %p50 = pneg %p44
    %p51 = scmp.eq.s32.totalorder %s9, 1
    %p52 = por %p50, %p51
    %p53 = scmp.ne.s32.totalorder %s45, %s48
    %p54 = scmp.eq.s32.totalorder %s9, 0
    %p55 = por %p53, %p54
    %p56 = scmp.ne.s32.totalorder %s45, %s48
    %p57 = scmp.eq.s32.totalorder %s14, 1
    %p58 = por %p56, %p57
    %p59 = scmp.ne.s32.totalorder %s48, %s49
    %p60 = scmp.eq.s32.totalorder %s14, 0
    %p61 = por %p59, %p60
    %p62 = scmp.ne.s32.totalorder %s48, %s49
    %p63 = scmp.eq.s32.totalorder %s15, 1
    %p64 = por %p62, %p63
    %p66 = scmp.ne.s32.totalorder %s49, %s65
    %p67 = scmp.eq.s32.totalorder %s15, 0
    %p68 = por %p66, %p67
    %s69 = ssub.s32 %s9, %s16
    %p70 = scmp.eq.s32.totalorder %s69, 0
    %s72 = sadd.s32 %s71, 1
    %s73 = scalar_select %p70, %s71, %s72
    %p76 = pneg %p70
    %p77 = scmp.eq.s32.totalorder %s9, 1
    %p78 = por %p76, %p77
    %p79 = scmp.ne.s32.totalorder %s71, %s74
    %p80 = scmp.eq.s32.totalorder %s9, 0
    %p81 = por %p79, %p80
    %p82 = scmp.ne.s32.totalorder %s71, %s74
    %p83 = scmp.eq.s32.totalorder %s14, 1
    %p84 = por %p82, %p83
    %p85 = scmp.ne.s32.totalorder %s74, %s75
    %p86 = scmp.eq.s32.totalorder %s14, 0
    %p87 = por %p85, %p86
    %p88 = scmp.ne.s32.totalorder %s74, %s75
    %p89 = scmp.eq.s32.totalorder %s15, 1
    %p90 = por %p88, %p89
    %p92 = scmp.ne.s32.totalorder %s75, %s91
    %p93 = scmp.eq.s32.totalorder %s15, 0
    %p94 = por %p92, %p93
    %s95 = ssub.s32 %s9, %s16
    %p96 = scmp.eq.s32.totalorder %s95, 0
    %s98 = sadd.s32 %s97, 1
    %s99 = scalar_select %p96, %s97, %s98
    %p102 = pneg %p96
    %p103 = scmp.eq.s32.totalorder %s9, 1
    %p104 = por %p102, %p103
    %p105 = scmp.ne.s32.totalorder %s97, %s100
    %p106 = scmp.eq.s32.totalorder %s9, 0
    %p107 = por %p105, %p106
    %p108 = scmp.ne.s32.totalorder %s97, %s100
    %p109 = scmp.eq.s32.totalorder %s14, 1
    %p110 = por %p108, %p109
    %p111 = scmp.ne.s32.totalorder %s100, %s101
    %p112 = scmp.eq.s32.totalorder %s14, 0
    %p113 = por %p111, %p112
    %p114 = scmp.ne.s32.totalorder %s100, %s101
    %p115 = scmp.eq.s32.totalorder %s15, 1
    %p116 = por %p114, %p115
    %p118 = scmp.ne.s32.totalorder %s101, %s117
    %p119 = scmp.eq.s32.totalorder %s15, 0
    %p120 = por %p118, %p119
    %p121 = scmp.le.s32.totalorder 1, %s9
    %p122 = scmp.lt.s32.totalorder %s9, 3
    %p123 = pnand %p121, %p122
    %p124 = pneg %p123
    // Predicated region
    $region9: #{medsam_forward.147} parent=5 // pred_check
      _
    $region10: #{medsam_forward.147} parent=5 // pred_check_branch
      %126 = sbr.rel (%p123) target = $region12
    $region11: #{medsam_forward.147} parent=5 // pred_region
      %s127 = ssub.s32 %s9, 1
    $region12: #{medsam_forward.147} parent=5 // pred_fallthru
      _
    %p128 = scmp.lt.s32.totalorder %s9, 2
    // Predicated region
    $region13: #{medsam_forward.147} parent=5 // pred_check
      %p129 = pneg %p128
    $region14: #{medsam_forward.147} parent=5 // pred_check_branch
      %131 = sbr.rel (%p129) target = $region16
    $region15: #{medsam_forward.147} parent=5 // pred_region
      // Predicated region
      $region17: #{medsam_forward.147} parent=15 // pred_check
        %p132 = pneg %p29
      $region18: #{medsam_forward.147} parent=15 // pred_check_branch
        %134 = sbr.rel (%p132) target = $region20
      $region19: #{medsam_forward.147} parent=15 // pred_region
        %p135 = scmp.lt.s32.totalorder %s9, 1
        %s136 = scalar_select %p135, %s9, 1
        %s137 = smul.addr %s136, 2
        %s138 = scalar_lea.vmem %s0, %s137
      $region20: #{medsam_forward.147} parent=15 // pred_fallthru
        _
      // Predicated region
      $region21: #{medsam_forward.147} parent=15 // pred_check
        %p139 = pneg %p55
      $region22: #{medsam_forward.147} parent=15 // pred_check_branch
        %141 = sbr.rel (%p139) target = $region24
      $region23: #{medsam_forward.147} parent=15 // pred_region
        %p142 = scmp.lt.s32.totalorder %s9, 1
        %s143 = scalar_select %p142, %s9, 1
        %s144 = smul.addr %s143, 32
        %s145 = smul.addr %s144, 4
        %s146 = scalar_lea.vmem %s1, %s145
      $region24: #{medsam_forward.147} parent=15 // pred_fallthru
        _
      // Predicated region
      $region25: #{medsam_forward.147} parent=15 // pred_check
        %p147 = pneg %p81
      $region26: #{medsam_forward.147} parent=15 // pred_check_branch
        %149 = sbr.rel (%p147) target = $region28
      $region27: #{medsam_forward.147} parent=15 // pred_region
        %p150 = scmp.lt.s32.totalorder %s9, 1
        %s151 = scalar_select %p150, %s9, 1
        %s152 = smul.addr %s151, 2
        %s153 = scalar_lea.vmem %s2, %s152
      $region28: #{medsam_forward.147} parent=15 // pred_fallthru
        _
    $region16: #{medsam_forward.147} parent=5 // pred_fallthru
      _
    %p154 = scmp.le.s32.totalorder 1, %s9
    %p155 = scmp.lt.s32.totalorder %s9, 3
    %p156 = pnand %p154, %p155
    %p157 = pneg %p156
    // Predicated region
    $region29: #{medsam_forward.147} parent=5 // pred_check
      _
    $region30: #{medsam_forward.147} parent=5 // pred_check_branch
      %159 = sbr.rel (%p156) target = $region32
    $region31: #{medsam_forward.147} parent=5 // pred_region
      %s160 = ssub.s32 %s9, 1
      %p161 = scmp.lt.s32.totalorder %s14, 1
      %s162 = scalar_select %p161, %s14, 1
      %s163 = smul.addr %s162, 2
      %s164 = scalar_lea.vmem %s0, %s163
      %p165 = pneg %p35
      %p166 = pneg %p32
      %p167 = scmp.lt.s32.totalorder %s14, 1
      %s168 = scalar_select %p167, %s14, 1
      %s169 = smul.addr %s168, 32
      %s170 = smul.addr %s169, 4
      %s171 = scalar_lea.vmem %s1, %s170
      %p172 = pneg %p61
      %p173 = pneg %p58
      %p174 = scmp.lt.s32.totalorder %s14, 1
      %s175 = scalar_select %p174, %s14, 1
      %s176 = smul.addr %s175, 2
      %s177 = scalar_lea.vmem %s2, %s176
      %p178 = pneg %p87
      %p179 = pneg %p84
      %p180 = pneg %p113
      %p181 = pneg %p110
      %p182 = scmp.lt.s32.totalorder %s14, 1
      %s183 = scalar_select %p182, %s14, 1
      %s184 = smul.addr %s183, 2
      %s185 = smul.addr %s184, 4
      %s186 = scalar_lea.vmem %s3, %s185
      %p187 = scmp.lt.s32.totalorder %s14, 1
      %s188 = scalar_select %p187, %s14, 1
      %s189 = smul.addr %s188, 2
      %s190 = scalar_lea.vmem %s0, %s189
      %p191 = scmp.lt.s32.totalorder %s14, 1
      %s192 = scalar_select %p191, %s14, 1
      %s193 = smul.addr %s192, 32
      %s194 = smul.addr %s193, 4
      %s195 = scalar_lea.vmem %s1, %s194
      %p196 = scmp.lt.s32.totalorder %s14, 1
      %s197 = scalar_select %p196, %s14, 1
      %s198 = smul.addr %s197, 2
      %s199 = scalar_lea.vmem %s2, %s198
      %p200 = scmp.lt.s32.totalorder %s14, 1
      %s201 = scalar_select %p200, %s14, 1
      %s202 = smul.addr %s201, 2
      %s203 = smul.addr %s202, 4
      %s204 = scalar_lea.vmem %s3, %s203
      %v206 = vld [vmem:[%s190] sm:$0x3]
      %v207 = vld [vmem:[%s195] sm:$0xf]
      %v208 = vld [vmem:[%s195 + $0x4] sm:$0xf]
      %v209 = vld [vmem:[%s195 + $0x8] sm:$0xf]
      %v210 = vld [vmem:[%s195 + $0xc] sm:$0xf]
      %v211 = vld [vmem:[%s195 + $0x10] sm:$0xf]
      %v212 = vld [vmem:[%s195 + $0x14] sm:$0xf]
      %v213 = vld [vmem:[%s195 + $0x18] sm:$0xf]
      %v214 = vld [vmem:[%s195 + $0x1c] sm:$0xf]
      %v215 = vld [vmem:[%s195 + $0x20] sm:$0xf]
      %v216 = vld [vmem:[%s195 + $0x24] sm:$0xf]
      %v217 = vld [vmem:[%s195 + $0x28] sm:$0xf]
      %v218 = vld [vmem:[%s195 + $0x2c] sm:$0xf]
      %v219 = vld [vmem:[%s195 + $0x30] sm:$0xf]
      %v220 = vld [vmem:[%s195 + $0x34] sm:$0xf]
      %v221 = vld [vmem:[%s195 + $0x38] sm:$0xf]
      %v222 = vld [vmem:[%s195 + $0x3c] sm:$0xf]
      %v223 = vld [vmem:[%s195 + $0x40] sm:$0xf]
      %v224 = vld [vmem:[%s195 + $0x44] sm:$0xf]
      %v225 = vld [vmem:[%s195 + $0x48] sm:$0xf]
      %v226 = vld [vmem:[%s195 + $0x4c] sm:$0xf]
      %v227 = vld [vmem:[%s195 + $0x50] sm:$0xf]
      %v228 = vld [vmem:[%s195 + $0x54] sm:$0xf]
      %v229 = vld [vmem:[%s195 + $0x58] sm:$0xf]
      %v230 = vld [vmem:[%s195 + $0x5c] sm:$0xf]
      %v231 = vld [vmem:[%s195 + $0x60] sm:$0xf]
      %v232 = vld [vmem:[%s195 + $0x64] sm:$0xf]
      %v233 = vld [vmem:[%s195 + $0x68] sm:$0xf]
      %v234 = vld [vmem:[%s195 + $0x6c] sm:$0xf]
      %v235 = vld [vmem:[%s195 + $0x70] sm:$0xf]
      %v236 = vld [vmem:[%s195 + $0x74] sm:$0xf]
      %v237 = vld [vmem:[%s195 + $0x78] sm:$0xf]
      %v238 = vld [vmem:[%s195 + $0x7c] sm:$0xf]
      %v239 = vld [vmem:[%s199] sm:$0x3]
      %v241 = vlaneseq
      %v242 = vshrl.u32 %v241, 7
      %v243 = vsub.s32 0, %v242
      %v244 = vrot.slane %v239, %v243
      %v245 = vlaneseq
      %v246 = vshrl.u32 %v245, 7
      %v247 = vsub.s32 1, %v246
      %v248 = vrot.slane %v239, %v247
      %v283 = vunpack.c.l.b16 %v207
      %v284 = vunpack.c.l.b16 %v208
      %v285 = vunpack.c.l.b16 %v209
      %v286 = vunpack.c.l.b16 %v210
      %v287 = vunpack.c.l.b16 %v211
      %v288 = vunpack.c.l.b16 %v212
      %v289 = vunpack.c.l.b16 %v213
      %v290 = vunpack.c.l.b16 %v214
      %v291 = vunpack.c.l.b16 %v215
      %v292 = vunpack.c.l.b16 %v216
      %v293 = vunpack.c.l.b16 %v217
      %v294 = vunpack.c.l.b16 %v218
      %v295 = vunpack.c.l.b16 %v219
      %v296 = vunpack.c.l.b16 %v220
      %v297 = vunpack.c.l.b16 %v221
      %v298 = vunpack.c.l.b16 %v222
      %v299 = vunpack.c.l.b16 %v223
      %v300 = vunpack.c.l.b16 %v224
      %v301 = vunpack.c.l.b16 %v225
      %v302 = vunpack.c.l.b16 %v226
      %v303 = vunpack.c.l.b16 %v227
      %v304 = vunpack.c.l.b16 %v228
      %v305 = vunpack.c.l.b16 %v229
      %v306 = vunpack.c.l.b16 %v230
      %v307 = vunpack.c.l.b16 %v231
      %v308 = vunpack.c.l.b16 %v232
      %v309 = vunpack.c.l.b16 %v233
      %v310 = vunpack.c.l.b16 %v234
      %v311 = vunpack.c.l.b16 %v235
      %v312 = vunpack.c.l.b16 %v236
      %v313 = vunpack.c.l.b16 %v237
      %v314 = vunpack.c.l.b16 %v238
      %v315 = vpack.c.b16 %v284, %v283
      %v316 = vpack.c.b16 %v286, %v285
      %v317 = vpack.c.b16 %v288, %v287
      %v318 = vpack.c.b16 %v290, %v289
      %v319 = vpack.c.b16 %v292, %v291
      %v320 = vpack.c.b16 %v294, %v293
      %v321 = vpack.c.b16 %v296, %v295
      %v322 = vpack.c.b16 %v298, %v297
      %v323 = vpack.c.b16 %v300, %v299
      %v324 = vpack.c.b16 %v302, %v301
      %v325 = vpack.c.b16 %v304, %v303
      %v326 = vpack.c.b16 %v306, %v305
      %v327 = vpack.c.b16 %v308, %v307
      %v328 = vpack.c.b16 %v310, %v309
      %v329 = vpack.c.b16 %v312, %v311
      %v330 = vpack.c.b16 %v314, %v313
      %vm331 = vcmask 31744
      %v333 = vsel %vm331, %v206, 0
      %v336 = vsel %vm331, %v315, 0
      %v339 = vsel %vm331, %v316, 0
      %v342 = vsel %vm331, %v317, 0
      %v345 = vsel %vm331, %v318, 0
      %v348 = vsel %vm331, %v319, 0
      %v351 = vsel %vm331, %v320, 0
      %v354 = vsel %vm331, %v321, 0
      %v357 = vsel %vm331, %v322, 0
      %v360 = vsel %vm331, %v323, 0
      %v363 = vsel %vm331, %v324, 0
      %v366 = vsel %vm331, %v325, 0
      %v369 = vsel %vm331, %v326, 0
      %v372 = vsel %vm331, %v327, 0
      %v375 = vsel %vm331, %v328, 0
      %v378 = vsel %vm331, %v329, 0
      %v381 = vsel %vm331, %v330, 0
      %383 = vmatprep.subr.bf16.mxu0 0
      %384 = vmatpush1.bf16.xpose.msra.mxu0 %v357
      %385 = vmatprep.subr.bf16.mxu0 0
      %386 = vmatpush1.bf16.xpose.msra.mxu0 %v354
      %387 = vmatprep.subr.bf16.mxu0 0
      %388 = vmatpush1.bf16.xpose.msra.mxu0 %v351
      %389 = vmatprep.subr.bf16.mxu0 0
      %390 = vmatpush1.bf16.xpose.msra.mxu0 %v348
      %391 = vmatprep.subr.bf16.mxu0 0
      %392 = vmatpush1.bf16.xpose.msra.mxu0 %v345
      %393 = vmatprep.subr.bf16.mxu0 0
      %394 = vmatpush1.bf16.xpose.msra.mxu0 %v342
      %395 = vmatprep.subr.bf16.mxu0 0
      %396 = vmatpush1.bf16.xpose.msra.mxu0 %v339
      %397 = vmatprep.subr.bf16.mxu0 0
      %398 = vmatpush1.bf16.xpose.msra.mxu0 %v336
      %399 = vmatprep.subr.bf16.mxu0 0
      %400 = vmatpush2.bf16.xpose.msra.mxu0 %v381
      %401 = vmatprep.subr.bf16.mxu0 0
      %402 = vmatpush2.bf16.xpose.msra.mxu0 %v378
      %403 = vmatprep.subr.bf16.mxu0 0
      %404 = vmatpush2.bf16.xpose.msra.mxu0 %v375
      %405 = vmatprep.subr.bf16.mxu0 0
      %406 = vmatpush2.bf16.xpose.msra.mxu0 %v372
      %407 = vmatprep.subr.bf16.mxu0 0
      %408 = vmatpush2.bf16.xpose.msra.mxu0 %v369
      %409 = vmatprep.subr.bf16.mxu0 0
      %410 = vmatpush2.bf16.xpose.msra.mxu0 %v366
      %411 = vmatprep.subr.bf16.mxu0 0
      %412 = vmatpush2.bf16.xpose.msra.mxu0 %v363
      %413 = vmatprep.subr.bf16.mxu0 0
      %414 = vmatpush2.bf16.xpose.msra.mxu0 %v360
      %415 = vmatprep.mubr.bf16.mxu0 0
      %416 = vmatmul.mubr.bf16.gmra.mxu0 %v333
      %v417 = vpop.f32.mrf.mxu0
      %v418 = vadd.f32 %v244, %v417
      %v419 = vpop.f32.mrf.mxu0
      %v420 = vadd.f32 %v248, %v419
      %v421 = vpop.f32.mrf.mxu0
      %v422 = vpop.f32.mrf.mxu0
      %423 = vdwg.mxu0
      %v426 = vcombine.low %v418, %v420
      %428 = vst [vmem:[%s204] sm:$0xff] %v426
      %p429 = scmp.lt.s32.totalorder %s14, 1
      %s430 = scalar_select %p429, %s14, 1
      %s431 = smul.addr %s430, 2
      %s432 = smul.addr %s431, 4
      %s433 = scalar_lea.vmem %s3, %s432
      // Predicated region
      $region33: #{medsam_forward.147} parent=31 // pred_check
        %p434 = pneg %p110
      $region34: #{medsam_forward.147} parent=31 // pred_check_branch
        %436 = sbr.rel (%p434) target = $region36
      $region35: #{medsam_forward.147} parent=31 // pred_region
        _
      $region36: #{medsam_forward.147} parent=31 // pred_fallthru
        _
    $region32: #{medsam_forward.147} parent=5 // pred_fallthru
      _
    %p437 = scmp.le.s32.totalorder 2, %s9
    // Predicated region
    $region37: #{medsam_forward.147} parent=5 // pred_check
      %p438 = pneg %p437
    $region38: #{medsam_forward.147} parent=5 // pred_check_branch
      %440 = sbr.rel (%p438) target = $region40
    $region39: #{medsam_forward.147} parent=5 // pred_region
      %s441 = ssub.s32 %s9, 2
      // Predicated region
      $region41: #{medsam_forward.147} parent=39 // pred_check
        %p442 = pneg %p116
      $region42: #{medsam_forward.147} parent=39 // pred_check_branch
        %444 = sbr.rel (%p442) target = $region44
      $region43: #{medsam_forward.147} parent=39 // pred_region
        %p445 = scmp.lt.s32.totalorder %s15, 1
        %s446 = scalar_select %p445, %s15, 1
        %s447 = smul.addr %s446, 2
        %s448 = smul.addr %s447, 4
        %s449 = scalar_lea.vmem %s3, %s448
      $region44: #{medsam_forward.147} parent=39 // pred_fallthru
        _
    $region40: #{medsam_forward.147} parent=5 // pred_fallthru
      _
  $region6: #{medsam_forward.147} parent=0 // loop_footer
    %s13 = sadd.s32 1, %s9
  $region7: #{medsam_forward.147} parent=0 // loop_footer_branch
    %8 = sbr.rel target = $region3
  $region8: #{medsam_forward.147} parent=0 // loop_exit
    _

</llo_original>
